<compile_context>
chip_gen: v7x
topology: tpu7x:2x2x1
jax: 0.10.0
libtpu: 0.0.40
codegen_flags: <defaults>
</compile_context>

<pallas_src>
import jax
import jax.numpy as jnp
from jax.experimental import pallas as pl
from jax.experimental.pallas import tpu as pltpu


def crnn_lstm_kernel(x_ref, w1f_ref, b1_ref, w2f_ref, b2_ref,
                     bl1_ref, bl2_ref, wfc_ref, bfc_ref,
                     wih1_hbm, wrec_hbm,
                     out_ref,
                     wih1_vmem, wrec_vmem, dma_sem):
    # x_ref    : (B, L1, NF) f32 model input (channel-last, as PyTorch receives it)
    # w1f/w2f  : (3*Cin, 128) bf16 im2col conv weights (channel-padded to 128)
    # b1/b2    : (1, 128) f32 conv biases (b1 zero-padded)
    # bl1/bl2  : (1, 4H) f32 LSTM biases (= b_ih + b_hh)
    # wfc      : (2H, ncat) bf16; bfc: (1, ncat) f32
    # wih1_hbm : (128, 4H) bf16 in HBM; wrec_hbm: (3, H, 4H) bf16 = [Whh1;Wih2;Whh2]
    # out_ref  : (B, ncat) f32
    B, L1, NF = x_ref.shape
    H = wrec_hbm.shape[1]
    G = 4 * H

    # --- kick off LSTM/recurrent weight DMAs so they overlap the conv stage ----
    cp_wih1 = pltpu.make_async_copy(wih1_hbm, wih1_vmem, dma_sem.at[0])
    cp_wrec = pltpu.make_async_copy(wrec_hbm, wrec_vmem, dma_sem.at[1])
    cp_wih1.start()
    cp_wrec.start()

    # ---- Conv1d(k=3, pad=1) + ReLU + MaxPool1d(2,2) as ONE im2col matmul ------
    def conv_relu_pool(src, w_ref, b_ref):
        # src: (B, L, Cin) f32  ->  (B, L//2, 128) f32
        Bv, L, Cin = src.shape
        Cout = w_ref.shape[1]                         # 128 (channel-padded)
        z = jnp.zeros((Bv, 1, Cin), src.dtype)
        xprev = jnp.concatenate([z, src[:, :L - 1, :]], axis=1)   # x[l-1], 0 at l=0
        xnext = jnp.concatenate([src[:, 1:, :], z], axis=1)       # x[l+1], 0 at l=L-1
        xim = jnp.concatenate([xprev, src, xnext], axis=2)        # (B, L, 3*Cin)
        xim = xim.reshape(Bv * L, 3 * Cin).astype(jnp.bfloat16)
        y = jnp.dot(xim, w_ref[...],
                    preferred_element_type=jnp.float32) + b_ref[...]
        y = jnp.maximum(y, 0.0)                       # ReLU; Dropout = identity at eval
        pooled = jnp.max(y.reshape(Bv * L // 2, 2, Cout), axis=1)  # MaxPool1d(2,2)
        return pooled.reshape(Bv, L // 2, Cout)

    a1 = conv_relu_pool(x_ref[...], w1f_ref, b1_ref)   # (B, L1/2, 128), chans>=64 are 0
    a2 = conv_relu_pool(a1, w2f_ref, b2_ref)           # (B, T, 128)

    T = a2.shape[1]
    C2 = a2.shape[2]

    # ---- 2-layer LSTM, PyTorch gate order [i, f, g, o] ------------------------
    # Layer-1 input projection hoisted out of the time loop: one big matmul.
    cp_wih1.wait()
    gx1 = (jnp.dot(a2.reshape(B * T, C2).astype(jnp.bfloat16), wih1_vmem[...],
                   preferred_element_type=jnp.float32)
           + bl1_ref[...]).reshape(B, T, G)

    cp_wrec.wait()
    whh1 = wrec_vmem[0]                               # (H, 4H) bf16, hoisted
    wih2 = wrec_vmem[1]
    whh2 = wrec_vmem[2]
    bl2 = jnp.broadcast_to(bl2_ref[...], (B, G))      # hoisted broadcast

    def cell(gates, c_prev):
        i = jax.nn.sigmoid(gates[:, 0 * H:1 * H])
        f = jax.nn.sigmoid(gates[:, 1 * H:2 * H])
        g = jnp.tanh(gates[:, 2 * H:3 * H])
        o = jax.nn.sigmoid(gates[:, 3 * H:4 * H])
        c_new = f * c_prev + i * g
        return o * jnp.tanh(c_new), c_new

    h1 = jnp.zeros((B, H), jnp.float32)
    c1 = jnp.zeros((B, H), jnp.float32)
    h2 = jnp.zeros((B, H), jnp.float32)
    c2 = jnp.zeros((B, H), jnp.float32)

    for t in range(T):  # static unroll: T is small and fixed (seq/4 = 8)
        # layer-2 recurrent half only depends on t-1 state -> off the critical path
        g2_rec = jnp.dot(h2.astype(jnp.bfloat16), whh2,
                         preferred_element_type=jnp.float32) + bl2
        g1 = gx1[:, t, :] + jnp.dot(h1.astype(jnp.bfloat16), whh1,
                                    preferred_element_type=jnp.float32)
        h1, c1 = cell(g1, c1)
        # layer-2 input half: only a K=256 matmul between cell1 and cell2
        # (inter-layer LSTM dropout is identity at inference)
        g2 = g2_rec + jnp.dot(h1.astype(jnp.bfloat16), wih2,
                              preferred_element_type=jnp.float32)
        h2, c2 = cell(g2, c2)

    # fc(concat(h_n[layer0], h_n[layer1]))
    hcat = jnp.concatenate([h1, h2], axis=1).astype(jnp.bfloat16)
    out_ref[...] = (jnp.dot(hcat, wfc_ref[...],
                            preferred_element_type=jnp.float32)
                    + bfc_ref[...])


def crnn_lstm_pallas(x, w1f, b1, w2f, b2, bl1, bl2, wfc, bfc, wih1, wrec):
    B, L1, NF = x.shape
    # two MaxPool1d(2,2) stages assume divisibility (PyTorch would floor-drop an
    # odd tail; assert instead of silently mispairing rows).
    assert L1 % 4 == 0, "seq_length must be divisible by 4"
    ncat = wfc.shape[1]
    vmem = pltpu.MemorySpace.VMEM
    return pl.pallas_call(
        crnn_lstm_kernel,
        out_shape=jax.ShapeDtypeStruct((B, ncat), jnp.float32),
        in_specs=[pl.BlockSpec(memory_space=vmem)] * 9          # small/immediately-needed
                 + [pl.BlockSpec(memory_space=pl.ANY)] * 2,     # big LSTM weights stay in HBM
        out_specs=pl.BlockSpec(memory_space=vmem),
        scratch_shapes=[
            pltpu.VMEM(wih1.shape, jnp.bfloat16),   # Wih1 landing buffer
            pltpu.VMEM(wrec.shape, jnp.bfloat16),   # [Whh1;Wih2;Whh2] landing buffer
            pltpu.SemaphoreType.DMA((2,)),
        ],
    )(x, w1f, b1, w2f, b2, bl1, bl2, wfc, bfc, wih1, wrec)


# ----------------------------------------------------------------------------
# Parameters (channel-last / pre-transposed layout) + one-time packing.
# When importing real PyTorch weights: conv weight (Cout,Cin,3) -> transpose to
# (3,Cin,Cout); LSTM weight_ih/hh (4H,in) -> transpose to (in,4H); bl* must be
# b_ih + b_hh summed; fc weight (ncat,2H) -> transpose to (2H,ncat).
# ----------------------------------------------------------------------------
def init_params(key, n_features=20, n_categories=10, hidden=256):
    H = hidden
    ks = jax.random.split(key, 12)
    s = 0.1
    return {
        "w1":   s * jax.random.normal(ks[0], (3, n_features, 64), jnp.float32),
        "b1":   s * jax.random.normal(ks[1], (1, 64), jnp.float32),
        "w2":   s * jax.random.normal(ks[2], (3, 64, 128), jnp.float32),
        "b2":   s * jax.random.normal(ks[3], (1, 128), jnp.float32),
        "wih1": s * jax.random.normal(ks[4], (128, 4 * H), jnp.float32),
        "whh1": s * jax.random.normal(ks[5], (H, 4 * H), jnp.float32),
        "bl1":  s * jax.random.normal(ks[6], (1, 4 * H), jnp.float32),
        "wih2": s * jax.random.normal(ks[7], (H, 4 * H), jnp.float32),
        "whh2": s * jax.random.normal(ks[8], (H, 4 * H), jnp.float32),
        "bl2":  s * jax.random.normal(ks[9], (1, 4 * H), jnp.float32),
        "wfc":  s * jax.random.normal(ks[10], (2 * H, n_categories), jnp.float32),
        "bfc":  s * jax.random.normal(ks[11], (1, n_categories), jnp.float32),
    }


def pack_params(p):
    """One-time packing: im2col + lane-padded conv weights, bf16 matmul weights,
    stacked recurrent weights for a single overlapped DMA."""
    bf = jnp.bfloat16
    w1 = p["w1"]                                       # (3, NF, 64)
    _, NF, C1 = w1.shape
    w1p = jnp.pad(w1, ((0, 0), (0, 0), (0, 128 - C1)))  # Cout 64 -> 128 (zeros)
    b1p = jnp.pad(p["b1"], ((0, 0), (0, 128 - C1)))
    w2 = p["w2"]                                       # (3, 64, 128)
    w2p = jnp.pad(w2, ((0, 0), (0, 128 - w2.shape[1]), (0, 0)))  # Cin 64 -> 128 (zeros)
    return {
        "w1f": w1p.reshape(3 * NF, 128).astype(bf),    # (3*NF, 128) im2col weight
        "b1":  b1p,
        "w2f": w2p.reshape(3 * 128, 128).astype(bf),   # (384, 128) im2col weight
        "b2":  p["b2"],
        "wih1": p["wih1"].astype(bf),
        "bl1":  p["bl1"],
        "wrec": jnp.stack([p["whh1"], p["wih2"], p["whh2"]], axis=0).astype(bf),
        "bl2":  p["bl2"],
        "wfc":  p["wfc"].astype(bf),
        "bfc":  p["bfc"],
    }


@jax.jit
def crnn_lstm_forward(x, pk):
    # x: (B, seq_length, n_features) -- same layout the PyTorch model receives.
    return crnn_lstm_pallas(
        x, pk["w1f"], pk["b1"], pk["w2f"], pk["b2"],
        pk["bl1"], pk["bl2"], pk["wfc"], pk["bfc"],
        pk["wih1"], pk["wrec"])


if __name__ == "__main__":
    B, SEQ, NFEAT, NCAT = 2, 32, 20, 10
    key = jax.random.PRNGKey(0)
    kp, kx = jax.random.split(key)
    params = init_params(kp, n_features=NFEAT, n_categories=NCAT)
    packed = pack_params(params)
    x = jax.random.normal(kx, (B, SEQ, NFEAT), jnp.float32)

    out = crnn_lstm_forward(x, packed)
    out = jax.block_until_ready(out)
    assert out.shape == (B, NCAT), out.shape
    assert bool(jnp.all(jnp.isfinite(out)))
    print("KERNEL_OK")
</pallas_src>

<mosaic_0001>
module attributes {stable_mosaic.version = 11 : i64} {
  func.func @crnn_lstm_kernel(%arg0: memref<2x32x20xf32, #tpu.memory_space<vmem>>, %arg1: memref<60x128xbf16, #tpu.memory_space<vmem>>, %arg2: memref<1x128xf32, #tpu.memory_space<vmem>>, %arg3: memref<384x128xbf16, #tpu.memory_space<vmem>>, %arg4: memref<1x128xf32, #tpu.memory_space<vmem>>, %arg5: memref<1x1024xf32, #tpu.memory_space<vmem>>, %arg6: memref<1x1024xf32, #tpu.memory_space<vmem>>, %arg7: memref<512x10xbf16, #tpu.memory_space<vmem>>, %arg8: memref<1x10xf32, #tpu.memory_space<vmem>>, %arg9: memref<128x1024xbf16, #tpu.memory_space<any>>, %arg10: memref<3x256x1024xbf16, #tpu.memory_space<any>>, %arg11: memref<2x10xf32, #tpu.memory_space<vmem>>, %arg12: memref<128x1024xbf16, #tpu.memory_space<vmem>>, %arg13: memref<3x256x1024xbf16, #tpu.memory_space<vmem>>, %arg14: memref<2x!tpu.dma_semaphore, #tpu.memory_space<semaphore_mem>>) attributes {dimension_semantics = [], scalar_prefetch = 0 : i64, scratch_operands = 3 : i64, tpu.core_type = #tpu.core_type<tc>} {
    %c0_i32 = arith.constant 0 : i32
    %0 = tpu.memref_slice %arg14[%c0_i32] : memref<2x!tpu.dma_semaphore, #tpu.memory_space<semaphore_mem>> -> memref<1x!tpu.dma_semaphore, #tpu.memory_space<semaphore_mem>>
    %1 = tpu.memref_squeeze %0 : memref<1x!tpu.dma_semaphore, #tpu.memory_space<semaphore_mem>> -> memref<!tpu.dma_semaphore, #tpu.memory_space<semaphore_mem>>
    tpu.enqueue_dma source(%arg9 : memref<128x1024xbf16, #tpu.memory_space<any>>) target(%arg12 : memref<128x1024xbf16, #tpu.memory_space<vmem>>) target_semaphore(%1 : memref<!tpu.dma_semaphore, #tpu.memory_space<semaphore_mem>>)
    %c1_i32 = arith.constant 1 : i32
    %2 = tpu.memref_slice %arg14[%c1_i32] : memref<2x!tpu.dma_semaphore, #tpu.memory_space<semaphore_mem>> -> memref<1x!tpu.dma_semaphore, #tpu.memory_space<semaphore_mem>>
    %3 = tpu.memref_squeeze %2 : memref<1x!tpu.dma_semaphore, #tpu.memory_space<semaphore_mem>> -> memref<!tpu.dma_semaphore, #tpu.memory_space<semaphore_mem>>
    tpu.enqueue_dma source(%arg10 : memref<3x256x1024xbf16, #tpu.memory_space<any>>) target(%arg13 : memref<3x256x1024xbf16, #tpu.memory_space<vmem>>) target_semaphore(%3 : memref<!tpu.dma_semaphore, #tpu.memory_space<semaphore_mem>>)
    %c0 = arith.constant 0 : index
    %c0_0 = arith.constant 0 : index
    %c0_1 = arith.constant 0 : index
    %4 = vector.load %arg0[%c0, %c0_0, %c0_1] : memref<2x32x20xf32, #tpu.memory_space<vmem>>, vector<2x32x20xf32>
    %cst = arith.constant 0.000000e+00 : f32
    %5 = vector.broadcast %cst : f32 to vector<2x1x20xf32>
    %6 = vector.extract_strided_slice %4 {offsets = [0, 0, 0], sizes = [2, 31, 20], strides = [1, 1, 1]} : vector<2x32x20xf32> to vector<2x31x20xf32>
    %7 = tpu.concatenate %5, %6 in 1 : vector<2x1x20xf32>, vector<2x31x20xf32> -> vector<2x32x20xf32>
    %8 = vector.extract_strided_slice %4 {offsets = [0, 1, 0], sizes = [2, 31, 20], strides = [1, 1, 1]} : vector<2x32x20xf32> to vector<2x31x20xf32>
    %9 = tpu.concatenate %8, %5 in 1 : vector<2x31x20xf32>, vector<2x1x20xf32> -> vector<2x32x20xf32>
    %10 = tpu.concatenate %7, %4, %9 in 2 : vector<2x32x20xf32>, vector<2x32x20xf32>, vector<2x32x20xf32> -> vector<2x32x60xf32>
    %11 = vector.shape_cast %10 : vector<2x32x60xf32> to vector<64x60xf32>
    %12 = arith.truncf %11 : vector<64x60xf32> to vector<64x60xbf16>
    %c0_2 = arith.constant 0 : index
    %c0_3 = arith.constant 0 : index
    %13 = vector.load %arg1[%c0_2, %c0_3] : memref<60x128xbf16, #tpu.memory_space<vmem>>, vector<60x128xbf16>
    %cst_4 = arith.constant dense<0.000000e+00> : vector<64x128xf32>
    %14 = tpu.matmul %12, %13, %cst_4 {dimension_numbers = #tpu.dot_dimension_numbers<[1], [0], [0], [1], [0, 0, 1, 1], [], []>} : vector<64x60xbf16>, vector<60x128xbf16>, vector<64x128xf32> -> vector<64x128xf32>
    %c0_5 = arith.constant 0 : index
    %c0_6 = arith.constant 0 : index
    %15 = vector.load %arg2[%c0_5, %c0_6] : memref<1x128xf32, #tpu.memory_space<vmem>>, vector<1x128xf32>
    %16 = vector.broadcast %15 : vector<1x128xf32> to vector<64x128xf32>
    %17 = arith.addf %14, %16 : vector<64x128xf32>
    %cst_7 = arith.constant 0.000000e+00 : f32
    %18 = vector.broadcast %cst_7 : f32 to vector<64x128xf32>
    %19 = arith.maximumf %17, %18 : vector<64x128xf32>
    %20 = vector.shape_cast %19 : vector<64x128xf32> to vector<32x2x128xf32>
    %cst_8 = arith.constant dense<0xFF800000> : vector<32x128xf32>
    %21 = vector.multi_reduction <maximumf>, %20, %cst_8 [1] : vector<32x2x128xf32> to vector<32x128xf32>
    %22 = vector.shape_cast %21 : vector<32x128xf32> to vector<2x16x128xf32>
    %cst_9 = arith.constant 0.000000e+00 : f32
    %23 = vector.broadcast %cst_9 : f32 to vector<2x1x128xf32>
    %24 = vector.extract_strided_slice %22 {offsets = [0, 0, 0], sizes = [2, 15, 128], strides = [1, 1, 1]} : vector<2x16x128xf32> to vector<2x15x128xf32>
    %25 = tpu.concatenate %23, %24 in 1 : vector<2x1x128xf32>, vector<2x15x128xf32> -> vector<2x16x128xf32>
    %26 = vector.extract_strided_slice %22 {offsets = [0, 1, 0], sizes = [2, 15, 128], strides = [1, 1, 1]} : vector<2x16x128xf32> to vector<2x15x128xf32>
    %27 = tpu.concatenate %26, %23 in 1 : vector<2x15x128xf32>, vector<2x1x128xf32> -> vector<2x16x128xf32>
    %28 = tpu.concatenate %25, %22, %27 in 2 : vector<2x16x128xf32>, vector<2x16x128xf32>, vector<2x16x128xf32> -> vector<2x16x384xf32>
    %29 = vector.shape_cast %28 : vector<2x16x384xf32> to vector<32x384xf32>
    %30 = arith.truncf %29 : vector<32x384xf32> to vector<32x384xbf16>
    %c0_10 = arith.constant 0 : index
    %c0_11 = arith.constant 0 : index
    %31 = vector.load %arg3[%c0_10, %c0_11] : memref<384x128xbf16, #tpu.memory_space<vmem>>, vector<384x128xbf16>
    %cst_12 = arith.constant dense<0.000000e+00> : vector<32x128xf32>
    %32 = tpu.matmul %30, %31, %cst_12 {dimension_numbers = #tpu.dot_dimension_numbers<[1], [0], [0], [1], [0, 0, 1, 1], [], []>} : vector<32x384xbf16>, vector<384x128xbf16>, vector<32x128xf32> -> vector<32x128xf32>
    %c0_13 = arith.constant 0 : index
    %c0_14 = arith.constant 0 : index
    %33 = vector.load %arg4[%c0_13, %c0_14] : memref<1x128xf32, #tpu.memory_space<vmem>>, vector<1x128xf32>
    %34 = vector.broadcast %33 : vector<1x128xf32> to vector<32x128xf32>
    %35 = arith.addf %32, %34 : vector<32x128xf32>
    %cst_15 = arith.constant 0.000000e+00 : f32
    %36 = vector.broadcast %cst_15 : f32 to vector<32x128xf32>
    %37 = arith.maximumf %35, %36 : vector<32x128xf32>
    %38 = vector.shape_cast %37 : vector<32x128xf32> to vector<16x2x128xf32>
    %cst_16 = arith.constant dense<0xFF800000> : vector<16x128xf32>
    %39 = vector.multi_reduction <maximumf>, %38, %cst_16 [1] : vector<16x2x128xf32> to vector<16x128xf32>
    %40 = vector.shape_cast %39 : vector<16x128xf32> to vector<2x8x128xf32>
    %c0_i32_17 = arith.constant 0 : i32
    %41 = tpu.memref_slice %arg14[%c0_i32_17] : memref<2x!tpu.dma_semaphore, #tpu.memory_space<semaphore_mem>> -> memref<1x!tpu.dma_semaphore, #tpu.memory_space<semaphore_mem>>
    %42 = tpu.memref_squeeze %41 : memref<1x!tpu.dma_semaphore, #tpu.memory_space<semaphore_mem>> -> memref<!tpu.dma_semaphore, #tpu.memory_space<semaphore_mem>>
    tpu.wait_dma2 semaphore(%42 : memref<!tpu.dma_semaphore, #tpu.memory_space<semaphore_mem>>) src(%arg9 : memref<128x1024xbf16, #tpu.memory_space<any>>) dst(%arg12 : memref<128x1024xbf16, #tpu.memory_space<vmem>>)
    %43 = vector.shape_cast %40 : vector<2x8x128xf32> to vector<16x128xf32>
    %44 = arith.truncf %43 : vector<16x128xf32> to vector<16x128xbf16>
    %c0_18 = arith.constant 0 : index
    %c0_19 = arith.constant 0 : index
    %45 = vector.load %arg12[%c0_18, %c0_19] : memref<128x1024xbf16, #tpu.memory_space<vmem>>, vector<128x1024xbf16>
    %cst_20 = arith.constant dense<0.000000e+00> : vector<16x1024xf32>
    %46 = tpu.matmul %44, %45, %cst_20 {dimension_numbers = #tpu.dot_dimension_numbers<[1], [0], [0], [1], [0, 0, 1, 1], [], []>} : vector<16x128xbf16>, vector<128x1024xbf16>, vector<16x1024xf32> -> vector<16x1024xf32>
    %c0_21 = arith.constant 0 : index
    %c0_22 = arith.constant 0 : index
    %47 = vector.load %arg5[%c0_21, %c0_22] : memref<1x1024xf32, #tpu.memory_space<vmem>>, vector<1x1024xf32>
    %48 = vector.broadcast %47 : vector<1x1024xf32> to vector<16x1024xf32>
    %49 = arith.addf %46, %48 : vector<16x1024xf32>
    %50 = vector.shape_cast %49 : vector<16x1024xf32> to vector<2x8x1024xf32>
    %c1_i32_23 = arith.constant 1 : i32
    %51 = tpu.memref_slice %arg14[%c1_i32_23] : memref<2x!tpu.dma_semaphore, #tpu.memory_space<semaphore_mem>> -> memref<1x!tpu.dma_semaphore, #tpu.memory_space<semaphore_mem>>
    %52 = tpu.memref_squeeze %51 : memref<1x!tpu.dma_semaphore, #tpu.memory_space<semaphore_mem>> -> memref<!tpu.dma_semaphore, #tpu.memory_space<semaphore_mem>>
    tpu.wait_dma2 semaphore(%52 : memref<!tpu.dma_semaphore, #tpu.memory_space<semaphore_mem>>) src(%arg10 : memref<3x256x1024xbf16, #tpu.memory_space<any>>) dst(%arg13 : memref<3x256x1024xbf16, #tpu.memory_space<vmem>>)
    %c0_24 = arith.constant 0 : index
    %c0_25 = arith.constant 0 : index
    %c0_26 = arith.constant 0 : index
    %53 = vector.load %arg13[%c0_24, %c0_25, %c0_26] : memref<3x256x1024xbf16, #tpu.memory_space<vmem>>, vector<1x256x1024xbf16>
    %54 = vector.shape_cast %53 : vector<1x256x1024xbf16> to vector<256x1024xbf16>
    %c1 = arith.constant 1 : index
    %c0_27 = arith.constant 0 : index
    %c0_28 = arith.constant 0 : index
    %55 = vector.load %arg13[%c1, %c0_27, %c0_28] : memref<3x256x1024xbf16, #tpu.memory_space<vmem>>, vector<1x256x1024xbf16>
    %56 = vector.shape_cast %55 : vector<1x256x1024xbf16> to vector<256x1024xbf16>
    %c2 = arith.constant 2 : index
    %c0_29 = arith.constant 0 : index
    %c0_30 = arith.constant 0 : index
    %57 = vector.load %arg13[%c2, %c0_29, %c0_30] : memref<3x256x1024xbf16, #tpu.memory_space<vmem>>, vector<1x256x1024xbf16>
    %58 = vector.shape_cast %57 : vector<1x256x1024xbf16> to vector<256x1024xbf16>
    %c0_31 = arith.constant 0 : index
    %c0_32 = arith.constant 0 : index
    %59 = vector.load %arg6[%c0_31, %c0_32] : memref<1x1024xf32, #tpu.memory_space<vmem>>, vector<1x1024xf32>
    %60 = vector.shape_cast %59 : vector<1x1024xf32> to vector<1x1024xf32>
    %61 = vector.broadcast %60 : vector<1x1024xf32> to vector<2x1024xf32>
    %cst_33 = arith.constant 0.000000e+00 : f32
    %62 = vector.broadcast %cst_33 : f32 to vector<2x256xf32>
    %cst_34 = arith.constant 0.000000e+00 : f32
    %63 = vector.broadcast %cst_34 : f32 to vector<2x256xf32>
    %cst_35 = arith.constant 0.000000e+00 : f32
    %64 = vector.broadcast %cst_35 : f32 to vector<2x256xf32>
    %cst_36 = arith.constant 0.000000e+00 : f32
    %65 = vector.broadcast %cst_36 : f32 to vector<2x256xf32>
    %66 = arith.truncf %64 : vector<2x256xf32> to vector<2x256xbf16>
    %cst_37 = arith.constant dense<0.000000e+00> : vector<2x1024xf32>
    %67 = tpu.matmul %66, %58, %cst_37 {dimension_numbers = #tpu.dot_dimension_numbers<[1], [0], [0], [1], [0, 0, 1, 1], [], []>} : vector<2x256xbf16>, vector<256x1024xbf16>, vector<2x1024xf32> -> vector<2x1024xf32>
    %68 = arith.addf %67, %61 : vector<2x1024xf32>
    %69 = vector.extract_strided_slice %50 {offsets = [0, 0, 0], sizes = [2, 1, 1024], strides = [1, 1, 1]} : vector<2x8x1024xf32> to vector<2x1x1024xf32>
    %70 = vector.shape_cast %69 : vector<2x1x1024xf32> to vector<2x1024xf32>
    %71 = arith.truncf %62 : vector<2x256xf32> to vector<2x256xbf16>
    %cst_38 = arith.constant dense<0.000000e+00> : vector<2x1024xf32>
    %72 = tpu.matmul %71, %54, %cst_38 {dimension_numbers = #tpu.dot_dimension_numbers<[1], [0], [0], [1], [0, 0, 1, 1], [], []>} : vector<2x256xbf16>, vector<256x1024xbf16>, vector<2x1024xf32> -> vector<2x1024xf32>
    %73 = arith.addf %70, %72 : vector<2x1024xf32>
    %74 = vector.extract_strided_slice %73 {offsets = [0, 0], sizes = [2, 256], strides = [1, 1]} : vector<2x1024xf32> to vector<2x256xf32>
    %75 = arith.negf %74 : vector<2x256xf32>
    %76 = math.exp %75 : vector<2x256xf32>
    %cst_39 = arith.constant 1.000000e+00 : f32
    %77 = vector.broadcast %cst_39 : f32 to vector<2x256xf32>
    %78 = arith.addf %77, %76 : vector<2x256xf32>
    %79 = arith.divf %77, %78 : vector<2x256xf32>
    %80 = vector.extract_strided_slice %73 {offsets = [0, 256], sizes = [2, 256], strides = [1, 1]} : vector<2x1024xf32> to vector<2x256xf32>
    %81 = arith.negf %80 : vector<2x256xf32>
    %82 = math.exp %81 : vector<2x256xf32>
    %cst_40 = arith.constant 1.000000e+00 : f32
    %83 = vector.broadcast %cst_40 : f32 to vector<2x256xf32>
    %84 = arith.addf %83, %82 : vector<2x256xf32>
    %85 = arith.divf %83, %84 : vector<2x256xf32>
    %86 = vector.extract_strided_slice %73 {offsets = [0, 512], sizes = [2, 256], strides = [1, 1]} : vector<2x1024xf32> to vector<2x256xf32>
    %87 = math.tanh %86 : vector<2x256xf32>
    %88 = vector.extract_strided_slice %73 {offsets = [0, 768], sizes = [2, 256], strides = [1, 1]} : vector<2x1024xf32> to vector<2x256xf32>
    %89 = arith.negf %88 : vector<2x256xf32>
    %90 = math.exp %89 : vector<2x256xf32>
    %cst_41 = arith.constant 1.000000e+00 : f32
    %91 = vector.broadcast %cst_41 : f32 to vector<2x256xf32>
    %92 = arith.addf %91, %90 : vector<2x256xf32>
    %93 = arith.divf %91, %92 : vector<2x256xf32>
    %94 = arith.mulf %85, %63 : vector<2x256xf32>
    %95 = arith.mulf %79, %87 : vector<2x256xf32>
    %96 = arith.addf %94, %95 : vector<2x256xf32>
    %97 = math.tanh %96 : vector<2x256xf32>
    %98 = arith.mulf %93, %97 : vector<2x256xf32>
    %99 = arith.truncf %98 : vector<2x256xf32> to vector<2x256xbf16>
    %cst_42 = arith.constant dense<0.000000e+00> : vector<2x1024xf32>
    %100 = tpu.matmul %99, %56, %cst_42 {dimension_numbers = #tpu.dot_dimension_numbers<[1], [0], [0], [1], [0, 0, 1, 1], [], []>} : vector<2x256xbf16>, vector<256x1024xbf16>, vector<2x1024xf32> -> vector<2x1024xf32>
    %101 = arith.addf %68, %100 : vector<2x1024xf32>
    %102 = vector.extract_strided_slice %101 {offsets = [0, 0], sizes = [2, 256], strides = [1, 1]} : vector<2x1024xf32> to vector<2x256xf32>
    %103 = arith.negf %102 : vector<2x256xf32>
    %104 = math.exp %103 : vector<2x256xf32>
    %cst_43 = arith.constant 1.000000e+00 : f32
    %105 = vector.broadcast %cst_43 : f32 to vector<2x256xf32>
    %106 = arith.addf %105, %104 : vector<2x256xf32>
    %107 = arith.divf %105, %106 : vector<2x256xf32>
    %108 = vector.extract_strided_slice %101 {offsets = [0, 256], sizes = [2, 256], strides = [1, 1]} : vector<2x1024xf32> to vector<2x256xf32>
    %109 = arith.negf %108 : vector<2x256xf32>
    %110 = math.exp %109 : vector<2x256xf32>
    %cst_44 = arith.constant 1.000000e+00 : f32
    %111 = vector.broadcast %cst_44 : f32 to vector<2x256xf32>
    %112 = arith.addf %111, %110 : vector<2x256xf32>
    %113 = arith.divf %111, %112 : vector<2x256xf32>
    %114 = vector.extract_strided_slice %101 {offsets = [0, 512], sizes = [2, 256], strides = [1, 1]} : vector<2x1024xf32> to vector<2x256xf32>
    %115 = math.tanh %114 : vector<2x256xf32>
    %116 = vector.extract_strided_slice %101 {offsets = [0, 768], sizes = [2, 256], strides = [1, 1]} : vector<2x1024xf32> to vector<2x256xf32>
    %117 = arith.negf %116 : vector<2x256xf32>
    %118 = math.exp %117 : vector<2x256xf32>
    %cst_45 = arith.constant 1.000000e+00 : f32
    %119 = vector.broadcast %cst_45 : f32 to vector<2x256xf32>
    %120 = arith.addf %119, %118 : vector<2x256xf32>
    %121 = arith.divf %119, %120 : vector<2x256xf32>
    %122 = arith.mulf %113, %65 : vector<2x256xf32>
    %123 = arith.mulf %107, %115 : vector<2x256xf32>
    %124 = arith.addf %122, %123 : vector<2x256xf32>
    %125 = math.tanh %124 : vector<2x256xf32>
    %126 = arith.mulf %121, %125 : vector<2x256xf32>
    %127 = arith.truncf %126 : vector<2x256xf32> to vector<2x256xbf16>
    %cst_46 = arith.constant dense<0.000000e+00> : vector<2x1024xf32>
    %128 = tpu.matmul %127, %58, %cst_46 {dimension_numbers = #tpu.dot_dimension_numbers<[1], [0], [0], [1], [0, 0, 1, 1], [], []>} : vector<2x256xbf16>, vector<256x1024xbf16>, vector<2x1024xf32> -> vector<2x1024xf32>
    %129 = arith.addf %128, %61 : vector<2x1024xf32>
    %130 = vector.extract_strided_slice %50 {offsets = [0, 1, 0], sizes = [2, 1, 1024], strides = [1, 1, 1]} : vector<2x8x1024xf32> to vector<2x1x1024xf32>
    %131 = vector.shape_cast %130 : vector<2x1x1024xf32> to vector<2x1024xf32>
    %132 = arith.truncf %98 : vector<2x256xf32> to vector<2x256xbf16>
    %cst_47 = arith.constant dense<0.000000e+00> : vector<2x1024xf32>
    %133 = tpu.matmul %132, %54, %cst_47 {dimension_numbers = #tpu.dot_dimension_numbers<[1], [0], [0], [1], [0, 0, 1, 1], [], []>} : vector<2x256xbf16>, vector<256x1024xbf16>, vector<2x1024xf32> -> vector<2x1024xf32>
    %134 = arith.addf %131, %133 : vector<2x1024xf32>
    %135 = vector.extract_strided_slice %134 {offsets = [0, 0], sizes = [2, 256], strides = [1, 1]} : vector<2x1024xf32> to vector<2x256xf32>
    %136 = arith.negf %135 : vector<2x256xf32>
    %137 = math.exp %136 : vector<2x256xf32>
    %cst_48 = arith.constant 1.000000e+00 : f32
    %138 = vector.broadcast %cst_48 : f32 to vector<2x256xf32>
    %139 = arith.addf %138, %137 : vector<2x256xf32>
    %140 = arith.divf %138, %139 : vector<2x256xf32>
    %141 = vector.extract_strided_slice %134 {offsets = [0, 256], sizes = [2, 256], strides = [1, 1]} : vector<2x1024xf32> to vector<2x256xf32>
    %142 = arith.negf %141 : vector<2x256xf32>
    %143 = math.exp %142 : vector<2x256xf32>
    %cst_49 = arith.constant 1.000000e+00 : f32
    %144 = vector.broadcast %cst_49 : f32 to vector<2x256xf32>
    %145 = arith.addf %144, %143 : vector<2x256xf32>
    %146 = arith.divf %144, %145 : vector<2x256xf32>
    %147 = vector.extract_strided_slice %134 {offsets = [0, 512], sizes = [2, 256], strides = [1, 1]} : vector<2x1024xf32> to vector<2x256xf32>
    %148 = math.tanh %147 : vector<2x256xf32>
    %149 = vector.extract_strided_slice %134 {offsets = [0, 768], sizes = [2, 256], strides = [1, 1]} : vector<2x1024xf32> to vector<2x256xf32>
    %150 = arith.negf %149 : vector<2x256xf32>
    %151 = math.exp %150 : vector<2x256xf32>
    %cst_50 = arith.constant 1.000000e+00 : f32
    %152 = vector.broadcast %cst_50 : f32 to vector<2x256xf32>
    %153 = arith.addf %152, %151 : vector<2x256xf32>
    %154 = arith.divf %152, %153 : vector<2x256xf32>
    %155 = arith.mulf %146, %96 : vector<2x256xf32>
    %156 = arith.mulf %140, %148 : vector<2x256xf32>
    %157 = arith.addf %155, %156 : vector<2x256xf32>
    %158 = math.tanh %157 : vector<2x256xf32>
    %159 = arith.mulf %154, %158 : vector<2x256xf32>
    %160 = arith.truncf %159 : vector<2x256xf32> to vector<2x256xbf16>
    %cst_51 = arith.constant dense<0.000000e+00> : vector<2x1024xf32>
    %161 = tpu.matmul %160, %56, %cst_51 {dimension_numbers = #tpu.dot_dimension_numbers<[1], [0], [0], [1], [0, 0, 1, 1], [], []>} : vector<2x256xbf16>, vector<256x1024xbf16>, vector<2x1024xf32> -> vector<2x1024xf32>
    %162 = arith.addf %129, %161 : vector<2x1024xf32>
    %163 = vector.extract_strided_slice %162 {offsets = [0, 0], sizes = [2, 256], strides = [1, 1]} : vector<2x1024xf32> to vector<2x256xf32>
    %164 = arith.negf %163 : vector<2x256xf32>
    %165 = math.exp %164 : vector<2x256xf32>
    %cst_52 = arith.constant 1.000000e+00 : f32
    %166 = vector.broadcast %cst_52 : f32 to vector<2x256xf32>
    %167 = arith.addf %166, %165 : vector<2x256xf32>
    %168 = arith.divf %166, %167 : vector<2x256xf32>
    %169 = vector.extract_strided_slice %162 {offsets = [0, 256], sizes = [2, 256], strides = [1, 1]} : vector<2x1024xf32> to vector<2x256xf32>
    %170 = arith.negf %169 : vector<2x256xf32>
    %171 = math.exp %170 : vector<2x256xf32>
    %cst_53 = arith.constant 1.000000e+00 : f32
    %172 = vector.broadcast %cst_53 : f32 to vector<2x256xf32>
    %173 = arith.addf %172, %171 : vector<2x256xf32>
    %174 = arith.divf %172, %173 : vector<2x256xf32>
    %175 = vector.extract_strided_slice %162 {offsets = [0, 512], sizes = [2, 256], strides = [1, 1]} : vector<2x1024xf32> to vector<2x256xf32>
    %176 = math.tanh %175 : vector<2x256xf32>
    %177 = vector.extract_strided_slice %162 {offsets = [0, 768], sizes = [2, 256], strides = [1, 1]} : vector<2x1024xf32> to vector<2x256xf32>
    %178 = arith.negf %177 : vector<2x256xf32>
    %179 = math.exp %178 : vector<2x256xf32>
    %cst_54 = arith.constant 1.000000e+00 : f32
    %180 = vector.broadcast %cst_54 : f32 to vector<2x256xf32>
    %181 = arith.addf %180, %179 : vector<2x256xf32>
    %182 = arith.divf %180, %181 : vector<2x256xf32>
    %183 = arith.mulf %174, %124 : vector<2x256xf32>
    %184 = arith.mulf %168, %176 : vector<2x256xf32>
    %185 = arith.addf %183, %184 : vector<2x256xf32>
    %186 = math.tanh %185 : vector<2x256xf32>
    %187 = arith.mulf %182, %186 : vector<2x256xf32>
    %188 = arith.truncf %187 : vector<2x256xf32> to vector<2x256xbf16>
    %cst_55 = arith.constant dense<0.000000e+00> : vector<2x1024xf32>
    %189 = tpu.matmul %188, %58, %cst_55 {dimension_numbers = #tpu.dot_dimension_numbers<[1], [0], [0], [1], [0, 0, 1, 1], [], []>} : vector<2x256xbf16>, vector<256x1024xbf16>, vector<2x1024xf32> -> vector<2x1024xf32>
    %190 = arith.addf %189, %61 : vector<2x1024xf32>
    %191 = vector.extract_strided_slice %50 {offsets = [0, 2, 0], sizes = [2, 1, 1024], strides = [1, 1, 1]} : vector<2x8x1024xf32> to vector<2x1x1024xf32>
    %192 = vector.shape_cast %191 : vector<2x1x1024xf32> to vector<2x1024xf32>
    %193 = arith.truncf %159 : vector<2x256xf32> to vector<2x256xbf16>
    %cst_56 = arith.constant dense<0.000000e+00> : vector<2x1024xf32>
    %194 = tpu.matmul %193, %54, %cst_56 {dimension_numbers = #tpu.dot_dimension_numbers<[1], [0], [0], [1], [0, 0, 1, 1], [], []>} : vector<2x256xbf16>, vector<256x1024xbf16>, vector<2x1024xf32> -> vector<2x1024xf32>
    %195 = arith.addf %192, %194 : vector<2x1024xf32>
    %196 = vector.extract_strided_slice %195 {offsets = [0, 0], sizes = [2, 256], strides = [1, 1]} : vector<2x1024xf32> to vector<2x256xf32>
    %197 = arith.negf %196 : vector<2x256xf32>
    %198 = math.exp %197 : vector<2x256xf32>
    %cst_57 = arith.constant 1.000000e+00 : f32
    %199 = vector.broadcast %cst_57 : f32 to vector<2x256xf32>
    %200 = arith.addf %199, %198 : vector<2x256xf32>
    %201 = arith.divf %199, %200 : vector<2x256xf32>
    %202 = vector.extract_strided_slice %195 {offsets = [0, 256], sizes = [2, 256], strides = [1, 1]} : vector<2x1024xf32> to vector<2x256xf32>
    %203 = arith.negf %202 : vector<2x256xf32>
    %204 = math.exp %203 : vector<2x256xf32>
    %cst_58 = arith.constant 1.000000e+00 : f32
    %205 = vector.broadcast %cst_58 : f32 to vector<2x256xf32>
    %206 = arith.addf %205, %204 : vector<2x256xf32>
    %207 = arith.divf %205, %206 : vector<2x256xf32>
    %208 = vector.extract_strided_slice %195 {offsets = [0, 512], sizes = [2, 256], strides = [1, 1]} : vector<2x1024xf32> to vector<2x256xf32>
    %209 = math.tanh %208 : vector<2x256xf32>
    %210 = vector.extract_strided_slice %195 {offsets = [0, 768], sizes = [2, 256], strides = [1, 1]} : vector<2x1024xf32> to vector<2x256xf32>
    %211 = arith.negf %210 : vector<2x256xf32>
    %212 = math.exp %211 : vector<2x256xf32>
    %cst_59 = arith.constant 1.000000e+00 : f32
    %213 = vector.broadcast %cst_59 : f32 to vector<2x256xf32>
    %214 = arith.addf %213, %212 : vector<2x256xf32>
    %215 = arith.divf %213, %214 : vector<2x256xf32>
    %216 = arith.mulf %207, %157 : vector<2x256xf32>
    %217 = arith.mulf %201, %209 : vector<2x256xf32>
    %218 = arith.addf %216, %217 : vector<2x256xf32>
    %219 = math.tanh %218 : vector<2x256xf32>
    %220 = arith.mulf %215, %219 : vector<2x256xf32>
    %221 = arith.truncf %220 : vector<2x256xf32> to vector<2x256xbf16>
    %cst_60 = arith.constant dense<0.000000e+00> : vector<2x1024xf32>
    %222 = tpu.matmul %221, %56, %cst_60 {dimension_numbers = #tpu.dot_dimension_numbers<[1], [0], [0], [1], [0, 0, 1, 1], [], []>} : vector<2x256xbf16>, vector<256x1024xbf16>, vector<2x1024xf32> -> vector<2x1024xf32>
    %223 = arith.addf %190, %222 : vector<2x1024xf32>
    %224 = vector.extract_strided_slice %223 {offsets = [0, 0], sizes = [2, 256], strides = [1, 1]} : vector<2x1024xf32> to vector<2x256xf32>
    %225 = arith.negf %224 : vector<2x256xf32>
    %226 = math.exp %225 : vector<2x256xf32>
    %cst_61 = arith.constant 1.000000e+00 : f32
    %227 = vector.broadcast %cst_61 : f32 to vector<2x256xf32>
    %228 = arith.addf %227, %226 : vector<2x256xf32>
    %229 = arith.divf %227, %228 : vector<2x256xf32>
    %230 = vector.extract_strided_slice %223 {offsets = [0, 256], sizes = [2, 256], strides = [1, 1]} : vector<2x1024xf32> to vector<2x256xf32>
    %231 = arith.negf %230 : vector<2x256xf32>
    %232 = math.exp %231 : vector<2x256xf32>
    %cst_62 = arith.constant 1.000000e+00 : f32
    %233 = vector.broadcast %cst_62 : f32 to vector<2x256xf32>
    %234 = arith.addf %233, %232 : vector<2x256xf32>
    %235 = arith.divf %233, %234 : vector<2x256xf32>
    %236 = vector.extract_strided_slice %223 {offsets = [0, 512], sizes = [2, 256], strides = [1, 1]} : vector<2x1024xf32> to vector<2x256xf32>
    %237 = math.tanh %236 : vector<2x256xf32>
    %238 = vector.extract_strided_slice %223 {offsets = [0, 768], sizes = [2, 256], strides = [1, 1]} : vector<2x1024xf32> to vector<2x256xf32>
    %239 = arith.negf %238 : vector<2x256xf32>
    %240 = math.exp %239 : vector<2x256xf32>
    %cst_63 = arith.constant 1.000000e+00 : f32
    %241 = vector.broadcast %cst_63 : f32 to vector<2x256xf32>
    %242 = arith.addf %241, %240 : vector<2x256xf32>
    %243 = arith.divf %241, %242 : vector<2x256xf32>
    %244 = arith.mulf %235, %185 : vector<2x256xf32>
    %245 = arith.mulf %229, %237 : vector<2x256xf32>
    %246 = arith.addf %244, %245 : vector<2x256xf32>
    %247 = math.tanh %246 : vector<2x256xf32>
    %248 = arith.mulf %243, %247 : vector<2x256xf32>
    %249 = arith.truncf %248 : vector<2x256xf32> to vector<2x256xbf16>
    %cst_64 = arith.constant dense<0.000000e+00> : vector<2x1024xf32>
    %250 = tpu.matmul %249, %58, %cst_64 {dimension_numbers = #tpu.dot_dimension_numbers<[1], [0], [0], [1], [0, 0, 1, 1], [], []>} : vector<2x256xbf16>, vector<256x1024xbf16>, vector<2x1024xf32> -> vector<2x1024xf32>
    %251 = arith.addf %250, %61 : vector<2x1024xf32>
    %252 = vector.extract_strided_slice %50 {offsets = [0, 3, 0], sizes = [2, 1, 1024], strides = [1, 1, 1]} : vector<2x8x1024xf32> to vector<2x1x1024xf32>
    %253 = vector.shape_cast %252 : vector<2x1x1024xf32> to vector<2x1024xf32>
    %254 = arith.truncf %220 : vector<2x256xf32> to vector<2x256xbf16>
    %cst_65 = arith.constant dense<0.000000e+00> : vector<2x1024xf32>
    %255 = tpu.matmul %254, %54, %cst_65 {dimension_numbers = #tpu.dot_dimension_numbers<[1], [0], [0], [1], [0, 0, 1, 1], [], []>} : vector<2x256xbf16>, vector<256x1024xbf16>, vector<2x1024xf32> -> vector<2x1024xf32>
    %256 = arith.addf %253, %255 : vector<2x1024xf32>
    %257 = vector.extract_strided_slice %256 {offsets = [0, 0], sizes = [2, 256], strides = [1, 1]} : vector<2x1024xf32> to vector<2x256xf32>
    %258 = arith.negf %257 : vector<2x256xf32>
    %259 = math.exp %258 : vector<2x256xf32>
    %cst_66 = arith.constant 1.000000e+00 : f32
    %260 = vector.broadcast %cst_66 : f32 to vector<2x256xf32>
    %261 = arith.addf %260, %259 : vector<2x256xf32>
    %262 = arith.divf %260, %261 : vector<2x256xf32>
    %263 = vector.extract_strided_slice %256 {offsets = [0, 256], sizes = [2, 256], strides = [1, 1]} : vector<2x1024xf32> to vector<2x256xf32>
    %264 = arith.negf %263 : vector<2x256xf32>
    %265 = math.exp %264 : vector<2x256xf32>
    %cst_67 = arith.constant 1.000000e+00 : f32
    %266 = vector.broadcast %cst_67 : f32 to vector<2x256xf32>
    %267 = arith.addf %266, %265 : vector<2x256xf32>
    %268 = arith.divf %266, %267 : vector<2x256xf32>
    %269 = vector.extract_strided_slice %256 {offsets = [0, 512], sizes = [2, 256], strides = [1, 1]} : vector<2x1024xf32> to vector<2x256xf32>
    %270 = math.tanh %269 : vector<2x256xf32>
    %271 = vector.extract_strided_slice %256 {offsets = [0, 768], sizes = [2, 256], strides = [1, 1]} : vector<2x1024xf32> to vector<2x256xf32>
    %272 = arith.negf %271 : vector<2x256xf32>
    %273 = math.exp %272 : vector<2x256xf32>
    %cst_68 = arith.constant 1.000000e+00 : f32
    %274 = vector.broadcast %cst_68 : f32 to vector<2x256xf32>
    %275 = arith.addf %274, %273 : vector<2x256xf32>
    %276 = arith.divf %274, %275 : vector<2x256xf32>
    %277 = arith.mulf %268, %218 : vector<2x256xf32>
    %278 = arith.mulf %262, %270 : vector<2x256xf32>
    %279 = arith.addf %277, %278 : vector<2x256xf32>
    %280 = math.tanh %279 : vector<2x256xf32>
    %281 = arith.mulf %276, %280 : vector<2x256xf32>
    %282 = arith.truncf %281 : vector<2x256xf32> to vector<2x256xbf16>
    %cst_69 = arith.constant dense<0.000000e+00> : vector<2x1024xf32>
    %283 = tpu.matmul %282, %56, %cst_69 {dimension_numbers = #tpu.dot_dimension_numbers<[1], [0], [0], [1], [0, 0, 1, 1], [], []>} : vector<2x256xbf16>, vector<256x1024xbf16>, vector<2x1024xf32> -> vector<2x1024xf32>
    %284 = arith.addf %251, %283 : vector<2x1024xf32>
    %285 = vector.extract_strided_slice %284 {offsets = [0, 0], sizes = [2, 256], strides = [1, 1]} : vector<2x1024xf32> to vector<2x256xf32>
    %286 = arith.negf %285 : vector<2x256xf32>
    %287 = math.exp %286 : vector<2x256xf32>
    %cst_70 = arith.constant 1.000000e+00 : f32
    %288 = vector.broadcast %cst_70 : f32 to vector<2x256xf32>
    %289 = arith.addf %288, %287 : vector<2x256xf32>
    %290 = arith.divf %288, %289 : vector<2x256xf32>
    %291 = vector.extract_strided_slice %284 {offsets = [0, 256], sizes = [2, 256], strides = [1, 1]} : vector<2x1024xf32> to vector<2x256xf32>
    %292 = arith.negf %291 : vector<2x256xf32>
    %293 = math.exp %292 : vector<2x256xf32>
    %cst_71 = arith.constant 1.000000e+00 : f32
    %294 = vector.broadcast %cst_71 : f32 to vector<2x256xf32>
    %295 = arith.addf %294, %293 : vector<2x256xf32>
    %296 = arith.divf %294, %295 : vector<2x256xf32>
    %297 = vector.extract_strided_slice %284 {offsets = [0, 512], sizes = [2, 256], strides = [1, 1]} : vector<2x1024xf32> to vector<2x256xf32>
    %298 = math.tanh %297 : vector<2x256xf32>
    %299 = vector.extract_strided_slice %284 {offsets = [0, 768], sizes = [2, 256], strides = [1, 1]} : vector<2x1024xf32> to vector<2x256xf32>
    %300 = arith.negf %299 : vector<2x256xf32>
    %301 = math.exp %300 : vector<2x256xf32>
    %cst_72 = arith.constant 1.000000e+00 : f32
    %302 = vector.broadcast %cst_72 : f32 to vector<2x256xf32>
    %303 = arith.addf %302, %301 : vector<2x256xf32>
    %304 = arith.divf %302, %303 : vector<2x256xf32>
    %305 = arith.mulf %296, %246 : vector<2x256xf32>
    %306 = arith.mulf %290, %298 : vector<2x256xf32>
    %307 = arith.addf %305, %306 : vector<2x256xf32>
    %308 = math.tanh %307 : vector<2x256xf32>
    %309 = arith.mulf %304, %308 : vector<2x256xf32>
    %310 = arith.truncf %309 : vector<2x256xf32> to vector<2x256xbf16>
    %cst_73 = arith.constant dense<0.000000e+00> : vector<2x1024xf32>
    %311 = tpu.matmul %310, %58, %cst_73 {dimension_numbers = #tpu.dot_dimension_numbers<[1], [0], [0], [1], [0, 0, 1, 1], [], []>} : vector<2x256xbf16>, vector<256x1024xbf16>, vector<2x1024xf32> -> vector<2x1024xf32>
    %312 = arith.addf %311, %61 : vector<2x1024xf32>
    %313 = vector.extract_strided_slice %50 {offsets = [0, 4, 0], sizes = [2, 1, 1024], strides = [1, 1, 1]} : vector<2x8x1024xf32> to vector<2x1x1024xf32>
    %314 = vector.shape_cast %313 : vector<2x1x1024xf32> to vector<2x1024xf32>
    %315 = arith.truncf %281 : vector<2x256xf32> to vector<2x256xbf16>
    %cst_74 = arith.constant dense<0.000000e+00> : vector<2x1024xf32>
    %316 = tpu.matmul %315, %54, %cst_74 {dimension_numbers = #tpu.dot_dimension_numbers<[1], [0], [0], [1], [0, 0, 1, 1], [], []>} : vector<2x256xbf16>, vector<256x1024xbf16>, vector<2x1024xf32> -> vector<2x1024xf32>
    %317 = arith.addf %314, %316 : vector<2x1024xf32>
    %318 = vector.extract_strided_slice %317 {offsets = [0, 0], sizes = [2, 256], strides = [1, 1]} : vector<2x1024xf32> to vector<2x256xf32>
    %319 = arith.negf %318 : vector<2x256xf32>
    %320 = math.exp %319 : vector<2x256xf32>
    %cst_75 = arith.constant 1.000000e+00 : f32
    %321 = vector.broadcast %cst_75 : f32 to vector<2x256xf32>
    %322 = arith.addf %321, %320 : vector<2x256xf32>
    %323 = arith.divf %321, %322 : vector<2x256xf32>
    %324 = vector.extract_strided_slice %317 {offsets = [0, 256], sizes = [2, 256], strides = [1, 1]} : vector<2x1024xf32> to vector<2x256xf32>
    %325 = arith.negf %324 : vector<2x256xf32>
    %326 = math.exp %325 : vector<2x256xf32>
    %cst_76 = arith.constant 1.000000e+00 : f32
    %327 = vector.broadcast %cst_76 : f32 to vector<2x256xf32>
    %328 = arith.addf %327, %326 : vector<2x256xf32>
    %329 = arith.divf %327, %328 : vector<2x256xf32>
    %330 = vector.extract_strided_slice %317 {offsets = [0, 512], sizes = [2, 256], strides = [1, 1]} : vector<2x1024xf32> to vector<2x256xf32>
    %331 = math.tanh %330 : vector<2x256xf32>
    %332 = vector.extract_strided_slice %317 {offsets = [0, 768], sizes = [2, 256], strides = [1, 1]} : vector<2x1024xf32> to vector<2x256xf32>
    %333 = arith.negf %332 : vector<2x256xf32>
    %334 = math.exp %333 : vector<2x256xf32>
    %cst_77 = arith.constant 1.000000e+00 : f32
    %335 = vector.broadcast %cst_77 : f32 to vector<2x256xf32>
    %336 = arith.addf %335, %334 : vector<2x256xf32>
    %337 = arith.divf %335, %336 : vector<2x256xf32>
    %338 = arith.mulf %329, %279 : vector<2x256xf32>
    %339 = arith.mulf %323, %331 : vector<2x256xf32>
    %340 = arith.addf %338, %339 : vector<2x256xf32>
    %341 = math.tanh %340 : vector<2x256xf32>
    %342 = arith.mulf %337, %341 : vector<2x256xf32>
    %343 = arith.truncf %342 : vector<2x256xf32> to vector<2x256xbf16>
    %cst_78 = arith.constant dense<0.000000e+00> : vector<2x1024xf32>
    %344 = tpu.matmul %343, %56, %cst_78 {dimension_numbers = #tpu.dot_dimension_numbers<[1], [0], [0], [1], [0, 0, 1, 1], [], []>} : vector<2x256xbf16>, vector<256x1024xbf16>, vector<2x1024xf32> -> vector<2x1024xf32>
    %345 = arith.addf %312, %344 : vector<2x1024xf32>
    %346 = vector.extract_strided_slice %345 {offsets = [0, 0], sizes = [2, 256], strides = [1, 1]} : vector<2x1024xf32> to vector<2x256xf32>
    %347 = arith.negf %346 : vector<2x256xf32>
    %348 = math.exp %347 : vector<2x256xf32>
    %cst_79 = arith.constant 1.000000e+00 : f32
    %349 = vector.broadcast %cst_79 : f32 to vector<2x256xf32>
    %350 = arith.addf %349, %348 : vector<2x256xf32>
    %351 = arith.divf %349, %350 : vector<2x256xf32>
    %352 = vector.extract_strided_slice %345 {offsets = [0, 256], sizes = [2, 256], strides = [1, 1]} : vector<2x1024xf32> to vector<2x256xf32>
    %353 = arith.negf %352 : vector<2x256xf32>
    %354 = math.exp %353 : vector<2x256xf32>
    %cst_80 = arith.constant 1.000000e+00 : f32
    %355 = vector.broadcast %cst_80 : f32 to vector<2x256xf32>
    %356 = arith.addf %355, %354 : vector<2x256xf32>
    %357 = arith.divf %355, %356 : vector<2x256xf32>
    %358 = vector.extract_strided_slice %345 {offsets = [0, 512], sizes = [2, 256], strides = [1, 1]} : vector<2x1024xf32> to vector<2x256xf32>
    %359 = math.tanh %358 : vector<2x256xf32>
    %360 = vector.extract_strided_slice %345 {offsets = [0, 768], sizes = [2, 256], strides = [1, 1]} : vector<2x1024xf32> to vector<2x256xf32>
    %361 = arith.negf %360 : vector<2x256xf32>
    %362 = math.exp %361 : vector<2x256xf32>
    %cst_81 = arith.constant 1.000000e+00 : f32
    %363 = vector.broadcast %cst_81 : f32 to vector<2x256xf32>
    %364 = arith.addf %363, %362 : vector<2x256xf32>
    %365 = arith.divf %363, %364 : vector<2x256xf32>
    %366 = arith.mulf %357, %307 : vector<2x256xf32>
    %367 = arith.mulf %351, %359 : vector<2x256xf32>
    %368 = arith.addf %366, %367 : vector<2x256xf32>
    %369 = math.tanh %368 : vector<2x256xf32>
    %370 = arith.mulf %365, %369 : vector<2x256xf32>
    %371 = arith.truncf %370 : vector<2x256xf32> to vector<2x256xbf16>
    %cst_82 = arith.constant dense<0.000000e+00> : vector<2x1024xf32>
    %372 = tpu.matmul %371, %58, %cst_82 {dimension_numbers = #tpu.dot_dimension_numbers<[1], [0], [0], [1], [0, 0, 1, 1], [], []>} : vector<2x256xbf16>, vector<256x1024xbf16>, vector<2x1024xf32> -> vector<2x1024xf32>
    %373 = arith.addf %372, %61 : vector<2x1024xf32>
    %374 = vector.extract_strided_slice %50 {offsets = [0, 5, 0], sizes = [2, 1, 1024], strides = [1, 1, 1]} : vector<2x8x1024xf32> to vector<2x1x1024xf32>
    %375 = vector.shape_cast %374 : vector<2x1x1024xf32> to vector<2x1024xf32>
    %376 = arith.truncf %342 : vector<2x256xf32> to vector<2x256xbf16>
    %cst_83 = arith.constant dense<0.000000e+00> : vector<2x1024xf32>
    %377 = tpu.matmul %376, %54, %cst_83 {dimension_numbers = #tpu.dot_dimension_numbers<[1], [0], [0], [1], [0, 0, 1, 1], [], []>} : vector<2x256xbf16>, vector<256x1024xbf16>, vector<2x1024xf32> -> vector<2x1024xf32>
    %378 = arith.addf %375, %377 : vector<2x1024xf32>
    %379 = vector.extract_strided_slice %378 {offsets = [0, 0], sizes = [2, 256], strides = [1, 1]} : vector<2x1024xf32> to vector<2x256xf32>
    %380 = arith.negf %379 : vector<2x256xf32>
    %381 = math.exp %380 : vector<2x256xf32>
    %cst_84 = arith.constant 1.000000e+00 : f32
    %382 = vector.broadcast %cst_84 : f32 to vector<2x256xf32>
    %383 = arith.addf %382, %381 : vector<2x256xf32>
    %384 = arith.divf %382, %383 : vector<2x256xf32>
    %385 = vector.extract_strided_slice %378 {offsets = [0, 256], sizes = [2, 256], strides = [1, 1]} : vector<2x1024xf32> to vector<2x256xf32>
    %386 = arith.negf %385 : vector<2x256xf32>
    %387 = math.exp %386 : vector<2x256xf32>
    %cst_85 = arith.constant 1.000000e+00 : f32
    %388 = vector.broadcast %cst_85 : f32 to vector<2x256xf32>
    %389 = arith.addf %388, %387 : vector<2x256xf32>
    %390 = arith.divf %388, %389 : vector<2x256xf32>
    %391 = vector.extract_strided_slice %378 {offsets = [0, 512], sizes = [2, 256], strides = [1, 1]} : vector<2x1024xf32> to vector<2x256xf32>
    %392 = math.tanh %391 : vector<2x256xf32>
    %393 = vector.extract_strided_slice %378 {offsets = [0, 768], sizes = [2, 256], strides = [1, 1]} : vector<2x1024xf32> to vector<2x256xf32>
    %394 = arith.negf %393 : vector<2x256xf32>
    %395 = math.exp %394 : vector<2x256xf32>
    %cst_86 = arith.constant 1.000000e+00 : f32
    %396 = vector.broadcast %cst_86 : f32 to vector<2x256xf32>
    %397 = arith.addf %396, %395 : vector<2x256xf32>
    %398 = arith.divf %396, %397 : vector<2x256xf32>
    %399 = arith.mulf %390, %340 : vector<2x256xf32>
    %400 = arith.mulf %384, %392 : vector<2x256xf32>
    %401 = arith.addf %399, %400 : vector<2x256xf32>
    %402 = math.tanh %401 : vector<2x256xf32>
    %403 = arith.mulf %398, %402 : vector<2x256xf32>
    %404 = arith.truncf %403 : vector<2x256xf32> to vector<2x256xbf16>
    %cst_87 = arith.constant dense<0.000000e+00> : vector<2x1024xf32>
    %405 = tpu.matmul %404, %56, %cst_87 {dimension_numbers = #tpu.dot_dimension_numbers<[1], [0], [0], [1], [0, 0, 1, 1], [], []>} : vector<2x256xbf16>, vector<256x1024xbf16>, vector<2x1024xf32> -> vector<2x1024xf32>
    %406 = arith.addf %373, %405 : vector<2x1024xf32>
    %407 = vector.extract_strided_slice %406 {offsets = [0, 0], sizes = [2, 256], strides = [1, 1]} : vector<2x1024xf32> to vector<2x256xf32>
    %408 = arith.negf %407 : vector<2x256xf32>
    %409 = math.exp %408 : vector<2x256xf32>
    %cst_88 = arith.constant 1.000000e+00 : f32
    %410 = vector.broadcast %cst_88 : f32 to vector<2x256xf32>
    %411 = arith.addf %410, %409 : vector<2x256xf32>
    %412 = arith.divf %410, %411 : vector<2x256xf32>
    %413 = vector.extract_strided_slice %406 {offsets = [0, 256], sizes = [2, 256], strides = [1, 1]} : vector<2x1024xf32> to vector<2x256xf32>
    %414 = arith.negf %413 : vector<2x256xf32>
    %415 = math.exp %414 : vector<2x256xf32>
    %cst_89 = arith.constant 1.000000e+00 : f32
    %416 = vector.broadcast %cst_89 : f32 to vector<2x256xf32>
    %417 = arith.addf %416, %415 : vector<2x256xf32>
    %418 = arith.divf %416, %417 : vector<2x256xf32>
    %419 = vector.extract_strided_slice %406 {offsets = [0, 512], sizes = [2, 256], strides = [1, 1]} : vector<2x1024xf32> to vector<2x256xf32>
    %420 = math.tanh %419 : vector<2x256xf32>
    %421 = vector.extract_strided_slice %406 {offsets = [0, 768], sizes = [2, 256], strides = [1, 1]} : vector<2x1024xf32> to vector<2x256xf32>
    %422 = arith.negf %421 : vector<2x256xf32>
    %423 = math.exp %422 : vector<2x256xf32>
    %cst_90 = arith.constant 1.000000e+00 : f32
    %424 = vector.broadcast %cst_90 : f32 to vector<2x256xf32>
    %425 = arith.addf %424, %423 : vector<2x256xf32>
    %426 = arith.divf %424, %425 : vector<2x256xf32>
    %427 = arith.mulf %418, %368 : vector<2x256xf32>
    %428 = arith.mulf %412, %420 : vector<2x256xf32>
    %429 = arith.addf %427, %428 : vector<2x256xf32>
    %430 = math.tanh %429 : vector<2x256xf32>
    %431 = arith.mulf %426, %430 : vector<2x256xf32>
    %432 = arith.truncf %431 : vector<2x256xf32> to vector<2x256xbf16>
    %cst_91 = arith.constant dense<0.000000e+00> : vector<2x1024xf32>
    %433 = tpu.matmul %432, %58, %cst_91 {dimension_numbers = #tpu.dot_dimension_numbers<[1], [0], [0], [1], [0, 0, 1, 1], [], []>} : vector<2x256xbf16>, vector<256x1024xbf16>, vector<2x1024xf32> -> vector<2x1024xf32>
    %434 = arith.addf %433, %61 : vector<2x1024xf32>
    %435 = vector.extract_strided_slice %50 {offsets = [0, 6, 0], sizes = [2, 1, 1024], strides = [1, 1, 1]} : vector<2x8x1024xf32> to vector<2x1x1024xf32>
    %436 = vector.shape_cast %435 : vector<2x1x1024xf32> to vector<2x1024xf32>
    %437 = arith.truncf %403 : vector<2x256xf32> to vector<2x256xbf16>
    %cst_92 = arith.constant dense<0.000000e+00> : vector<2x1024xf32>
    %438 = tpu.matmul %437, %54, %cst_92 {dimension_numbers = #tpu.dot_dimension_numbers<[1], [0], [0], [1], [0, 0, 1, 1], [], []>} : vector<2x256xbf16>, vector<256x1024xbf16>, vector<2x1024xf32> -> vector<2x1024xf32>
    %439 = arith.addf %436, %438 : vector<2x1024xf32>
    %440 = vector.extract_strided_slice %439 {offsets = [0, 0], sizes = [2, 256], strides = [1, 1]} : vector<2x1024xf32> to vector<2x256xf32>
    %441 = arith.negf %440 : vector<2x256xf32>
    %442 = math.exp %441 : vector<2x256xf32>
    %cst_93 = arith.constant 1.000000e+00 : f32
    %443 = vector.broadcast %cst_93 : f32 to vector<2x256xf32>
    %444 = arith.addf %443, %442 : vector<2x256xf32>
    %445 = arith.divf %443, %444 : vector<2x256xf32>
    %446 = vector.extract_strided_slice %439 {offsets = [0, 256], sizes = [2, 256], strides = [1, 1]} : vector<2x1024xf32> to vector<2x256xf32>
    %447 = arith.negf %446 : vector<2x256xf32>
    %448 = math.exp %447 : vector<2x256xf32>
    %cst_94 = arith.constant 1.000000e+00 : f32
    %449 = vector.broadcast %cst_94 : f32 to vector<2x256xf32>
    %450 = arith.addf %449, %448 : vector<2x256xf32>
    %451 = arith.divf %449, %450 : vector<2x256xf32>
    %452 = vector.extract_strided_slice %439 {offsets = [0, 512], sizes = [2, 256], strides = [1, 1]} : vector<2x1024xf32> to vector<2x256xf32>
    %453 = math.tanh %452 : vector<2x256xf32>
    %454 = vector.extract_strided_slice %439 {offsets = [0, 768], sizes = [2, 256], strides = [1, 1]} : vector<2x1024xf32> to vector<2x256xf32>
    %455 = arith.negf %454 : vector<2x256xf32>
    %456 = math.exp %455 : vector<2x256xf32>
    %cst_95 = arith.constant 1.000000e+00 : f32
    %457 = vector.broadcast %cst_95 : f32 to vector<2x256xf32>
    %458 = arith.addf %457, %456 : vector<2x256xf32>
    %459 = arith.divf %457, %458 : vector<2x256xf32>
    %460 = arith.mulf %451, %401 : vector<2x256xf32>
    %461 = arith.mulf %445, %453 : vector<2x256xf32>
    %462 = arith.addf %460, %461 : vector<2x256xf32>
    %463 = math.tanh %462 : vector<2x256xf32>
    %464 = arith.mulf %459, %463 : vector<2x256xf32>
    %465 = arith.truncf %464 : vector<2x256xf32> to vector<2x256xbf16>
    %cst_96 = arith.constant dense<0.000000e+00> : vector<2x1024xf32>
    %466 = tpu.matmul %465, %56, %cst_96 {dimension_numbers = #tpu.dot_dimension_numbers<[1], [0], [0], [1], [0, 0, 1, 1], [], []>} : vector<2x256xbf16>, vector<256x1024xbf16>, vector<2x1024xf32> -> vector<2x1024xf32>
    %467 = arith.addf %434, %466 : vector<2x1024xf32>
    %468 = vector.extract_strided_slice %467 {offsets = [0, 0], sizes = [2, 256], strides = [1, 1]} : vector<2x1024xf32> to vector<2x256xf32>
    %469 = arith.negf %468 : vector<2x256xf32>
    %470 = math.exp %469 : vector<2x256xf32>
    %cst_97 = arith.constant 1.000000e+00 : f32
    %471 = vector.broadcast %cst_97 : f32 to vector<2x256xf32>
    %472 = arith.addf %471, %470 : vector<2x256xf32>
    %473 = arith.divf %471, %472 : vector<2x256xf32>
    %474 = vector.extract_strided_slice %467 {offsets = [0, 256], sizes = [2, 256], strides = [1, 1]} : vector<2x1024xf32> to vector<2x256xf32>
    %475 = arith.negf %474 : vector<2x256xf32>
    %476 = math.exp %475 : vector<2x256xf32>
    %cst_98 = arith.constant 1.000000e+00 : f32
    %477 = vector.broadcast %cst_98 : f32 to vector<2x256xf32>
    %478 = arith.addf %477, %476 : vector<2x256xf32>
    %479 = arith.divf %477, %478 : vector<2x256xf32>
    %480 = vector.extract_strided_slice %467 {offsets = [0, 512], sizes = [2, 256], strides = [1, 1]} : vector<2x1024xf32> to vector<2x256xf32>
    %481 = math.tanh %480 : vector<2x256xf32>
    %482 = vector.extract_strided_slice %467 {offsets = [0, 768], sizes = [2, 256], strides = [1, 1]} : vector<2x1024xf32> to vector<2x256xf32>
    %483 = arith.negf %482 : vector<2x256xf32>
    %484 = math.exp %483 : vector<2x256xf32>
    %cst_99 = arith.constant 1.000000e+00 : f32
    %485 = vector.broadcast %cst_99 : f32 to vector<2x256xf32>
    %486 = arith.addf %485, %484 : vector<2x256xf32>
    %487 = arith.divf %485, %486 : vector<2x256xf32>
    %488 = arith.mulf %479, %429 : vector<2x256xf32>
    %489 = arith.mulf %473, %481 : vector<2x256xf32>
    %490 = arith.addf %488, %489 : vector<2x256xf32>
    %491 = math.tanh %490 : vector<2x256xf32>
    %492 = arith.mulf %487, %491 : vector<2x256xf32>
    %493 = arith.truncf %492 : vector<2x256xf32> to vector<2x256xbf16>
    %cst_100 = arith.constant dense<0.000000e+00> : vector<2x1024xf32>
    %494 = tpu.matmul %493, %58, %cst_100 {dimension_numbers = #tpu.dot_dimension_numbers<[1], [0], [0], [1], [0, 0, 1, 1], [], []>} : vector<2x256xbf16>, vector<256x1024xbf16>, vector<2x1024xf32> -> vector<2x1024xf32>
    %495 = arith.addf %494, %61 : vector<2x1024xf32>
    %496 = vector.extract_strided_slice %50 {offsets = [0, 7, 0], sizes = [2, 1, 1024], strides = [1, 1, 1]} : vector<2x8x1024xf32> to vector<2x1x1024xf32>
    %497 = vector.shape_cast %496 : vector<2x1x1024xf32> to vector<2x1024xf32>
    %498 = arith.truncf %464 : vector<2x256xf32> to vector<2x256xbf16>
    %cst_101 = arith.constant dense<0.000000e+00> : vector<2x1024xf32>
    %499 = tpu.matmul %498, %54, %cst_101 {dimension_numbers = #tpu.dot_dimension_numbers<[1], [0], [0], [1], [0, 0, 1, 1], [], []>} : vector<2x256xbf16>, vector<256x1024xbf16>, vector<2x1024xf32> -> vector<2x1024xf32>
    %500 = arith.addf %497, %499 : vector<2x1024xf32>
    %501 = vector.extract_strided_slice %500 {offsets = [0, 0], sizes = [2, 256], strides = [1, 1]} : vector<2x1024xf32> to vector<2x256xf32>
    %502 = arith.negf %501 : vector<2x256xf32>
    %503 = math.exp %502 : vector<2x256xf32>
    %cst_102 = arith.constant 1.000000e+00 : f32
    %504 = vector.broadcast %cst_102 : f32 to vector<2x256xf32>
    %505 = arith.addf %504, %503 : vector<2x256xf32>
    %506 = arith.divf %504, %505 : vector<2x256xf32>
    %507 = vector.extract_strided_slice %500 {offsets = [0, 256], sizes = [2, 256], strides = [1, 1]} : vector<2x1024xf32> to vector<2x256xf32>
    %508 = arith.negf %507 : vector<2x256xf32>
    %509 = math.exp %508 : vector<2x256xf32>
    %cst_103 = arith.constant 1.000000e+00 : f32
    %510 = vector.broadcast %cst_103 : f32 to vector<2x256xf32>
    %511 = arith.addf %510, %509 : vector<2x256xf32>
    %512 = arith.divf %510, %511 : vector<2x256xf32>
    %513 = vector.extract_strided_slice %500 {offsets = [0, 512], sizes = [2, 256], strides = [1, 1]} : vector<2x1024xf32> to vector<2x256xf32>
    %514 = math.tanh %513 : vector<2x256xf32>
    %515 = vector.extract_strided_slice %500 {offsets = [0, 768], sizes = [2, 256], strides = [1, 1]} : vector<2x1024xf32> to vector<2x256xf32>
    %516 = arith.negf %515 : vector<2x256xf32>
    %517 = math.exp %516 : vector<2x256xf32>
    %cst_104 = arith.constant 1.000000e+00 : f32
    %518 = vector.broadcast %cst_104 : f32 to vector<2x256xf32>
    %519 = arith.addf %518, %517 : vector<2x256xf32>
    %520 = arith.divf %518, %519 : vector<2x256xf32>
    %521 = arith.mulf %512, %462 : vector<2x256xf32>
    %522 = arith.mulf %506, %514 : vector<2x256xf32>
    %523 = arith.addf %521, %522 : vector<2x256xf32>
    %524 = math.tanh %523 : vector<2x256xf32>
    %525 = arith.mulf %520, %524 : vector<2x256xf32>
    %526 = arith.truncf %525 : vector<2x256xf32> to vector<2x256xbf16>
    %cst_105 = arith.constant dense<0.000000e+00> : vector<2x1024xf32>
    %527 = tpu.matmul %526, %56, %cst_105 {dimension_numbers = #tpu.dot_dimension_numbers<[1], [0], [0], [1], [0, 0, 1, 1], [], []>} : vector<2x256xbf16>, vector<256x1024xbf16>, vector<2x1024xf32> -> vector<2x1024xf32>
    %528 = arith.addf %495, %527 : vector<2x1024xf32>
    %529 = vector.extract_strided_slice %528 {offsets = [0, 0], sizes = [2, 256], strides = [1, 1]} : vector<2x1024xf32> to vector<2x256xf32>
    %530 = arith.negf %529 : vector<2x256xf32>
    %531 = math.exp %530 : vector<2x256xf32>
    %cst_106 = arith.constant 1.000000e+00 : f32
    %532 = vector.broadcast %cst_106 : f32 to vector<2x256xf32>
    %533 = arith.addf %532, %531 : vector<2x256xf32>
    %534 = arith.divf %532, %533 : vector<2x256xf32>
    %535 = vector.extract_strided_slice %528 {offsets = [0, 256], sizes = [2, 256], strides = [1, 1]} : vector<2x1024xf32> to vector<2x256xf32>
    %536 = arith.negf %535 : vector<2x256xf32>
    %537 = math.exp %536 : vector<2x256xf32>
    %cst_107 = arith.constant 1.000000e+00 : f32
    %538 = vector.broadcast %cst_107 : f32 to vector<2x256xf32>
    %539 = arith.addf %538, %537 : vector<2x256xf32>
    %540 = arith.divf %538, %539 : vector<2x256xf32>
    %541 = vector.extract_strided_slice %528 {offsets = [0, 512], sizes = [2, 256], strides = [1, 1]} : vector<2x1024xf32> to vector<2x256xf32>
    %542 = math.tanh %541 : vector<2x256xf32>
    %543 = vector.extract_strided_slice %528 {offsets = [0, 768], sizes = [2, 256], strides = [1, 1]} : vector<2x1024xf32> to vector<2x256xf32>
    %544 = arith.negf %543 : vector<2x256xf32>
    %545 = math.exp %544 : vector<2x256xf32>
    %cst_108 = arith.constant 1.000000e+00 : f32
    %546 = vector.broadcast %cst_108 : f32 to vector<2x256xf32>
    %547 = arith.addf %546, %545 : vector<2x256xf32>
    %548 = arith.divf %546, %547 : vector<2x256xf32>
    %549 = arith.mulf %540, %490 : vector<2x256xf32>
    %550 = arith.mulf %534, %542 : vector<2x256xf32>
    %551 = arith.addf %549, %550 : vector<2x256xf32>
    %552 = math.tanh %551 : vector<2x256xf32>
    %553 = arith.mulf %548, %552 : vector<2x256xf32>
    %554 = tpu.concatenate %525, %553 in 1 : vector<2x256xf32>, vector<2x256xf32> -> vector<2x512xf32>
    %555 = arith.truncf %554 : vector<2x512xf32> to vector<2x512xbf16>
    %c0_109 = arith.constant 0 : index
    %c0_110 = arith.constant 0 : index
    %556 = vector.load %arg7[%c0_109, %c0_110] : memref<512x10xbf16, #tpu.memory_space<vmem>>, vector<512x10xbf16>
    %cst_111 = arith.constant dense<0.000000e+00> : vector<2x10xf32>
    %557 = tpu.matmul %555, %556, %cst_111 {dimension_numbers = #tpu.dot_dimension_numbers<[1], [0], [0], [1], [0, 0, 1, 1], [], []>} : vector<2x512xbf16>, vector<512x10xbf16>, vector<2x10xf32> -> vector<2x10xf32>
    %c0_112 = arith.constant 0 : index
    %c0_113 = arith.constant 0 : index
    %558 = vector.load %arg8[%c0_112, %c0_113] : memref<1x10xf32, #tpu.memory_space<vmem>>, vector<1x10xf32>
    %559 = vector.broadcast %558 : vector<1x10xf32> to vector<2x10xf32>
    %560 = arith.addf %557, %559 : vector<2x10xf32>
    %c0_114 = arith.constant 0 : index
    %c0_115 = arith.constant 0 : index
    %561 = vector.load %arg11[%c0_114, %c0_115] : memref<2x10xf32, #tpu.memory_space<vmem>>, vector<2x10xf32>
    tpu.vector_store %arg11[%c0_114, %c0_115], %560 {strides = array<i32>} : memref<2x10xf32, #tpu.memory_space<vmem>>, vector<2x10xf32>,
    return
  }
}

</mosaic_0001>

<llo_original>
// kernel: crnn_lstm_forward.1
$region0: #{crnn_lstm_forward.1}
  #allocation0 [shape = 'u32[]', space=smem, size = 0x4, offset = 0x4, fixed_abs, tag = 'smem constant byte address 0x4 - core index']
  #allocation1 [shape = 'u32[144,128]{1,0:T(1,128)}', space=vmem, size = 0x12000, scoped, tag = 'internal scratch']
  #allocation2 [shape = 'bf16[128,1024]{1,0:T(16,128)(2,1)}', space=vmem, size = 0x40000, scoped, tag = 'scratch operand']
  #allocation3 [shape = 'bf16[3,256,1024]{2,1,0:T(16,128)(2,1)}', space=vmem, size = 0x180000, scoped, tag = 'scratch operand']
  #allocation4 [shape = 's32[2]{0}', space=sflag, size = 0x8, scoped, tag = 'scratch operand']
  #allocation18 [shape = 's32[]', space=sflag, size = 0x4, offset = 0, fixed_abs, tag = 'sflag constant byte address 0x0 - dummy sync flag']
  #allocation20 [shape = 's32[]', space=sflag, size = 0x4, offset = 0, fixed_abs, tag = 'sflag constant byte address 0x0 - dummy sync flag']
  %s0 = inlined_call_operand.vmem [shape: f32[2,32,20], index: 0, kind: input, shape index: {}]
  %s1 = inlined_call_operand.hbm [shape: bf16[60,128], index: 1, kind: input, shape index: {}]
  %s2 = inlined_call_operand.hbm [shape: f32[1,128], index: 2, kind: input, shape index: {}]
  %s3 = inlined_call_operand.hbm [shape: bf16[384,128], index: 3, kind: input, shape index: {}]
  %s4 = inlined_call_operand.hbm [shape: f32[1,128], index: 4, kind: input, shape index: {}]
  %s5 = inlined_call_operand.hbm [shape: f32[1,1024], index: 5, kind: input, shape index: {}]
  %s6 = inlined_call_operand.hbm [shape: f32[1,1024], index: 6, kind: input, shape index: {}]
  %s7 = inlined_call_operand.vmem [shape: bf16[512,10], index: 7, kind: input, shape index: {}]
  %s8 = inlined_call_operand.hbm [shape: f32[1,10], index: 8, kind: input, shape index: {}]
  %s9 = inlined_call_operand.hbm [shape: bf16[128,1024], index: 9, kind: input, shape index: {}]
  %s10 = inlined_call_operand.hbm [shape: bf16[3,256,1024], index: 10, kind: input, shape index: {}]
  %s11 = inlined_call_operand.hbm [shape: f32[2,10], index: 11, kind: output, shape index: {}]
  %s12 = sld [smem:[#allocation0]]
  $region74: #{crnn_lstm_forward.1} parent=0
    _
  %s14 = ssub.s32 1, %s12
  %s15 = scalar_select 0, %s14, %s12
  $region1: #{crnn_lstm_forward.1} parent=0
    #allocation5 [shape = 'u8[16384]{0}', space=vmem, size = 0x4000, scoped, tag = 'input window, operand 1, single buffered']
    #allocation6 [shape = 's32[1]{0}', space=sflag, size = 0x4, scoped, tag = 'scoped memory for crnn_lstm_forward.1']
    #allocation7 [shape = 's32[1]{0}', space=sflag, size = 0x4, scoped, tag = 'scoped memory for crnn_lstm_forward.1']
    #allocation8 [shape = 'u8[512]{0}', space=vmem, size = 0x400, scoped, tag = 'input window, operand 2, single buffered']
    #allocation9 [shape = 's32[1]{0}', space=sflag, size = 0x4, scoped, tag = 'scoped memory for crnn_lstm_forward.1']
    #allocation10 [shape = 'u8[98304]{0}', space=vmem, size = 0x18000, scoped, tag = 'input window, operand 3, single buffered']
    #allocation11 [shape = 'u8[512]{0}', space=vmem, size = 0x400, scoped, tag = 'input window, operand 4, single buffered']
    #allocation12 [shape = 's32[1]{0}', space=sflag, size = 0x4, scoped, tag = 'scoped memory for crnn_lstm_forward.1']
    #allocation13 [shape = 'u8[4096]{0}', space=vmem, size = 0x1000, scoped, tag = 'input window, operand 5, single buffered']
    #allocation14 [shape = 'u8[4096]{0}', space=vmem, size = 0x1000, scoped, tag = 'input window, operand 6, single buffered']
    #allocation15 [shape = 's32[1]{0}', space=sflag, size = 0x4, scoped, tag = 'scoped memory for crnn_lstm_forward.1']
    #allocation16 [shape = 'u8[512]{0}', space=vmem, size = 0x400, scoped, tag = 'input window, operand 8, single buffered']
    #allocation17 [shape = 'u8[1024]{0}', space=vmem, size = 0x400, scoped, tag = 'output window, operand 0, single buffered']
    #allocation19 [shape = 'u32[9]{0}', space=smem, size = 0x24, scoped, tag = 'DMA stride descriptor']
    #allocation21 [shape = 'u32[9]{0}', space=smem, size = 0x24, scoped, tag = 'DMA stride descriptor']
    %16 = vsyncpa [#allocation6], 0
    %17 = vsyncpa [#allocation9], 0
    %18 = vsyncpa [#allocation12], 0
    %19 = vsyncpa [#allocation15], 0
    %20 = vsyncpa [#allocation7], 0
    // Predicated region
    $region2: #{crnn_lstm_forward.1} parent=1 // pred_check
      _
    $region3: #{crnn_lstm_forward.1} parent=1 // pred_check_branch
      %22 = sbr.rel (0) target = $region5
    $region4: #{crnn_lstm_forward.1} parent=1 // pred_region
      _
    $region5: #{crnn_lstm_forward.1} parent=1 // pred_fallthru
      _
    // Predicated region
    $region6: #{crnn_lstm_forward.1} parent=1 // pred_check
      _
    $region7: #{crnn_lstm_forward.1} parent=1 // pred_check_branch
      %24 = sbr.rel (0) target = $region9
    $region8: #{crnn_lstm_forward.1} parent=1 // pred_region
      %s26 = ssub.s32 512, 512
      %27 = vsyncadd [#allocation6], %s26
      %s28 = sshll.u32 [#allocation5], 4
      %s29 = int_to_ptr.vmem [resolvable:$true] %s28
      %34 = dma.hbm_to_vmem [thread:$0]  %s1, 512, %s29, [#allocation6], 64, 64, 4
    $region9: #{crnn_lstm_forward.1} parent=1 // pred_fallthru
      _
    // Predicated region
    $region10: #{crnn_lstm_forward.1} parent=1 // pred_check
      _
    $region11: #{crnn_lstm_forward.1} parent=1 // pred_check_branch
      %36 = sbr.rel (0) target = $region13
    $region12: #{crnn_lstm_forward.1} parent=1 // pred_region
      %s38 = ssub.s32 16, 16
      %39 = vsyncadd [#allocation9], %s38
      %s41 = sshll.u32 [#allocation8], 4
      %s42 = int_to_ptr.vmem [resolvable:$true] %s41
      %44 = dma.hbm_to_vmem [thread:$0]  %s2, 16, %s42, [#allocation9]
    $region13: #{crnn_lstm_forward.1} parent=1 // pred_fallthru
      _
    // Predicated region
    $region14: #{crnn_lstm_forward.1} parent=1 // pred_check
      _
    $region15: #{crnn_lstm_forward.1} parent=1 // pred_check_branch
      %46 = sbr.rel (0) target = $region17
    $region16: #{crnn_lstm_forward.1} parent=1 // pred_region
      %s48 = ssub.s32 3072, 3072
      %49 = vsyncadd [#allocation9], %s48
      %s50 = sshll.u32 [#allocation10], 4
      %s51 = int_to_ptr.vmem [resolvable:$true] %s50
      %56 = dma.hbm_to_vmem [thread:$0]  %s3, 3072, %s51, [#allocation9], 64, 64, 4
    $region17: #{crnn_lstm_forward.1} parent=1 // pred_fallthru
      _
    // Predicated region
    $region18: #{crnn_lstm_forward.1} parent=1 // pred_check
      _
    $region19: #{crnn_lstm_forward.1} parent=1 // pred_check_branch
      %58 = sbr.rel (0) target = $region21
    $region20: #{crnn_lstm_forward.1} parent=1 // pred_region
      %s60 = ssub.s32 16, 16
      %61 = vsyncadd [#allocation12], %s60
      %s63 = sshll.u32 [#allocation11], 4
      %s64 = int_to_ptr.vmem [resolvable:$true] %s63
      %66 = dma.hbm_to_vmem [thread:$0]  %s4, 16, %s64, [#allocation12]
    $region21: #{crnn_lstm_forward.1} parent=1 // pred_fallthru
      _
    // Predicated region
    $region22: #{crnn_lstm_forward.1} parent=1 // pred_check
      _
    $region23: #{crnn_lstm_forward.1} parent=1 // pred_check_branch
      %68 = sbr.rel (0) target = $region25
    $region24: #{crnn_lstm_forward.1} parent=1 // pred_region
      %s70 = ssub.s32 128, 128
      %71 = vsyncadd [#allocation12], %s70
      %s73 = sshll.u32 [#allocation13], 4
      %s74 = int_to_ptr.vmem [resolvable:$true] %s73
      %76 = dma.hbm_to_vmem [thread:$0]  %s5, 128, %s74, [#allocation12]
    $region25: #{crnn_lstm_forward.1} parent=1 // pred_fallthru
      _
    // Predicated region
    $region26: #{crnn_lstm_forward.1} parent=1 // pred_check
      _
    $region27: #{crnn_lstm_forward.1} parent=1 // pred_check_branch
      %78 = sbr.rel (0) target = $region29
    $region28: #{crnn_lstm_forward.1} parent=1 // pred_region
      %s80 = ssub.s32 128, 128
      %81 = vsyncadd [#allocation15], %s80
      %s83 = sshll.u32 [#allocation14], 4
      %s84 = int_to_ptr.vmem [resolvable:$true] %s83
      %86 = dma.hbm_to_vmem [thread:$0]  %s6, 128, %s84, [#allocation15]
    $region29: #{crnn_lstm_forward.1} parent=1 // pred_fallthru
      _
    // Predicated region
    $region30: #{crnn_lstm_forward.1} parent=1 // pred_check
      _
    $region31: #{crnn_lstm_forward.1} parent=1 // pred_check_branch
      %88 = sbr.rel (0) target = $region33
    $region32: #{crnn_lstm_forward.1} parent=1 // pred_region
      _
    $region33: #{crnn_lstm_forward.1} parent=1 // pred_fallthru
      _
    // Predicated region
    $region34: #{crnn_lstm_forward.1} parent=1 // pred_check
      _
    $region35: #{crnn_lstm_forward.1} parent=1 // pred_check_branch
      %90 = sbr.rel (0) target = $region37
    $region36: #{crnn_lstm_forward.1} parent=1 // pred_region
      %s92 = ssub.s32 16, 16
      %93 = vsyncadd [#allocation15], %s92
      %s95 = sshll.u32 [#allocation16], 4
      %s96 = int_to_ptr.vmem [resolvable:$true] %s95
      %98 = dma.hbm_to_vmem [thread:$0]  %s8, 16, %s96, [#allocation15]
    $region37: #{crnn_lstm_forward.1} parent=1 // pred_fallthru
      _
    // Predicated region
    $region38: #{crnn_lstm_forward.1} parent=1 // pred_check
      _
    $region39: #{crnn_lstm_forward.1} parent=1 // pred_check_branch
      %100 = sbr.rel (0) target = $region41
    $region40: #{crnn_lstm_forward.1} parent=1 // pred_region
      %101 = dma.done [#allocation6], 512
    $region41: #{crnn_lstm_forward.1} parent=1 // pred_fallthru
      _
    // Predicated region
    $region42: #{crnn_lstm_forward.1} parent=1 // pred_check
      _
    $region43: #{crnn_lstm_forward.1} parent=1 // pred_check_branch
      %103 = sbr.rel (0) target = $region45
    $region44: #{crnn_lstm_forward.1} parent=1 // pred_region
      %104 = dma.done [#allocation9], 16
    $region45: #{crnn_lstm_forward.1} parent=1 // pred_fallthru
      _
    // Predicated region
    $region46: #{crnn_lstm_forward.1} parent=1 // pred_check
      _
    $region47: #{crnn_lstm_forward.1} parent=1 // pred_check_branch
      %106 = sbr.rel (0) target = $region49
    $region48: #{crnn_lstm_forward.1} parent=1 // pred_region
      %107 = dma.done [#allocation9], 3072
    $region49: #{crnn_lstm_forward.1} parent=1 // pred_fallthru
      _
    // Predicated region
    $region50: #{crnn_lstm_forward.1} parent=1 // pred_check
      _
    $region51: #{crnn_lstm_forward.1} parent=1 // pred_check_branch
      %109 = sbr.rel (0) target = $region53
    $region52: #{crnn_lstm_forward.1} parent=1 // pred_region
      %110 = dma.done [#allocation12], 16
    $region53: #{crnn_lstm_forward.1} parent=1 // pred_fallthru
      _
    // Predicated region
    $region54: #{crnn_lstm_forward.1} parent=1 // pred_check
      _
    $region55: #{crnn_lstm_forward.1} parent=1 // pred_check_branch
      %112 = sbr.rel (0) target = $region57
    $region56: #{crnn_lstm_forward.1} parent=1 // pred_region
      %113 = dma.done [#allocation12], 128
    $region57: #{crnn_lstm_forward.1} parent=1 // pred_fallthru
      _
    // Predicated region
    $region58: #{crnn_lstm_forward.1} parent=1 // pred_check
      _
    $region59: #{crnn_lstm_forward.1} parent=1 // pred_check_branch
      %115 = sbr.rel (0) target = $region61
    $region60: #{crnn_lstm_forward.1} parent=1 // pred_region
      %116 = dma.done [#allocation15], 128
    $region61: #{crnn_lstm_forward.1} parent=1 // pred_fallthru
      _
    // Predicated region
    $region62: #{crnn_lstm_forward.1} parent=1 // pred_check
      _
    $region63: #{crnn_lstm_forward.1} parent=1 // pred_check_branch
      %118 = sbr.rel (0) target = $region65
    $region64: #{crnn_lstm_forward.1} parent=1 // pred_region
      %119 = dma.done [#allocation15], 16
    $region65: #{crnn_lstm_forward.1} parent=1 // pred_fallthru
      _
    %s122 = sshll.u32 1, 14
    %s123 = sxor.u32 4294967295, %s122
    %s125 = sld [smem:[#allocation0]]
    %s126 = sadd.s32 2, %s125
    %s128 = sshll.u32 7, 26
    %s129 = sxor.u32 4294967295, %s128
    %s130 = sand.u32 0, %s129
    %s131 = sshll.u32 %s126, 26
    %s132 = sor.u32 %s130, %s131
    %s133 = sshll.u32 [#allocation2], 4
    %s134 = int_to_ptr.vmem [resolvable:$true] %s133
    %137 = sst [smem:[#allocation19]] 1024
    %s138 = scalar_lea.smem [#allocation19], 1
    %139 = sst [smem:[%s138]] 1024
    %s140 = scalar_lea.smem [#allocation19], 2
    %141 = sst [smem:[%s140]] 8
    %s142 = scalar_lea.smem [#allocation19], 3
    %143 = sst [smem:[%s142]] 64
    %s144 = scalar_lea.smem [#allocation19], 4
    %145 = sst [smem:[%s144]] 128
    %s146 = scalar_lea.smem [#allocation19], 5
    %147 = sst [smem:[%s146]] 2
    %s148 = scalar_lea.smem [#allocation19], 6
    %149 = sst [smem:[%s148]] 512
    %s150 = scalar_lea.smem [#allocation19], 7
    %151 = sst [smem:[%s150]] 64
    %s152 = scalar_lea.smem [#allocation19], 8
    %153 = sst [smem:[%s152]] 4
    %155 = dma.general %s9, 8192, %s134, [#allocation4], [#allocation18], [#allocation19], %s132, 0
    %s156 = scalar_lea.sflag [#allocation4], 1
    %s158 = sshll.u32 1, 14
    %s159 = sxor.u32 4294967295, %s158
    %s161 = sadd.s32 2, %s125
    %s163 = sshll.u32 7, 26
    %s164 = sxor.u32 4294967295, %s163
    %s165 = sand.u32 0, %s164
    %s166 = sshll.u32 %s161, 26
    %s167 = sor.u32 %s165, %s166
    %s168 = sshll.u32 [#allocation3], 4
    %s169 = int_to_ptr.vmem [resolvable:$true] %s168
    %172 = sst [smem:[#allocation21]] 1024
    %s173 = scalar_lea.smem [#allocation21], 1
    %174 = sst [smem:[%s173]] 1024
    %s175 = scalar_lea.smem [#allocation21], 2
    %176 = sst [smem:[%s175]] 8
    %s177 = scalar_lea.smem [#allocation21], 3
    %178 = sst [smem:[%s177]] 64
    %s179 = scalar_lea.smem [#allocation21], 4
    %180 = sst [smem:[%s179]] 128
    %s181 = scalar_lea.smem [#allocation21], 5
    %182 = sst [smem:[%s181]] 2
    %s183 = scalar_lea.smem [#allocation21], 6
    %184 = sst [smem:[%s183]] 512
    %s185 = scalar_lea.smem [#allocation21], 7
    %186 = sst [smem:[%s185]] 64
    %s187 = scalar_lea.smem [#allocation21], 8
    %188 = sst [smem:[%s187]] 4
    %190 = dma.general %s10, 49152, %s169, %s156, [#allocation20], [#allocation21], %s167, 0
    %v191 = vld [vmem:[%s0] sm:$0xff]
    %v192 = vld [vmem:[%s0 + $0x8] sm:$0xff]
    %v193 = vld [vmem:[%s0 + $0x10] sm:$0xff]
    %v194 = vld [vmem:[%s0 + $0x18] sm:$0xff]
    %v195 = vld [vmem:[%s0 + $0x20] sm:$0xff]
    %v196 = vld [vmem:[%s0 + $0x28] sm:$0xff]
    %v197 = vld [vmem:[%s0 + $0x30] sm:$0xff]
    %v198 = vld [vmem:[%s0 + $0x38] sm:$0xff]
    %vm207 = vcmask 1040384
    %v208 = vrot.slane %v191, 7
    %v209 = vrot.slane %v192, 7
    %v210 = vsel %vm207, %v208, %v209
    %v211 = vrot.slane %v193, 7
    %v212 = vsel %vm207, %v209, %v211
    %v213 = vrot.slane %v194, 7
    %v214 = vsel %vm207, %v211, %v213
    %v215 = vrot.slane %v195, 7
    %v216 = vrot.slane %v196, 7
    %v217 = vsel %vm207, %v215, %v216
    %v218 = vrot.slane %v197, 7
    %v219 = vsel %vm207, %v216, %v218
    %v220 = vrot.slane %v198, 7
    %v221 = vsel %vm207, %v218, %v220
    %v230 = vsel %vm207, 0.0, %v208
    %v231 = vsel %vm207, 0.0, %v215
    %vm232 = vcmask 1046528
    %v233 = vrot.slane %v191, 1
    %v234 = vrot.slane %v192, 1
    %v235 = vsel %vm232, %v233, %v234
    %v236 = vrot.slane %v193, 1
    %v237 = vsel %vm232, %v234, %v236
    %v238 = vrot.slane %v194, 1
    %v239 = vsel %vm232, %v236, %v238
    %v240 = vrot.slane %v195, 1
    %v241 = vrot.slane %v196, 1
    %v242 = vsel %vm232, %v240, %v241
    %v243 = vrot.slane %v197, 1
    %v244 = vsel %vm232, %v241, %v243
    %v245 = vrot.slane %v198, 1
    %v246 = vsel %vm232, %v243, %v245
    %v249 = vsel %vm232, %v238, 0.0
    %v250 = vsel %vm232, %v245, 0.0
    %251 = vrot.lane.b32.xlu0 %v191, 20
    %v252 = vpop.permute.xlu0 %251
    %253 = vrot.lane.b32.xlu0 %v192, 20
    %v254 = vpop.permute.xlu0 %253
    %255 = vrot.lane.b32.xlu0 %v193, 20
    %v256 = vpop.permute.xlu0 %255
    %257 = vrot.lane.b32.xlu0 %v194, 20
    %v258 = vpop.permute.xlu0 %257
    %259 = vrot.lane.b32.xlu0 %v195, 20
    %v260 = vpop.permute.xlu0 %259
    %261 = vrot.lane.b32.xlu0 %v196, 20
    %v262 = vpop.permute.xlu0 %261
    %263 = vrot.lane.b32.xlu0 %v197, 20
    %v264 = vpop.permute.xlu0 %263
    %265 = vrot.lane.b32.xlu0 %v198, 20
    %v266 = vpop.permute.xlu0 %265
    %277 = vrot.lane.b32.xlu0 %v235, 40
    %v278 = vpop.permute.xlu0 %277
    %279 = vrot.lane.b32.xlu0 %v237, 40
    %v280 = vpop.permute.xlu0 %279
    %281 = vrot.lane.b32.xlu0 %v239, 40
    %v282 = vpop.permute.xlu0 %281
    %283 = vrot.lane.b32.xlu0 %v249, 40
    %v284 = vpop.permute.xlu0 %283
    %285 = vrot.lane.b32.xlu0 %v242, 40
    %v286 = vpop.permute.xlu0 %285
    %287 = vrot.lane.b32.xlu0 %v244, 40
    %v288 = vpop.permute.xlu0 %287
    %289 = vrot.lane.b32.xlu0 %v246, 40
    %v290 = vpop.permute.xlu0 %289
    %291 = vrot.lane.b32.xlu0 %v250, 40
    %v292 = vpop.permute.xlu0 %291
    %vm301 = vcmask 162816
    %v302 = vsel %vm301, %v230, %v252
    %v303 = vsel %vm301, %v210, %v254
    %v304 = vsel %vm301, %v212, %v256
    %v305 = vsel %vm301, %v214, %v258
    %v306 = vsel %vm301, %v231, %v260
    %v307 = vsel %vm301, %v217, %v262
    %v308 = vsel %vm301, %v219, %v264
    %v309 = vsel %vm301, %v221, %v266
    %vm310 = vcmask 326656
    %v311 = vsel %vm310, %v302, %v278
    %v312 = vsel %vm310, %v303, %v280
    %v313 = vsel %vm310, %v304, %v282
    %v314 = vsel %vm310, %v305, %v284
    %v315 = vsel %vm310, %v306, %v286
    %v316 = vsel %vm310, %v307, %v288
    %v317 = vsel %vm310, %v308, %v290
    %v318 = vsel %vm310, %v309, %v292
    %v319 = vpack.c.bf16 %v312, %v311
    %v320 = vpack.c.bf16 %v314, %v313
    %v321 = vpack.c.bf16 %v316, %v315
    %v322 = vpack.c.bf16 %v318, %v317
    %v323 = vld [vmem:[#allocation5] sm:$0xf]
    %v324 = vld [vmem:[#allocation5 + $0x4] sm:$0xf]
    %v325 = vld [vmem:[#allocation5 + $0x8] sm:$0xf]
    %v326 = vld [vmem:[#allocation5 + $0xc] sm:$0xf]
    %v327 = vld [vmem:[#allocation5 + $0x10] sm:$0xf]
    %v328 = vld [vmem:[#allocation5 + $0x14] sm:$0xf]
    %v329 = vld [vmem:[#allocation5 + $0x18] sm:$0xf]
    %v330 = vld [vmem:[#allocation5 + $0x1c] sm:$0x3]
    %v331 = vld [vmem:[#allocation8] sm:$0x1]
    %v333 = vlaneseq
    %v334 = vshrl.u32 %v333, 7
    %v335 = vsub.s32 0, %v334
    %v336 = vrot.slane %v331, %v335
    %v346 = vunpack.c.l.b16 %v323
    %v347 = vunpack.c.l.b16 %v324
    %v348 = vunpack.c.l.b16 %v325
    %v349 = vunpack.c.l.b16 %v326
    %v350 = vunpack.c.l.b16 %v327
    %v351 = vunpack.c.l.b16 %v328
    %v352 = vunpack.c.l.b16 %v329
    %v353 = vunpack.c.l.b16 %v330
    %v354 = vpack.c.b16 %v347, %v346
    %v355 = vpack.c.b16 %v349, %v348
    %v356 = vpack.c.b16 %v351, %v350
    %v357 = vpack.c.b16 %v353, %v352
    %vm361 = vcmask 490496
    %v363 = vsel %vm361, %v319, 0
    %v366 = vsel %vm361, %v320, 0
    %v369 = vsel %vm361, %v321, 0
    %v372 = vsel %vm361, %v322, 0
    %vm374 = vcmask 1045504
    %v376 = vsel %vm374, %v357, 0
    %378 = vmatprep.subr.bf16.mxu0 0
    %379 = vmatpush1.bf16.msra.mxu0 %v354
    %380 = vmatprep.subr.bf16.mxu0 0
    %381 = vmatpush1.bf16.msra.mxu0 %v355
    %382 = vmatprep.subr.bf16.mxu0 0
    %383 = vmatpush1.bf16.msra.mxu0 %v356
    %384 = vmatprep.subr.bf16.mxu0 0
    %385 = vmatpush1.bf16.msra.mxu0 %v376
    %386 = vmatprep.subr.bf16.mxu0 0
    %387 = vmatpush1.bf16.msra.mxu0 0
    %388 = vmatprep.subr.bf16.mxu0 0
    %389 = vmatpush1.bf16.msra.mxu0 0
    %390 = vmatprep.subr.bf16.mxu0 0
    %391 = vmatpush1.bf16.msra.mxu0 0
    %392 = vmatprep.subr.bf16.mxu0 0
    %393 = vmatpush1.bf16.msra.mxu0 0
    %394 = vmatprep.subr.bf16.mxu0 0
    %395 = vmatpush1.bf16.msra.mxu0 0
    %396 = vmatprep.subr.bf16.mxu0 0
    %397 = vmatpush1.bf16.msra.mxu0 0
    %398 = vmatprep.subr.bf16.mxu0 0
    %399 = vmatpush1.bf16.msra.mxu0 0
    %400 = vmatprep.subr.bf16.mxu0 0
    %401 = vmatpush1.bf16.msra.mxu0 0
    %402 = vmatprep.subr.bf16.mxu0 0
    %403 = vmatpush1.bf16.msra.mxu0 0
    %404 = vmatprep.subr.bf16.mxu0 0
    %405 = vmatpush1.bf16.msra.mxu0 0
    %406 = vmatprep.subr.bf16.mxu0 0
    %407 = vmatpush1.bf16.msra.mxu0 0
    %408 = vmatprep.subr.bf16.mxu0 0
    %409 = vmatpush1.bf16.msra.mxu0 0
    %410 = vmatprep.mubr.bf16.mxu0 0
    %411 = vmatmul.mubr.bf16.gmra.mrb[0].mxu0 %v363
    %v412 = vpop.f32.mrb[0].mxu0
    %v413 = vadd.f32 %v336, %v412
    %v414 = vpop.f32.mrb[0].mxu0
    %v415 = vpop.f32.mrb[0].mxu0
    %v416 = vadd.f32 %v336, %v415
    %v417 = vpop.f32.mrb[0].mxu0
    %418 = vmatprep.mubr.bf16.mxu0 0
    %419 = vmatmul.mubr.bf16.gmra.mrb[0].mxu0 %v366
    %v420 = vpop.f32.mrb[0].mxu0
    %v421 = vadd.f32 %v336, %v420
    %v422 = vpop.f32.mrb[0].mxu0
    %v423 = vpop.f32.mrb[0].mxu0
    %v424 = vadd.f32 %v336, %v423
    %v425 = vpop.f32.mrb[0].mxu0
    %426 = vmatprep.mubr.bf16.mxu0 0
    %427 = vmatmul.mubr.bf16.gmra.mrb[0].mxu0 %v369
    %v428 = vpop.f32.mrb[0].mxu0
    %v429 = vadd.f32 %v336, %v428
    %v430 = vpop.f32.mrb[0].mxu0
    %v431 = vpop.f32.mrb[0].mxu0
    %v432 = vadd.f32 %v336, %v431
    %v433 = vpop.f32.mrb[0].mxu0
    %434 = vmatprep.mubr.bf16.mxu0 0
    %435 = vmatmul.mubr.bf16.gmra.mrb[0].mxu0 %v372
    %v436 = vpop.f32.mrb[0].mxu0
    %v437 = vadd.f32 %v336, %v436
    %v438 = vpop.f32.mrb[0].mxu0
    %v439 = vpop.f32.mrb[0].mxu0
    %v440 = vadd.f32 %v336, %v439
    %v441 = vpop.f32.mrb[0].mxu0
    %442 = vdwg.mxu0
    %v443 = vmax.f32 %v413, 0.0
    %v444 = vmax.f32 %v416, 0.0
    %v445 = vmax.f32 %v421, 0.0
    %v446 = vmax.f32 %v424, 0.0
    %v447 = vmax.f32 %v429, 0.0
    %v448 = vmax.f32 %v432, 0.0
    %v449 = vmax.f32 %v437, 0.0
    %v450 = vmax.f32 %v440, 0.0
    %v459 = vcombine.high %v443, %v443
    %v461 = vunpack.c.l.s4 1983009808
    %v462 = vunpack.c.0.s8 %v461
    %v463 = vlaneseq
    %v464 = vshrl.u32 %v463, 7
    %v465 = vsub.s32 %v462, %v464
    %v466 = vrot.slane %v443, %v465
    %v468 = vunpack.c.l.s4 1983009808
    %v469 = vunpack.c.0.s8 %v468
    %v470 = vlaneseq
    %v471 = vshrl.u32 %v470, 7
    %v472 = vsub.s32 %v469, %v471
    %v473 = vrot.slane %v459, %v472
    %v474 = vcombine.high %v466, %v466
    %v475 = vcombine.high %v473, %v473
    %v476 = vcombine.high %v444, %v444
    %v478 = vunpack.c.l.s4 1983009808
    %v479 = vunpack.c.0.s8 %v478
    %v480 = vlaneseq
    %v481 = vshrl.u32 %v480, 7
    %v482 = vsub.s32 %v479, %v481
    %v483 = vrot.slane %v444, %v482
    %v485 = vunpack.c.l.s4 1983009808
    %v486 = vunpack.c.0.s8 %v485
    %v487 = vlaneseq
    %v488 = vshrl.u32 %v487, 7
    %v489 = vsub.s32 %v486, %v488
    %v490 = vrot.slane %v476, %v489
    %v491 = vcombine.high %v483, %v483
    %v492 = vcombine.high %v490, %v490
    %v493 = vcombine.high %v445, %v445
    %v495 = vunpack.c.l.s4 1983009808
    %v496 = vunpack.c.0.s8 %v495
    %v497 = vlaneseq
    %v498 = vshrl.u32 %v497, 7
    %v499 = vsub.s32 %v496, %v498
    %v500 = vrot.slane %v445, %v499
    %v502 = vunpack.c.l.s4 1983009808
    %v503 = vunpack.c.0.s8 %v502
    %v504 = vlaneseq
    %v505 = vshrl.u32 %v504, 7
    %v506 = vsub.s32 %v503, %v505
    %v507 = vrot.slane %v493, %v506
    %v508 = vcombine.high %v500, %v500
    %v509 = vcombine.high %v507, %v507
    %v510 = vcombine.high %v446, %v446
    %v512 = vunpack.c.l.s4 1983009808
    %v513 = vunpack.c.0.s8 %v512
    %v514 = vlaneseq
    %v515 = vshrl.u32 %v514, 7
    %v516 = vsub.s32 %v513, %v515
    %v517 = vrot.slane %v446, %v516
    %v519 = vunpack.c.l.s4 1983009808
    %v520 = vunpack.c.0.s8 %v519
    %v521 = vlaneseq
    %v522 = vshrl.u32 %v521, 7
    %v523 = vsub.s32 %v520, %v522
    %v524 = vrot.slane %v510, %v523
    %v525 = vcombine.high %v517, %v517
    %v526 = vcombine.high %v524, %v524
    %v527 = vcombine.high %v447, %v447
    %v529 = vunpack.c.l.s4 1983009808
    %v530 = vunpack.c.0.s8 %v529
    %v531 = vlaneseq
    %v532 = vshrl.u32 %v531, 7
    %v533 = vsub.s32 %v530, %v532
    %v534 = vrot.slane %v447, %v533
    %v536 = vunpack.c.l.s4 1983009808
    %v537 = vunpack.c.0.s8 %v536
    %v538 = vlaneseq
    %v539 = vshrl.u32 %v538, 7
    %v540 = vsub.s32 %v537, %v539
    %v541 = vrot.slane %v527, %v540
    %v542 = vcombine.high %v534, %v534
    %v543 = vcombine.high %v541, %v541
    %v544 = vcombine.high %v448, %v448
    %v546 = vunpack.c.l.s4 1983009808
    %v547 = vunpack.c.0.s8 %v546
    %v548 = vlaneseq
    %v549 = vshrl.u32 %v548, 7
    %v550 = vsub.s32 %v547, %v549
    %v551 = vrot.slane %v448, %v550
    %v553 = vunpack.c.l.s4 1983009808
    %v554 = vunpack.c.0.s8 %v553
    %v555 = vlaneseq
    %v556 = vshrl.u32 %v555, 7
    %v557 = vsub.s32 %v554, %v556
    %v558 = vrot.slane %v544, %v557
    %v559 = vcombine.high %v551, %v551
    %v560 = vcombine.high %v558, %v558
    %v561 = vcombine.high %v449, %v449
    %v563 = vunpack.c.l.s4 1983009808
    %v564 = vunpack.c.0.s8 %v563
    %v565 = vlaneseq
    %v566 = vshrl.u32 %v565, 7
    %v567 = vsub.s32 %v564, %v566
    %v568 = vrot.slane %v449, %v567
    %v570 = vunpack.c.l.s4 1983009808
    %v571 = vunpack.c.0.s8 %v570
    %v572 = vlaneseq
    %v573 = vshrl.u32 %v572, 7
    %v574 = vsub.s32 %v571, %v573
    %v575 = vrot.slane %v561, %v574
    %v576 = vcombine.high %v568, %v568
    %v577 = vcombine.high %v575, %v575
    %v578 = vcombine.high %v450, %v450
    %v580 = vunpack.c.l.s4 1983009808
    %v581 = vunpack.c.0.s8 %v580
    %v582 = vlaneseq
    %v583 = vshrl.u32 %v582, 7
    %v584 = vsub.s32 %v581, %v583
    %v585 = vrot.slane %v450, %v584
    %v587 = vunpack.c.l.s4 1983009808
    %v588 = vunpack.c.0.s8 %v587
    %v589 = vlaneseq
    %v590 = vshrl.u32 %v589, 7
    %v591 = vsub.s32 %v588, %v590
    %v592 = vrot.slane %v578, %v591
    %v593 = vcombine.high %v585, %v585
    %v594 = vcombine.high %v592, %v592
    %vm627 = vcmask 1041408
    %v628 = vsel %vm627, %v466, -inf
    %v629 = vrot.slane %v628, 4
    %v630 = vmax.f32 %v628, %v629
    %v631 = vrot.slane %v630, 2
    %v632 = vmax.f32 %v630, %v631
    %v633 = vrot.slane %v632, 1
    %v634 = vmax.f32 %v632, %v633
    %v635 = vsel %vm627, %v474, -inf
    %v636 = vrot.slane %v635, 4
    %v637 = vmax.f32 %v635, %v636
    %v638 = vrot.slane %v637, 2
    %v639 = vmax.f32 %v637, %v638
    %v640 = vrot.slane %v639, 1
    %v641 = vmax.f32 %v639, %v640
    %v642 = vsel %vm627, %v473, -inf
    %v643 = vrot.slane %v642, 4
    %v644 = vmax.f32 %v642, %v643
    %v645 = vrot.slane %v644, 2
    %v646 = vmax.f32 %v644, %v645
    %v647 = vrot.slane %v646, 1
    %v648 = vmax.f32 %v646, %v647
    %v649 = vsel %vm627, %v475, -inf
    %v650 = vrot.slane %v649, 4
    %v651 = vmax.f32 %v649, %v650
    %v652 = vrot.slane %v651, 2
    %v653 = vmax.f32 %v651, %v652
    %v654 = vrot.slane %v653, 1
    %v655 = vmax.f32 %v653, %v654
    %v656 = vsel %vm627, %v483, -inf
    %v657 = vrot.slane %v656, 4
    %v658 = vmax.f32 %v656, %v657
    %v659 = vrot.slane %v658, 2
    %v660 = vmax.f32 %v658, %v659
    %v661 = vrot.slane %v660, 1
    %v662 = vmax.f32 %v660, %v661
    %v663 = vsel %vm627, %v491, -inf
    %v664 = vrot.slane %v663, 4
    %v665 = vmax.f32 %v663, %v664
    %v666 = vrot.slane %v665, 2
    %v667 = vmax.f32 %v665, %v666
    %v668 = vrot.slane %v667, 1
    %v669 = vmax.f32 %v667, %v668
    %v670 = vsel %vm627, %v490, -inf
    %v671 = vrot.slane %v670, 4
    %v672 = vmax.f32 %v670, %v671
    %v673 = vrot.slane %v672, 2
    %v674 = vmax.f32 %v672, %v673
    %v675 = vrot.slane %v674, 1
    %v676 = vmax.f32 %v674, %v675
    %v677 = vsel %vm627, %v492, -inf
    %v678 = vrot.slane %v677, 4
    %v679 = vmax.f32 %v677, %v678
    %v680 = vrot.slane %v679, 2
    %v681 = vmax.f32 %v679, %v680
    %v682 = vrot.slane %v681, 1
    %v683 = vmax.f32 %v681, %v682
    %v684 = vsel %vm627, %v500, -inf
    %v685 = vrot.slane %v684, 4
    %v686 = vmax.f32 %v684, %v685
    %v687 = vrot.slane %v686, 2
    %v688 = vmax.f32 %v686, %v687
    %v689 = vrot.slane %v688, 1
    %v690 = vmax.f32 %v688, %v689
    %v691 = vsel %vm627, %v508, -inf
    %v692 = vrot.slane %v691, 4
    %v693 = vmax.f32 %v691, %v692
    %v694 = vrot.slane %v693, 2
    %v695 = vmax.f32 %v693, %v694
    %v696 = vrot.slane %v695, 1
    %v697 = vmax.f32 %v695, %v696
    %v698 = vsel %vm627, %v507, -inf
    %v699 = vrot.slane %v698, 4
    %v700 = vmax.f32 %v698, %v699
    %v701 = vrot.slane %v700, 2
    %v702 = vmax.f32 %v700, %v701
    %v703 = vrot.slane %v702, 1
    %v704 = vmax.f32 %v702, %v703
    %v705 = vsel %vm627, %v509, -inf
    %v706 = vrot.slane %v705, 4
    %v707 = vmax.f32 %v705, %v706
    %v708 = vrot.slane %v707, 2
    %v709 = vmax.f32 %v707, %v708
    %v710 = vrot.slane %v709, 1
    %v711 = vmax.f32 %v709, %v710
    %v712 = vsel %vm627, %v517, -inf
    %v713 = vrot.slane %v712, 4
    %v714 = vmax.f32 %v712, %v713
    %v715 = vrot.slane %v714, 2
    %v716 = vmax.f32 %v714, %v715
    %v717 = vrot.slane %v716, 1
    %v718 = vmax.f32 %v716, %v717
    %v719 = vsel %vm627, %v525, -inf
    %v720 = vrot.slane %v719, 4
    %v721 = vmax.f32 %v719, %v720
    %v722 = vrot.slane %v721, 2
    %v723 = vmax.f32 %v721, %v722
    %v724 = vrot.slane %v723, 1
    %v725 = vmax.f32 %v723, %v724
    %v726 = vsel %vm627, %v524, -inf
    %v727 = vrot.slane %v726, 4
    %v728 = vmax.f32 %v726, %v727
    %v729 = vrot.slane %v728, 2
    %v730 = vmax.f32 %v728, %v729
    %v731 = vrot.slane %v730, 1
    %v732 = vmax.f32 %v730, %v731
    %v733 = vsel %vm627, %v526, -inf
    %v734 = vrot.slane %v733, 4
    %v735 = vmax.f32 %v733, %v734
    %v736 = vrot.slane %v735, 2
    %v737 = vmax.f32 %v735, %v736
    %v738 = vrot.slane %v737, 1
    %v739 = vmax.f32 %v737, %v738
    %v740 = vsel %vm627, %v534, -inf
    %v741 = vrot.slane %v740, 4
    %v742 = vmax.f32 %v740, %v741
    %v743 = vrot.slane %v742, 2
    %v744 = vmax.f32 %v742, %v743
    %v745 = vrot.slane %v744, 1
    %v746 = vmax.f32 %v744, %v745
    %v747 = vsel %vm627, %v542, -inf
    %v748 = vrot.slane %v747, 4
    %v749 = vmax.f32 %v747, %v748
    %v750 = vrot.slane %v749, 2
    %v751 = vmax.f32 %v749, %v750
    %v752 = vrot.slane %v751, 1
    %v753 = vmax.f32 %v751, %v752
    %v754 = vsel %vm627, %v541, -inf
    %v755 = vrot.slane %v754, 4
    %v756 = vmax.f32 %v754, %v755
    %v757 = vrot.slane %v756, 2
    %v758 = vmax.f32 %v756, %v757
    %v759 = vrot.slane %v758, 1
    %v760 = vmax.f32 %v758, %v759
    %v761 = vsel %vm627, %v543, -inf
    %v762 = vrot.slane %v761, 4
    %v763 = vmax.f32 %v761, %v762
    %v764 = vrot.slane %v763, 2
    %v765 = vmax.f32 %v763, %v764
    %v766 = vrot.slane %v765, 1
    %v767 = vmax.f32 %v765, %v766
    %v768 = vsel %vm627, %v551, -inf
    %v769 = vrot.slane %v768, 4
    %v770 = vmax.f32 %v768, %v769
    %v771 = vrot.slane %v770, 2
    %v772 = vmax.f32 %v770, %v771
    %v773 = vrot.slane %v772, 1
    %v774 = vmax.f32 %v772, %v773
    %v775 = vsel %vm627, %v559, -inf
    %v776 = vrot.slane %v775, 4
    %v777 = vmax.f32 %v775, %v776
    %v778 = vrot.slane %v777, 2
    %v779 = vmax.f32 %v777, %v778
    %v780 = vrot.slane %v779, 1
    %v781 = vmax.f32 %v779, %v780
    %v782 = vsel %vm627, %v558, -inf
    %v783 = vrot.slane %v782, 4
    %v784 = vmax.f32 %v782, %v783
    %v785 = vrot.slane %v784, 2
    %v786 = vmax.f32 %v784, %v785
    %v787 = vrot.slane %v786, 1
    %v788 = vmax.f32 %v786, %v787
    %v789 = vsel %vm627, %v560, -inf
    %v790 = vrot.slane %v789, 4
    %v791 = vmax.f32 %v789, %v790
    %v792 = vrot.slane %v791, 2
    %v793 = vmax.f32 %v791, %v792
    %v794 = vrot.slane %v793, 1
    %v795 = vmax.f32 %v793, %v794
    %v796 = vsel %vm627, %v568, -inf
    %v797 = vrot.slane %v796, 4
    %v798 = vmax.f32 %v796, %v797
    %v799 = vrot.slane %v798, 2
    %v800 = vmax.f32 %v798, %v799
    %v801 = vrot.slane %v800, 1
    %v802 = vmax.f32 %v800, %v801
    %v803 = vsel %vm627, %v576, -inf
    %v804 = vrot.slane %v803, 4
    %v805 = vmax.f32 %v803, %v804
    %v806 = vrot.slane %v805, 2
    %v807 = vmax.f32 %v805, %v806
    %v808 = vrot.slane %v807, 1
    %v809 = vmax.f32 %v807, %v808
    %v810 = vsel %vm627, %v575, -inf
    %v811 = vrot.slane %v810, 4
    %v812 = vmax.f32 %v810, %v811
    %v813 = vrot.slane %v812, 2
    %v814 = vmax.f32 %v812, %v813
    %v815 = vrot.slane %v814, 1
    %v816 = vmax.f32 %v814, %v815
    %v817 = vsel %vm627, %v577, -inf
    %v818 = vrot.slane %v817, 4
    %v819 = vmax.f32 %v817, %v818
    %v820 = vrot.slane %v819, 2
    %v821 = vmax.f32 %v819, %v820
    %v822 = vrot.slane %v821, 1
    %v823 = vmax.f32 %v821, %v822
    %v824 = vsel %vm627, %v585, -inf
    %v825 = vrot.slane %v824, 4
    %v826 = vmax.f32 %v824, %v825
    %v827 = vrot.slane %v826, 2
    %v828 = vmax.f32 %v826, %v827
    %v829 = vrot.slane %v828, 1
    %v830 = vmax.f32 %v828, %v829
    %v831 = vsel %vm627, %v593, -inf
    %v832 = vrot.slane %v831, 4
    %v833 = vmax.f32 %v831, %v832
    %v834 = vrot.slane %v833, 2
    %v835 = vmax.f32 %v833, %v834
    %v836 = vrot.slane %v835, 1
    %v837 = vmax.f32 %v835, %v836
    %v838 = vsel %vm627, %v592, -inf
    %v839 = vrot.slane %v838, 4
    %v840 = vmax.f32 %v838, %v839
    %v841 = vrot.slane %v840, 2
    %v842 = vmax.f32 %v840, %v841
    %v843 = vrot.slane %v842, 1
    %v844 = vmax.f32 %v842, %v843
    %v845 = vsel %vm627, %v594, -inf
    %v846 = vrot.slane %v845, 4
    %v847 = vmax.f32 %v845, %v846
    %v848 = vrot.slane %v847, 2
    %v849 = vmax.f32 %v847, %v848
    %v850 = vrot.slane %v849, 1
    %v851 = vmax.f32 %v849, %v850
    %vm882 = vcmask 1042434
    %v883 = vsel %vm882, %v641, %v634
    %vm884 = vcmask 1043459
    %v885 = vsel %vm884, %v648, %v883
    %vm886 = vcmask 1044484
    %v887 = vsel %vm886, %v655, %v885
    %vm888 = vcmask 1045509
    %v889 = vsel %vm888, %v662, %v887
    %vm890 = vcmask 1046534
    %v891 = vsel %vm890, %v669, %v889
    %vm892 = vcmask 1047559
    %v893 = vsel %vm892, %v676, %v891
    %vm894 = vcmask 1041409
    %v895 = vsel %vm894, %v690, %v683
    %v896 = vsel %vm882, %v697, %v895
    %v897 = vsel %vm884, %v704, %v896
    %v898 = vsel %vm886, %v711, %v897
    %v899 = vsel %vm888, %v718, %v898
    %v900 = vsel %vm890, %v725, %v899
    %v901 = vsel %vm892, %v732, %v900
    %v902 = vsel %vm882, %v753, %v746
    %v903 = vsel %vm884, %v760, %v902
    %v904 = vsel %vm886, %v767, %v903
    %v905 = vsel %vm888, %v774, %v904
    %v906 = vsel %vm890, %v781, %v905
    %v907 = vsel %vm892, %v788, %v906
    %v908 = vsel %vm894, %v802, %v795
    %v909 = vsel %vm882, %v809, %v908
    %v910 = vsel %vm884, %v816, %v909
    %v911 = vsel %vm886, %v823, %v910
    %v912 = vsel %vm888, %v830, %v911
    %v913 = vsel %vm890, %v837, %v912
    %v914 = vsel %vm892, %v844, %v913
    %v919 = vsel %vm207, 0.0, %v893
    %v920 = vsel %vm207, 0.0, %v907
    %v923 = vsel %vm894, %v648, %v641
    %v924 = vsel %vm882, %v655, %v923
    %v925 = vsel %vm884, %v662, %v924
    %v926 = vsel %vm886, %v669, %v925
    %v927 = vsel %vm888, %v676, %v926
    %v928 = vsel %vm890, %v683, %v927
    %v929 = vsel %vm892, %v690, %v928
    %v930 = vsel %vm894, %v704, %v697
    %v931 = vsel %vm882, %v711, %v930
    %v932 = vsel %vm884, %v718, %v931
    %v933 = vsel %vm886, %v725, %v932
    %v934 = vsel %vm888, %v732, %v933
    %v935 = vsel %vm890, %v739, %v934
    %v936 = vsel %vm894, %v760, %v753
    %v937 = vsel %vm882, %v767, %v936
    %v938 = vsel %vm884, %v774, %v937
    %v939 = vsel %vm886, %v781, %v938
    %v940 = vsel %vm888, %v788, %v939
    %v941 = vsel %vm890, %v795, %v940
    %v942 = vsel %vm892, %v802, %v941
    %v943 = vsel %vm894, %v816, %v809
    %v944 = vsel %vm882, %v823, %v943
    %v945 = vsel %vm884, %v830, %v944
    %v946 = vsel %vm886, %v837, %v945
    %v947 = vsel %vm888, %v844, %v946
    %v948 = vsel %vm890, %v851, %v947
    %v953 = vsel %vm232, %v935, 0.0
    %v954 = vsel %vm232, %v948, 0.0
    %v955 = vsel %vm894, %v641, %v634
    %v956 = vsel %vm882, %v648, %v955
    %v957 = vsel %vm884, %v655, %v956
    %v958 = vsel %vm886, %v662, %v957
    %v959 = vsel %vm888, %v669, %v958
    %v960 = vsel %vm890, %v676, %v959
    %v961 = vsel %vm892, %v683, %v960
    %v962 = vsel %vm894, %v697, %v690
    %v963 = vsel %vm882, %v704, %v962
    %v964 = vsel %vm884, %v711, %v963
    %v965 = vsel %vm886, %v718, %v964
    %v966 = vsel %vm888, %v725, %v965
    %v967 = vsel %vm890, %v732, %v966
    %v968 = vsel %vm892, %v739, %v967
    %v969 = vsel %vm894, %v753, %v746
    %v970 = vsel %vm882, %v760, %v969
    %v971 = vsel %vm884, %v767, %v970
    %v972 = vsel %vm886, %v774, %v971
    %v973 = vsel %vm888, %v781, %v972
    %v974 = vsel %vm890, %v788, %v973
    %v975 = vsel %vm892, %v795, %v974
    %v976 = vsel %vm894, %v809, %v802
    %v977 = vsel %vm882, %v816, %v976
    %v978 = vsel %vm884, %v823, %v977
    %v979 = vsel %vm886, %v830, %v978
    %v980 = vsel %vm888, %v837, %v979
    %v981 = vsel %vm890, %v844, %v980
    %v982 = vsel %vm892, %v851, %v981
    %v987 = vpack.c.bf16 %v901, %v919
    %v988 = vpack.c.bf16 %v968, %v961
    %v989 = vpack.c.bf16 %v953, %v929
    %v990 = vpack.c.bf16 %v914, %v920
    %v991 = vpack.c.bf16 %v982, %v975
    %v992 = vpack.c.bf16 %v954, %v942
    %v993 = vld [vmem:[#allocation10] sm:$0xf]
    %v994 = vld [vmem:[#allocation10 + $0x4] sm:$0xf]
    %v995 = vld [vmem:[#allocation10 + $0x8] sm:$0xf]
    %v996 = vld [vmem:[#allocation10 + $0xc] sm:$0xf]
    %v997 = vld [vmem:[#allocation10 + $0x10] sm:$0xf]
    %v998 = vld [vmem:[#allocation10 + $0x14] sm:$0xf]
    %v999 = vld [vmem:[#allocation10 + $0x18] sm:$0xf]
    %v1000 = vld [vmem:[#allocation10 + $0x1c] sm:$0xf]
    %v1001 = vld [vmem:[#allocation10 + $0x20] sm:$0xf]
    %v1002 = vld [vmem:[#allocation10 + $0x24] sm:$0xf]
    %v1003 = vld [vmem:[#allocation10 + $0x28] sm:$0xf]
    %v1004 = vld [vmem:[#allocation10 + $0x2c] sm:$0xf]
    %v1005 = vld [vmem:[#allocation10 + $0x30] sm:$0xf]
    %v1006 = vld [vmem:[#allocation10 + $0x34] sm:$0xf]
    %v1007 = vld [vmem:[#allocation10 + $0x38] sm:$0xf]
    %v1008 = vld [vmem:[#allocation10 + $0x3c] sm:$0xf]
    %v1009 = vld [vmem:[#allocation10 + $0x40] sm:$0xf]
    %v1010 = vld [vmem:[#allocation10 + $0x44] sm:$0xf]
    %v1011 = vld [vmem:[#allocation10 + $0x48] sm:$0xf]
    %v1012 = vld [vmem:[#allocation10 + $0x4c] sm:$0xf]
    %v1013 = vld [vmem:[#allocation10 + $0x50] sm:$0xf]
    %v1014 = vld [vmem:[#allocation10 + $0x54] sm:$0xf]
    %v1015 = vld [vmem:[#allocation10 + $0x58] sm:$0xf]
    %v1016 = vld [vmem:[#allocation10 + $0x5c] sm:$0xf]
    %v1017 = vld [vmem:[#allocation10 + $0x60] sm:$0xf]
    %v1018 = vld [vmem:[#allocation10 + $0x64] sm:$0xf]
    %v1019 = vld [vmem:[#allocation10 + $0x68] sm:$0xf]
    %v1020 = vld [vmem:[#allocation10 + $0x6c] sm:$0xf]
    %v1021 = vld [vmem:[#allocation10 + $0x70] sm:$0xf]
    %v1022 = vld [vmem:[#allocation10 + $0x74] sm:$0xf]
    %v1023 = vld [vmem:[#allocation10 + $0x78] sm:$0xf]
    %v1024 = vld [vmem:[#allocation10 + $0x7c] sm:$0xf]
    %v1025 = vld [vmem:[#allocation10 + $0x80] sm:$0xf]
    %v1026 = vld [vmem:[#allocation10 + $0x84] sm:$0xf]
    %v1027 = vld [vmem:[#allocation10 + $0x88] sm:$0xf]
    %v1028 = vld [vmem:[#allocation10 + $0x8c] sm:$0xf]
    %v1029 = vld [vmem:[#allocation10 + $0x90] sm:$0xf]
    %v1030 = vld [vmem:[#allocation10 + $0x94] sm:$0xf]
    %v1031 = vld [vmem:[#allocation10 + $0x98] sm:$0xf]
    %v1032 = vld [vmem:[#allocation10 + $0x9c] sm:$0xf]
    %v1033 = vld [vmem:[#allocation10 + $0xa0] sm:$0xf]
    %v1034 = vld [vmem:[#allocation10 + $0xa4] sm:$0xf]
    %v1035 = vld [vmem:[#allocation10 + $0xa8] sm:$0xf]
    %v1036 = vld [vmem:[#allocation10 + $0xac] sm:$0xf]
    %v1037 = vld [vmem:[#allocation10 + $0xb0] sm:$0xf]
    %v1038 = vld [vmem:[#allocation10 + $0xb4] sm:$0xf]
    %v1039 = vld [vmem:[#allocation10 + $0xb8] sm:$0xf]
    %v1040 = vld [vmem:[#allocation10 + $0xbc] sm:$0xf]
    %v1041 = vld [vmem:[#allocation11] sm:$0x1]
    %v1043 = vlaneseq
    %v1044 = vshrl.u32 %v1043, 7
    %v1045 = vsub.s32 0, %v1044
    %v1046 = vrot.slane %v1041, %v1045
    %v1096 = vunpack.c.l.b16 %v993
    %v1097 = vunpack.c.l.b16 %v994
    %v1098 = vunpack.c.l.b16 %v995
    %v1099 = vunpack.c.l.b16 %v996
    %v1100 = vunpack.c.l.b16 %v997
    %v1101 = vunpack.c.l.b16 %v998
    %v1102 = vunpack.c.l.b16 %v999
    %v1103 = vunpack.c.l.b16 %v1000
    %v1104 = vunpack.c.l.b16 %v1001
    %v1105 = vunpack.c.l.b16 %v1002
    %v1106 = vunpack.c.l.b16 %v1003
    %v1107 = vunpack.c.l.b16 %v1004
    %v1108 = vunpack.c.l.b16 %v1005
    %v1109 = vunpack.c.l.b16 %v1006
    %v1110 = vunpack.c.l.b16 %v1007
    %v1111 = vunpack.c.l.b16 %v1008
    %v1112 = vunpack.c.l.b16 %v1009
    %v1113 = vunpack.c.l.b16 %v1010
    %v1114 = vunpack.c.l.b16 %v1011
    %v1115 = vunpack.c.l.b16 %v1012
    %v1116 = vunpack.c.l.b16 %v1013
    %v1117 = vunpack.c.l.b16 %v1014
    %v1118 = vunpack.c.l.b16 %v1015
    %v1119 = vunpack.c.l.b16 %v1016
    %v1120 = vunpack.c.l.b16 %v1017
    %v1121 = vunpack.c.l.b16 %v1018
    %v1122 = vunpack.c.l.b16 %v1019
    %v1123 = vunpack.c.l.b16 %v1020
    %v1124 = vunpack.c.l.b16 %v1021
    %v1125 = vunpack.c.l.b16 %v1022
    %v1126 = vunpack.c.l.b16 %v1023
    %v1127 = vunpack.c.l.b16 %v1024
    %v1128 = vunpack.c.l.b16 %v1025
    %v1129 = vunpack.c.l.b16 %v1026
    %v1130 = vunpack.c.l.b16 %v1027
    %v1131 = vunpack.c.l.b16 %v1028
    %v1132 = vunpack.c.l.b16 %v1029
    %v1133 = vunpack.c.l.b16 %v1030
    %v1134 = vunpack.c.l.b16 %v1031
    %v1135 = vunpack.c.l.b16 %v1032
    %v1136 = vunpack.c.l.b16 %v1033
    %v1137 = vunpack.c.l.b16 %v1034
    %v1138 = vunpack.c.l.b16 %v1035
    %v1139 = vunpack.c.l.b16 %v1036
    %v1140 = vunpack.c.l.b16 %v1037
    %v1141 = vunpack.c.l.b16 %v1038
    %v1142 = vunpack.c.l.b16 %v1039
    %v1143 = vunpack.c.l.b16 %v1040
    %v1144 = vpack.c.b16 %v1097, %v1096
    %v1145 = vpack.c.b16 %v1099, %v1098
    %v1146 = vpack.c.b16 %v1101, %v1100
    %v1147 = vpack.c.b16 %v1103, %v1102
    %v1148 = vpack.c.b16 %v1105, %v1104
    %v1149 = vpack.c.b16 %v1107, %v1106
    %v1150 = vpack.c.b16 %v1109, %v1108
    %v1151 = vpack.c.b16 %v1111, %v1110
    %v1152 = vpack.c.b16 %v1113, %v1112
    %v1153 = vpack.c.b16 %v1115, %v1114
    %v1154 = vpack.c.b16 %v1117, %v1116
    %v1155 = vpack.c.b16 %v1119, %v1118
    %v1156 = vpack.c.b16 %v1121, %v1120
    %v1157 = vpack.c.b16 %v1123, %v1122
    %v1158 = vpack.c.b16 %v1125, %v1124
    %v1159 = vpack.c.b16 %v1127, %v1126
    %v1160 = vpack.c.b16 %v1129, %v1128
    %v1161 = vpack.c.b16 %v1131, %v1130
    %v1162 = vpack.c.b16 %v1133, %v1132
    %v1163 = vpack.c.b16 %v1135, %v1134
    %v1164 = vpack.c.b16 %v1137, %v1136
    %v1165 = vpack.c.b16 %v1139, %v1138
    %v1166 = vpack.c.b16 %v1141, %v1140
    %v1167 = vpack.c.b16 %v1143, %v1142
    %1192 = vmatprep.subr.bf16.mxu0 0
    %1193 = vmatpush1.bf16.msra.mxu0 %v1144
    %1194 = vmatprep.subr.bf16.mxu0 0
    %1195 = vmatpush1.bf16.msra.mxu0 %v1145
    %1196 = vmatprep.subr.bf16.mxu0 0
    %1197 = vmatpush1.bf16.msra.mxu0 %v1146
    %1198 = vmatprep.subr.bf16.mxu0 0
    %1199 = vmatpush1.bf16.msra.mxu0 %v1147
    %1200 = vmatprep.subr.bf16.mxu0 0
    %1201 = vmatpush1.bf16.msra.mxu0 %v1148
    %1202 = vmatprep.subr.bf16.mxu0 0
    %1203 = vmatpush1.bf16.msra.mxu0 %v1149
    %1204 = vmatprep.subr.bf16.mxu0 0
    %1205 = vmatpush1.bf16.msra.mxu0 %v1150
    %1206 = vmatprep.subr.bf16.mxu0 0
    %1207 = vmatpush1.bf16.msra.mxu0 %v1151
    %1208 = vmatprep.subr.bf16.mxu0 0
    %1209 = vmatpush1.bf16.msra.mxu0 %v1152
    %1210 = vmatprep.subr.bf16.mxu0 0
    %1211 = vmatpush1.bf16.msra.mxu0 %v1153
    %1212 = vmatprep.subr.bf16.mxu0 0
    %1213 = vmatpush1.bf16.msra.mxu0 %v1154
    %1214 = vmatprep.subr.bf16.mxu0 0
    %1215 = vmatpush1.bf16.msra.mxu0 %v1155
    %1216 = vmatprep.subr.bf16.mxu0 0
    %1217 = vmatpush1.bf16.msra.mxu0 %v1156
    %1218 = vmatprep.subr.bf16.mxu0 0
    %1219 = vmatpush1.bf16.msra.mxu0 %v1157
    %1220 = vmatprep.subr.bf16.mxu0 0
    %1221 = vmatpush1.bf16.msra.mxu0 %v1158
    %1222 = vmatprep.subr.bf16.mxu0 0
    %1223 = vmatpush1.bf16.msra.mxu0 %v1159
    %1224 = vmatprep.mubr.bf16.mxu0 %v988
    %1225 = vmatmul.mubr.bf16.gmra.mrb[0].mxu0 %v987
    %v1226 = vpop.f32.mrb[0].mxu0
    %v1227 = vadd.f32 %v1046, %v1226
    %v1228 = vpop.f32.mrb[0].mxu0
    %v1229 = vpop.f32.mrb[0].mxu0
    %v1230 = vadd.f32 %v1046, %v1229
    %v1231 = vpop.f32.mrb[0].mxu0
    %1232 = vmatprep.mubr.bf16.mxu0 %v991
    %1233 = vmatmul.mubr.bf16.gmra.mrb[0].mxu0 %v990
    %v1234 = vpop.f32.mrb[0].mxu0
    %v1235 = vadd.f32 %v1046, %v1234
    %v1236 = vpop.f32.mrb[0].mxu0
    %v1237 = vpop.f32.mrb[0].mxu0
    %v1238 = vadd.f32 %v1046, %v1237
    %v1239 = vpop.f32.mrb[0].mxu0
    %1240 = vdwg.mxu0
    %1241 = vmatprep.subr.bf16.mxu0 0
    %1242 = vmatpush1.bf16.msra.mxu0 %v1160
    %1243 = vmatprep.subr.bf16.mxu0 0
    %1244 = vmatpush1.bf16.msra.mxu0 %v1161
    %1245 = vmatprep.subr.bf16.mxu0 0
    %1246 = vmatpush1.bf16.msra.mxu0 %v1162
    %1247 = vmatprep.subr.bf16.mxu0 0
    %1248 = vmatpush1.bf16.msra.mxu0 %v1163
    %1249 = vmatprep.subr.bf16.mxu0 0
    %1250 = vmatpush1.bf16.msra.mxu0 %v1164
    %1251 = vmatprep.subr.bf16.mxu0 0
    %1252 = vmatpush1.bf16.msra.mxu0 %v1165
    %1253 = vmatprep.subr.bf16.mxu0 0
    %1254 = vmatpush1.bf16.msra.mxu0 %v1166
    %1255 = vmatprep.subr.bf16.mxu0 0
    %1256 = vmatpush1.bf16.msra.mxu0 %v1167
    %1257 = vmatprep.subr.bf16.mxu0 0
    %1258 = vmatpush1.bf16.msra.mxu0 0
    %1259 = vmatprep.subr.bf16.mxu0 0
    %1260 = vmatpush1.bf16.msra.mxu0 0
    %1261 = vmatprep.subr.bf16.mxu0 0
    %1262 = vmatpush1.bf16.msra.mxu0 0
    %1263 = vmatprep.subr.bf16.mxu0 0
    %1264 = vmatpush1.bf16.msra.mxu0 0
    %1265 = vmatprep.subr.bf16.mxu0 0
    %1266 = vmatpush1.bf16.msra.mxu0 0
    %1267 = vmatprep.subr.bf16.mxu0 0
    %1268 = vmatpush1.bf16.msra.mxu0 0
    %1269 = vmatprep.subr.bf16.mxu0 0
    %1270 = vmatpush1.bf16.msra.mxu0 0
    %1271 = vmatprep.subr.bf16.mxu0 0
    %1272 = vmatpush1.bf16.msra.mxu0 0
    %1273 = vmatprep.mubr.bf16.mxu0 0
    %1274 = vmatmul.mubr.bf16.gmra.mrb[0].mxu0 %v989
    %v1275 = vpop.f32.mrb[0].mxu0
    %v1276 = vadd.f32 %v1227, %v1275
    %v1277 = vpop.f32.mrb[0].mxu0
    %v1278 = vpop.f32.mrb[0].mxu0
    %v1279 = vadd.f32 %v1230, %v1278
    %v1280 = vpop.f32.mrb[0].mxu0
    %1281 = vmatprep.mubr.bf16.mxu0 0
    %1282 = vmatmul.mubr.bf16.gmra.mrb[0].mxu0 %v992
    %v1283 = vpop.f32.mrb[0].mxu0
    %v1284 = vadd.f32 %v1235, %v1283
    %v1285 = vpop.f32.mrb[0].mxu0
    %v1286 = vpop.f32.mrb[0].mxu0
    %v1287 = vadd.f32 %v1238, %v1286
    %v1288 = vpop.f32.mrb[0].mxu0
    %1289 = vdwg.mxu0
    %v1290 = vmax.f32 %v1276, 0.0
    %v1291 = vmax.f32 %v1279, 0.0
    %v1292 = vmax.f32 %v1284, 0.0
    %v1293 = vmax.f32 %v1287, 0.0
    %v1298 = vcombine.high %v1290, %v1290
    %v1300 = vunpack.c.l.s4 1983009808
    %v1301 = vunpack.c.0.s8 %v1300
    %v1302 = vlaneseq
    %v1303 = vshrl.u32 %v1302, 7
    %v1304 = vsub.s32 %v1301, %v1303
    %v1305 = vrot.slane %v1290, %v1304
    %v1307 = vunpack.c.l.s4 1983009808
    %v1308 = vunpack.c.0.s8 %v1307
    %v1309 = vlaneseq
    %v1310 = vshrl.u32 %v1309, 7
    %v1311 = vsub.s32 %v1308, %v1310
    %v1312 = vrot.slane %v1298, %v1311
    %v1313 = vcombine.high %v1305, %v1305
    %v1314 = vcombine.high %v1312, %v1312
    %v1315 = vcombine.high %v1291, %v1291
    %v1317 = vunpack.c.l.s4 1983009808
    %v1318 = vunpack.c.0.s8 %v1317
    %v1319 = vlaneseq
    %v1320 = vshrl.u32 %v1319, 7
    %v1321 = vsub.s32 %v1318, %v1320
    %v1322 = vrot.slane %v1291, %v1321
    %v1324 = vunpack.c.l.s4 1983009808
    %v1325 = vunpack.c.0.s8 %v1324
    %v1326 = vlaneseq
    %v1327 = vshrl.u32 %v1326, 7
    %v1328 = vsub.s32 %v1325, %v1327
    %v1329 = vrot.slane %v1315, %v1328
    %v1330 = vcombine.high %v1322, %v1322
    %v1331 = vcombine.high %v1329, %v1329
    %v1332 = vcombine.high %v1292, %v1292
    %v1334 = vunpack.c.l.s4 1983009808
    %v1335 = vunpack.c.0.s8 %v1334
    %v1336 = vlaneseq
    %v1337 = vshrl.u32 %v1336, 7
    %v1338 = vsub.s32 %v1335, %v1337
    %v1339 = vrot.slane %v1292, %v1338
    %v1341 = vunpack.c.l.s4 1983009808
    %v1342 = vunpack.c.0.s8 %v1341
    %v1343 = vlaneseq
    %v1344 = vshrl.u32 %v1343, 7
    %v1345 = vsub.s32 %v1342, %v1344
    %v1346 = vrot.slane %v1332, %v1345
    %v1347 = vcombine.high %v1339, %v1339
    %v1348 = vcombine.high %v1346, %v1346
    %v1349 = vcombine.high %v1293, %v1293
    %v1351 = vunpack.c.l.s4 1983009808
    %v1352 = vunpack.c.0.s8 %v1351
    %v1353 = vlaneseq
    %v1354 = vshrl.u32 %v1353, 7
    %v1355 = vsub.s32 %v1352, %v1354
    %v1356 = vrot.slane %v1293, %v1355
    %v1358 = vunpack.c.l.s4 1983009808
    %v1359 = vunpack.c.0.s8 %v1358
    %v1360 = vlaneseq
    %v1361 = vshrl.u32 %v1360, 7
    %v1362 = vsub.s32 %v1359, %v1361
    %v1363 = vrot.slane %v1349, %v1362
    %v1364 = vcombine.high %v1356, %v1356
    %v1365 = vcombine.high %v1363, %v1363
    %v1382 = vsel %vm627, %v1305, -inf
    %v1383 = vrot.slane %v1382, 4
    %v1384 = vmax.f32 %v1382, %v1383
    %v1385 = vrot.slane %v1384, 2
    %v1386 = vmax.f32 %v1384, %v1385
    %v1387 = vrot.slane %v1386, 1
    %v1388 = vmax.f32 %v1386, %v1387
    %v1389 = vsel %vm627, %v1313, -inf
    %v1390 = vrot.slane %v1389, 4
    %v1391 = vmax.f32 %v1389, %v1390
    %v1392 = vrot.slane %v1391, 2
    %v1393 = vmax.f32 %v1391, %v1392
    %v1394 = vrot.slane %v1393, 1
    %v1395 = vmax.f32 %v1393, %v1394
    %v1396 = vsel %vm627, %v1312, -inf
    %v1397 = vrot.slane %v1396, 4
    %v1398 = vmax.f32 %v1396, %v1397
    %v1399 = vrot.slane %v1398, 2
    %v1400 = vmax.f32 %v1398, %v1399
    %v1401 = vrot.slane %v1400, 1
    %v1402 = vmax.f32 %v1400, %v1401
    %v1403 = vsel %vm627, %v1314, -inf
    %v1404 = vrot.slane %v1403, 4
    %v1405 = vmax.f32 %v1403, %v1404
    %v1406 = vrot.slane %v1405, 2
    %v1407 = vmax.f32 %v1405, %v1406
    %v1408 = vrot.slane %v1407, 1
    %v1409 = vmax.f32 %v1407, %v1408
    %v1410 = vsel %vm627, %v1322, -inf
    %v1411 = vrot.slane %v1410, 4
    %v1412 = vmax.f32 %v1410, %v1411
    %v1413 = vrot.slane %v1412, 2
    %v1414 = vmax.f32 %v1412, %v1413
    %v1415 = vrot.slane %v1414, 1
    %v1416 = vmax.f32 %v1414, %v1415
    %v1417 = vsel %vm627, %v1330, -inf
    %v1418 = vrot.slane %v1417, 4
    %v1419 = vmax.f32 %v1417, %v1418
    %v1420 = vrot.slane %v1419, 2
    %v1421 = vmax.f32 %v1419, %v1420
    %v1422 = vrot.slane %v1421, 1
    %v1423 = vmax.f32 %v1421, %v1422
    %v1424 = vsel %vm627, %v1329, -inf
    %v1425 = vrot.slane %v1424, 4
    %v1426 = vmax.f32 %v1424, %v1425
    %v1427 = vrot.slane %v1426, 2
    %v1428 = vmax.f32 %v1426, %v1427
    %v1429 = vrot.slane %v1428, 1
    %v1430 = vmax.f32 %v1428, %v1429
    %v1431 = vsel %vm627, %v1331, -inf
    %v1432 = vrot.slane %v1431, 4
    %v1433 = vmax.f32 %v1431, %v1432
    %v1434 = vrot.slane %v1433, 2
    %v1435 = vmax.f32 %v1433, %v1434
    %v1436 = vrot.slane %v1435, 1
    %v1437 = vmax.f32 %v1435, %v1436
    %v1438 = vsel %vm627, %v1339, -inf
    %v1439 = vrot.slane %v1438, 4
    %v1440 = vmax.f32 %v1438, %v1439
    %v1441 = vrot.slane %v1440, 2
    %v1442 = vmax.f32 %v1440, %v1441
    %v1443 = vrot.slane %v1442, 1
    %v1444 = vmax.f32 %v1442, %v1443
    %v1445 = vsel %vm627, %v1347, -inf
    %v1446 = vrot.slane %v1445, 4
    %v1447 = vmax.f32 %v1445, %v1446
    %v1448 = vrot.slane %v1447, 2
    %v1449 = vmax.f32 %v1447, %v1448
    %v1450 = vrot.slane %v1449, 1
    %v1451 = vmax.f32 %v1449, %v1450
    %v1452 = vsel %vm627, %v1346, -inf
    %v1453 = vrot.slane %v1452, 4
    %v1454 = vmax.f32 %v1452, %v1453
    %v1455 = vrot.slane %v1454, 2
    %v1456 = vmax.f32 %v1454, %v1455
    %v1457 = vrot.slane %v1456, 1
    %v1458 = vmax.f32 %v1456, %v1457
    %v1459 = vsel %vm627, %v1348, -inf
    %v1460 = vrot.slane %v1459, 4
    %v1461 = vmax.f32 %v1459, %v1460
    %v1462 = vrot.slane %v1461, 2
    %v1463 = vmax.f32 %v1461, %v1462
    %v1464 = vrot.slane %v1463, 1
    %v1465 = vmax.f32 %v1463, %v1464
    %v1466 = vsel %vm627, %v1356, -inf
    %v1467 = vrot.slane %v1466, 4
    %v1468 = vmax.f32 %v1466, %v1467
    %v1469 = vrot.slane %v1468, 2
    %v1470 = vmax.f32 %v1468, %v1469
    %v1471 = vrot.slane %v1470, 1
    %v1472 = vmax.f32 %v1470, %v1471
    %v1473 = vsel %vm627, %v1364, -inf
    %v1474 = vrot.slane %v1473, 4
    %v1475 = vmax.f32 %v1473, %v1474
    %v1476 = vrot.slane %v1475, 2
    %v1477 = vmax.f32 %v1475, %v1476
    %v1478 = vrot.slane %v1477, 1
    %v1479 = vmax.f32 %v1477, %v1478
    %v1480 = vsel %vm627, %v1363, -inf
    %v1481 = vrot.slane %v1480, 4
    %v1482 = vmax.f32 %v1480, %v1481
    %v1483 = vrot.slane %v1482, 2
    %v1484 = vmax.f32 %v1482, %v1483
    %v1485 = vrot.slane %v1484, 1
    %v1486 = vmax.f32 %v1484, %v1485
    %v1487 = vsel %vm627, %v1365, -inf
    %v1488 = vrot.slane %v1487, 4
    %v1489 = vmax.f32 %v1487, %v1488
    %v1490 = vrot.slane %v1489, 2
    %v1491 = vmax.f32 %v1489, %v1490
    %v1492 = vrot.slane %v1491, 1
    %v1493 = vmax.f32 %v1491, %v1492
    %s1494 = smul.u32 4, 16
    %s1495 = smul.u32 %s1494, 8
    %s1496 = sshll.u32 %s1495, 4
    %1497 = dma.done [#allocation4], %s1496
    %v1498 = vpack.c.bf16 %v1388, %v1388
    %v1499 = vpack.c.bf16 %v1395, %v1395
    %v1500 = vpack.c.bf16 %v1402, %v1402
    %v1501 = vpack.c.bf16 %v1409, %v1409
    %v1502 = vpack.c.bf16 %v1416, %v1416
    %v1503 = vpack.c.bf16 %v1423, %v1423
    %v1504 = vpack.c.bf16 %v1430, %v1430
    %v1505 = vpack.c.bf16 %v1437, %v1437
    %v1506 = vpack.c.bf16 %v1444, %v1444
    %v1507 = vpack.c.bf16 %v1451, %v1451
    %v1508 = vpack.c.bf16 %v1458, %v1458
    %v1509 = vpack.c.bf16 %v1465, %v1465
    %v1510 = vpack.c.bf16 %v1472, %v1472
    %v1511 = vpack.c.bf16 %v1479, %v1479
    %v1512 = vpack.c.bf16 %v1486, %v1486
    %v1513 = vpack.c.bf16 %v1493, %v1493
    %v1514 = vld [vmem:[#allocation2] sm:$0xff]
    %v1515 = vld [vmem:[#allocation2 + $0x8] sm:$0xff]
    %v1516 = vld [vmem:[#allocation2 + $0x10] sm:$0xff]
    %v1517 = vld [vmem:[#allocation2 + $0x18] sm:$0xff]
    %v1518 = vld [vmem:[#allocation2 + $0x20] sm:$0xff]
    %v1519 = vld [vmem:[#allocation2 + $0x28] sm:$0xff]
    %v1520 = vld [vmem:[#allocation2 + $0x30] sm:$0xff]
    %v1521 = vld [vmem:[#allocation2 + $0x38] sm:$0xff]
    %v1522 = vld [vmem:[#allocation2 + $0x40] sm:$0xff]
    %v1523 = vld [vmem:[#allocation2 + $0x48] sm:$0xff]
    %v1524 = vld [vmem:[#allocation2 + $0x50] sm:$0xff]
    %v1525 = vld [vmem:[#allocation2 + $0x58] sm:$0xff]
    %v1526 = vld [vmem:[#allocation2 + $0x60] sm:$0xff]
    %v1527 = vld [vmem:[#allocation2 + $0x68] sm:$0xff]
    %v1528 = vld [vmem:[#allocation2 + $0x70] sm:$0xff]
    %v1529 = vld [vmem:[#allocation2 + $0x78] sm:$0xff]
    %v1530 = vld [vmem:[#allocation2 + $0x80] sm:$0xff]
    %v1531 = vld [vmem:[#allocation2 + $0x88] sm:$0xff]
    %v1532 = vld [vmem:[#allocation2 + $0x90] sm:$0xff]
    %v1533 = vld [vmem:[#allocation2 + $0x98] sm:$0xff]
    %v1534 = vld [vmem:[#allocation2 + $0xa0] sm:$0xff]
    %v1535 = vld [vmem:[#allocation2 + $0xa8] sm:$0xff]
    %v1536 = vld [vmem:[#allocation2 + $0xb0] sm:$0xff]
    %v1537 = vld [vmem:[#allocation2 + $0xb8] sm:$0xff]
    %v1538 = vld [vmem:[#allocation2 + $0xc0] sm:$0xff]
    %v1539 = vld [vmem:[#allocation2 + $0xc8] sm:$0xff]
    %v1540 = vld [vmem:[#allocation2 + $0xd0] sm:$0xff]
    %v1541 = vld [vmem:[#allocation2 + $0xd8] sm:$0xff]
    %v1542 = vld [vmem:[#allocation2 + $0xe0] sm:$0xff]
    %v1543 = vld [vmem:[#allocation2 + $0xe8] sm:$0xff]
    %v1544 = vld [vmem:[#allocation2 + $0xf0] sm:$0xff]
    %v1545 = vld [vmem:[#allocation2 + $0xf8] sm:$0xff]
    %v1546 = vld [vmem:[#allocation2 + $0x100] sm:$0xff]
    %v1547 = vld [vmem:[#allocation2 + $0x108] sm:$0xff]
    %v1548 = vld [vmem:[#allocation2 + $0x110] sm:$0xff]
    %v1549 = vld [vmem:[#allocation2 + $0x118] sm:$0xff]
    %v1550 = vld [vmem:[#allocation2 + $0x120] sm:$0xff]
    %v1551 = vld [vmem:[#allocation2 + $0x128] sm:$0xff]
    %v1552 = vld [vmem:[#allocation2 + $0x130] sm:$0xff]
    %v1553 = vld [vmem:[#allocation2 + $0x138] sm:$0xff]
    %v1554 = vld [vmem:[#allocation2 + $0x140] sm:$0xff]
    %v1555 = vld [vmem:[#allocation2 + $0x148] sm:$0xff]
    %v1556 = vld [vmem:[#allocation2 + $0x150] sm:$0xff]
    %v1557 = vld [vmem:[#allocation2 + $0x158] sm:$0xff]
    %v1558 = vld [vmem:[#allocation2 + $0x160] sm:$0xff]
    %v1559 = vld [vmem:[#allocation2 + $0x168] sm:$0xff]
    %v1560 = vld [vmem:[#allocation2 + $0x170] sm:$0xff]
    %v1561 = vld [vmem:[#allocation2 + $0x178] sm:$0xff]
    %v1562 = vld [vmem:[#allocation2 + $0x180] sm:$0xff]
    %v1563 = vld [vmem:[#allocation2 + $0x188] sm:$0xff]
    %v1564 = vld [vmem:[#allocation2 + $0x190] sm:$0xff]
    %v1565 = vld [vmem:[#allocation2 + $0x198] sm:$0xff]
    %v1566 = vld [vmem:[#allocation2 + $0x1a0] sm:$0xff]
    %v1567 = vld [vmem:[#allocation2 + $0x1a8] sm:$0xff]
    %v1568 = vld [vmem:[#allocation2 + $0x1b0] sm:$0xff]
    %v1569 = vld [vmem:[#allocation2 + $0x1b8] sm:$0xff]
    %v1570 = vld [vmem:[#allocation2 + $0x1c0] sm:$0xff]
    %v1571 = vld [vmem:[#allocation2 + $0x1c8] sm:$0xff]
    %v1572 = vld [vmem:[#allocation2 + $0x1d0] sm:$0xff]
    %v1573 = vld [vmem:[#allocation2 + $0x1d8] sm:$0xff]
    %v1574 = vld [vmem:[#allocation2 + $0x1e0] sm:$0xff]
    %v1575 = vld [vmem:[#allocation2 + $0x1e8] sm:$0xff]
    %v1576 = vld [vmem:[#allocation2 + $0x1f0] sm:$0xff]
    %v1577 = vld [vmem:[#allocation2 + $0x1f8] sm:$0xff]
    %v1578 = vld [vmem:[#allocation13] sm:$0xff]
    %v1580 = vlaneseq
    %v1581 = vshrl.u32 %v1580, 7
    %v1582 = vsub.s32 0, %v1581
    %v1583 = vrot.slane %v1578, %v1582
    %v1584 = vlaneseq
    %v1585 = vshrl.u32 %v1584, 7
    %v1586 = vsub.s32 1, %v1585
    %v1587 = vrot.slane %v1578, %v1586
    %v1588 = vlaneseq
    %v1589 = vshrl.u32 %v1588, 7
    %v1590 = vsub.s32 2, %v1589
    %v1591 = vrot.slane %v1578, %v1590
    %v1592 = vlaneseq
    %v1593 = vshrl.u32 %v1592, 7
    %v1594 = vsub.s32 3, %v1593
    %v1595 = vrot.slane %v1578, %v1594
    %v1596 = vlaneseq
    %v1597 = vshrl.u32 %v1596, 7
    %v1598 = vsub.s32 4, %v1597
    %v1599 = vrot.slane %v1578, %v1598
    %v1600 = vlaneseq
    %v1601 = vshrl.u32 %v1600, 7
    %v1602 = vsub.s32 5, %v1601
    %v1603 = vrot.slane %v1578, %v1602
    %v1604 = vlaneseq
    %v1605 = vshrl.u32 %v1604, 7
    %v1606 = vsub.s32 6, %v1605
    %v1607 = vrot.slane %v1578, %v1606
    %v1608 = vlaneseq
    %v1609 = vshrl.u32 %v1608, 7
    %v1610 = vsub.s32 7, %v1609
    %v1611 = vrot.slane %v1578, %v1610
    %v1636 = vunpack.c.l.b16 %v1498
    %v1637 = vunpack.c.l.b16 %v1499
    %v1638 = vunpack.c.l.b16 %v1500
    %v1639 = vunpack.c.l.b16 %v1501
    %v1640 = vunpack.c.l.b16 %v1502
    %v1641 = vunpack.c.l.b16 %v1503
    %v1642 = vunpack.c.l.b16 %v1504
    %v1643 = vunpack.c.l.b16 %v1505
    %v1644 = vunpack.c.l.b16 %v1506
    %v1645 = vunpack.c.l.b16 %v1507
    %v1646 = vunpack.c.l.b16 %v1508
    %v1647 = vunpack.c.l.b16 %v1509
    %v1648 = vunpack.c.l.b16 %v1510
    %v1649 = vunpack.c.l.b16 %v1511
    %v1650 = vunpack.c.l.b16 %v1512
    %v1651 = vunpack.c.l.b16 %v1513
    %v1652 = vsel %vm894, %v1637, %v1636
    %v1653 = vsel %vm882, %v1638, %v1652
    %v1654 = vsel %vm884, %v1639, %v1653
    %v1655 = vsel %vm886, %v1640, %v1654
    %v1656 = vsel %vm888, %v1641, %v1655
    %v1657 = vsel %vm890, %v1642, %v1656
    %v1658 = vsel %vm892, %v1643, %v1657
    %v1659 = vsel %vm894, %v1645, %v1644
    %v1660 = vsel %vm882, %v1646, %v1659
    %v1661 = vsel %vm884, %v1647, %v1660
    %v1662 = vsel %vm886, %v1648, %v1661
    %v1663 = vsel %vm888, %v1649, %v1662
    %v1664 = vsel %vm890, %v1650, %v1663
    %v1665 = vsel %vm892, %v1651, %v1664
    %v1666 = vpack.c.b16 %v1665, %v1658
    %1668 = vmatprep.subr.bf16.mxu0 %v1515
    %1669 = vmatpush1.bf16.msra.mxu0 %v1514
    %1670 = vmatprep.subr.bf16.mxu0 %v1523
    %1671 = vmatpush1.bf16.msra.mxu0 %v1522
    %1672 = vmatprep.subr.bf16.mxu0 %v1531
    %1673 = vmatpush1.bf16.msra.mxu0 %v1530
    %1674 = vmatprep.subr.bf16.mxu0 %v1539
    %1675 = vmatpush1.bf16.msra.mxu0 %v1538
    %1676 = vmatprep.subr.bf16.mxu0 %v1547
    %1677 = vmatpush1.bf16.msra.mxu0 %v1546
    %1678 = vmatprep.subr.bf16.mxu0 %v1555
    %1679 = vmatpush1.bf16.msra.mxu0 %v1554
    %1680 = vmatprep.subr.bf16.mxu0 %v1563
    %1681 = vmatpush1.bf16.msra.mxu0 %v1562
    %1682 = vmatprep.subr.bf16.mxu0 %v1571
    %1683 = vmatpush1.bf16.msra.mxu0 %v1570
    %1684 = vmatprep.subr.bf16.mxu0 0
    %1685 = vmatpush1.bf16.msra.mxu0 0
    %1686 = vmatprep.subr.bf16.mxu0 0
    %1687 = vmatpush1.bf16.msra.mxu0 0
    %1688 = vmatprep.subr.bf16.mxu0 0
    %1689 = vmatpush1.bf16.msra.mxu0 0
    %1690 = vmatprep.subr.bf16.mxu0 0
    %1691 = vmatpush1.bf16.msra.mxu0 0
    %1692 = vmatprep.subr.bf16.mxu0 0
    %1693 = vmatpush1.bf16.msra.mxu0 0
    %1694 = vmatprep.subr.bf16.mxu0 0
    %1695 = vmatpush1.bf16.msra.mxu0 0
    %1696 = vmatprep.subr.bf16.mxu0 0
    %1697 = vmatpush1.bf16.msra.mxu0 0
    %1698 = vmatprep.subr.bf16.mxu0 0
    %1699 = vmatpush1.bf16.msra.mxu0 0
    %1700 = vmatprep.mubr.bf16.mxu0 0
    %1701 = vmatmul.mubr.bf16.gmra.mrb[0].mxu0 %v1666
    %v1702 = vpop.f32.mrb[0].mxu0
    %v1703 = vadd.f32 %v1583, %v1702
    %v1704 = vpop.f32.mrb[0].mxu0
    %v1705 = vadd.f32 %v1587, %v1704
    %v1706 = vpop.f32.mrb[0].mxu0
    %v1707 = vadd.f32 %v1583, %v1706
    %v1708 = vpop.f32.mrb[0].mxu0
    %v1709 = vadd.f32 %v1587, %v1708
    %1710 = vdwg.mxu0
    %1711 = vmatprep.subr.bf16.mxu0 %v1517
    %1712 = vmatpush1.bf16.msra.mxu0 %v1516
    %1713 = vmatprep.subr.bf16.mxu0 %v1525
    %1714 = vmatpush1.bf16.msra.mxu0 %v1524
    %1715 = vmatprep.subr.bf16.mxu0 %v1533
    %1716 = vmatpush1.bf16.msra.mxu0 %v1532
    %1717 = vmatprep.subr.bf16.mxu0 %v1541
    %1718 = vmatpush1.bf16.msra.mxu0 %v1540
    %1719 = vmatprep.subr.bf16.mxu0 %v1549
    %1720 = vmatpush1.bf16.msra.mxu0 %v1548
    %1721 = vmatprep.subr.bf16.mxu0 %v1557
    %1722 = vmatpush1.bf16.msra.mxu0 %v1556
    %1723 = vmatprep.subr.bf16.mxu0 %v1565
    %1724 = vmatpush1.bf16.msra.mxu0 %v1564
    %1725 = vmatprep.subr.bf16.mxu0 %v1573
    %1726 = vmatpush1.bf16.msra.mxu0 %v1572
    %1727 = vmatprep.subr.bf16.mxu0 0
    %1728 = vmatpush1.bf16.msra.mxu0 0
    %1729 = vmatprep.subr.bf16.mxu0 0
    %1730 = vmatpush1.bf16.msra.mxu0 0
    %1731 = vmatprep.subr.bf16.mxu0 0
    %1732 = vmatpush1.bf16.msra.mxu0 0
    %1733 = vmatprep.subr.bf16.mxu0 0
    %1734 = vmatpush1.bf16.msra.mxu0 0
    %1735 = vmatprep.subr.bf16.mxu0 0
    %1736 = vmatpush1.bf16.msra.mxu0 0
    %1737 = vmatprep.subr.bf16.mxu0 0
    %1738 = vmatpush1.bf16.msra.mxu0 0
    %1739 = vmatprep.subr.bf16.mxu0 0
    %1740 = vmatpush1.bf16.msra.mxu0 0
    %1741 = vmatprep.subr.bf16.mxu0 0
    %1742 = vmatpush1.bf16.msra.mxu0 0
    %1743 = vmatprep.mubr.bf16.mxu0 0
    %1744 = vmatmul.mubr.bf16.gmra.mrb[0].mxu0 %v1666
    %v1745 = vpop.f32.mrb[0].mxu0
    %v1746 = vadd.f32 %v1591, %v1745
    %v1747 = vpop.f32.mrb[0].mxu0
    %v1748 = vadd.f32 %v1595, %v1747
    %v1749 = vpop.f32.mrb[0].mxu0
    %v1750 = vadd.f32 %v1591, %v1749
    %v1751 = vpop.f32.mrb[0].mxu0
    %v1752 = vadd.f32 %v1595, %v1751
    %1753 = vdwg.mxu0
    %1754 = vmatprep.subr.bf16.mxu0 %v1519
    %1755 = vmatpush1.bf16.msra.mxu0 %v1518
    %1756 = vmatprep.subr.bf16.mxu0 %v1527
    %1757 = vmatpush1.bf16.msra.mxu0 %v1526
    %1758 = vmatprep.subr.bf16.mxu0 %v1535
    %1759 = vmatpush1.bf16.msra.mxu0 %v1534
    %1760 = vmatprep.subr.bf16.mxu0 %v1543
    %1761 = vmatpush1.bf16.msra.mxu0 %v1542
    %1762 = vmatprep.subr.bf16.mxu0 %v1551
    %1763 = vmatpush1.bf16.msra.mxu0 %v1550
    %1764 = vmatprep.subr.bf16.mxu0 %v1559
    %1765 = vmatpush1.bf16.msra.mxu0 %v1558
    %1766 = vmatprep.subr.bf16.mxu0 %v1567
    %1767 = vmatpush1.bf16.msra.mxu0 %v1566
    %1768 = vmatprep.subr.bf16.mxu0 %v1575
    %1769 = vmatpush1.bf16.msra.mxu0 %v1574
    %1770 = vmatprep.subr.bf16.mxu0 0
    %1771 = vmatpush1.bf16.msra.mxu0 0
    %1772 = vmatprep.subr.bf16.mxu0 0
    %1773 = vmatpush1.bf16.msra.mxu0 0
    %1774 = vmatprep.subr.bf16.mxu0 0
    %1775 = vmatpush1.bf16.msra.mxu0 0
    %1776 = vmatprep.subr.bf16.mxu0 0
    %1777 = vmatpush1.bf16.msra.mxu0 0
    %1778 = vmatprep.subr.bf16.mxu0 0
    %1779 = vmatpush1.bf16.msra.mxu0 0
    %1780 = vmatprep.subr.bf16.mxu0 0
    %1781 = vmatpush1.bf16.msra.mxu0 0
    %1782 = vmatprep.subr.bf16.mxu0 0
    %1783 = vmatpush1.bf16.msra.mxu0 0
    %1784 = vmatprep.subr.bf16.mxu0 0
    %1785 = vmatpush1.bf16.msra.mxu0 0
    %1786 = vmatprep.mubr.bf16.mxu0 0
    %1787 = vmatmul.mubr.bf16.gmra.mrb[0].mxu0 %v1666
    %v1788 = vpop.f32.mrb[0].mxu0
    %v1789 = vadd.f32 %v1599, %v1788
    %v1790 = vpop.f32.mrb[0].mxu0
    %v1791 = vadd.f32 %v1603, %v1790
    %v1792 = vpop.f32.mrb[0].mxu0
    %v1793 = vadd.f32 %v1599, %v1792
    %v1794 = vpop.f32.mrb[0].mxu0
    %v1795 = vadd.f32 %v1603, %v1794
    %1796 = vdwg.mxu0
    %1797 = vmatprep.subr.bf16.mxu0 %v1521
    %1798 = vmatpush1.bf16.msra.mxu0 %v1520
    %1799 = vmatprep.subr.bf16.mxu0 %v1529
    %1800 = vmatpush1.bf16.msra.mxu0 %v1528
    %1801 = vmatprep.subr.bf16.mxu0 %v1537
    %1802 = vmatpush1.bf16.msra.mxu0 %v1536
    %1803 = vmatprep.subr.bf16.mxu0 %v1545
    %1804 = vmatpush1.bf16.msra.mxu0 %v1544
    %1805 = vmatprep.subr.bf16.mxu0 %v1553
    %1806 = vmatpush1.bf16.msra.mxu0 %v1552
    %1807 = vmatprep.subr.bf16.mxu0 %v1561
    %1808 = vmatpush1.bf16.msra.mxu0 %v1560
    %1809 = vmatprep.subr.bf16.mxu0 %v1569
    %1810 = vmatpush1.bf16.msra.mxu0 %v1568
    %1811 = vmatprep.subr.bf16.mxu0 %v1577
    %1812 = vmatpush1.bf16.msra.mxu0 %v1576
    %1813 = vmatprep.subr.bf16.mxu0 0
    %1814 = vmatpush1.bf16.msra.mxu0 0
    %1815 = vmatprep.subr.bf16.mxu0 0
    %1816 = vmatpush1.bf16.msra.mxu0 0
    %1817 = vmatprep.subr.bf16.mxu0 0
    %1818 = vmatpush1.bf16.msra.mxu0 0
    %1819 = vmatprep.subr.bf16.mxu0 0
    %1820 = vmatpush1.bf16.msra.mxu0 0
    %1821 = vmatprep.subr.bf16.mxu0 0
    %1822 = vmatpush1.bf16.msra.mxu0 0
    %1823 = vmatprep.subr.bf16.mxu0 0
    %1824 = vmatpush1.bf16.msra.mxu0 0
    %1825 = vmatprep.subr.bf16.mxu0 0
    %1826 = vmatpush1.bf16.msra.mxu0 0
    %1827 = vmatprep.subr.bf16.mxu0 0
    %1828 = vmatpush1.bf16.msra.mxu0 0
    %1829 = vmatprep.mubr.bf16.mxu0 0
    %1830 = vmatmul.mubr.bf16.gmra.mrb[0].mxu0 %v1666
    %v1831 = vpop.f32.mrb[0].mxu0
    %v1832 = vadd.f32 %v1607, %v1831
    %v1833 = vpop.f32.mrb[0].mxu0
    %v1834 = vadd.f32 %v1611, %v1833
    %v1835 = vpop.f32.mrb[0].mxu0
    %v1836 = vadd.f32 %v1607, %v1835
    %v1837 = vpop.f32.mrb[0].mxu0
    %v1838 = vadd.f32 %v1611, %v1837
    %1839 = vdwg.mxu0
    %s1840 = smul.u32 4, 3
    %s1841 = smul.u32 %s1840, 32
    %s1842 = smul.u32 %s1841, 8
    %s1843 = sshll.u32 %s1842, 4
    %1844 = dma.done %s156, %s1843
    %v1845 = vld [vmem:[#allocation3] sm:$0xff]
    %v1846 = vld [vmem:[#allocation3 + $0x8] sm:$0xff]
    %v1847 = vld [vmem:[#allocation3 + $0x10] sm:$0xff]
    %v1848 = vld [vmem:[#allocation3 + $0x18] sm:$0xff]
    %v1849 = vld [vmem:[#allocation3 + $0x20] sm:$0xff]
    %v1850 = vld [vmem:[#allocation3 + $0x28] sm:$0xff]
    %v1851 = vld [vmem:[#allocation3 + $0x30] sm:$0xff]
    %v1852 = vld [vmem:[#allocation3 + $0x38] sm:$0xff]
    %v1853 = vld [vmem:[#allocation3 + $0x40] sm:$0xff]
    %v1854 = vld [vmem:[#allocation3 + $0x48] sm:$0xff]
    %v1855 = vld [vmem:[#allocation3 + $0x50] sm:$0xff]
    %v1856 = vld [vmem:[#allocation3 + $0x58] sm:$0xff]
    %v1857 = vld [vmem:[#allocation3 + $0x60] sm:$0xff]
    %v1858 = vld [vmem:[#allocation3 + $0x68] sm:$0xff]
    %v1859 = vld [vmem:[#allocation3 + $0x70] sm:$0xff]
    %v1860 = vld [vmem:[#allocation3 + $0x78] sm:$0xff]
    %v1861 = vld [vmem:[#allocation3 + $0x80] sm:$0xff]
    %v1862 = vld [vmem:[#allocation3 + $0x88] sm:$0xff]
    %v1863 = vld [vmem:[#allocation3 + $0x90] sm:$0xff]
    %v1864 = vld [vmem:[#allocation3 + $0x98] sm:$0xff]
    %v1865 = vld [vmem:[#allocation3 + $0xa0] sm:$0xff]
    %v1866 = vld [vmem:[#allocation3 + $0xa8] sm:$0xff]
    %v1867 = vld [vmem:[#allocation3 + $0xb0] sm:$0xff]
    %v1868 = vld [vmem:[#allocation3 + $0xb8] sm:$0xff]
    %v1869 = vld [vmem:[#allocation3 + $0xc0] sm:$0xff]
    %v1870 = vld [vmem:[#allocation3 + $0xc8] sm:$0xff]
    %v1871 = vld [vmem:[#allocation3 + $0xd0] sm:$0xff]
    %v1872 = vld [vmem:[#allocation3 + $0xd8] sm:$0xff]
    %v1873 = vld [vmem:[#allocation3 + $0xe0] sm:$0xff]
    %v1874 = vld [vmem:[#allocation3 + $0xe8] sm:$0xff]
    %v1875 = vld [vmem:[#allocation3 + $0xf0] sm:$0xff]
    %v1876 = vld [vmem:[#allocation3 + $0xf8] sm:$0xff]
    %v1877 = vld [vmem:[#allocation3 + $0x100] sm:$0xff]
    %v1878 = vld [vmem:[#allocation3 + $0x108] sm:$0xff]
    %v1879 = vld [vmem:[#allocation3 + $0x110] sm:$0xff]
    %v1880 = vld [vmem:[#allocation3 + $0x118] sm:$0xff]
    %v1881 = vld [vmem:[#allocation3 + $0x120] sm:$0xff]
    %v1882 = vld [vmem:[#allocation3 + $0x128] sm:$0xff]
    %v1883 = vld [vmem:[#allocation3 + $0x130] sm:$0xff]
    %v1884 = vld [vmem:[#allocation3 + $0x138] sm:$0xff]
    %v1885 = vld [vmem:[#allocation3 + $0x140] sm:$0xff]
    %v1886 = vld [vmem:[#allocation3 + $0x148] sm:$0xff]
    %v1887 = vld [vmem:[#allocation3 + $0x150] sm:$0xff]
    %v1888 = vld [vmem:[#allocation3 + $0x158] sm:$0xff]
    %v1889 = vld [vmem:[#allocation3 + $0x160] sm:$0xff]
    %v1890 = vld [vmem:[#allocation3 + $0x168] sm:$0xff]
    %v1891 = vld [vmem:[#allocation3 + $0x170] sm:$0xff]
    %v1892 = vld [vmem:[#allocation3 + $0x178] sm:$0xff]
    %v1893 = vld [vmem:[#allocation3 + $0x180] sm:$0xff]
    %v1894 = vld [vmem:[#allocation3 + $0x188] sm:$0xff]
    %v1895 = vld [vmem:[#allocation3 + $0x190] sm:$0xff]
    %v1896 = vld [vmem:[#allocation3 + $0x198] sm:$0xff]
    %v1897 = vld [vmem:[#allocation3 + $0x1a0] sm:$0xff]
    %v1898 = vld [vmem:[#allocation3 + $0x1a8] sm:$0xff]
    %v1899 = vld [vmem:[#allocation3 + $0x1b0] sm:$0xff]
    %v1900 = vld [vmem:[#allocation3 + $0x1b8] sm:$0xff]
    %v1901 = vld [vmem:[#allocation3 + $0x1c0] sm:$0xff]
    %v1902 = vld [vmem:[#allocation3 + $0x1c8] sm:$0xff]
    %v1903 = vld [vmem:[#allocation3 + $0x1d0] sm:$0xff]
    %v1904 = vld [vmem:[#allocation3 + $0x1d8] sm:$0xff]
    %v1905 = vld [vmem:[#allocation3 + $0x1e0] sm:$0xff]
    %v1906 = vld [vmem:[#allocation3 + $0x1e8] sm:$0xff]
    %v1907 = vld [vmem:[#allocation3 + $0x1f0] sm:$0xff]
    %v1908 = vld [vmem:[#allocation3 + $0x1f8] sm:$0xff]
    %v1909 = vld [vmem:[#allocation3 + $0x200] sm:$0xff]
    %v1910 = vld [vmem:[#allocation3 + $0x208] sm:$0xff]
    %v1911 = vld [vmem:[#allocation3 + $0x210] sm:$0xff]
    %v1912 = vld [vmem:[#allocation3 + $0x218] sm:$0xff]
    %v1913 = vld [vmem:[#allocation3 + $0x220] sm:$0xff]
    %v1914 = vld [vmem:[#allocation3 + $0x228] sm:$0xff]
    %v1915 = vld [vmem:[#allocation3 + $0x230] sm:$0xff]
    %v1916 = vld [vmem:[#allocation3 + $0x238] sm:$0xff]
    %v1917 = vld [vmem:[#allocation3 + $0x240] sm:$0xff]
    %v1918 = vld [vmem:[#allocation3 + $0x248] sm:$0xff]
    %v1919 = vld [vmem:[#allocation3 + $0x250] sm:$0xff]
    %v1920 = vld [vmem:[#allocation3 + $0x258] sm:$0xff]
    %v1921 = vld [vmem:[#allocation3 + $0x260] sm:$0xff]
    %v1922 = vld [vmem:[#allocation3 + $0x268] sm:$0xff]
    %v1923 = vld [vmem:[#allocation3 + $0x270] sm:$0xff]
    %v1924 = vld [vmem:[#allocation3 + $0x278] sm:$0xff]
    %v1925 = vld [vmem:[#allocation3 + $0x280] sm:$0xff]
    %v1926 = vld [vmem:[#allocation3 + $0x288] sm:$0xff]
    %v1927 = vld [vmem:[#allocation3 + $0x290] sm:$0xff]
    %v1928 = vld [vmem:[#allocation3 + $0x298] sm:$0xff]
    %v1929 = vld [vmem:[#allocation3 + $0x2a0] sm:$0xff]
    %v1930 = vld [vmem:[#allocation3 + $0x2a8] sm:$0xff]
    %v1931 = vld [vmem:[#allocation3 + $0x2b0] sm:$0xff]
    %v1932 = vld [vmem:[#allocation3 + $0x2b8] sm:$0xff]
    %v1933 = vld [vmem:[#allocation3 + $0x2c0] sm:$0xff]
    %v1934 = vld [vmem:[#allocation3 + $0x2c8] sm:$0xff]
    %v1935 = vld [vmem:[#allocation3 + $0x2d0] sm:$0xff]
    %v1936 = vld [vmem:[#allocation3 + $0x2d8] sm:$0xff]
    %v1937 = vld [vmem:[#allocation3 + $0x2e0] sm:$0xff]
    %v1938 = vld [vmem:[#allocation3 + $0x2e8] sm:$0xff]
    %v1939 = vld [vmem:[#allocation3 + $0x2f0] sm:$0xff]
    %v1940 = vld [vmem:[#allocation3 + $0x2f8] sm:$0xff]
    %v1941 = vld [vmem:[#allocation3 + $0x300] sm:$0xff]
    %v1942 = vld [vmem:[#allocation3 + $0x308] sm:$0xff]
    %v1943 = vld [vmem:[#allocation3 + $0x310] sm:$0xff]
    %v1944 = vld [vmem:[#allocation3 + $0x318] sm:$0xff]
    %v1945 = vld [vmem:[#allocation3 + $0x320] sm:$0xff]
    %v1946 = vld [vmem:[#allocation3 + $0x328] sm:$0xff]
    %v1947 = vld [vmem:[#allocation3 + $0x330] sm:$0xff]
    %v1948 = vld [vmem:[#allocation3 + $0x338] sm:$0xff]
    %v1949 = vld [vmem:[#allocation3 + $0x340] sm:$0xff]
    %v1950 = vld [vmem:[#allocation3 + $0x348] sm:$0xff]
    %v1951 = vld [vmem:[#allocation3 + $0x350] sm:$0xff]
    %v1952 = vld [vmem:[#allocation3 + $0x358] sm:$0xff]
    %v1953 = vld [vmem:[#allocation3 + $0x360] sm:$0xff]
    %v1954 = vld [vmem:[#allocation3 + $0x368] sm:$0xff]
    %v1955 = vld [vmem:[#allocation3 + $0x370] sm:$0xff]
    %v1956 = vld [vmem:[#allocation3 + $0x378] sm:$0xff]
    %v1957 = vld [vmem:[#allocation3 + $0x380] sm:$0xff]
    %v1958 = vld [vmem:[#allocation3 + $0x388] sm:$0xff]
    %v1959 = vld [vmem:[#allocation3 + $0x390] sm:$0xff]
    %v1960 = vld [vmem:[#allocation3 + $0x398] sm:$0xff]
    %v1961 = vld [vmem:[#allocation3 + $0x3a0] sm:$0xff]
    %v1962 = vld [vmem:[#allocation3 + $0x3a8] sm:$0xff]
    %v1963 = vld [vmem:[#allocation3 + $0x3b0] sm:$0xff]
    %v1964 = vld [vmem:[#allocation3 + $0x3b8] sm:$0xff]
    %v1965 = vld [vmem:[#allocation3 + $0x3c0] sm:$0xff]
    %v1966 = vld [vmem:[#allocation3 + $0x3c8] sm:$0xff]
    %v1967 = vld [vmem:[#allocation3 + $0x3d0] sm:$0xff]
    %v1968 = vld [vmem:[#allocation3 + $0x3d8] sm:$0xff]
    %v1969 = vld [vmem:[#allocation3 + $0x3e0] sm:$0xff]
    %v1970 = vld [vmem:[#allocation3 + $0x3e8] sm:$0xff]
    %v1971 = vld [vmem:[#allocation3 + $0x3f0] sm:$0xff]
    %v1972 = vld [vmem:[#allocation3 + $0x3f8] sm:$0xff]
    %s1973 = scalar_lea.vmem [#allocation3], 1024
    %v1974 = vld [vmem:[%s1973] sm:$0xff]
    %v1975 = vld [vmem:[%s1973 + $0x8] sm:$0xff]
    %v1976 = vld [vmem:[%s1973 + $0x10] sm:$0xff]
    %v1977 = vld [vmem:[%s1973 + $0x18] sm:$0xff]
    %v1978 = vld [vmem:[%s1973 + $0x20] sm:$0xff]
    %v1979 = vld [vmem:[%s1973 + $0x28] sm:$0xff]
    %v1980 = vld [vmem:[%s1973 + $0x30] sm:$0xff]
    %v1981 = vld [vmem:[%s1973 + $0x38] sm:$0xff]
    %v1982 = vld [vmem:[%s1973 + $0x40] sm:$0xff]
    %v1983 = vld [vmem:[%s1973 + $0x48] sm:$0xff]
    %v1984 = vld [vmem:[%s1973 + $0x50] sm:$0xff]
    %v1985 = vld [vmem:[%s1973 + $0x58] sm:$0xff]
    %v1986 = vld [vmem:[%s1973 + $0x60] sm:$0xff]
    %v1987 = vld [vmem:[%s1973 + $0x68] sm:$0xff]
    %v1988 = vld [vmem:[%s1973 + $0x70] sm:$0xff]
    %v1989 = vld [vmem:[%s1973 + $0x78] sm:$0xff]
    %v1990 = vld [vmem:[%s1973 + $0x80] sm:$0xff]
    %v1991 = vld [vmem:[%s1973 + $0x88] sm:$0xff]
    %v1992 = vld [vmem:[%s1973 + $0x90] sm:$0xff]
    %v1993 = vld [vmem:[%s1973 + $0x98] sm:$0xff]
    %v1994 = vld [vmem:[%s1973 + $0xa0] sm:$0xff]
    %v1995 = vld [vmem:[%s1973 + $0xa8] sm:$0xff]
    %v1996 = vld [vmem:[%s1973 + $0xb0] sm:$0xff]
    %v1997 = vld [vmem:[%s1973 + $0xb8] sm:$0xff]
    %v1998 = vld [vmem:[%s1973 + $0xc0] sm:$0xff]
    %v1999 = vld [vmem:[%s1973 + $0xc8] sm:$0xff]
    %v2000 = vld [vmem:[%s1973 + $0xd0] sm:$0xff]
    %v2001 = vld [vmem:[%s1973 + $0xd8] sm:$0xff]
    %v2002 = vld [vmem:[%s1973 + $0xe0] sm:$0xff]
    %v2003 = vld [vmem:[%s1973 + $0xe8] sm:$0xff]
    %v2004 = vld [vmem:[%s1973 + $0xf0] sm:$0xff]
    %v2005 = vld [vmem:[%s1973 + $0xf8] sm:$0xff]
    %v2006 = vld [vmem:[%s1973 + $0x100] sm:$0xff]
    %v2007 = vld [vmem:[%s1973 + $0x108] sm:$0xff]
    %v2008 = vld [vmem:[%s1973 + $0x110] sm:$0xff]
    %v2009 = vld [vmem:[%s1973 + $0x118] sm:$0xff]
    %v2010 = vld [vmem:[%s1973 + $0x120] sm:$0xff]
    %v2011 = vld [vmem:[%s1973 + $0x128] sm:$0xff]
    %v2012 = vld [vmem:[%s1973 + $0x130] sm:$0xff]
    %v2013 = vld [vmem:[%s1973 + $0x138] sm:$0xff]
    %v2014 = vld [vmem:[%s1973 + $0x140] sm:$0xff]
    %v2015 = vld [vmem:[%s1973 + $0x148] sm:$0xff]
    %v2016 = vld [vmem:[%s1973 + $0x150] sm:$0xff]
    %v2017 = vld [vmem:[%s1973 + $0x158] sm:$0xff]
    %v2018 = vld [vmem:[%s1973 + $0x160] sm:$0xff]
    %v2019 = vld [vmem:[%s1973 + $0x168] sm:$0xff]
    %v2020 = vld [vmem:[%s1973 + $0x170] sm:$0xff]
    %v2021 = vld [vmem:[%s1973 + $0x178] sm:$0xff]
    %v2022 = vld [vmem:[%s1973 + $0x180] sm:$0xff]
    %v2023 = vld [vmem:[%s1973 + $0x188] sm:$0xff]
    %v2024 = vld [vmem:[%s1973 + $0x190] sm:$0xff]
    %v2025 = vld [vmem:[%s1973 + $0x198] sm:$0xff]
    %v2026 = vld [vmem:[%s1973 + $0x1a0] sm:$0xff]
    %v2027 = vld [vmem:[%s1973 + $0x1a8] sm:$0xff]
    %v2028 = vld [vmem:[%s1973 + $0x1b0] sm:$0xff]
    %v2029 = vld [vmem:[%s1973 + $0x1b8] sm:$0xff]
    %v2030 = vld [vmem:[%s1973 + $0x1c0] sm:$0xff]
    %v2031 = vld [vmem:[%s1973 + $0x1c8] sm:$0xff]
    %v2032 = vld [vmem:[%s1973 + $0x1d0] sm:$0xff]
    %v2033 = vld [vmem:[%s1973 + $0x1d8] sm:$0xff]
    %v2034 = vld [vmem:[%s1973 + $0x1e0] sm:$0xff]
    %v2035 = vld [vmem:[%s1973 + $0x1e8] sm:$0xff]
    %v2036 = vld [vmem:[%s1973 + $0x1f0] sm:$0xff]
    %v2037 = vld [vmem:[%s1973 + $0x1f8] sm:$0xff]
    %v2038 = vld [vmem:[%s1973 + $0x200] sm:$0xff]
    %v2039 = vld [vmem:[%s1973 + $0x208] sm:$0xff]
    %v2040 = vld [vmem:[%s1973 + $0x210] sm:$0xff]
    %v2041 = vld [vmem:[%s1973 + $0x218] sm:$0xff]
    %v2042 = vld [vmem:[%s1973 + $0x220] sm:$0xff]
    %v2043 = vld [vmem:[%s1973 + $0x228] sm:$0xff]
    %v2044 = vld [vmem:[%s1973 + $0x230] sm:$0xff]
    %v2045 = vld [vmem:[%s1973 + $0x238] sm:$0xff]
    %v2046 = vld [vmem:[%s1973 + $0x240] sm:$0xff]
    %v2047 = vld [vmem:[%s1973 + $0x248] sm:$0xff]
    %v2048 = vld [vmem:[%s1973 + $0x250] sm:$0xff]
    %v2049 = vld [vmem:[%s1973 + $0x258] sm:$0xff]
    %v2050 = vld [vmem:[%s1973 + $0x260] sm:$0xff]
    %v2051 = vld [vmem:[%s1973 + $0x268] sm:$0xff]
    %v2052 = vld [vmem:[%s1973 + $0x270] sm:$0xff]
    %v2053 = vld [vmem:[%s1973 + $0x278] sm:$0xff]
    %v2054 = vld [vmem:[%s1973 + $0x280] sm:$0xff]
    %v2055 = vld [vmem:[%s1973 + $0x288] sm:$0xff]
    %v2056 = vld [vmem:[%s1973 + $0x290] sm:$0xff]
    %v2057 = vld [vmem:[%s1973 + $0x298] sm:$0xff]
    %v2058 = vld [vmem:[%s1973 + $0x2a0] sm:$0xff]
    %v2059 = vld [vmem:[%s1973 + $0x2a8] sm:$0xff]
    %v2060 = vld [vmem:[%s1973 + $0x2b0] sm:$0xff]
    %v2061 = vld [vmem:[%s1973 + $0x2b8] sm:$0xff]
    %v2062 = vld [vmem:[%s1973 + $0x2c0] sm:$0xff]
    %v2063 = vld [vmem:[%s1973 + $0x2c8] sm:$0xff]
    %v2064 = vld [vmem:[%s1973 + $0x2d0] sm:$0xff]
    %v2065 = vld [vmem:[%s1973 + $0x2d8] sm:$0xff]
    %v2066 = vld [vmem:[%s1973 + $0x2e0] sm:$0xff]
    %v2067 = vld [vmem:[%s1973 + $0x2e8] sm:$0xff]
    %v2068 = vld [vmem:[%s1973 + $0x2f0] sm:$0xff]
    %v2069 = vld [vmem:[%s1973 + $0x2f8] sm:$0xff]
    %v2070 = vld [vmem:[%s1973 + $0x300] sm:$0xff]
    %v2071 = vld [vmem:[%s1973 + $0x308] sm:$0xff]
    %v2072 = vld [vmem:[%s1973 + $0x310] sm:$0xff]
    %v2073 = vld [vmem:[%s1973 + $0x318] sm:$0xff]
    %v2074 = vld [vmem:[%s1973 + $0x320] sm:$0xff]
    %v2075 = vld [vmem:[%s1973 + $0x328] sm:$0xff]
    %v2076 = vld [vmem:[%s1973 + $0x330] sm:$0xff]
    %v2077 = vld [vmem:[%s1973 + $0x338] sm:$0xff]
    %v2078 = vld [vmem:[%s1973 + $0x340] sm:$0xff]
    %v2079 = vld [vmem:[%s1973 + $0x348] sm:$0xff]
    %v2080 = vld [vmem:[%s1973 + $0x350] sm:$0xff]
    %v2081 = vld [vmem:[%s1973 + $0x358] sm:$0xff]
    %v2082 = vld [vmem:[%s1973 + $0x360] sm:$0xff]
    %v2083 = vld [vmem:[%s1973 + $0x368] sm:$0xff]
    %v2084 = vld [vmem:[%s1973 + $0x370] sm:$0xff]
    %v2085 = vld [vmem:[%s1973 + $0x378] sm:$0xff]
    %v2086 = vld [vmem:[%s1973 + $0x380] sm:$0xff]
    %v2087 = vld [vmem:[%s1973 + $0x388] sm:$0xff]
    %v2088 = vld [vmem:[%s1973 + $0x390] sm:$0xff]
    %v2089 = vld [vmem:[%s1973 + $0x398] sm:$0xff]
    %v2090 = vld [vmem:[%s1973 + $0x3a0] sm:$0xff]
    %v2091 = vld [vmem:[%s1973 + $0x3a8] sm:$0xff]
    %v2092 = vld [vmem:[%s1973 + $0x3b0] sm:$0xff]
    %v2093 = vld [vmem:[%s1973 + $0x3b8] sm:$0xff]
    %v2094 = vld [vmem:[%s1973 + $0x3c0] sm:$0xff]
    %v2095 = vld [vmem:[%s1973 + $0x3c8] sm:$0xff]
    %v2096 = vld [vmem:[%s1973 + $0x3d0] sm:$0xff]
    %v2097 = vld [vmem:[%s1973 + $0x3d8] sm:$0xff]
    %v2098 = vld [vmem:[%s1973 + $0x3e0] sm:$0xff]
    %v2099 = vld [vmem:[%s1973 + $0x3e8] sm:$0xff]
    %v2100 = vld [vmem:[%s1973 + $0x3f0] sm:$0xff]
    %v2101 = vld [vmem:[%s1973 + $0x3f8] sm:$0xff]
    %s2102 = scalar_lea.vmem [#allocation3], 2048
    %v2103 = vld [vmem:[%s2102] sm:$0xff]
    %v2104 = vld [vmem:[%s2102 + $0x8] sm:$0xff]
    %v2105 = vld [vmem:[%s2102 + $0x10] sm:$0xff]
    %v2106 = vld [vmem:[%s2102 + $0x18] sm:$0xff]
    %v2107 = vld [vmem:[%s2102 + $0x20] sm:$0xff]
    %v2108 = vld [vmem:[%s2102 + $0x28] sm:$0xff]
    %v2109 = vld [vmem:[%s2102 + $0x30] sm:$0xff]
    %v2110 = vld [vmem:[%s2102 + $0x38] sm:$0xff]
    %v2111 = vld [vmem:[%s2102 + $0x40] sm:$0xff]
    %v2112 = vld [vmem:[%s2102 + $0x48] sm:$0xff]
    %v2113 = vld [vmem:[%s2102 + $0x50] sm:$0xff]
    %v2114 = vld [vmem:[%s2102 + $0x58] sm:$0xff]
    %v2115 = vld [vmem:[%s2102 + $0x60] sm:$0xff]
    %v2116 = vld [vmem:[%s2102 + $0x68] sm:$0xff]
    %v2117 = vld [vmem:[%s2102 + $0x70] sm:$0xff]
    %v2118 = vld [vmem:[%s2102 + $0x78] sm:$0xff]
    %v2119 = vld [vmem:[%s2102 + $0x80] sm:$0xff]
    %v2120 = vld [vmem:[%s2102 + $0x88] sm:$0xff]
    %v2121 = vld [vmem:[%s2102 + $0x90] sm:$0xff]
    %v2122 = vld [vmem:[%s2102 + $0x98] sm:$0xff]
    %v2123 = vld [vmem:[%s2102 + $0xa0] sm:$0xff]
    %v2124 = vld [vmem:[%s2102 + $0xa8] sm:$0xff]
    %v2125 = vld [vmem:[%s2102 + $0xb0] sm:$0xff]
    %v2126 = vld [vmem:[%s2102 + $0xb8] sm:$0xff]
    %v2127 = vld [vmem:[%s2102 + $0xc0] sm:$0xff]
    %v2128 = vld [vmem:[%s2102 + $0xc8] sm:$0xff]
    %v2129 = vld [vmem:[%s2102 + $0xd0] sm:$0xff]
    %v2130 = vld [vmem:[%s2102 + $0xd8] sm:$0xff]
    %v2131 = vld [vmem:[%s2102 + $0xe0] sm:$0xff]
    %v2132 = vld [vmem:[%s2102 + $0xe8] sm:$0xff]
    %v2133 = vld [vmem:[%s2102 + $0xf0] sm:$0xff]
    %v2134 = vld [vmem:[%s2102 + $0xf8] sm:$0xff]
    %v2135 = vld [vmem:[%s2102 + $0x100] sm:$0xff]
    %v2136 = vld [vmem:[%s2102 + $0x108] sm:$0xff]
    %v2137 = vld [vmem:[%s2102 + $0x110] sm:$0xff]
    %v2138 = vld [vmem:[%s2102 + $0x118] sm:$0xff]
    %v2139 = vld [vmem:[%s2102 + $0x120] sm:$0xff]
    %v2140 = vld [vmem:[%s2102 + $0x128] sm:$0xff]
    %v2141 = vld [vmem:[%s2102 + $0x130] sm:$0xff]
    %v2142 = vld [vmem:[%s2102 + $0x138] sm:$0xff]
    %v2143 = vld [vmem:[%s2102 + $0x140] sm:$0xff]
    %v2144 = vld [vmem:[%s2102 + $0x148] sm:$0xff]
    %v2145 = vld [vmem:[%s2102 + $0x150] sm:$0xff]
    %v2146 = vld [vmem:[%s2102 + $0x158] sm:$0xff]
    %v2147 = vld [vmem:[%s2102 + $0x160] sm:$0xff]
    %v2148 = vld [vmem:[%s2102 + $0x168] sm:$0xff]
    %v2149 = vld [vmem:[%s2102 + $0x170] sm:$0xff]
    %v2150 = vld [vmem:[%s2102 + $0x178] sm:$0xff]
    %v2151 = vld [vmem:[%s2102 + $0x180] sm:$0xff]
    %v2152 = vld [vmem:[%s2102 + $0x188] sm:$0xff]
    %v2153 = vld [vmem:[%s2102 + $0x190] sm:$0xff]
    %v2154 = vld [vmem:[%s2102 + $0x198] sm:$0xff]
    %v2155 = vld [vmem:[%s2102 + $0x1a0] sm:$0xff]
    %v2156 = vld [vmem:[%s2102 + $0x1a8] sm:$0xff]
    %v2157 = vld [vmem:[%s2102 + $0x1b0] sm:$0xff]
    %v2158 = vld [vmem:[%s2102 + $0x1b8] sm:$0xff]
    %v2159 = vld [vmem:[%s2102 + $0x1c0] sm:$0xff]
    %v2160 = vld [vmem:[%s2102 + $0x1c8] sm:$0xff]
    %v2161 = vld [vmem:[%s2102 + $0x1d0] sm:$0xff]
    %v2162 = vld [vmem:[%s2102 + $0x1d8] sm:$0xff]
    %v2163 = vld [vmem:[%s2102 + $0x1e0] sm:$0xff]
    %v2164 = vld [vmem:[%s2102 + $0x1e8] sm:$0xff]
    %v2165 = vld [vmem:[%s2102 + $0x1f0] sm:$0xff]
    %v2166 = vld [vmem:[%s2102 + $0x1f8] sm:$0xff]
    %v2167 = vld [vmem:[%s2102 + $0x200] sm:$0xff]
    %v2168 = vld [vmem:[%s2102 + $0x208] sm:$0xff]
    %v2169 = vld [vmem:[%s2102 + $0x210] sm:$0xff]
    %v2170 = vld [vmem:[%s2102 + $0x218] sm:$0xff]
    %v2171 = vld [vmem:[%s2102 + $0x220] sm:$0xff]
    %v2172 = vld [vmem:[%s2102 + $0x228] sm:$0xff]
    %v2173 = vld [vmem:[%s2102 + $0x230] sm:$0xff]
    %v2174 = vld [vmem:[%s2102 + $0x238] sm:$0xff]
    %v2175 = vld [vmem:[%s2102 + $0x240] sm:$0xff]
    %v2176 = vld [vmem:[%s2102 + $0x248] sm:$0xff]
    %v2177 = vld [vmem:[%s2102 + $0x250] sm:$0xff]
    %v2178 = vld [vmem:[%s2102 + $0x258] sm:$0xff]
    %v2179 = vld [vmem:[%s2102 + $0x260] sm:$0xff]
    %v2180 = vld [vmem:[%s2102 + $0x268] sm:$0xff]
    %v2181 = vld [vmem:[%s2102 + $0x270] sm:$0xff]
    %v2182 = vld [vmem:[%s2102 + $0x278] sm:$0xff]
    %v2183 = vld [vmem:[%s2102 + $0x280] sm:$0xff]
    %v2184 = vld [vmem:[%s2102 + $0x288] sm:$0xff]
    %v2185 = vld [vmem:[%s2102 + $0x290] sm:$0xff]
    %v2186 = vld [vmem:[%s2102 + $0x298] sm:$0xff]
    %v2187 = vld [vmem:[%s2102 + $0x2a0] sm:$0xff]
    %v2188 = vld [vmem:[%s2102 + $0x2a8] sm:$0xff]
    %v2189 = vld [vmem:[%s2102 + $0x2b0] sm:$0xff]
    %v2190 = vld [vmem:[%s2102 + $0x2b8] sm:$0xff]
    %v2191 = vld [vmem:[%s2102 + $0x2c0] sm:$0xff]
    %v2192 = vld [vmem:[%s2102 + $0x2c8] sm:$0xff]
    %v2193 = vld [vmem:[%s2102 + $0x2d0] sm:$0xff]
    %v2194 = vld [vmem:[%s2102 + $0x2d8] sm:$0xff]
    %v2195 = vld [vmem:[%s2102 + $0x2e0] sm:$0xff]
    %v2196 = vld [vmem:[%s2102 + $0x2e8] sm:$0xff]
    %v2197 = vld [vmem:[%s2102 + $0x2f0] sm:$0xff]
    %v2198 = vld [vmem:[%s2102 + $0x2f8] sm:$0xff]
    %v2199 = vld [vmem:[%s2102 + $0x300] sm:$0xff]
    %v2200 = vld [vmem:[%s2102 + $0x308] sm:$0xff]
    %v2201 = vld [vmem:[%s2102 + $0x310] sm:$0xff]
    %v2202 = vld [vmem:[%s2102 + $0x318] sm:$0xff]
    %v2203 = vld [vmem:[%s2102 + $0x320] sm:$0xff]
    %v2204 = vld [vmem:[%s2102 + $0x328] sm:$0xff]
    %v2205 = vld [vmem:[%s2102 + $0x330] sm:$0xff]
    %v2206 = vld [vmem:[%s2102 + $0x338] sm:$0xff]
    %v2207 = vld [vmem:[%s2102 + $0x340] sm:$0xff]
    %v2208 = vld [vmem:[%s2102 + $0x348] sm:$0xff]
    %v2209 = vld [vmem:[%s2102 + $0x350] sm:$0xff]
    %v2210 = vld [vmem:[%s2102 + $0x358] sm:$0xff]
    %v2211 = vld [vmem:[%s2102 + $0x360] sm:$0xff]
    %v2212 = vld [vmem:[%s2102 + $0x368] sm:$0xff]
    %v2213 = vld [vmem:[%s2102 + $0x370] sm:$0xff]
    %v2214 = vld [vmem:[%s2102 + $0x378] sm:$0xff]
    %v2215 = vld [vmem:[%s2102 + $0x380] sm:$0xff]
    %v2216 = vld [vmem:[%s2102 + $0x388] sm:$0xff]
    %v2217 = vld [vmem:[%s2102 + $0x390] sm:$0xff]
    %v2218 = vld [vmem:[%s2102 + $0x398] sm:$0xff]
    %v2219 = vld [vmem:[%s2102 + $0x3a0] sm:$0xff]
    %v2220 = vld [vmem:[%s2102 + $0x3a8] sm:$0xff]
    %v2221 = vld [vmem:[%s2102 + $0x3b0] sm:$0xff]
    %v2222 = vld [vmem:[%s2102 + $0x3b8] sm:$0xff]
    %v2223 = vld [vmem:[%s2102 + $0x3c0] sm:$0xff]
    %v2224 = vld [vmem:[%s2102 + $0x3c8] sm:$0xff]
    %v2225 = vld [vmem:[%s2102 + $0x3d0] sm:$0xff]
    %v2226 = vld [vmem:[%s2102 + $0x3d8] sm:$0xff]
    %v2227 = vld [vmem:[%s2102 + $0x3e0] sm:$0xff]
    %v2228 = vld [vmem:[%s2102 + $0x3e8] sm:$0xff]
    %v2229 = vld [vmem:[%s2102 + $0x3f0] sm:$0xff]
    %v2230 = vld [vmem:[%s2102 + $0x3f8] sm:$0xff]
    %v2231 = vld [vmem:[#allocation14] sm:$0xff]
    %v2233 = vlaneseq
    %v2234 = vshrl.u32 %v2233, 7
    %v2235 = vsub.s32 0, %v2234
    %v2236 = vrot.slane %v2231, %v2235
    %v2237 = vlaneseq
    %v2238 = vshrl.u32 %v2237, 7
    %v2239 = vsub.s32 1, %v2238
    %v2240 = vrot.slane %v2231, %v2239
    %v2241 = vlaneseq
    %v2242 = vshrl.u32 %v2241, 7
    %v2243 = vsub.s32 2, %v2242
    %v2244 = vrot.slane %v2231, %v2243
    %v2245 = vlaneseq
    %v2246 = vshrl.u32 %v2245, 7
    %v2247 = vsub.s32 3, %v2246
    %v2248 = vrot.slane %v2231, %v2247
    %v2249 = vlaneseq
    %v2250 = vshrl.u32 %v2249, 7
    %v2251 = vsub.s32 4, %v2250
    %v2252 = vrot.slane %v2231, %v2251
    %v2253 = vlaneseq
    %v2254 = vshrl.u32 %v2253, 7
    %v2255 = vsub.s32 5, %v2254
    %v2256 = vrot.slane %v2231, %v2255
    %v2257 = vlaneseq
    %v2258 = vshrl.u32 %v2257, 7
    %v2259 = vsub.s32 6, %v2258
    %v2260 = vrot.slane %v2231, %v2259
    %v2261 = vlaneseq
    %v2262 = vshrl.u32 %v2261, 7
    %v2263 = vsub.s32 7, %v2262
    %v2264 = vrot.slane %v2231, %v2263
    %2273 = vmatprep.subr.bf16.mxu0 %v2104
    %2274 = vmatpush1.bf16.msra.mxu0 %v2103
    %2275 = vmatprep.subr.bf16.mxu0 %v2112
    %2276 = vmatpush1.bf16.msra.mxu0 %v2111
    %2277 = vmatprep.subr.bf16.mxu0 %v2120
    %2278 = vmatpush1.bf16.msra.mxu0 %v2119
    %2279 = vmatprep.subr.bf16.mxu0 %v2128
    %2280 = vmatpush1.bf16.msra.mxu0 %v2127
    %2281 = vmatprep.subr.bf16.mxu0 %v2136
    %2282 = vmatpush1.bf16.msra.mxu0 %v2135
    %2283 = vmatprep.subr.bf16.mxu0 %v2144
    %2284 = vmatpush1.bf16.msra.mxu0 %v2143
    %2285 = vmatprep.subr.bf16.mxu0 %v2152
    %2286 = vmatpush1.bf16.msra.mxu0 %v2151
    %2287 = vmatprep.subr.bf16.mxu0 %v2160
    %2288 = vmatpush1.bf16.msra.mxu0 %v2159
    %2289 = vmatprep.subr.bf16.mxu0 %v2168
    %2290 = vmatpush1.bf16.msra.mxu0 %v2167
    %2291 = vmatprep.subr.bf16.mxu0 %v2176
    %2292 = vmatpush1.bf16.msra.mxu0 %v2175
    %2293 = vmatprep.subr.bf16.mxu0 %v2184
    %2294 = vmatpush1.bf16.msra.mxu0 %v2183
    %2295 = vmatprep.subr.bf16.mxu0 %v2192
    %2296 = vmatpush1.bf16.msra.mxu0 %v2191
    %2297 = vmatprep.subr.bf16.mxu0 %v2200
    %2298 = vmatpush1.bf16.msra.mxu0 %v2199
    %2299 = vmatprep.subr.bf16.mxu0 %v2208
    %2300 = vmatpush1.bf16.msra.mxu0 %v2207
    %2301 = vmatprep.subr.bf16.mxu0 %v2216
    %2302 = vmatpush1.bf16.msra.mxu0 %v2215
    %2303 = vmatprep.subr.bf16.mxu0 %v2224
    %2304 = vmatpush1.bf16.msra.mxu0 %v2223
    %2305 = vmatprep.mubr.bf16.mxu0 0
    %2306 = vmatmul.mubr.bf16.gmra.mrb[0].mxu0 0
    %v2307 = vpop.f32.mrb[0].mxu0
    %v2308 = vadd.f32 %v2236, %v2307
    %v2309 = vpop.f32.mrb[0].mxu0
    %v2310 = vadd.f32 %v2240, %v2309
    %v2311 = vpop.f32.mrb[0].mxu0
    %v2312 = vpop.f32.mrb[0].mxu0
    %2313 = vdwg.mxu0
    %2314 = vmatprep.subr.bf16.mxu0 %v2106
    %2315 = vmatpush1.bf16.msra.mxu0 %v2105
    %2316 = vmatprep.subr.bf16.mxu0 %v2114
    %2317 = vmatpush1.bf16.msra.mxu0 %v2113
    %2318 = vmatprep.subr.bf16.mxu0 %v2122
    %2319 = vmatpush1.bf16.msra.mxu0 %v2121
    %2320 = vmatprep.subr.bf16.mxu0 %v2130
    %2321 = vmatpush1.bf16.msra.mxu0 %v2129
    %2322 = vmatprep.subr.bf16.mxu0 %v2138
    %2323 = vmatpush1.bf16.msra.mxu0 %v2137
    %2324 = vmatprep.subr.bf16.mxu0 %v2146
    %2325 = vmatpush1.bf16.msra.mxu0 %v2145
    %2326 = vmatprep.subr.bf16.mxu0 %v2154
    %2327 = vmatpush1.bf16.msra.mxu0 %v2153
    %2328 = vmatprep.subr.bf16.mxu0 %v2162
    %2329 = vmatpush1.bf16.msra.mxu0 %v2161
    %2330 = vmatprep.subr.bf16.mxu0 %v2170
    %2331 = vmatpush1.bf16.msra.mxu0 %v2169
    %2332 = vmatprep.subr.bf16.mxu0 %v2178
    %2333 = vmatpush1.bf16.msra.mxu0 %v2177
    %2334 = vmatprep.subr.bf16.mxu0 %v2186
    %2335 = vmatpush1.bf16.msra.mxu0 %v2185
    %2336 = vmatprep.subr.bf16.mxu0 %v2194
    %2337 = vmatpush1.bf16.msra.mxu0 %v2193
    %2338 = vmatprep.subr.bf16.mxu0 %v2202
    %2339 = vmatpush1.bf16.msra.mxu0 %v2201
    %2340 = vmatprep.subr.bf16.mxu0 %v2210
    %2341 = vmatpush1.bf16.msra.mxu0 %v2209
    %2342 = vmatprep.subr.bf16.mxu0 %v2218
    %2343 = vmatpush1.bf16.msra.mxu0 %v2217
    %2344 = vmatprep.subr.bf16.mxu0 %v2226
    %2345 = vmatpush1.bf16.msra.mxu0 %v2225
    %2346 = vmatprep.mubr.bf16.mxu0 0
    %2347 = vmatmul.mubr.bf16.gmra.mrb[0].mxu0 0
    %v2348 = vpop.f32.mrb[0].mxu0
    %v2349 = vadd.f32 %v2244, %v2348
    %v2350 = vpop.f32.mrb[0].mxu0
    %v2351 = vadd.f32 %v2248, %v2350
    %v2352 = vpop.f32.mrb[0].mxu0
    %v2353 = vpop.f32.mrb[0].mxu0
    %2354 = vdwg.mxu0
    %2355 = vmatprep.subr.bf16.mxu0 %v2108
    %2356 = vmatpush1.bf16.msra.mxu0 %v2107
    %2357 = vmatprep.subr.bf16.mxu0 %v2116
    %2358 = vmatpush1.bf16.msra.mxu0 %v2115
    %2359 = vmatprep.subr.bf16.mxu0 %v2124
    %2360 = vmatpush1.bf16.msra.mxu0 %v2123
    %2361 = vmatprep.subr.bf16.mxu0 %v2132
    %2362 = vmatpush1.bf16.msra.mxu0 %v2131
    %2363 = vmatprep.subr.bf16.mxu0 %v2140
    %2364 = vmatpush1.bf16.msra.mxu0 %v2139
    %2365 = vmatprep.subr.bf16.mxu0 %v2148
    %2366 = vmatpush1.bf16.msra.mxu0 %v2147
    %2367 = vmatprep.subr.bf16.mxu0 %v2156
    %2368 = vmatpush1.bf16.msra.mxu0 %v2155
    %2369 = vmatprep.subr.bf16.mxu0 %v2164
    %2370 = vmatpush1.bf16.msra.mxu0 %v2163
    %2371 = vmatprep.subr.bf16.mxu0 %v2172
    %2372 = vmatpush1.bf16.msra.mxu0 %v2171
    %2373 = vmatprep.subr.bf16.mxu0 %v2180
    %2374 = vmatpush1.bf16.msra.mxu0 %v2179
    %2375 = vmatprep.subr.bf16.mxu0 %v2188
    %2376 = vmatpush1.bf16.msra.mxu0 %v2187
    %2377 = vmatprep.subr.bf16.mxu0 %v2196
    %2378 = vmatpush1.bf16.msra.mxu0 %v2195
    %2379 = vmatprep.subr.bf16.mxu0 %v2204
    %2380 = vmatpush1.bf16.msra.mxu0 %v2203
    %2381 = vmatprep.subr.bf16.mxu0 %v2212
    %2382 = vmatpush1.bf16.msra.mxu0 %v2211
    %2383 = vmatprep.subr.bf16.mxu0 %v2220
    %2384 = vmatpush1.bf16.msra.mxu0 %v2219
    %2385 = vmatprep.subr.bf16.mxu0 %v2228
    %2386 = vmatpush1.bf16.msra.mxu0 %v2227
    %2387 = vmatprep.mubr.bf16.mxu0 0
    %2388 = vmatmul.mubr.bf16.gmra.mrb[0].mxu0 0
    %v2389 = vpop.f32.mrb[0].mxu0
    %v2390 = vadd.f32 %v2252, %v2389
    %v2391 = vpop.f32.mrb[0].mxu0
    %v2392 = vadd.f32 %v2256, %v2391
    %v2393 = vpop.f32.mrb[0].mxu0
    %v2394 = vpop.f32.mrb[0].mxu0
    %2395 = vdwg.mxu0
    %2396 = vmatprep.subr.bf16.mxu0 %v2110
    %2397 = vmatpush1.bf16.msra.mxu0 %v2109
    %2398 = vmatprep.subr.bf16.mxu0 %v2118
    %2399 = vmatpush1.bf16.msra.mxu0 %v2117
    %2400 = vmatprep.subr.bf16.mxu0 %v2126
    %2401 = vmatpush1.bf16.msra.mxu0 %v2125
    %2402 = vmatprep.subr.bf16.mxu0 %v2134
    %2403 = vmatpush1.bf16.msra.mxu0 %v2133
    %2404 = vmatprep.subr.bf16.mxu0 %v2142
    %2405 = vmatpush1.bf16.msra.mxu0 %v2141
    %2406 = vmatprep.subr.bf16.mxu0 %v2150
    %2407 = vmatpush1.bf16.msra.mxu0 %v2149
    %2408 = vmatprep.subr.bf16.mxu0 %v2158
    %2409 = vmatpush1.bf16.msra.mxu0 %v2157
    %2410 = vmatprep.subr.bf16.mxu0 %v2166
    %2411 = vmatpush1.bf16.msra.mxu0 %v2165
    %2412 = vmatprep.subr.bf16.mxu0 %v2174
    %2413 = vmatpush1.bf16.msra.mxu0 %v2173
    %2414 = vmatprep.subr.bf16.mxu0 %v2182
    %2415 = vmatpush1.bf16.msra.mxu0 %v2181
    %2416 = vmatprep.subr.bf16.mxu0 %v2190
    %2417 = vmatpush1.bf16.msra.mxu0 %v2189
    %2418 = vmatprep.subr.bf16.mxu0 %v2198
    %2419 = vmatpush1.bf16.msra.mxu0 %v2197
    %2420 = vmatprep.subr.bf16.mxu0 %v2206
    %2421 = vmatpush1.bf16.msra.mxu0 %v2205
    %2422 = vmatprep.subr.bf16.mxu0 %v2214
    %2423 = vmatpush1.bf16.msra.mxu0 %v2213
    %2424 = vmatprep.subr.bf16.mxu0 %v2222
    %2425 = vmatpush1.bf16.msra.mxu0 %v2221
    %2426 = vmatprep.subr.bf16.mxu0 %v2230
    %2427 = vmatpush1.bf16.msra.mxu0 %v2229
    %2428 = vmatprep.mubr.bf16.mxu0 0
    %2429 = vmatmul.mubr.bf16.gmra.mrb[0].mxu0 0
    %v2430 = vpop.f32.mrb[0].mxu0
    %v2431 = vadd.f32 %v2260, %v2430
    %v2432 = vpop.f32.mrb[0].mxu0
    %v2433 = vadd.f32 %v2264, %v2432
    %v2434 = vpop.f32.mrb[0].mxu0
    %v2435 = vpop.f32.mrb[0].mxu0
    %2436 = vdwg.mxu0
    %2437 = vmatprep.subr.bf16.mxu0 %v1846
    %2438 = vmatpush1.bf16.msra.mxu0 %v1845
    %2439 = vmatprep.subr.bf16.mxu0 %v1854
    %2440 = vmatpush1.bf16.msra.mxu0 %v1853
    %2441 = vmatprep.subr.bf16.mxu0 %v1862
    %2442 = vmatpush1.bf16.msra.mxu0 %v1861
    %2443 = vmatprep.subr.bf16.mxu0 %v1870
    %2444 = vmatpush1.bf16.msra.mxu0 %v1869
    %2445 = vmatprep.subr.bf16.mxu0 %v1878
    %2446 = vmatpush1.bf16.msra.mxu0 %v1877
    %2447 = vmatprep.subr.bf16.mxu0 %v1886
    %2448 = vmatpush1.bf16.msra.mxu0 %v1885
    %2449 = vmatprep.subr.bf16.mxu0 %v1894
    %2450 = vmatpush1.bf16.msra.mxu0 %v1893
    %2451 = vmatprep.subr.bf16.mxu0 %v1902
    %2452 = vmatpush1.bf16.msra.mxu0 %v1901
    %2453 = vmatprep.subr.bf16.mxu0 %v1910
    %2454 = vmatpush1.bf16.msra.mxu0 %v1909
    %2455 = vmatprep.subr.bf16.mxu0 %v1918
    %2456 = vmatpush1.bf16.msra.mxu0 %v1917
    %2457 = vmatprep.subr.bf16.mxu0 %v1926
    %2458 = vmatpush1.bf16.msra.mxu0 %v1925
    %2459 = vmatprep.subr.bf16.mxu0 %v1934
    %2460 = vmatpush1.bf16.msra.mxu0 %v1933
    %2461 = vmatprep.subr.bf16.mxu0 %v1942
    %2462 = vmatpush1.bf16.msra.mxu0 %v1941
    %2463 = vmatprep.subr.bf16.mxu0 %v1950
    %2464 = vmatpush1.bf16.msra.mxu0 %v1949
    %2465 = vmatprep.subr.bf16.mxu0 %v1958
    %2466 = vmatpush1.bf16.msra.mxu0 %v1957
    %2467 = vmatprep.subr.bf16.mxu0 %v1966
    %2468 = vmatpush1.bf16.msra.mxu0 %v1965
    %2469 = vmatprep.mubr.bf16.mxu0 0
    %2470 = vmatmul.mubr.bf16.gmra.mrb[0].mxu0 0
    %v2471 = vpop.f32.mrb[0].mxu0
    %v2472 = vadd.f32 0.0, %v2471
    %v2473 = vpop.f32.mrb[0].mxu0
    %v2474 = vadd.f32 0.0, %v2473
    %v2475 = vpop.f32.mrb[0].mxu0
    %v2476 = vpop.f32.mrb[0].mxu0
    %2477 = vdwg.mxu0
    %2478 = vmatprep.subr.bf16.mxu0 %v1848
    %2479 = vmatpush1.bf16.msra.mxu0 %v1847
    %2480 = vmatprep.subr.bf16.mxu0 %v1856
    %2481 = vmatpush1.bf16.msra.mxu0 %v1855
    %2482 = vmatprep.subr.bf16.mxu0 %v1864
    %2483 = vmatpush1.bf16.msra.mxu0 %v1863
    %2484 = vmatprep.subr.bf16.mxu0 %v1872
    %2485 = vmatpush1.bf16.msra.mxu0 %v1871
    %2486 = vmatprep.subr.bf16.mxu0 %v1880
    %2487 = vmatpush1.bf16.msra.mxu0 %v1879
    %2488 = vmatprep.subr.bf16.mxu0 %v1888
    %2489 = vmatpush1.bf16.msra.mxu0 %v1887
    %2490 = vmatprep.subr.bf16.mxu0 %v1896
    %2491 = vmatpush1.bf16.msra.mxu0 %v1895
    %2492 = vmatprep.subr.bf16.mxu0 %v1904
    %2493 = vmatpush1.bf16.msra.mxu0 %v1903
    %2494 = vmatprep.subr.bf16.mxu0 %v1912
    %2495 = vmatpush1.bf16.msra.mxu0 %v1911
    %2496 = vmatprep.subr.bf16.mxu0 %v1920
    %2497 = vmatpush1.bf16.msra.mxu0 %v1919
    %2498 = vmatprep.subr.bf16.mxu0 %v1928
    %2499 = vmatpush1.bf16.msra.mxu0 %v1927
    %2500 = vmatprep.subr.bf16.mxu0 %v1936
    %2501 = vmatpush1.bf16.msra.mxu0 %v1935
    %2502 = vmatprep.subr.bf16.mxu0 %v1944
    %2503 = vmatpush1.bf16.msra.mxu0 %v1943
    %2504 = vmatprep.subr.bf16.mxu0 %v1952
    %2505 = vmatpush1.bf16.msra.mxu0 %v1951
    %2506 = vmatprep.subr.bf16.mxu0 %v1960
    %2507 = vmatpush1.bf16.msra.mxu0 %v1959
    %2508 = vmatprep.subr.bf16.mxu0 %v1968
    %2509 = vmatpush1.bf16.msra.mxu0 %v1967
    %2510 = vmatprep.mubr.bf16.mxu0 0
    %2511 = vmatmul.mubr.bf16.gmra.mrb[0].mxu0 0
    %v2512 = vpop.f32.mrb[0].mxu0
    %v2513 = vadd.f32 0.0, %v2512
    %v2514 = vpop.f32.mrb[0].mxu0
    %v2515 = vadd.f32 0.0, %v2514
    %v2516 = vpop.f32.mrb[0].mxu0
    %v2517 = vpop.f32.mrb[0].mxu0
    %2518 = vdwg.mxu0
    %2519 = vmatprep.subr.bf16.mxu0 %v1850
    %2520 = vmatpush1.bf16.msra.mxu0 %v1849
    %2521 = vmatprep.subr.bf16.mxu0 %v1858
    %2522 = vmatpush1.bf16.msra.mxu0 %v1857
    %2523 = vmatprep.subr.bf16.mxu0 %v1866
    %2524 = vmatpush1.bf16.msra.mxu0 %v1865
    %2525 = vmatprep.subr.bf16.mxu0 %v1874
    %2526 = vmatpush1.bf16.msra.mxu0 %v1873
    %2527 = vmatprep.subr.bf16.mxu0 %v1882
    %2528 = vmatpush1.bf16.msra.mxu0 %v1881
    %2529 = vmatprep.subr.bf16.mxu0 %v1890
    %2530 = vmatpush1.bf16.msra.mxu0 %v1889
    %2531 = vmatprep.subr.bf16.mxu0 %v1898
    %2532 = vmatpush1.bf16.msra.mxu0 %v1897
    %2533 = vmatprep.subr.bf16.mxu0 %v1906
    %2534 = vmatpush1.bf16.msra.mxu0 %v1905
    %2535 = vmatprep.subr.bf16.mxu0 %v1914
    %2536 = vmatpush1.bf16.msra.mxu0 %v1913
    %2537 = vmatprep.subr.bf16.mxu0 %v1922
    %2538 = vmatpush1.bf16.msra.mxu0 %v1921
    %2539 = vmatprep.subr.bf16.mxu0 %v1930
    %2540 = vmatpush1.bf16.msra.mxu0 %v1929
    %2541 = vmatprep.subr.bf16.mxu0 %v1938
    %2542 = vmatpush1.bf16.msra.mxu0 %v1937
    %2543 = vmatprep.subr.bf16.mxu0 %v1946
    %2544 = vmatpush1.bf16.msra.mxu0 %v1945
    %2545 = vmatprep.subr.bf16.mxu0 %v1954
    %2546 = vmatpush1.bf16.msra.mxu0 %v1953
    %2547 = vmatprep.subr.bf16.mxu0 %v1962
    %2548 = vmatpush1.bf16.msra.mxu0 %v1961
    %2549 = vmatprep.subr.bf16.mxu0 %v1970
    %2550 = vmatpush1.bf16.msra.mxu0 %v1969
    %2551 = vmatprep.mubr.bf16.mxu0 0
    %2552 = vmatmul.mubr.bf16.gmra.mrb[0].mxu0 0
    %v2553 = vpop.f32.mrb[0].mxu0
    %v2554 = vadd.f32 0.0, %v2553
    %v2555 = vpop.f32.mrb[0].mxu0
    %v2556 = vadd.f32 0.0, %v2555
    %v2557 = vpop.f32.mrb[0].mxu0
    %v2558 = vpop.f32.mrb[0].mxu0
    %2559 = vdwg.mxu0
    %2560 = vmatprep.subr.bf16.mxu0 %v1852
    %2561 = vmatpush1.bf16.msra.mxu0 %v1851
    %2562 = vmatprep.subr.bf16.mxu0 %v1860
    %2563 = vmatpush1.bf16.msra.mxu0 %v1859
    %2564 = vmatprep.subr.bf16.mxu0 %v1868
    %2565 = vmatpush1.bf16.msra.mxu0 %v1867
    %2566 = vmatprep.subr.bf16.mxu0 %v1876
    %2567 = vmatpush1.bf16.msra.mxu0 %v1875
    %2568 = vmatprep.subr.bf16.mxu0 %v1884
    %2569 = vmatpush1.bf16.msra.mxu0 %v1883
    %2570 = vmatprep.subr.bf16.mxu0 %v1892
    %2571 = vmatpush1.bf16.msra.mxu0 %v1891
    %2572 = vmatprep.subr.bf16.mxu0 %v1900
    %2573 = vmatpush1.bf16.msra.mxu0 %v1899
    %2574 = vmatprep.subr.bf16.mxu0 %v1908
    %2575 = vmatpush1.bf16.msra.mxu0 %v1907
    %2576 = vmatprep.subr.bf16.mxu0 %v1916
    %2577 = vmatpush1.bf16.msra.mxu0 %v1915
    %2578 = vmatprep.subr.bf16.mxu0 %v1924
    %2579 = vmatpush1.bf16.msra.mxu0 %v1923
    %2580 = vmatprep.subr.bf16.mxu0 %v1932
    %2581 = vmatpush1.bf16.msra.mxu0 %v1931
    %2582 = vmatprep.subr.bf16.mxu0 %v1940
    %2583 = vmatpush1.bf16.msra.mxu0 %v1939
    %2584 = vmatprep.subr.bf16.mxu0 %v1948
    %2585 = vmatpush1.bf16.msra.mxu0 %v1947
    %2586 = vmatprep.subr.bf16.mxu0 %v1956
    %2587 = vmatpush1.bf16.msra.mxu0 %v1955
    %2588 = vmatprep.subr.bf16.mxu0 %v1964
    %2589 = vmatpush1.bf16.msra.mxu0 %v1963
    %2590 = vmatprep.subr.bf16.mxu0 %v1972
    %2591 = vmatpush1.bf16.msra.mxu0 %v1971
    %2592 = vmatprep.mubr.bf16.mxu0 0
    %2593 = vmatmul.mubr.bf16.gmra.mrb[0].mxu0 0
    %v2594 = vpop.f32.mrb[0].mxu0
    %v2595 = vadd.f32 0.0, %v2594
    %v2596 = vpop.f32.mrb[0].mxu0
    %v2597 = vadd.f32 0.0, %v2596
    %v2598 = vpop.f32.mrb[0].mxu0
    %v2599 = vpop.f32.mrb[0].mxu0
    %2600 = vdwg.mxu0
    %v2609 = vrot.slane %v2472, 1
    %v2610 = vrot.slane %v2474, 1
    %v2611 = vrot.slane %v2513, 1
    %v2612 = vrot.slane %v2515, 1
    %v2613 = vrot.slane %v2554, 1
    %v2614 = vrot.slane %v2556, 1
    %v2615 = vrot.slane %v2595, 1
    %v2616 = vrot.slane %v2597, 1
    %v2633 = vadd.f32 %v1703, %v2472
    %v2634 = vadd.f32 %v1705, %v2474
    %v2635 = vadd.f32 %v1746, %v2513
    %v2636 = vadd.f32 %v1748, %v2515
    %v2637 = vadd.f32 %v1789, %v2554
    %v2638 = vadd.f32 %v1791, %v2556
    %v2639 = vadd.f32 %v1832, %v2595
    %v2640 = vadd.f32 %v1834, %v2597
    %v2641 = vadd.f32 %v1707, %v2609
    %v2642 = vadd.f32 %v1709, %v2610
    %v2643 = vadd.f32 %v1750, %v2611
    %v2644 = vadd.f32 %v1752, %v2612
    %v2645 = vadd.f32 %v1793, %v2613
    %v2646 = vadd.f32 %v1795, %v2614
    %v2647 = vadd.f32 %v1836, %v2615
    %v2648 = vadd.f32 %v1838, %v2616
    %v2649 = vxor.u32 %v2633, 2147483648
    %v2650 = vxor.u32 %v2634, 2147483648
    %v2651 = vxor.u32 %v2641, 2147483648
    %v2652 = vxor.u32 %v2642, 2147483648
    %v2653 = vmul.f32 %v2649, 1.442695
    %v2654 = vpow.pop %v2653
    %v2655 = vmul.f32 %v2650, 1.442695
    %v2656 = vpow.pop %v2655
    %v2657 = vmul.f32 %v2651, 1.442695
    %v2658 = vpow.pop %v2657
    %v2659 = vmul.f32 %v2652, 1.442695
    %v2660 = vpow.pop %v2659
    %v2661 = vadd.f32 %v2654, 1.0
    %v2662 = vadd.f32 %v2656, 1.0
    %v2663 = vadd.f32 %v2658, 1.0
    %v2664 = vadd.f32 %v2660, 1.0
    %v2665 = vrcp.pop %v2661
    %v2666 = vmul.f32 1.0, %v2665
    %v2667 = vrcp.pop %v2662
    %v2668 = vmul.f32 1.0, %v2667
    %v2669 = vrcp.pop %v2663
    %v2670 = vmul.f32 1.0, %v2669
    %v2671 = vrcp.pop %v2664
    %v2672 = vmul.f32 1.0, %v2671
    %v2673 = vxor.u32 %v2635, 2147483648
    %v2674 = vxor.u32 %v2636, 2147483648
    %v2675 = vxor.u32 %v2643, 2147483648
    %v2676 = vxor.u32 %v2644, 2147483648
    %v2677 = vmul.f32 %v2673, 1.442695
    %v2678 = vpow.pop %v2677
    %v2679 = vmul.f32 %v2674, 1.442695
    %v2680 = vpow.pop %v2679
    %v2681 = vmul.f32 %v2675, 1.442695
    %v2682 = vpow.pop %v2681
    %v2683 = vmul.f32 %v2676, 1.442695
    %v2684 = vpow.pop %v2683
    %v2685 = vadd.f32 %v2678, 1.0
    %v2686 = vadd.f32 %v2680, 1.0
    %v2687 = vadd.f32 %v2682, 1.0
    %v2688 = vadd.f32 %v2684, 1.0
    %v2689 = vrcp.pop %v2685
    %v2690 = vmul.f32 1.0, %v2689
    %v2691 = vrcp.pop %v2686
    %v2692 = vmul.f32 1.0, %v2691
    %v2693 = vrcp.pop %v2687
    %v2694 = vmul.f32 1.0, %v2693
    %v2695 = vrcp.pop %v2688
    %v2696 = vmul.f32 1.0, %v2695
    %v2697 = vtanh.pop %v2637
    %v2698 = vtanh.pop %v2638
    %v2699 = vtanh.pop %v2645
    %v2700 = vtanh.pop %v2646
    %v2701 = vxor.u32 %v2639, 2147483648
    %v2702 = vxor.u32 %v2640, 2147483648
    %v2703 = vxor.u32 %v2647, 2147483648
    %v2704 = vxor.u32 %v2648, 2147483648
    %v2705 = vmul.f32 %v2701, 1.442695
    %v2706 = vpow.pop %v2705
    %v2707 = vmul.f32 %v2702, 1.442695
    %v2708 = vpow.pop %v2707
    %v2709 = vmul.f32 %v2703, 1.442695
    %v2710 = vpow.pop %v2709
    %v2711 = vmul.f32 %v2704, 1.442695
    %v2712 = vpow.pop %v2711
    %v2713 = vadd.f32 %v2706, 1.0
    %v2714 = vadd.f32 %v2708, 1.0
    %v2715 = vadd.f32 %v2710, 1.0
    %v2716 = vadd.f32 %v2712, 1.0
    %v2717 = vrcp.pop %v2713
    %v2718 = vmul.f32 1.0, %v2717
    %v2719 = vrcp.pop %v2714
    %v2720 = vmul.f32 1.0, %v2719
    %v2721 = vrcp.pop %v2715
    %v2722 = vmul.f32 1.0, %v2721
    %v2723 = vrcp.pop %v2716
    %v2724 = vmul.f32 1.0, %v2723
    %v2725 = vmul.f32 %v2690, 0.0
    %v2726 = vmul.f32 %v2692, 0.0
    %v2727 = vmul.f32 %v2694, 0.0
    %v2728 = vmul.f32 %v2696, 0.0
    %v2729 = vmul.f32 %v2666, %v2697
    %v2730 = vmul.f32 %v2668, %v2698
    %v2731 = vmul.f32 %v2670, %v2699
    %v2732 = vmul.f32 %v2672, %v2700
    %v2733 = vadd.f32 %v2725, %v2729
    %v2734 = vadd.f32 %v2726, %v2730
    %v2735 = vadd.f32 %v2727, %v2731
    %v2736 = vadd.f32 %v2728, %v2732
    %v2737 = vtanh.pop %v2733
    %v2738 = vtanh.pop %v2734
    %v2739 = vtanh.pop %v2735
    %v2740 = vtanh.pop %v2736
    %v2741 = vmul.f32 %v2718, %v2737
    %v2742 = vmul.f32 %v2720, %v2738
    %v2743 = vmul.f32 %v2722, %v2739
    %v2744 = vmul.f32 %v2724, %v2740
    %v2745 = vpack.c.bf16 %v2741, %v2741
    %v2746 = vpack.c.bf16 %v2742, %v2742
    %v2747 = vpack.c.bf16 %v2743, %v2743
    %v2748 = vpack.c.bf16 %v2744, %v2744
    %v2753 = vunpack.c.l.b16 %v2745
    %v2754 = vunpack.c.l.b16 %v2746
    %v2755 = vunpack.c.l.b16 %v2747
    %v2756 = vunpack.c.l.b16 %v2748
    %v2757 = vrot.slane %v2755, 7
    %v2758 = vsel %vm894, %v2757, %v2753
    %v2759 = vrot.slane %v2756, 7
    %v2760 = vsel %vm894, %v2759, %v2754
    %v2761 = vpack.c.b16 %v2758, %v2758
    %v2762 = vpack.c.b16 %v2760, %v2760
    %2765 = vmatprep.subr.bf16.mxu0 %v1975
    %2766 = vmatpush1.bf16.msra.mxu0 %v1974
    %2767 = vmatprep.subr.bf16.mxu0 %v1983
    %2768 = vmatpush1.bf16.msra.mxu0 %v1982
    %2769 = vmatprep.subr.bf16.mxu0 %v1991
    %2770 = vmatpush1.bf16.msra.mxu0 %v1990
    %2771 = vmatprep.subr.bf16.mxu0 %v1999
    %2772 = vmatpush1.bf16.msra.mxu0 %v1998
    %2773 = vmatprep.subr.bf16.mxu0 %v2007
    %2774 = vmatpush1.bf16.msra.mxu0 %v2006
    %2775 = vmatprep.subr.bf16.mxu0 %v2015
    %2776 = vmatpush1.bf16.msra.mxu0 %v2014
    %2777 = vmatprep.subr.bf16.mxu0 %v2023
    %2778 = vmatpush1.bf16.msra.mxu0 %v2022
    %2779 = vmatprep.subr.bf16.mxu0 %v2031
    %2780 = vmatpush1.bf16.msra.mxu0 %v2030
    %2781 = vmatprep.subr.bf16.mxu0 %v2039
    %2782 = vmatpush1.bf16.msra.mxu0 %v2038
    %2783 = vmatprep.subr.bf16.mxu0 %v2047
    %2784 = vmatpush1.bf16.msra.mxu0 %v2046
    %2785 = vmatprep.subr.bf16.mxu0 %v2055
    %2786 = vmatpush1.bf16.msra.mxu0 %v2054
    %2787 = vmatprep.subr.bf16.mxu0 %v2063
    %2788 = vmatpush1.bf16.msra.mxu0 %v2062
    %2789 = vmatprep.subr.bf16.mxu0 %v2071
    %2790 = vmatpush1.bf16.msra.mxu0 %v2070
    %2791 = vmatprep.subr.bf16.mxu0 %v2079
    %2792 = vmatpush1.bf16.msra.mxu0 %v2078
    %2793 = vmatprep.subr.bf16.mxu0 %v2087
    %2794 = vmatpush1.bf16.msra.mxu0 %v2086
    %2795 = vmatprep.subr.bf16.mxu0 %v2095
    %2796 = vmatpush1.bf16.msra.mxu0 %v2094
    %2797 = vmatprep.mubr.bf16.mxu0 %v2762
    %2798 = vmatmul.mubr.bf16.gmra.mrb[0].mxu0 %v2761
    %v2799 = vpop.f32.mrb[0].mxu0
    %v2800 = vadd.f32 0.0, %v2799
    %v2801 = vpop.f32.mrb[0].mxu0
    %v2802 = vadd.f32 0.0, %v2801
    %v2803 = vpop.f32.mrb[0].mxu0
    %v2804 = vpop.f32.mrb[0].mxu0
    %2805 = vdwg.mxu0
    %2806 = vmatprep.subr.bf16.mxu0 %v1977
    %2807 = vmatpush1.bf16.msra.mxu0 %v1976
    %2808 = vmatprep.subr.bf16.mxu0 %v1985
    %2809 = vmatpush1.bf16.msra.mxu0 %v1984
    %2810 = vmatprep.subr.bf16.mxu0 %v1993
    %2811 = vmatpush1.bf16.msra.mxu0 %v1992
    %2812 = vmatprep.subr.bf16.mxu0 %v2001
    %2813 = vmatpush1.bf16.msra.mxu0 %v2000
    %2814 = vmatprep.subr.bf16.mxu0 %v2009
    %2815 = vmatpush1.bf16.msra.mxu0 %v2008
    %2816 = vmatprep.subr.bf16.mxu0 %v2017
    %2817 = vmatpush1.bf16.msra.mxu0 %v2016
    %2818 = vmatprep.subr.bf16.mxu0 %v2025
    %2819 = vmatpush1.bf16.msra.mxu0 %v2024
    %2820 = vmatprep.subr.bf16.mxu0 %v2033
    %2821 = vmatpush1.bf16.msra.mxu0 %v2032
    %2822 = vmatprep.subr.bf16.mxu0 %v2041
    %2823 = vmatpush1.bf16.msra.mxu0 %v2040
    %2824 = vmatprep.subr.bf16.mxu0 %v2049
    %2825 = vmatpush1.bf16.msra.mxu0 %v2048
    %2826 = vmatprep.subr.bf16.mxu0 %v2057
    %2827 = vmatpush1.bf16.msra.mxu0 %v2056
    %2828 = vmatprep.subr.bf16.mxu0 %v2065
    %2829 = vmatpush1.bf16.msra.mxu0 %v2064
    %2830 = vmatprep.subr.bf16.mxu0 %v2073
    %2831 = vmatpush1.bf16.msra.mxu0 %v2072
    %2832 = vmatprep.subr.bf16.mxu0 %v2081
    %2833 = vmatpush1.bf16.msra.mxu0 %v2080
    %2834 = vmatprep.subr.bf16.mxu0 %v2089
    %2835 = vmatpush1.bf16.msra.mxu0 %v2088
    %2836 = vmatprep.subr.bf16.mxu0 %v2097
    %2837 = vmatpush1.bf16.msra.mxu0 %v2096
    %2838 = vmatprep.mubr.bf16.mxu0 %v2762
    %2839 = vmatmul.mubr.bf16.gmra.mrb[0].mxu0 %v2761
    %v2840 = vpop.f32.mrb[0].mxu0
    %v2841 = vadd.f32 0.0, %v2840
    %v2842 = vpop.f32.mrb[0].mxu0
    %v2843 = vadd.f32 0.0, %v2842
    %v2844 = vpop.f32.mrb[0].mxu0
    %v2845 = vpop.f32.mrb[0].mxu0
    %2846 = vdwg.mxu0
    %2847 = vmatprep.subr.bf16.mxu0 %v1979
    %2848 = vmatpush1.bf16.msra.mxu0 %v1978
    %2849 = vmatprep.subr.bf16.mxu0 %v1987
    %2850 = vmatpush1.bf16.msra.mxu0 %v1986
    %2851 = vmatprep.subr.bf16.mxu0 %v1995
    %2852 = vmatpush1.bf16.msra.mxu0 %v1994
    %2853 = vmatprep.subr.bf16.mxu0 %v2003
    %2854 = vmatpush1.bf16.msra.mxu0 %v2002
    %2855 = vmatprep.subr.bf16.mxu0 %v2011
    %2856 = vmatpush1.bf16.msra.mxu0 %v2010
    %2857 = vmatprep.subr.bf16.mxu0 %v2019
    %2858 = vmatpush1.bf16.msra.mxu0 %v2018
    %2859 = vmatprep.subr.bf16.mxu0 %v2027
    %2860 = vmatpush1.bf16.msra.mxu0 %v2026
    %2861 = vmatprep.subr.bf16.mxu0 %v2035
    %2862 = vmatpush1.bf16.msra.mxu0 %v2034
    %2863 = vmatprep.subr.bf16.mxu0 %v2043
    %2864 = vmatpush1.bf16.msra.mxu0 %v2042
    %2865 = vmatprep.subr.bf16.mxu0 %v2051
    %2866 = vmatpush1.bf16.msra.mxu0 %v2050
    %2867 = vmatprep.subr.bf16.mxu0 %v2059
    %2868 = vmatpush1.bf16.msra.mxu0 %v2058
    %2869 = vmatprep.subr.bf16.mxu0 %v2067
    %2870 = vmatpush1.bf16.msra.mxu0 %v2066
    %2871 = vmatprep.subr.bf16.mxu0 %v2075
    %2872 = vmatpush1.bf16.msra.mxu0 %v2074
    %2873 = vmatprep.subr.bf16.mxu0 %v2083
    %2874 = vmatpush1.bf16.msra.mxu0 %v2082
    %2875 = vmatprep.subr.bf16.mxu0 %v2091
    %2876 = vmatpush1.bf16.msra.mxu0 %v2090
    %2877 = vmatprep.subr.bf16.mxu0 %v2099
    %2878 = vmatpush1.bf16.msra.mxu0 %v2098
    %2879 = vmatprep.mubr.bf16.mxu0 %v2762
    %2880 = vmatmul.mubr.bf16.gmra.mrb[0].mxu0 %v2761
    %v2881 = vpop.f32.mrb[0].mxu0
    %v2882 = vadd.f32 0.0, %v2881
    %v2883 = vpop.f32.mrb[0].mxu0
    %v2884 = vadd.f32 0.0, %v2883
    %v2885 = vpop.f32.mrb[0].mxu0
    %v2886 = vpop.f32.mrb[0].mxu0
    %2887 = vdwg.mxu0
    %2888 = vmatprep.subr.bf16.mxu0 %v1981
    %2889 = vmatpush1.bf16.msra.mxu0 %v1980
    %2890 = vmatprep.subr.bf16.mxu0 %v1989
    %2891 = vmatpush1.bf16.msra.mxu0 %v1988
    %2892 = vmatprep.subr.bf16.mxu0 %v1997
    %2893 = vmatpush1.bf16.msra.mxu0 %v1996
    %2894 = vmatprep.subr.bf16.mxu0 %v2005
    %2895 = vmatpush1.bf16.msra.mxu0 %v2004
    %2896 = vmatprep.subr.bf16.mxu0 %v2013
    %2897 = vmatpush1.bf16.msra.mxu0 %v2012
    %2898 = vmatprep.subr.bf16.mxu0 %v2021
    %2899 = vmatpush1.bf16.msra.mxu0 %v2020
    %2900 = vmatprep.subr.bf16.mxu0 %v2029
    %2901 = vmatpush1.bf16.msra.mxu0 %v2028
    %2902 = vmatprep.subr.bf16.mxu0 %v2037
    %2903 = vmatpush1.bf16.msra.mxu0 %v2036
    %2904 = vmatprep.subr.bf16.mxu0 %v2045
    %2905 = vmatpush1.bf16.msra.mxu0 %v2044
    %2906 = vmatprep.subr.bf16.mxu0 %v2053
    %2907 = vmatpush1.bf16.msra.mxu0 %v2052
    %2908 = vmatprep.subr.bf16.mxu0 %v2061
    %2909 = vmatpush1.bf16.msra.mxu0 %v2060
    %2910 = vmatprep.subr.bf16.mxu0 %v2069
    %2911 = vmatpush1.bf16.msra.mxu0 %v2068
    %2912 = vmatprep.subr.bf16.mxu0 %v2077
    %2913 = vmatpush1.bf16.msra.mxu0 %v2076
    %2914 = vmatprep.subr.bf16.mxu0 %v2085
    %2915 = vmatpush1.bf16.msra.mxu0 %v2084
    %2916 = vmatprep.subr.bf16.mxu0 %v2093
    %2917 = vmatpush1.bf16.msra.mxu0 %v2092
    %2918 = vmatprep.subr.bf16.mxu0 %v2101
    %2919 = vmatpush1.bf16.msra.mxu0 %v2100
    %2920 = vmatprep.mubr.bf16.mxu0 %v2762
    %2921 = vmatmul.mubr.bf16.gmra.mrb[0].mxu0 %v2761
    %v2922 = vpop.f32.mrb[0].mxu0
    %v2923 = vadd.f32 0.0, %v2922
    %v2924 = vpop.f32.mrb[0].mxu0
    %v2925 = vadd.f32 0.0, %v2924
    %v2926 = vpop.f32.mrb[0].mxu0
    %v2927 = vpop.f32.mrb[0].mxu0
    %2928 = vdwg.mxu0
    %v2929 = vadd.f32 %v2308, %v2800
    %v2930 = vadd.f32 %v2310, %v2802
    %v2931 = vadd.f32 %v2349, %v2841
    %v2932 = vadd.f32 %v2351, %v2843
    %v2933 = vadd.f32 %v2390, %v2882
    %v2934 = vadd.f32 %v2392, %v2884
    %v2935 = vadd.f32 %v2431, %v2923
    %v2936 = vadd.f32 %v2433, %v2925
    %v2937 = vxor.u32 %v2929, 2147483648
    %v2938 = vxor.u32 %v2930, 2147483648
    %v2939 = vmul.f32 %v2937, 1.442695
    %v2940 = vpow.pop %v2939
    %v2941 = vmul.f32 %v2938, 1.442695
    %v2942 = vpow.pop %v2941
    %v2943 = vadd.f32 %v2940, 1.0
    %v2944 = vadd.f32 %v2942, 1.0
    %v2945 = vrcp.pop %v2943
    %v2946 = vmul.f32 1.0, %v2945
    %v2947 = vrcp.pop %v2944
    %v2948 = vmul.f32 1.0, %v2947
    %v2949 = vxor.u32 %v2931, 2147483648
    %v2950 = vxor.u32 %v2932, 2147483648
    %v2951 = vmul.f32 %v2949, 1.442695
    %v2952 = vpow.pop %v2951
    %v2953 = vmul.f32 %v2950, 1.442695
    %v2954 = vpow.pop %v2953
    %v2955 = vadd.f32 %v2952, 1.0
    %v2956 = vadd.f32 %v2954, 1.0
    %v2957 = vrcp.pop %v2955
    %v2958 = vmul.f32 1.0, %v2957
    %v2959 = vrcp.pop %v2956
    %v2960 = vmul.f32 1.0, %v2959
    %v2961 = vtanh.pop %v2933
    %v2962 = vtanh.pop %v2934
    %v2963 = vxor.u32 %v2935, 2147483648
    %v2964 = vxor.u32 %v2936, 2147483648
    %v2965 = vmul.f32 %v2963, 1.442695
    %v2966 = vpow.pop %v2965
    %v2967 = vmul.f32 %v2964, 1.442695
    %v2968 = vpow.pop %v2967
    %v2969 = vadd.f32 %v2966, 1.0
    %v2970 = vadd.f32 %v2968, 1.0
    %v2971 = vrcp.pop %v2969
    %v2972 = vmul.f32 1.0, %v2971
    %v2973 = vrcp.pop %v2970
    %v2974 = vmul.f32 1.0, %v2973
    %v2975 = vmul.f32 %v2958, 0.0
    %v2976 = vmul.f32 %v2960, 0.0
    %v2977 = vmul.f32 %v2946, %v2961
    %v2978 = vmul.f32 %v2948, %v2962
    %v2979 = vadd.f32 %v2975, %v2977
    %v2980 = vadd.f32 %v2976, %v2978
    %v2981 = vtanh.pop %v2979
    %v2982 = vtanh.pop %v2980
    %v2983 = vmul.f32 %v2972, %v2981
    %v2984 = vmul.f32 %v2974, %v2982
    %v2985 = vpack.c.bf16 %v2983, %v2983
    %v2986 = vpack.c.bf16 %v2984, %v2984
    %2987 = vmatprep.subr.bf16.mxu0 %v2104
    %2988 = vmatpush1.bf16.msra.mxu0 %v2103
    %2989 = vmatprep.subr.bf16.mxu0 %v2112
    %2990 = vmatpush1.bf16.msra.mxu0 %v2111
    %2991 = vmatprep.subr.bf16.mxu0 %v2120
    %2992 = vmatpush1.bf16.msra.mxu0 %v2119
    %2993 = vmatprep.subr.bf16.mxu0 %v2128
    %2994 = vmatpush1.bf16.msra.mxu0 %v2127
    %2995 = vmatprep.subr.bf16.mxu0 %v2136
    %2996 = vmatpush1.bf16.msra.mxu0 %v2135
    %2997 = vmatprep.subr.bf16.mxu0 %v2144
    %2998 = vmatpush1.bf16.msra.mxu0 %v2143
    %2999 = vmatprep.subr.bf16.mxu0 %v2152
    %3000 = vmatpush1.bf16.msra.mxu0 %v2151
    %3001 = vmatprep.subr.bf16.mxu0 %v2160
    %3002 = vmatpush1.bf16.msra.mxu0 %v2159
    %3003 = vmatprep.subr.bf16.mxu0 %v2168
    %3004 = vmatpush1.bf16.msra.mxu0 %v2167
    %3005 = vmatprep.subr.bf16.mxu0 %v2176
    %3006 = vmatpush1.bf16.msra.mxu0 %v2175
    %3007 = vmatprep.subr.bf16.mxu0 %v2184
    %3008 = vmatpush1.bf16.msra.mxu0 %v2183
    %3009 = vmatprep.subr.bf16.mxu0 %v2192
    %3010 = vmatpush1.bf16.msra.mxu0 %v2191
    %3011 = vmatprep.subr.bf16.mxu0 %v2200
    %3012 = vmatpush1.bf16.msra.mxu0 %v2199
    %3013 = vmatprep.subr.bf16.mxu0 %v2208
    %3014 = vmatpush1.bf16.msra.mxu0 %v2207
    %3015 = vmatprep.subr.bf16.mxu0 %v2216
    %3016 = vmatpush1.bf16.msra.mxu0 %v2215
    %3017 = vmatprep.subr.bf16.mxu0 %v2224
    %3018 = vmatpush1.bf16.msra.mxu0 %v2223
    %3019 = vmatprep.mubr.bf16.mxu0 %v2986
    %3020 = vmatmul.mubr.bf16.gmra.mrb[0].mxu0 %v2985
    %v3021 = vpop.f32.mrb[0].mxu0
    %v3022 = vadd.f32 %v2236, %v3021
    %v3023 = vpop.f32.mrb[0].mxu0
    %v3024 = vadd.f32 %v2240, %v3023
    %v3025 = vpop.f32.mrb[0].mxu0
    %v3026 = vpop.f32.mrb[0].mxu0
    %3027 = vdwg.mxu0
    %3028 = vmatprep.subr.bf16.mxu0 %v2106
    %3029 = vmatpush1.bf16.msra.mxu0 %v2105
    %3030 = vmatprep.subr.bf16.mxu0 %v2114
    %3031 = vmatpush1.bf16.msra.mxu0 %v2113
    %3032 = vmatprep.subr.bf16.mxu0 %v2122
    %3033 = vmatpush1.bf16.msra.mxu0 %v2121
    %3034 = vmatprep.subr.bf16.mxu0 %v2130
    %3035 = vmatpush1.bf16.msra.mxu0 %v2129
    %3036 = vmatprep.subr.bf16.mxu0 %v2138
    %3037 = vmatpush1.bf16.msra.mxu0 %v2137
    %3038 = vmatprep.subr.bf16.mxu0 %v2146
    %3039 = vmatpush1.bf16.msra.mxu0 %v2145
    %3040 = vmatprep.subr.bf16.mxu0 %v2154
    %3041 = vmatpush1.bf16.msra.mxu0 %v2153
    %3042 = vmatprep.subr.bf16.mxu0 %v2162
    %3043 = vmatpush1.bf16.msra.mxu0 %v2161
    %3044 = vmatprep.subr.bf16.mxu0 %v2170
    %3045 = vmatpush1.bf16.msra.mxu0 %v2169
    %3046 = vmatprep.subr.bf16.mxu0 %v2178
    %3047 = vmatpush1.bf16.msra.mxu0 %v2177
    %3048 = vmatprep.subr.bf16.mxu0 %v2186
    %3049 = vmatpush1.bf16.msra.mxu0 %v2185
    %3050 = vmatprep.subr.bf16.mxu0 %v2194
    %3051 = vmatpush1.bf16.msra.mxu0 %v2193
    %3052 = vmatprep.subr.bf16.mxu0 %v2202
    %3053 = vmatpush1.bf16.msra.mxu0 %v2201
    %3054 = vmatprep.subr.bf16.mxu0 %v2210
    %3055 = vmatpush1.bf16.msra.mxu0 %v2209
    %3056 = vmatprep.subr.bf16.mxu0 %v2218
    %3057 = vmatpush1.bf16.msra.mxu0 %v2217
    %3058 = vmatprep.subr.bf16.mxu0 %v2226
    %3059 = vmatpush1.bf16.msra.mxu0 %v2225
    %3060 = vmatprep.mubr.bf16.mxu0 %v2986
    %3061 = vmatmul.mubr.bf16.gmra.mrb[0].mxu0 %v2985
    %v3062 = vpop.f32.mrb[0].mxu0
    %v3063 = vadd.f32 %v2244, %v3062
    %v3064 = vpop.f32.mrb[0].mxu0
    %v3065 = vadd.f32 %v2248, %v3064
    %v3066 = vpop.f32.mrb[0].mxu0
    %v3067 = vpop.f32.mrb[0].mxu0
    %3068 = vdwg.mxu0
    %3069 = vmatprep.subr.bf16.mxu0 %v2108
    %3070 = vmatpush1.bf16.msra.mxu0 %v2107
    %3071 = vmatprep.subr.bf16.mxu0 %v2116
    %3072 = vmatpush1.bf16.msra.mxu0 %v2115
    %3073 = vmatprep.subr.bf16.mxu0 %v2124
    %3074 = vmatpush1.bf16.msra.mxu0 %v2123
    %3075 = vmatprep.subr.bf16.mxu0 %v2132
    %3076 = vmatpush1.bf16.msra.mxu0 %v2131
    %3077 = vmatprep.subr.bf16.mxu0 %v2140
    %3078 = vmatpush1.bf16.msra.mxu0 %v2139
    %3079 = vmatprep.subr.bf16.mxu0 %v2148
    %3080 = vmatpush1.bf16.msra.mxu0 %v2147
    %3081 = vmatprep.subr.bf16.mxu0 %v2156
    %3082 = vmatpush1.bf16.msra.mxu0 %v2155
    %3083 = vmatprep.subr.bf16.mxu0 %v2164
    %3084 = vmatpush1.bf16.msra.mxu0 %v2163
    %3085 = vmatprep.subr.bf16.mxu0 %v2172
    %3086 = vmatpush1.bf16.msra.mxu0 %v2171
    %3087 = vmatprep.subr.bf16.mxu0 %v2180
    %3088 = vmatpush1.bf16.msra.mxu0 %v2179
    %3089 = vmatprep.subr.bf16.mxu0 %v2188
    %3090 = vmatpush1.bf16.msra.mxu0 %v2187
    %3091 = vmatprep.subr.bf16.mxu0 %v2196
    %3092 = vmatpush1.bf16.msra.mxu0 %v2195
    %3093 = vmatprep.subr.bf16.mxu0 %v2204
    %3094 = vmatpush1.bf16.msra.mxu0 %v2203
    %3095 = vmatprep.subr.bf16.mxu0 %v2212
    %3096 = vmatpush1.bf16.msra.mxu0 %v2211
    %3097 = vmatprep.subr.bf16.mxu0 %v2220
    %3098 = vmatpush1.bf16.msra.mxu0 %v2219
    %3099 = vmatprep.subr.bf16.mxu0 %v2228
    %3100 = vmatpush1.bf16.msra.mxu0 %v2227
    %3101 = vmatprep.mubr.bf16.mxu0 %v2986
    %3102 = vmatmul.mubr.bf16.gmra.mrb[0].mxu0 %v2985
    %v3103 = vpop.f32.mrb[0].mxu0
    %v3104 = vadd.f32 %v2252, %v3103
    %v3105 = vpop.f32.mrb[0].mxu0
    %v3106 = vadd.f32 %v2256, %v3105
    %v3107 = vpop.f32.mrb[0].mxu0
    %v3108 = vpop.f32.mrb[0].mxu0
    %3109 = vdwg.mxu0
    %3110 = vmatprep.subr.bf16.mxu0 %v2110
    %3111 = vmatpush1.bf16.msra.mxu0 %v2109
    %3112 = vmatprep.subr.bf16.mxu0 %v2118
    %3113 = vmatpush1.bf16.msra.mxu0 %v2117
    %3114 = vmatprep.subr.bf16.mxu0 %v2126
    %3115 = vmatpush1.bf16.msra.mxu0 %v2125
    %3116 = vmatprep.subr.bf16.mxu0 %v2134
    %3117 = vmatpush1.bf16.msra.mxu0 %v2133
    %3118 = vmatprep.subr.bf16.mxu0 %v2142
    %3119 = vmatpush1.bf16.msra.mxu0 %v2141
    %3120 = vmatprep.subr.bf16.mxu0 %v2150
    %3121 = vmatpush1.bf16.msra.mxu0 %v2149
    %3122 = vmatprep.subr.bf16.mxu0 %v2158
    %3123 = vmatpush1.bf16.msra.mxu0 %v2157
    %3124 = vmatprep.subr.bf16.mxu0 %v2166
    %3125 = vmatpush1.bf16.msra.mxu0 %v2165
    %3126 = vmatprep.subr.bf16.mxu0 %v2174
    %3127 = vmatpush1.bf16.msra.mxu0 %v2173
    %3128 = vmatprep.subr.bf16.mxu0 %v2182
    %3129 = vmatpush1.bf16.msra.mxu0 %v2181
    %3130 = vmatprep.subr.bf16.mxu0 %v2190
    %3131 = vmatpush1.bf16.msra.mxu0 %v2189
    %3132 = vmatprep.subr.bf16.mxu0 %v2198
    %3133 = vmatpush1.bf16.msra.mxu0 %v2197
    %3134 = vmatprep.subr.bf16.mxu0 %v2206
    %3135 = vmatpush1.bf16.msra.mxu0 %v2205
    %3136 = vmatprep.subr.bf16.mxu0 %v2214
    %3137 = vmatpush1.bf16.msra.mxu0 %v2213
    %3138 = vmatprep.subr.bf16.mxu0 %v2222
    %3139 = vmatpush1.bf16.msra.mxu0 %v2221
    %3140 = vmatprep.subr.bf16.mxu0 %v2230
    %3141 = vmatpush1.bf16.msra.mxu0 %v2229
    %3142 = vmatprep.mubr.bf16.mxu0 %v2986
    %3143 = vmatmul.mubr.bf16.gmra.mrb[0].mxu0 %v2985
    %v3144 = vpop.f32.mrb[0].mxu0
    %v3145 = vadd.f32 %v2260, %v3144
    %v3146 = vpop.f32.mrb[0].mxu0
    %v3147 = vadd.f32 %v2264, %v3146
    %v3148 = vpop.f32.mrb[0].mxu0
    %v3149 = vpop.f32.mrb[0].mxu0
    %3150 = vdwg.mxu0
    %3151 = vmatprep.subr.bf16.mxu0 %v1846
    %3152 = vmatpush1.bf16.msra.mxu0 %v1845
    %3153 = vmatprep.subr.bf16.mxu0 %v1854
    %3154 = vmatpush1.bf16.msra.mxu0 %v1853
    %3155 = vmatprep.subr.bf16.mxu0 %v1862
    %3156 = vmatpush1.bf16.msra.mxu0 %v1861
    %3157 = vmatprep.subr.bf16.mxu0 %v1870
    %3158 = vmatpush1.bf16.msra.mxu0 %v1869
    %3159 = vmatprep.subr.bf16.mxu0 %v1878
    %3160 = vmatpush1.bf16.msra.mxu0 %v1877
    %3161 = vmatprep.subr.bf16.mxu0 %v1886
    %3162 = vmatpush1.bf16.msra.mxu0 %v1885
    %3163 = vmatprep.subr.bf16.mxu0 %v1894
    %3164 = vmatpush1.bf16.msra.mxu0 %v1893
    %3165 = vmatprep.subr.bf16.mxu0 %v1902
    %3166 = vmatpush1.bf16.msra.mxu0 %v1901
    %3167 = vmatprep.subr.bf16.mxu0 %v1910
    %3168 = vmatpush1.bf16.msra.mxu0 %v1909
    %3169 = vmatprep.subr.bf16.mxu0 %v1918
    %3170 = vmatpush1.bf16.msra.mxu0 %v1917
    %3171 = vmatprep.subr.bf16.mxu0 %v1926
    %3172 = vmatpush1.bf16.msra.mxu0 %v1925
    %3173 = vmatprep.subr.bf16.mxu0 %v1934
    %3174 = vmatpush1.bf16.msra.mxu0 %v1933
    %3175 = vmatprep.subr.bf16.mxu0 %v1942
    %3176 = vmatpush1.bf16.msra.mxu0 %v1941
    %3177 = vmatprep.subr.bf16.mxu0 %v1950
    %3178 = vmatpush1.bf16.msra.mxu0 %v1949
    %3179 = vmatprep.subr.bf16.mxu0 %v1958
    %3180 = vmatpush1.bf16.msra.mxu0 %v1957
    %3181 = vmatprep.subr.bf16.mxu0 %v1966
    %3182 = vmatpush1.bf16.msra.mxu0 %v1965
    %3183 = vmatprep.mubr.bf16.mxu0 %v2762
    %3184 = vmatmul.mubr.bf16.gmra.mrb[0].mxu0 %v2761
    %v3185 = vpop.f32.mrb[0].mxu0
    %v3186 = vadd.f32 0.0, %v3185
    %v3187 = vpop.f32.mrb[0].mxu0
    %v3188 = vadd.f32 0.0, %v3187
    %v3189 = vpop.f32.mrb[0].mxu0
    %v3190 = vpop.f32.mrb[0].mxu0
    %3191 = vdwg.mxu0
    %3192 = vmatprep.subr.bf16.mxu0 %v1848
    %3193 = vmatpush1.bf16.msra.mxu0 %v1847
    %3194 = vmatprep.subr.bf16.mxu0 %v1856
    %3195 = vmatpush1.bf16.msra.mxu0 %v1855
    %3196 = vmatprep.subr.bf16.mxu0 %v1864
    %3197 = vmatpush1.bf16.msra.mxu0 %v1863
    %3198 = vmatprep.subr.bf16.mxu0 %v1872
    %3199 = vmatpush1.bf16.msra.mxu0 %v1871
    %3200 = vmatprep.subr.bf16.mxu0 %v1880
    %3201 = vmatpush1.bf16.msra.mxu0 %v1879
    %3202 = vmatprep.subr.bf16.mxu0 %v1888
    %3203 = vmatpush1.bf16.msra.mxu0 %v1887
    %3204 = vmatprep.subr.bf16.mxu0 %v1896
    %3205 = vmatpush1.bf16.msra.mxu0 %v1895
    %3206 = vmatprep.subr.bf16.mxu0 %v1904
    %3207 = vmatpush1.bf16.msra.mxu0 %v1903
    %3208 = vmatprep.subr.bf16.mxu0 %v1912
    %3209 = vmatpush1.bf16.msra.mxu0 %v1911
    %3210 = vmatprep.subr.bf16.mxu0 %v1920
    %3211 = vmatpush1.bf16.msra.mxu0 %v1919
    %3212 = vmatprep.subr.bf16.mxu0 %v1928
    %3213 = vmatpush1.bf16.msra.mxu0 %v1927
    %3214 = vmatprep.subr.bf16.mxu0 %v1936
    %3215 = vmatpush1.bf16.msra.mxu0 %v1935
    %3216 = vmatprep.subr.bf16.mxu0 %v1944
    %3217 = vmatpush1.bf16.msra.mxu0 %v1943
    %3218 = vmatprep.subr.bf16.mxu0 %v1952
    %3219 = vmatpush1.bf16.msra.mxu0 %v1951
    %3220 = vmatprep.subr.bf16.mxu0 %v1960
    %3221 = vmatpush1.bf16.msra.mxu0 %v1959
    %3222 = vmatprep.subr.bf16.mxu0 %v1968
    %3223 = vmatpush1.bf16.msra.mxu0 %v1967
    %3224 = vmatprep.mubr.bf16.mxu0 %v2762
    %3225 = vmatmul.mubr.bf16.gmra.mrb[0].mxu0 %v2761
    %v3226 = vpop.f32.mrb[0].mxu0
    %v3227 = vadd.f32 0.0, %v3226
    %v3228 = vpop.f32.mrb[0].mxu0
    %v3229 = vadd.f32 0.0, %v3228
    %v3230 = vpop.f32.mrb[0].mxu0
    %v3231 = vpop.f32.mrb[0].mxu0
    %3232 = vdwg.mxu0
    %3233 = vmatprep.subr.bf16.mxu0 %v1850
    %3234 = vmatpush1.bf16.msra.mxu0 %v1849
    %3235 = vmatprep.subr.bf16.mxu0 %v1858
    %3236 = vmatpush1.bf16.msra.mxu0 %v1857
    %3237 = vmatprep.subr.bf16.mxu0 %v1866
    %3238 = vmatpush1.bf16.msra.mxu0 %v1865
    %3239 = vmatprep.subr.bf16.mxu0 %v1874
    %3240 = vmatpush1.bf16.msra.mxu0 %v1873
    %3241 = vmatprep.subr.bf16.mxu0 %v1882
    %3242 = vmatpush1.bf16.msra.mxu0 %v1881
    %3243 = vmatprep.subr.bf16.mxu0 %v1890
    %3244 = vmatpush1.bf16.msra.mxu0 %v1889
    %3245 = vmatprep.subr.bf16.mxu0 %v1898
    %3246 = vmatpush1.bf16.msra.mxu0 %v1897
    %3247 = vmatprep.subr.bf16.mxu0 %v1906
    %3248 = vmatpush1.bf16.msra.mxu0 %v1905
    %3249 = vmatprep.subr.bf16.mxu0 %v1914
    %3250 = vmatpush1.bf16.msra.mxu0 %v1913
    %3251 = vmatprep.subr.bf16.mxu0 %v1922
    %3252 = vmatpush1.bf16.msra.mxu0 %v1921
    %3253 = vmatprep.subr.bf16.mxu0 %v1930
    %3254 = vmatpush1.bf16.msra.mxu0 %v1929
    %3255 = vmatprep.subr.bf16.mxu0 %v1938
    %3256 = vmatpush1.bf16.msra.mxu0 %v1937
    %3257 = vmatprep.subr.bf16.mxu0 %v1946
    %3258 = vmatpush1.bf16.msra.mxu0 %v1945
    %3259 = vmatprep.subr.bf16.mxu0 %v1954
    %3260 = vmatpush1.bf16.msra.mxu0 %v1953
    %3261 = vmatprep.subr.bf16.mxu0 %v1962
    %3262 = vmatpush1.bf16.msra.mxu0 %v1961
    %3263 = vmatprep.subr.bf16.mxu0 %v1970
    %3264 = vmatpush1.bf16.msra.mxu0 %v1969
    %3265 = vmatprep.mubr.bf16.mxu0 %v2762
    %3266 = vmatmul.mubr.bf16.gmra.mrb[0].mxu0 %v2761
    %v3267 = vpop.f32.mrb[0].mxu0
    %v3268 = vadd.f32 0.0, %v3267
    %v3269 = vpop.f32.mrb[0].mxu0
    %v3270 = vadd.f32 0.0, %v3269
    %v3271 = vpop.f32.mrb[0].mxu0
    %v3272 = vpop.f32.mrb[0].mxu0
    %3273 = vdwg.mxu0
    %3274 = vmatprep.subr.bf16.mxu0 %v1852
    %3275 = vmatpush1.bf16.msra.mxu0 %v1851
    %3276 = vmatprep.subr.bf16.mxu0 %v1860
    %3277 = vmatpush1.bf16.msra.mxu0 %v1859
    %3278 = vmatprep.subr.bf16.mxu0 %v1868
    %3279 = vmatpush1.bf16.msra.mxu0 %v1867
    %3280 = vmatprep.subr.bf16.mxu0 %v1876
    %3281 = vmatpush1.bf16.msra.mxu0 %v1875
    %3282 = vmatprep.subr.bf16.mxu0 %v1884
    %3283 = vmatpush1.bf16.msra.mxu0 %v1883
    %3284 = vmatprep.subr.bf16.mxu0 %v1892
    %3285 = vmatpush1.bf16.msra.mxu0 %v1891
    %3286 = vmatprep.subr.bf16.mxu0 %v1900
    %3287 = vmatpush1.bf16.msra.mxu0 %v1899
    %3288 = vmatprep.subr.bf16.mxu0 %v1908
    %3289 = vmatpush1.bf16.msra.mxu0 %v1907
    %3290 = vmatprep.subr.bf16.mxu0 %v1916
    %3291 = vmatpush1.bf16.msra.mxu0 %v1915
    %3292 = vmatprep.subr.bf16.mxu0 %v1924
    %3293 = vmatpush1.bf16.msra.mxu0 %v1923
    %3294 = vmatprep.subr.bf16.mxu0 %v1932
    %3295 = vmatpush1.bf16.msra.mxu0 %v1931
    %3296 = vmatprep.subr.bf16.mxu0 %v1940
    %3297 = vmatpush1.bf16.msra.mxu0 %v1939
    %3298 = vmatprep.subr.bf16.mxu0 %v1948
    %3299 = vmatpush1.bf16.msra.mxu0 %v1947
    %3300 = vmatprep.subr.bf16.mxu0 %v1956
    %3301 = vmatpush1.bf16.msra.mxu0 %v1955
    %3302 = vmatprep.subr.bf16.mxu0 %v1964
    %3303 = vmatpush1.bf16.msra.mxu0 %v1963
    %3304 = vmatprep.subr.bf16.mxu0 %v1972
    %3305 = vmatpush1.bf16.msra.mxu0 %v1971
    %3306 = vmatprep.mubr.bf16.mxu0 %v2762
    %3307 = vmatmul.mubr.bf16.gmra.mrb[0].mxu0 %v2761
    %v3308 = vpop.f32.mrb[0].mxu0
    %v3309 = vadd.f32 0.0, %v3308
    %v3310 = vpop.f32.mrb[0].mxu0
    %v3311 = vadd.f32 0.0, %v3310
    %v3312 = vpop.f32.mrb[0].mxu0
    %v3313 = vpop.f32.mrb[0].mxu0
    %3314 = vdwg.mxu0
    %v3323 = vrot.slane %v3186, 7
    %v3324 = vrot.slane %v3188, 7
    %v3325 = vrot.slane %v3227, 7
    %v3326 = vrot.slane %v3229, 7
    %v3327 = vrot.slane %v3268, 7
    %v3328 = vrot.slane %v3270, 7
    %v3329 = vrot.slane %v3309, 7
    %v3330 = vrot.slane %v3311, 7
    %v3347 = vadd.f32 %v1703, %v3323
    %v3348 = vadd.f32 %v1705, %v3324
    %v3349 = vadd.f32 %v1746, %v3325
    %v3350 = vadd.f32 %v1748, %v3326
    %v3351 = vadd.f32 %v1789, %v3327
    %v3352 = vadd.f32 %v1791, %v3328
    %v3353 = vadd.f32 %v1832, %v3329
    %v3354 = vadd.f32 %v1834, %v3330
    %v3355 = vadd.f32 %v1707, %v3186
    %v3356 = vadd.f32 %v1709, %v3188
    %v3357 = vadd.f32 %v1750, %v3227
    %v3358 = vadd.f32 %v1752, %v3229
    %v3359 = vadd.f32 %v1793, %v3268
    %v3360 = vadd.f32 %v1795, %v3270
    %v3361 = vadd.f32 %v1836, %v3309
    %v3362 = vadd.f32 %v1838, %v3311
    %v3363 = vxor.u32 %v3347, 2147483648
    %v3364 = vxor.u32 %v3348, 2147483648
    %v3365 = vxor.u32 %v3355, 2147483648
    %v3366 = vxor.u32 %v3356, 2147483648
    %v3367 = vmul.f32 %v3363, 1.442695
    %v3368 = vpow.pop %v3367
    %v3369 = vmul.f32 %v3364, 1.442695
    %v3370 = vpow.pop %v3369
    %v3371 = vmul.f32 %v3365, 1.442695
    %v3372 = vpow.pop %v3371
    %v3373 = vmul.f32 %v3366, 1.442695
    %v3374 = vpow.pop %v3373
    %v3375 = vadd.f32 %v3368, 1.0
    %v3376 = vadd.f32 %v3370, 1.0
    %v3377 = vadd.f32 %v3372, 1.0
    %v3378 = vadd.f32 %v3374, 1.0
    %v3379 = vrcp.pop %v3375
    %v3380 = vmul.f32 1.0, %v3379
    %v3381 = vrcp.pop %v3376
    %v3382 = vmul.f32 1.0, %v3381
    %v3383 = vrcp.pop %v3377
    %v3384 = vmul.f32 1.0, %v3383
    %v3385 = vrcp.pop %v3378
    %v3386 = vmul.f32 1.0, %v3385
    %v3387 = vxor.u32 %v3349, 2147483648
    %v3388 = vxor.u32 %v3350, 2147483648
    %v3389 = vxor.u32 %v3357, 2147483648
    %v3390 = vxor.u32 %v3358, 2147483648
    %v3391 = vmul.f32 %v3387, 1.442695
    %v3392 = vpow.pop %v3391
    %v3393 = vmul.f32 %v3388, 1.442695
    %v3394 = vpow.pop %v3393
    %v3395 = vmul.f32 %v3389, 1.442695
    %v3396 = vpow.pop %v3395
    %v3397 = vmul.f32 %v3390, 1.442695
    %v3398 = vpow.pop %v3397
    %v3399 = vadd.f32 %v3392, 1.0
    %v3400 = vadd.f32 %v3394, 1.0
    %v3401 = vadd.f32 %v3396, 1.0
    %v3402 = vadd.f32 %v3398, 1.0
    %v3403 = vrcp.pop %v3399
    %v3404 = vmul.f32 1.0, %v3403
    %v3405 = vrcp.pop %v3400
    %v3406 = vmul.f32 1.0, %v3405
    %v3407 = vrcp.pop %v3401
    %v3408 = vmul.f32 1.0, %v3407
    %v3409 = vrcp.pop %v3402
    %v3410 = vmul.f32 1.0, %v3409
    %v3411 = vtanh.pop %v3351
    %v3412 = vtanh.pop %v3352
    %v3413 = vtanh.pop %v3359
    %v3414 = vtanh.pop %v3360
    %v3415 = vxor.u32 %v3353, 2147483648
    %v3416 = vxor.u32 %v3354, 2147483648
    %v3417 = vxor.u32 %v3361, 2147483648
    %v3418 = vxor.u32 %v3362, 2147483648
    %v3419 = vmul.f32 %v3415, 1.442695
    %v3420 = vpow.pop %v3419
    %v3421 = vmul.f32 %v3416, 1.442695
    %v3422 = vpow.pop %v3421
    %v3423 = vmul.f32 %v3417, 1.442695
    %v3424 = vpow.pop %v3423
    %v3425 = vmul.f32 %v3418, 1.442695
    %v3426 = vpow.pop %v3425
    %v3427 = vadd.f32 %v3420, 1.0
    %v3428 = vadd.f32 %v3422, 1.0
    %v3429 = vadd.f32 %v3424, 1.0
    %v3430 = vadd.f32 %v3426, 1.0
    %v3431 = vrcp.pop %v3427
    %v3432 = vmul.f32 1.0, %v3431
    %v3433 = vrcp.pop %v3428
    %v3434 = vmul.f32 1.0, %v3433
    %v3435 = vrcp.pop %v3429
    %v3436 = vmul.f32 1.0, %v3435
    %v3437 = vrcp.pop %v3430
    %v3438 = vmul.f32 1.0, %v3437
    %v3443 = vrot.slane %v2733, 7
    %v3444 = vrot.slane %v2734, 7
    %v3445 = vrot.slane %v2735, 7
    %v3446 = vrot.slane %v2736, 7
    %v3451 = vmul.f32 %v3404, %v3443
    %v3452 = vmul.f32 %v3406, %v3444
    %v3453 = vmul.f32 %v3408, %v3445
    %v3454 = vmul.f32 %v3410, %v3446
    %v3455 = vmul.f32 %v3380, %v3411
    %v3456 = vmul.f32 %v3382, %v3412
    %v3457 = vmul.f32 %v3384, %v3413
    %v3458 = vmul.f32 %v3386, %v3414
    %v3459 = vadd.f32 %v3451, %v3455
    %v3460 = vadd.f32 %v3452, %v3456
    %v3461 = vadd.f32 %v3453, %v3457
    %v3462 = vadd.f32 %v3454, %v3458
    %v3463 = vtanh.pop %v3459
    %v3464 = vtanh.pop %v3460
    %v3465 = vtanh.pop %v3461
    %v3466 = vtanh.pop %v3462
    %v3467 = vmul.f32 %v3432, %v3463
    %v3468 = vmul.f32 %v3434, %v3464
    %v3469 = vmul.f32 %v3436, %v3465
    %v3470 = vmul.f32 %v3438, %v3466
    %v3471 = vpack.c.bf16 %v3467, %v3467
    %v3472 = vpack.c.bf16 %v3468, %v3468
    %v3473 = vpack.c.bf16 %v3469, %v3469
    %v3474 = vpack.c.bf16 %v3470, %v3470
    %v3479 = vunpack.c.l.b16 %v3471
    %v3480 = vunpack.c.l.b16 %v3472
    %v3481 = vunpack.c.l.b16 %v3473
    %v3482 = vunpack.c.l.b16 %v3474
    %v3483 = vrot.slane %v3479, 1
    %v3484 = vsel %vm894, %v3481, %v3483
    %v3485 = vrot.slane %v3480, 1
    %v3486 = vsel %vm894, %v3482, %v3485
    %v3487 = vpack.c.b16 %v3484, %v3484
    %v3488 = vpack.c.b16 %v3486, %v3486
    %3491 = vmatprep.subr.bf16.mxu0 %v1975
    %3492 = vmatpush1.bf16.msra.mxu0 %v1974
    %3493 = vmatprep.subr.bf16.mxu0 %v1983
    %3494 = vmatpush1.bf16.msra.mxu0 %v1982
    %3495 = vmatprep.subr.bf16.mxu0 %v1991
    %3496 = vmatpush1.bf16.msra.mxu0 %v1990
    %3497 = vmatprep.subr.bf16.mxu0 %v1999
    %3498 = vmatpush1.bf16.msra.mxu0 %v1998
    %3499 = vmatprep.subr.bf16.mxu0 %v2007
    %3500 = vmatpush1.bf16.msra.mxu0 %v2006
    %3501 = vmatprep.subr.bf16.mxu0 %v2015
    %3502 = vmatpush1.bf16.msra.mxu0 %v2014
    %3503 = vmatprep.subr.bf16.mxu0 %v2023
    %3504 = vmatpush1.bf16.msra.mxu0 %v2022
    %3505 = vmatprep.subr.bf16.mxu0 %v2031
    %3506 = vmatpush1.bf16.msra.mxu0 %v2030
    %3507 = vmatprep.subr.bf16.mxu0 %v2039
    %3508 = vmatpush1.bf16.msra.mxu0 %v2038
    %3509 = vmatprep.subr.bf16.mxu0 %v2047
    %3510 = vmatpush1.bf16.msra.mxu0 %v2046
    %3511 = vmatprep.subr.bf16.mxu0 %v2055
    %3512 = vmatpush1.bf16.msra.mxu0 %v2054
    %3513 = vmatprep.subr.bf16.mxu0 %v2063
    %3514 = vmatpush1.bf16.msra.mxu0 %v2062
    %3515 = vmatprep.subr.bf16.mxu0 %v2071
    %3516 = vmatpush1.bf16.msra.mxu0 %v2070
    %3517 = vmatprep.subr.bf16.mxu0 %v2079
    %3518 = vmatpush1.bf16.msra.mxu0 %v2078
    %3519 = vmatprep.subr.bf16.mxu0 %v2087
    %3520 = vmatpush1.bf16.msra.mxu0 %v2086
    %3521 = vmatprep.subr.bf16.mxu0 %v2095
    %3522 = vmatpush1.bf16.msra.mxu0 %v2094
    %3523 = vmatprep.mubr.bf16.mxu0 %v3488
    %3524 = vmatmul.mubr.bf16.gmra.mrb[0].mxu0 %v3487
    %v3525 = vpop.f32.mrb[0].mxu0
    %v3526 = vadd.f32 0.0, %v3525
    %v3527 = vpop.f32.mrb[0].mxu0
    %v3528 = vadd.f32 0.0, %v3527
    %v3529 = vpop.f32.mrb[0].mxu0
    %v3530 = vpop.f32.mrb[0].mxu0
    %3531 = vdwg.mxu0
    %3532 = vmatprep.subr.bf16.mxu0 %v1977
    %3533 = vmatpush1.bf16.msra.mxu0 %v1976
    %3534 = vmatprep.subr.bf16.mxu0 %v1985
    %3535 = vmatpush1.bf16.msra.mxu0 %v1984
    %3536 = vmatprep.subr.bf16.mxu0 %v1993
    %3537 = vmatpush1.bf16.msra.mxu0 %v1992
    %3538 = vmatprep.subr.bf16.mxu0 %v2001
    %3539 = vmatpush1.bf16.msra.mxu0 %v2000
    %3540 = vmatprep.subr.bf16.mxu0 %v2009
    %3541 = vmatpush1.bf16.msra.mxu0 %v2008
    %3542 = vmatprep.subr.bf16.mxu0 %v2017
    %3543 = vmatpush1.bf16.msra.mxu0 %v2016
    %3544 = vmatprep.subr.bf16.mxu0 %v2025
    %3545 = vmatpush1.bf16.msra.mxu0 %v2024
    %3546 = vmatprep.subr.bf16.mxu0 %v2033
    %3547 = vmatpush1.bf16.msra.mxu0 %v2032
    %3548 = vmatprep.subr.bf16.mxu0 %v2041
    %3549 = vmatpush1.bf16.msra.mxu0 %v2040
    %3550 = vmatprep.subr.bf16.mxu0 %v2049
    %3551 = vmatpush1.bf16.msra.mxu0 %v2048
    %3552 = vmatprep.subr.bf16.mxu0 %v2057
    %3553 = vmatpush1.bf16.msra.mxu0 %v2056
    %3554 = vmatprep.subr.bf16.mxu0 %v2065
    %3555 = vmatpush1.bf16.msra.mxu0 %v2064
    %3556 = vmatprep.subr.bf16.mxu0 %v2073
    %3557 = vmatpush1.bf16.msra.mxu0 %v2072
    %3558 = vmatprep.subr.bf16.mxu0 %v2081
    %3559 = vmatpush1.bf16.msra.mxu0 %v2080
    %3560 = vmatprep.subr.bf16.mxu0 %v2089
    %3561 = vmatpush1.bf16.msra.mxu0 %v2088
    %3562 = vmatprep.subr.bf16.mxu0 %v2097
    %3563 = vmatpush1.bf16.msra.mxu0 %v2096
    %3564 = vmatprep.mubr.bf16.mxu0 %v3488
    %3565 = vmatmul.mubr.bf16.gmra.mrb[0].mxu0 %v3487
    %v3566 = vpop.f32.mrb[0].mxu0
    %v3567 = vadd.f32 0.0, %v3566
    %v3568 = vpop.f32.mrb[0].mxu0
    %v3569 = vadd.f32 0.0, %v3568
    %v3570 = vpop.f32.mrb[0].mxu0
    %v3571 = vpop.f32.mrb[0].mxu0
    %3572 = vdwg.mxu0
    %3573 = vmatprep.subr.bf16.mxu0 %v1979
    %3574 = vmatpush1.bf16.msra.mxu0 %v1978
    %3575 = vmatprep.subr.bf16.mxu0 %v1987
    %3576 = vmatpush1.bf16.msra.mxu0 %v1986
    %3577 = vmatprep.subr.bf16.mxu0 %v1995
    %3578 = vmatpush1.bf16.msra.mxu0 %v1994
    %3579 = vmatprep.subr.bf16.mxu0 %v2003
    %3580 = vmatpush1.bf16.msra.mxu0 %v2002
    %3581 = vmatprep.subr.bf16.mxu0 %v2011
    %3582 = vmatpush1.bf16.msra.mxu0 %v2010
    %3583 = vmatprep.subr.bf16.mxu0 %v2019
    %3584 = vmatpush1.bf16.msra.mxu0 %v2018
    %3585 = vmatprep.subr.bf16.mxu0 %v2027
    %3586 = vmatpush1.bf16.msra.mxu0 %v2026
    %3587 = vmatprep.subr.bf16.mxu0 %v2035
    %3588 = vmatpush1.bf16.msra.mxu0 %v2034
    %3589 = vmatprep.subr.bf16.mxu0 %v2043
    %3590 = vmatpush1.bf16.msra.mxu0 %v2042
    %3591 = vmatprep.subr.bf16.mxu0 %v2051
    %3592 = vmatpush1.bf16.msra.mxu0 %v2050
    %3593 = vmatprep.subr.bf16.mxu0 %v2059
    %3594 = vmatpush1.bf16.msra.mxu0 %v2058
    %3595 = vmatprep.subr.bf16.mxu0 %v2067
    %3596 = vmatpush1.bf16.msra.mxu0 %v2066
    %3597 = vmatprep.subr.bf16.mxu0 %v2075
    %3598 = vmatpush1.bf16.msra.mxu0 %v2074
    %3599 = vmatprep.subr.bf16.mxu0 %v2083
    %3600 = vmatpush1.bf16.msra.mxu0 %v2082
    %3601 = vmatprep.subr.bf16.mxu0 %v2091
    %3602 = vmatpush1.bf16.msra.mxu0 %v2090
    %3603 = vmatprep.subr.bf16.mxu0 %v2099
    %3604 = vmatpush1.bf16.msra.mxu0 %v2098
    %3605 = vmatprep.mubr.bf16.mxu0 %v3488
    %3606 = vmatmul.mubr.bf16.gmra.mrb[0].mxu0 %v3487
    %v3607 = vpop.f32.mrb[0].mxu0
    %v3608 = vadd.f32 0.0, %v3607
    %v3609 = vpop.f32.mrb[0].mxu0
    %v3610 = vadd.f32 0.0, %v3609
    %v3611 = vpop.f32.mrb[0].mxu0
    %v3612 = vpop.f32.mrb[0].mxu0
    %3613 = vdwg.mxu0
    %3614 = vmatprep.subr.bf16.mxu0 %v1981
    %3615 = vmatpush1.bf16.msra.mxu0 %v1980
    %3616 = vmatprep.subr.bf16.mxu0 %v1989
    %3617 = vmatpush1.bf16.msra.mxu0 %v1988
    %3618 = vmatprep.subr.bf16.mxu0 %v1997
    %3619 = vmatpush1.bf16.msra.mxu0 %v1996
    %3620 = vmatprep.subr.bf16.mxu0 %v2005
    %3621 = vmatpush1.bf16.msra.mxu0 %v2004
    %3622 = vmatprep.subr.bf16.mxu0 %v2013
    %3623 = vmatpush1.bf16.msra.mxu0 %v2012
    %3624 = vmatprep.subr.bf16.mxu0 %v2021
    %3625 = vmatpush1.bf16.msra.mxu0 %v2020
    %3626 = vmatprep.subr.bf16.mxu0 %v2029
    %3627 = vmatpush1.bf16.msra.mxu0 %v2028
    %3628 = vmatprep.subr.bf16.mxu0 %v2037
    %3629 = vmatpush1.bf16.msra.mxu0 %v2036
    %3630 = vmatprep.subr.bf16.mxu0 %v2045
    %3631 = vmatpush1.bf16.msra.mxu0 %v2044
    %3632 = vmatprep.subr.bf16.mxu0 %v2053
    %3633 = vmatpush1.bf16.msra.mxu0 %v2052
    %3634 = vmatprep.subr.bf16.mxu0 %v2061
    %3635 = vmatpush1.bf16.msra.mxu0 %v2060
    %3636 = vmatprep.subr.bf16.mxu0 %v2069
    %3637 = vmatpush1.bf16.msra.mxu0 %v2068
    %3638 = vmatprep.subr.bf16.mxu0 %v2077
    %3639 = vmatpush1.bf16.msra.mxu0 %v2076
    %3640 = vmatprep.subr.bf16.mxu0 %v2085
    %3641 = vmatpush1.bf16.msra.mxu0 %v2084
    %3642 = vmatprep.subr.bf16.mxu0 %v2093
    %3643 = vmatpush1.bf16.msra.mxu0 %v2092
    %3644 = vmatprep.subr.bf16.mxu0 %v2101
    %3645 = vmatpush1.bf16.msra.mxu0 %v2100
    %3646 = vmatprep.mubr.bf16.mxu0 %v3488
    %3647 = vmatmul.mubr.bf16.gmra.mrb[0].mxu0 %v3487
    %v3648 = vpop.f32.mrb[0].mxu0
    %v3649 = vadd.f32 0.0, %v3648
    %v3650 = vpop.f32.mrb[0].mxu0
    %v3651 = vadd.f32 0.0, %v3650
    %v3652 = vpop.f32.mrb[0].mxu0
    %v3653 = vpop.f32.mrb[0].mxu0
    %3654 = vdwg.mxu0
    %v3655 = vadd.f32 %v3022, %v3526
    %v3656 = vadd.f32 %v3024, %v3528
    %v3657 = vadd.f32 %v3063, %v3567
    %v3658 = vadd.f32 %v3065, %v3569
    %v3659 = vadd.f32 %v3104, %v3608
    %v3660 = vadd.f32 %v3106, %v3610
    %v3661 = vadd.f32 %v3145, %v3649
    %v3662 = vadd.f32 %v3147, %v3651
    %v3663 = vxor.u32 %v3655, 2147483648
    %v3664 = vxor.u32 %v3656, 2147483648
    %v3665 = vmul.f32 %v3663, 1.442695
    %v3666 = vpow.pop %v3665
    %v3667 = vmul.f32 %v3664, 1.442695
    %v3668 = vpow.pop %v3667
    %v3669 = vadd.f32 %v3666, 1.0
    %v3670 = vadd.f32 %v3668, 1.0
    %v3671 = vrcp.pop %v3669
    %v3672 = vmul.f32 1.0, %v3671
    %v3673 = vrcp.pop %v3670
    %v3674 = vmul.f32 1.0, %v3673
    %v3675 = vxor.u32 %v3657, 2147483648
    %v3676 = vxor.u32 %v3658, 2147483648
    %v3677 = vmul.f32 %v3675, 1.442695
    %v3678 = vpow.pop %v3677
    %v3679 = vmul.f32 %v3676, 1.442695
    %v3680 = vpow.pop %v3679
    %v3681 = vadd.f32 %v3678, 1.0
    %v3682 = vadd.f32 %v3680, 1.0
    %v3683 = vrcp.pop %v3681
    %v3684 = vmul.f32 1.0, %v3683
    %v3685 = vrcp.pop %v3682
    %v3686 = vmul.f32 1.0, %v3685
    %v3687 = vtanh.pop %v3659
    %v3688 = vtanh.pop %v3660
    %v3689 = vxor.u32 %v3661, 2147483648
    %v3690 = vxor.u32 %v3662, 2147483648
    %v3691 = vmul.f32 %v3689, 1.442695
    %v3692 = vpow.pop %v3691
    %v3693 = vmul.f32 %v3690, 1.442695
    %v3694 = vpow.pop %v3693
    %v3695 = vadd.f32 %v3692, 1.0
    %v3696 = vadd.f32 %v3694, 1.0
    %v3697 = vrcp.pop %v3695
    %v3698 = vmul.f32 1.0, %v3697
    %v3699 = vrcp.pop %v3696
    %v3700 = vmul.f32 1.0, %v3699
    %v3701 = vmul.f32 %v3684, %v2979
    %v3702 = vmul.f32 %v3686, %v2980
    %v3703 = vmul.f32 %v3672, %v3687
    %v3704 = vmul.f32 %v3674, %v3688
    %v3705 = vadd.f32 %v3701, %v3703
    %v3706 = vadd.f32 %v3702, %v3704
    %v3707 = vtanh.pop %v3705
    %v3708 = vtanh.pop %v3706
    %v3709 = vmul.f32 %v3698, %v3707
    %v3710 = vmul.f32 %v3700, %v3708
    %v3711 = vpack.c.bf16 %v3709, %v3709
    %v3712 = vpack.c.bf16 %v3710, %v3710
    %3713 = vmatprep.subr.bf16.mxu0 %v2104
    %3714 = vmatpush1.bf16.msra.mxu0 %v2103
    %3715 = vmatprep.subr.bf16.mxu0 %v2112
    %3716 = vmatpush1.bf16.msra.mxu0 %v2111
    %3717 = vmatprep.subr.bf16.mxu0 %v2120
    %3718 = vmatpush1.bf16.msra.mxu0 %v2119
    %3719 = vmatprep.subr.bf16.mxu0 %v2128
    %3720 = vmatpush1.bf16.msra.mxu0 %v2127
    %3721 = vmatprep.subr.bf16.mxu0 %v2136
    %3722 = vmatpush1.bf16.msra.mxu0 %v2135
    %3723 = vmatprep.subr.bf16.mxu0 %v2144
    %3724 = vmatpush1.bf16.msra.mxu0 %v2143
    %3725 = vmatprep.subr.bf16.mxu0 %v2152
    %3726 = vmatpush1.bf16.msra.mxu0 %v2151
    %3727 = vmatprep.subr.bf16.mxu0 %v2160
    %3728 = vmatpush1.bf16.msra.mxu0 %v2159
    %3729 = vmatprep.subr.bf16.mxu0 %v2168
    %3730 = vmatpush1.bf16.msra.mxu0 %v2167
    %3731 = vmatprep.subr.bf16.mxu0 %v2176
    %3732 = vmatpush1.bf16.msra.mxu0 %v2175
    %3733 = vmatprep.subr.bf16.mxu0 %v2184
    %3734 = vmatpush1.bf16.msra.mxu0 %v2183
    %3735 = vmatprep.subr.bf16.mxu0 %v2192
    %3736 = vmatpush1.bf16.msra.mxu0 %v2191
    %3737 = vmatprep.subr.bf16.mxu0 %v2200
    %3738 = vmatpush1.bf16.msra.mxu0 %v2199
    %3739 = vmatprep.subr.bf16.mxu0 %v2208
    %3740 = vmatpush1.bf16.msra.mxu0 %v2207
    %3741 = vmatprep.subr.bf16.mxu0 %v2216
    %3742 = vmatpush1.bf16.msra.mxu0 %v2215
    %3743 = vmatprep.subr.bf16.mxu0 %v2224
    %3744 = vmatpush1.bf16.msra.mxu0 %v2223
    %3745 = vmatprep.mubr.bf16.mxu0 %v3712
    %3746 = vmatmul.mubr.bf16.gmra.mrb[0].mxu0 %v3711
    %v3747 = vpop.f32.mrb[0].mxu0
    %v3748 = vadd.f32 %v2236, %v3747
    %v3749 = vpop.f32.mrb[0].mxu0
    %v3750 = vadd.f32 %v2240, %v3749
    %v3751 = vpop.f32.mrb[0].mxu0
    %v3752 = vpop.f32.mrb[0].mxu0
    %3753 = vdwg.mxu0
    %3754 = vmatprep.subr.bf16.mxu0 %v2106
    %3755 = vmatpush1.bf16.msra.mxu0 %v2105
    %3756 = vmatprep.subr.bf16.mxu0 %v2114
    %3757 = vmatpush1.bf16.msra.mxu0 %v2113
    %3758 = vmatprep.subr.bf16.mxu0 %v2122
    %3759 = vmatpush1.bf16.msra.mxu0 %v2121
    %3760 = vmatprep.subr.bf16.mxu0 %v2130
    %3761 = vmatpush1.bf16.msra.mxu0 %v2129
    %3762 = vmatprep.subr.bf16.mxu0 %v2138
    %3763 = vmatpush1.bf16.msra.mxu0 %v2137
    %3764 = vmatprep.subr.bf16.mxu0 %v2146
    %3765 = vmatpush1.bf16.msra.mxu0 %v2145
    %3766 = vmatprep.subr.bf16.mxu0 %v2154
    %3767 = vmatpush1.bf16.msra.mxu0 %v2153
    %3768 = vmatprep.subr.bf16.mxu0 %v2162
    %3769 = vmatpush1.bf16.msra.mxu0 %v2161
    %3770 = vmatprep.subr.bf16.mxu0 %v2170
    %3771 = vmatpush1.bf16.msra.mxu0 %v2169
    %3772 = vmatprep.subr.bf16.mxu0 %v2178
    %3773 = vmatpush1.bf16.msra.mxu0 %v2177
    %3774 = vmatprep.subr.bf16.mxu0 %v2186
    %3775 = vmatpush1.bf16.msra.mxu0 %v2185
    %3776 = vmatprep.subr.bf16.mxu0 %v2194
    %3777 = vmatpush1.bf16.msra.mxu0 %v2193
    %3778 = vmatprep.subr.bf16.mxu0 %v2202
    %3779 = vmatpush1.bf16.msra.mxu0 %v2201
    %3780 = vmatprep.subr.bf16.mxu0 %v2210
    %3781 = vmatpush1.bf16.msra.mxu0 %v2209
    %3782 = vmatprep.subr.bf16.mxu0 %v2218
    %3783 = vmatpush1.bf16.msra.mxu0 %v2217
    %3784 = vmatprep.subr.bf16.mxu0 %v2226
    %3785 = vmatpush1.bf16.msra.mxu0 %v2225
    %3786 = vmatprep.mubr.bf16.mxu0 %v3712
    %3787 = vmatmul.mubr.bf16.gmra.mrb[0].mxu0 %v3711
    %v3788 = vpop.f32.mrb[0].mxu0
    %v3789 = vadd.f32 %v2244, %v3788
    %v3790 = vpop.f32.mrb[0].mxu0
    %v3791 = vadd.f32 %v2248, %v3790
    %v3792 = vpop.f32.mrb[0].mxu0
    %v3793 = vpop.f32.mrb[0].mxu0
    %3794 = vdwg.mxu0
    %3795 = vmatprep.subr.bf16.mxu0 %v2108
    %3796 = vmatpush1.bf16.msra.mxu0 %v2107
    %3797 = vmatprep.subr.bf16.mxu0 %v2116
    %3798 = vmatpush1.bf16.msra.mxu0 %v2115
    %3799 = vmatprep.subr.bf16.mxu0 %v2124
    %3800 = vmatpush1.bf16.msra.mxu0 %v2123
    %3801 = vmatprep.subr.bf16.mxu0 %v2132
    %3802 = vmatpush1.bf16.msra.mxu0 %v2131
    %3803 = vmatprep.subr.bf16.mxu0 %v2140
    %3804 = vmatpush1.bf16.msra.mxu0 %v2139
    %3805 = vmatprep.subr.bf16.mxu0 %v2148
    %3806 = vmatpush1.bf16.msra.mxu0 %v2147
    %3807 = vmatprep.subr.bf16.mxu0 %v2156
    %3808 = vmatpush1.bf16.msra.mxu0 %v2155
    %3809 = vmatprep.subr.bf16.mxu0 %v2164
    %3810 = vmatpush1.bf16.msra.mxu0 %v2163
    %3811 = vmatprep.subr.bf16.mxu0 %v2172
    %3812 = vmatpush1.bf16.msra.mxu0 %v2171
    %3813 = vmatprep.subr.bf16.mxu0 %v2180
    %3814 = vmatpush1.bf16.msra.mxu0 %v2179
    %3815 = vmatprep.subr.bf16.mxu0 %v2188
    %3816 = vmatpush1.bf16.msra.mxu0 %v2187
    %3817 = vmatprep.subr.bf16.mxu0 %v2196
    %3818 = vmatpush1.bf16.msra.mxu0 %v2195
    %3819 = vmatprep.subr.bf16.mxu0 %v2204
    %3820 = vmatpush1.bf16.msra.mxu0 %v2203
    %3821 = vmatprep.subr.bf16.mxu0 %v2212
    %3822 = vmatpush1.bf16.msra.mxu0 %v2211
    %3823 = vmatprep.subr.bf16.mxu0 %v2220
    %3824 = vmatpush1.bf16.msra.mxu0 %v2219
    %3825 = vmatprep.subr.bf16.mxu0 %v2228
    %3826 = vmatpush1.bf16.msra.mxu0 %v2227
    %3827 = vmatprep.mubr.bf16.mxu0 %v3712
    %3828 = vmatmul.mubr.bf16.gmra.mrb[0].mxu0 %v3711
    %v3829 = vpop.f32.mrb[0].mxu0
    %v3830 = vadd.f32 %v2252, %v3829
    %v3831 = vpop.f32.mrb[0].mxu0
    %v3832 = vadd.f32 %v2256, %v3831
    %v3833 = vpop.f32.mrb[0].mxu0
    %v3834 = vpop.f32.mrb[0].mxu0
    %3835 = vdwg.mxu0
    %3836 = vmatprep.subr.bf16.mxu0 %v2110
    %3837 = vmatpush1.bf16.msra.mxu0 %v2109
    %3838 = vmatprep.subr.bf16.mxu0 %v2118
    %3839 = vmatpush1.bf16.msra.mxu0 %v2117
    %3840 = vmatprep.subr.bf16.mxu0 %v2126
    %3841 = vmatpush1.bf16.msra.mxu0 %v2125
    %3842 = vmatprep.subr.bf16.mxu0 %v2134
    %3843 = vmatpush1.bf16.msra.mxu0 %v2133
    %3844 = vmatprep.subr.bf16.mxu0 %v2142
    %3845 = vmatpush1.bf16.msra.mxu0 %v2141
    %3846 = vmatprep.subr.bf16.mxu0 %v2150
    %3847 = vmatpush1.bf16.msra.mxu0 %v2149
    %3848 = vmatprep.subr.bf16.mxu0 %v2158
    %3849 = vmatpush1.bf16.msra.mxu0 %v2157
    %3850 = vmatprep.subr.bf16.mxu0 %v2166
    %3851 = vmatpush1.bf16.msra.mxu0 %v2165
    %3852 = vmatprep.subr.bf16.mxu0 %v2174
    %3853 = vmatpush1.bf16.msra.mxu0 %v2173
    %3854 = vmatprep.subr.bf16.mxu0 %v2182
    %3855 = vmatpush1.bf16.msra.mxu0 %v2181
    %3856 = vmatprep.subr.bf16.mxu0 %v2190
    %3857 = vmatpush1.bf16.msra.mxu0 %v2189
    %3858 = vmatprep.subr.bf16.mxu0 %v2198
    %3859 = vmatpush1.bf16.msra.mxu0 %v2197
    %3860 = vmatprep.subr.bf16.mxu0 %v2206
    %3861 = vmatpush1.bf16.msra.mxu0 %v2205
    %3862 = vmatprep.subr.bf16.mxu0 %v2214
    %3863 = vmatpush1.bf16.msra.mxu0 %v2213
    %3864 = vmatprep.subr.bf16.mxu0 %v2222
    %3865 = vmatpush1.bf16.msra.mxu0 %v2221
    %3866 = vmatprep.subr.bf16.mxu0 %v2230
    %3867 = vmatpush1.bf16.msra.mxu0 %v2229
    %3868 = vmatprep.mubr.bf16.mxu0 %v3712
    %3869 = vmatmul.mubr.bf16.gmra.mrb[0].mxu0 %v3711
    %v3870 = vpop.f32.mrb[0].mxu0
    %v3871 = vadd.f32 %v2260, %v3870
    %v3872 = vpop.f32.mrb[0].mxu0
    %v3873 = vadd.f32 %v2264, %v3872
    %v3874 = vpop.f32.mrb[0].mxu0
    %v3875 = vpop.f32.mrb[0].mxu0
    %3876 = vdwg.mxu0
    %3877 = vmatprep.subr.bf16.mxu0 %v1846
    %3878 = vmatpush1.bf16.msra.mxu0 %v1845
    %3879 = vmatprep.subr.bf16.mxu0 %v1854
    %3880 = vmatpush1.bf16.msra.mxu0 %v1853
    %3881 = vmatprep.subr.bf16.mxu0 %v1862
    %3882 = vmatpush1.bf16.msra.mxu0 %v1861
    %3883 = vmatprep.subr.bf16.mxu0 %v1870
    %3884 = vmatpush1.bf16.msra.mxu0 %v1869
    %3885 = vmatprep.subr.bf16.mxu0 %v1878
    %3886 = vmatpush1.bf16.msra.mxu0 %v1877
    %3887 = vmatprep.subr.bf16.mxu0 %v1886
    %3888 = vmatpush1.bf16.msra.mxu0 %v1885
    %3889 = vmatprep.subr.bf16.mxu0 %v1894
    %3890 = vmatpush1.bf16.msra.mxu0 %v1893
    %3891 = vmatprep.subr.bf16.mxu0 %v1902
    %3892 = vmatpush1.bf16.msra.mxu0 %v1901
    %3893 = vmatprep.subr.bf16.mxu0 %v1910
    %3894 = vmatpush1.bf16.msra.mxu0 %v1909
    %3895 = vmatprep.subr.bf16.mxu0 %v1918
    %3896 = vmatpush1.bf16.msra.mxu0 %v1917
    %3897 = vmatprep.subr.bf16.mxu0 %v1926
    %3898 = vmatpush1.bf16.msra.mxu0 %v1925
    %3899 = vmatprep.subr.bf16.mxu0 %v1934
    %3900 = vmatpush1.bf16.msra.mxu0 %v1933
    %3901 = vmatprep.subr.bf16.mxu0 %v1942
    %3902 = vmatpush1.bf16.msra.mxu0 %v1941
    %3903 = vmatprep.subr.bf16.mxu0 %v1950
    %3904 = vmatpush1.bf16.msra.mxu0 %v1949
    %3905 = vmatprep.subr.bf16.mxu0 %v1958
    %3906 = vmatpush1.bf16.msra.mxu0 %v1957
    %3907 = vmatprep.subr.bf16.mxu0 %v1966
    %3908 = vmatpush1.bf16.msra.mxu0 %v1965
    %3909 = vmatprep.mubr.bf16.mxu0 %v3488
    %3910 = vmatmul.mubr.bf16.gmra.mrb[0].mxu0 %v3487
    %v3911 = vpop.f32.mrb[0].mxu0
    %v3912 = vadd.f32 0.0, %v3911
    %v3913 = vpop.f32.mrb[0].mxu0
    %v3914 = vadd.f32 0.0, %v3913
    %v3915 = vpop.f32.mrb[0].mxu0
    %v3916 = vpop.f32.mrb[0].mxu0
    %3917 = vdwg.mxu0
    %3918 = vmatprep.subr.bf16.mxu0 %v1848
    %3919 = vmatpush1.bf16.msra.mxu0 %v1847
    %3920 = vmatprep.subr.bf16.mxu0 %v1856
    %3921 = vmatpush1.bf16.msra.mxu0 %v1855
    %3922 = vmatprep.subr.bf16.mxu0 %v1864
    %3923 = vmatpush1.bf16.msra.mxu0 %v1863
    %3924 = vmatprep.subr.bf16.mxu0 %v1872
    %3925 = vmatpush1.bf16.msra.mxu0 %v1871
    %3926 = vmatprep.subr.bf16.mxu0 %v1880
    %3927 = vmatpush1.bf16.msra.mxu0 %v1879
    %3928 = vmatprep.subr.bf16.mxu0 %v1888
    %3929 = vmatpush1.bf16.msra.mxu0 %v1887
    %3930 = vmatprep.subr.bf16.mxu0 %v1896
    %3931 = vmatpush1.bf16.msra.mxu0 %v1895
    %3932 = vmatprep.subr.bf16.mxu0 %v1904
    %3933 = vmatpush1.bf16.msra.mxu0 %v1903
    %3934 = vmatprep.subr.bf16.mxu0 %v1912
    %3935 = vmatpush1.bf16.msra.mxu0 %v1911
    %3936 = vmatprep.subr.bf16.mxu0 %v1920
    %3937 = vmatpush1.bf16.msra.mxu0 %v1919
    %3938 = vmatprep.subr.bf16.mxu0 %v1928
    %3939 = vmatpush1.bf16.msra.mxu0 %v1927
    %3940 = vmatprep.subr.bf16.mxu0 %v1936
    %3941 = vmatpush1.bf16.msra.mxu0 %v1935
    %3942 = vmatprep.subr.bf16.mxu0 %v1944
    %3943 = vmatpush1.bf16.msra.mxu0 %v1943
    %3944 = vmatprep.subr.bf16.mxu0 %v1952
    %3945 = vmatpush1.bf16.msra.mxu0 %v1951
    %3946 = vmatprep.subr.bf16.mxu0 %v1960
    %3947 = vmatpush1.bf16.msra.mxu0 %v1959
    %3948 = vmatprep.subr.bf16.mxu0 %v1968
    %3949 = vmatpush1.bf16.msra.mxu0 %v1967
    %3950 = vmatprep.mubr.bf16.mxu0 %v3488
    %3951 = vmatmul.mubr.bf16.gmra.mrb[0].mxu0 %v3487
    %v3952 = vpop.f32.mrb[0].mxu0
    %v3953 = vadd.f32 0.0, %v3952
    %v3954 = vpop.f32.mrb[0].mxu0
    %v3955 = vadd.f32 0.0, %v3954
    %v3956 = vpop.f32.mrb[0].mxu0
    %v3957 = vpop.f32.mrb[0].mxu0
    %3958 = vdwg.mxu0
    %3959 = vmatprep.subr.bf16.mxu0 %v1850
    %3960 = vmatpush1.bf16.msra.mxu0 %v1849
    %3961 = vmatprep.subr.bf16.mxu0 %v1858
    %3962 = vmatpush1.bf16.msra.mxu0 %v1857
    %3963 = vmatprep.subr.bf16.mxu0 %v1866
    %3964 = vmatpush1.bf16.msra.mxu0 %v1865
    %3965 = vmatprep.subr.bf16.mxu0 %v1874
    %3966 = vmatpush1.bf16.msra.mxu0 %v1873
    %3967 = vmatprep.subr.bf16.mxu0 %v1882
    %3968 = vmatpush1.bf16.msra.mxu0 %v1881
    %3969 = vmatprep.subr.bf16.mxu0 %v1890
    %3970 = vmatpush1.bf16.msra.mxu0 %v1889
    %3971 = vmatprep.subr.bf16.mxu0 %v1898
    %3972 = vmatpush1.bf16.msra.mxu0 %v1897
    %3973 = vmatprep.subr.bf16.mxu0 %v1906
    %3974 = vmatpush1.bf16.msra.mxu0 %v1905
    %3975 = vmatprep.subr.bf16.mxu0 %v1914
    %3976 = vmatpush1.bf16.msra.mxu0 %v1913
    %3977 = vmatprep.subr.bf16.mxu0 %v1922
    %3978 = vmatpush1.bf16.msra.mxu0 %v1921
    %3979 = vmatprep.subr.bf16.mxu0 %v1930
    %3980 = vmatpush1.bf16.msra.mxu0 %v1929
    %3981 = vmatprep.subr.bf16.mxu0 %v1938
    %3982 = vmatpush1.bf16.msra.mxu0 %v1937
    %3983 = vmatprep.subr.bf16.mxu0 %v1946
    %3984 = vmatpush1.bf16.msra.mxu0 %v1945
    %3985 = vmatprep.subr.bf16.mxu0 %v1954
    %3986 = vmatpush1.bf16.msra.mxu0 %v1953
    %3987 = vmatprep.subr.bf16.mxu0 %v1962
    %3988 = vmatpush1.bf16.msra.mxu0 %v1961
    %3989 = vmatprep.subr.bf16.mxu0 %v1970
    %3990 = vmatpush1.bf16.msra.mxu0 %v1969
    %3991 = vmatprep.mubr.bf16.mxu0 %v3488
    %3992 = vmatmul.mubr.bf16.gmra.mrb[0].mxu0 %v3487
    %v3993 = vpop.f32.mrb[0].mxu0
    %v3994 = vadd.f32 0.0, %v3993
    %v3995 = vpop.f32.mrb[0].mxu0
    %v3996 = vadd.f32 0.0, %v3995
    %v3997 = vpop.f32.mrb[0].mxu0
    %v3998 = vpop.f32.mrb[0].mxu0
    %3999 = vdwg.mxu0
    %4000 = vmatprep.subr.bf16.mxu0 %v1852
    %4001 = vmatpush1.bf16.msra.mxu0 %v1851
    %4002 = vmatprep.subr.bf16.mxu0 %v1860
    %4003 = vmatpush1.bf16.msra.mxu0 %v1859
    %4004 = vmatprep.subr.bf16.mxu0 %v1868
    %4005 = vmatpush1.bf16.msra.mxu0 %v1867
    %4006 = vmatprep.subr.bf16.mxu0 %v1876
    %4007 = vmatpush1.bf16.msra.mxu0 %v1875
    %4008 = vmatprep.subr.bf16.mxu0 %v1884
    %4009 = vmatpush1.bf16.msra.mxu0 %v1883
    %4010 = vmatprep.subr.bf16.mxu0 %v1892
    %4011 = vmatpush1.bf16.msra.mxu0 %v1891
    %4012 = vmatprep.subr.bf16.mxu0 %v1900
    %4013 = vmatpush1.bf16.msra.mxu0 %v1899
    %4014 = vmatprep.subr.bf16.mxu0 %v1908
    %4015 = vmatpush1.bf16.msra.mxu0 %v1907
    %4016 = vmatprep.subr.bf16.mxu0 %v1916
    %4017 = vmatpush1.bf16.msra.mxu0 %v1915
    %4018 = vmatprep.subr.bf16.mxu0 %v1924
    %4019 = vmatpush1.bf16.msra.mxu0 %v1923
    %4020 = vmatprep.subr.bf16.mxu0 %v1932
    %4021 = vmatpush1.bf16.msra.mxu0 %v1931
    %4022 = vmatprep.subr.bf16.mxu0 %v1940
    %4023 = vmatpush1.bf16.msra.mxu0 %v1939
    %4024 = vmatprep.subr.bf16.mxu0 %v1948
    %4025 = vmatpush1.bf16.msra.mxu0 %v1947
    %4026 = vmatprep.subr.bf16.mxu0 %v1956
    %4027 = vmatpush1.bf16.msra.mxu0 %v1955
    %4028 = vmatprep.subr.bf16.mxu0 %v1964
    %4029 = vmatpush1.bf16.msra.mxu0 %v1963
    %4030 = vmatprep.subr.bf16.mxu0 %v1972
    %4031 = vmatpush1.bf16.msra.mxu0 %v1971
    %4032 = vmatprep.mubr.bf16.mxu0 %v3488
    %4033 = vmatmul.mubr.bf16.gmra.mrb[0].mxu0 %v3487
    %v4034 = vpop.f32.mrb[0].mxu0
    %v4035 = vadd.f32 0.0, %v4034
    %v4036 = vpop.f32.mrb[0].mxu0
    %v4037 = vadd.f32 0.0, %v4036
    %v4038 = vpop.f32.mrb[0].mxu0
    %v4039 = vpop.f32.mrb[0].mxu0
    %4040 = vdwg.mxu0
    %v4049 = vrot.slane %v3912, 6
    %v4050 = vrot.slane %v3914, 6
    %v4051 = vrot.slane %v3953, 6
    %v4052 = vrot.slane %v3955, 6
    %v4053 = vrot.slane %v3994, 6
    %v4054 = vrot.slane %v3996, 6
    %v4055 = vrot.slane %v4035, 6
    %v4056 = vrot.slane %v4037, 6
    %v4057 = vrot.slane %v3912, 7
    %v4058 = vrot.slane %v3914, 7
    %v4059 = vrot.slane %v3953, 7
    %v4060 = vrot.slane %v3955, 7
    %v4061 = vrot.slane %v3994, 7
    %v4062 = vrot.slane %v3996, 7
    %v4063 = vrot.slane %v4035, 7
    %v4064 = vrot.slane %v4037, 7
    %v4081 = vadd.f32 %v1703, %v4049
    %v4082 = vadd.f32 %v1705, %v4050
    %v4083 = vadd.f32 %v1746, %v4051
    %v4084 = vadd.f32 %v1748, %v4052
    %v4085 = vadd.f32 %v1789, %v4053
    %v4086 = vadd.f32 %v1791, %v4054
    %v4087 = vadd.f32 %v1832, %v4055
    %v4088 = vadd.f32 %v1834, %v4056
    %v4089 = vadd.f32 %v1707, %v4057
    %v4090 = vadd.f32 %v1709, %v4058
    %v4091 = vadd.f32 %v1750, %v4059
    %v4092 = vadd.f32 %v1752, %v4060
    %v4093 = vadd.f32 %v1793, %v4061
    %v4094 = vadd.f32 %v1795, %v4062
    %v4095 = vadd.f32 %v1836, %v4063
    %v4096 = vadd.f32 %v1838, %v4064
    %v4097 = vxor.u32 %v4081, 2147483648
    %v4098 = vxor.u32 %v4082, 2147483648
    %v4099 = vxor.u32 %v4089, 2147483648
    %v4100 = vxor.u32 %v4090, 2147483648
    %v4101 = vmul.f32 %v4097, 1.442695
    %v4102 = vpow.pop %v4101
    %v4103 = vmul.f32 %v4098, 1.442695
    %v4104 = vpow.pop %v4103
    %v4105 = vmul.f32 %v4099, 1.442695
    %v4106 = vpow.pop %v4105
    %v4107 = vmul.f32 %v4100, 1.442695
    %v4108 = vpow.pop %v4107
    %v4109 = vadd.f32 %v4102, 1.0
    %v4110 = vadd.f32 %v4104, 1.0
    %v4111 = vadd.f32 %v4106, 1.0
    %v4112 = vadd.f32 %v4108, 1.0
    %v4113 = vrcp.pop %v4109
    %v4114 = vmul.f32 1.0, %v4113
    %v4115 = vrcp.pop %v4110
    %v4116 = vmul.f32 1.0, %v4115
    %v4117 = vrcp.pop %v4111
    %v4118 = vmul.f32 1.0, %v4117
    %v4119 = vrcp.pop %v4112
    %v4120 = vmul.f32 1.0, %v4119
    %v4121 = vxor.u32 %v4083, 2147483648
    %v4122 = vxor.u32 %v4084, 2147483648
    %v4123 = vxor.u32 %v4091, 2147483648
    %v4124 = vxor.u32 %v4092, 2147483648
    %v4125 = vmul.f32 %v4121, 1.442695
    %v4126 = vpow.pop %v4125
    %v4127 = vmul.f32 %v4122, 1.442695
    %v4128 = vpow.pop %v4127
    %v4129 = vmul.f32 %v4123, 1.442695
    %v4130 = vpow.pop %v4129
    %v4131 = vmul.f32 %v4124, 1.442695
    %v4132 = vpow.pop %v4131
    %v4133 = vadd.f32 %v4126, 1.0
    %v4134 = vadd.f32 %v4128, 1.0
    %v4135 = vadd.f32 %v4130, 1.0
    %v4136 = vadd.f32 %v4132, 1.0
    %v4137 = vrcp.pop %v4133
    %v4138 = vmul.f32 1.0, %v4137
    %v4139 = vrcp.pop %v4134
    %v4140 = vmul.f32 1.0, %v4139
    %v4141 = vrcp.pop %v4135
    %v4142 = vmul.f32 1.0, %v4141
    %v4143 = vrcp.pop %v4136
    %v4144 = vmul.f32 1.0, %v4143
    %v4145 = vtanh.pop %v4085
    %v4146 = vtanh.pop %v4086
    %v4147 = vtanh.pop %v4093
    %v4148 = vtanh.pop %v4094
    %v4149 = vxor.u32 %v4087, 2147483648
    %v4150 = vxor.u32 %v4088, 2147483648
    %v4151 = vxor.u32 %v4095, 2147483648
    %v4152 = vxor.u32 %v4096, 2147483648
    %v4153 = vmul.f32 %v4149, 1.442695
    %v4154 = vpow.pop %v4153
    %v4155 = vmul.f32 %v4150, 1.442695
    %v4156 = vpow.pop %v4155
    %v4157 = vmul.f32 %v4151, 1.442695
    %v4158 = vpow.pop %v4157
    %v4159 = vmul.f32 %v4152, 1.442695
    %v4160 = vpow.pop %v4159
    %v4161 = vadd.f32 %v4154, 1.0
    %v4162 = vadd.f32 %v4156, 1.0
    %v4163 = vadd.f32 %v4158, 1.0
    %v4164 = vadd.f32 %v4160, 1.0
    %v4165 = vrcp.pop %v4161
    %v4166 = vmul.f32 1.0, %v4165
    %v4167 = vrcp.pop %v4162
    %v4168 = vmul.f32 1.0, %v4167
    %v4169 = vrcp.pop %v4163
    %v4170 = vmul.f32 1.0, %v4169
    %v4171 = vrcp.pop %v4164
    %v4172 = vmul.f32 1.0, %v4171
    %v4177 = vrot.slane %v3459, 7
    %v4178 = vrot.slane %v3460, 7
    %v4179 = vrot.slane %v3461, 7
    %v4180 = vrot.slane %v3462, 7
    %v4185 = vmul.f32 %v4138, %v4177
    %v4186 = vmul.f32 %v4140, %v4178
    %v4187 = vmul.f32 %v4142, %v4179
    %v4188 = vmul.f32 %v4144, %v4180
    %v4189 = vmul.f32 %v4114, %v4145
    %v4190 = vmul.f32 %v4116, %v4146
    %v4191 = vmul.f32 %v4118, %v4147
    %v4192 = vmul.f32 %v4120, %v4148
    %v4193 = vadd.f32 %v4185, %v4189
    %v4194 = vadd.f32 %v4186, %v4190
    %v4195 = vadd.f32 %v4187, %v4191
    %v4196 = vadd.f32 %v4188, %v4192
    %v4197 = vtanh.pop %v4193
    %v4198 = vtanh.pop %v4194
    %v4199 = vtanh.pop %v4195
    %v4200 = vtanh.pop %v4196
    %v4201 = vmul.f32 %v4166, %v4197
    %v4202 = vmul.f32 %v4168, %v4198
    %v4203 = vmul.f32 %v4170, %v4199
    %v4204 = vmul.f32 %v4172, %v4200
    %v4205 = vpack.c.bf16 %v4201, %v4201
    %v4206 = vpack.c.bf16 %v4202, %v4202
    %v4207 = vpack.c.bf16 %v4203, %v4203
    %v4208 = vpack.c.bf16 %v4204, %v4204
    %v4213 = vunpack.c.l.b16 %v4205
    %v4214 = vunpack.c.l.b16 %v4206
    %v4215 = vunpack.c.l.b16 %v4207
    %v4216 = vunpack.c.l.b16 %v4208
    %v4217 = vrot.slane %v4213, 2
    %v4218 = vrot.slane %v4215, 1
    %v4219 = vsel %vm894, %v4218, %v4217
    %v4220 = vrot.slane %v4214, 2
    %v4221 = vrot.slane %v4216, 1
    %v4222 = vsel %vm894, %v4221, %v4220
    %v4223 = vpack.c.b16 %v4219, %v4219
    %v4224 = vpack.c.b16 %v4222, %v4222
    %4227 = vmatprep.subr.bf16.mxu0 %v1975
    %4228 = vmatpush1.bf16.msra.mxu0 %v1974
    %4229 = vmatprep.subr.bf16.mxu0 %v1983
    %4230 = vmatpush1.bf16.msra.mxu0 %v1982
    %4231 = vmatprep.subr.bf16.mxu0 %v1991
    %4232 = vmatpush1.bf16.msra.mxu0 %v1990
    %4233 = vmatprep.subr.bf16.mxu0 %v1999
    %4234 = vmatpush1.bf16.msra.mxu0 %v1998
    %4235 = vmatprep.subr.bf16.mxu0 %v2007
    %4236 = vmatpush1.bf16.msra.mxu0 %v2006
    %4237 = vmatprep.subr.bf16.mxu0 %v2015
    %4238 = vmatpush1.bf16.msra.mxu0 %v2014
    %4239 = vmatprep.subr.bf16.mxu0 %v2023
    %4240 = vmatpush1.bf16.msra.mxu0 %v2022
    %4241 = vmatprep.subr.bf16.mxu0 %v2031
    %4242 = vmatpush1.bf16.msra.mxu0 %v2030
    %4243 = vmatprep.subr.bf16.mxu0 %v2039
    %4244 = vmatpush1.bf16.msra.mxu0 %v2038
    %4245 = vmatprep.subr.bf16.mxu0 %v2047
    %4246 = vmatpush1.bf16.msra.mxu0 %v2046
    %4247 = vmatprep.subr.bf16.mxu0 %v2055
    %4248 = vmatpush1.bf16.msra.mxu0 %v2054
    %4249 = vmatprep.subr.bf16.mxu0 %v2063
    %4250 = vmatpush1.bf16.msra.mxu0 %v2062
    %4251 = vmatprep.subr.bf16.mxu0 %v2071
    %4252 = vmatpush1.bf16.msra.mxu0 %v2070
    %4253 = vmatprep.subr.bf16.mxu0 %v2079
    %4254 = vmatpush1.bf16.msra.mxu0 %v2078
    %4255 = vmatprep.subr.bf16.mxu0 %v2087
    %4256 = vmatpush1.bf16.msra.mxu0 %v2086
    %4257 = vmatprep.subr.bf16.mxu0 %v2095
    %4258 = vmatpush1.bf16.msra.mxu0 %v2094
    %4259 = vmatprep.mubr.bf16.mxu0 %v4224
    %4260 = vmatmul.mubr.bf16.gmra.mrb[0].mxu0 %v4223
    %v4261 = vpop.f32.mrb[0].mxu0
    %v4262 = vadd.f32 0.0, %v4261
    %v4263 = vpop.f32.mrb[0].mxu0
    %v4264 = vadd.f32 0.0, %v4263
    %v4265 = vpop.f32.mrb[0].mxu0
    %v4266 = vpop.f32.mrb[0].mxu0
    %4267 = vdwg.mxu0
    %4268 = vmatprep.subr.bf16.mxu0 %v1977
    %4269 = vmatpush1.bf16.msra.mxu0 %v1976
    %4270 = vmatprep.subr.bf16.mxu0 %v1985
    %4271 = vmatpush1.bf16.msra.mxu0 %v1984
    %4272 = vmatprep.subr.bf16.mxu0 %v1993
    %4273 = vmatpush1.bf16.msra.mxu0 %v1992
    %4274 = vmatprep.subr.bf16.mxu0 %v2001
    %4275 = vmatpush1.bf16.msra.mxu0 %v2000
    %4276 = vmatprep.subr.bf16.mxu0 %v2009
    %4277 = vmatpush1.bf16.msra.mxu0 %v2008
    %4278 = vmatprep.subr.bf16.mxu0 %v2017
    %4279 = vmatpush1.bf16.msra.mxu0 %v2016
    %4280 = vmatprep.subr.bf16.mxu0 %v2025
    %4281 = vmatpush1.bf16.msra.mxu0 %v2024
    %4282 = vmatprep.subr.bf16.mxu0 %v2033
    %4283 = vmatpush1.bf16.msra.mxu0 %v2032
    %4284 = vmatprep.subr.bf16.mxu0 %v2041
    %4285 = vmatpush1.bf16.msra.mxu0 %v2040
    %4286 = vmatprep.subr.bf16.mxu0 %v2049
    %4287 = vmatpush1.bf16.msra.mxu0 %v2048
    %4288 = vmatprep.subr.bf16.mxu0 %v2057
    %4289 = vmatpush1.bf16.msra.mxu0 %v2056
    %4290 = vmatprep.subr.bf16.mxu0 %v2065
    %4291 = vmatpush1.bf16.msra.mxu0 %v2064
    %4292 = vmatprep.subr.bf16.mxu0 %v2073
    %4293 = vmatpush1.bf16.msra.mxu0 %v2072
    %4294 = vmatprep.subr.bf16.mxu0 %v2081
    %4295 = vmatpush1.bf16.msra.mxu0 %v2080
    %4296 = vmatprep.subr.bf16.mxu0 %v2089
    %4297 = vmatpush1.bf16.msra.mxu0 %v2088
    %4298 = vmatprep.subr.bf16.mxu0 %v2097
    %4299 = vmatpush1.bf16.msra.mxu0 %v2096
    %4300 = vmatprep.mubr.bf16.mxu0 %v4224
    %4301 = vmatmul.mubr.bf16.gmra.mrb[0].mxu0 %v4223
    %v4302 = vpop.f32.mrb[0].mxu0
    %v4303 = vadd.f32 0.0, %v4302
    %v4304 = vpop.f32.mrb[0].mxu0
    %v4305 = vadd.f32 0.0, %v4304
    %v4306 = vpop.f32.mrb[0].mxu0
    %v4307 = vpop.f32.mrb[0].mxu0
    %4308 = vdwg.mxu0
    %4309 = vmatprep.subr.bf16.mxu0 %v1979
    %4310 = vmatpush1.bf16.msra.mxu0 %v1978
    %4311 = vmatprep.subr.bf16.mxu0 %v1987
    %4312 = vmatpush1.bf16.msra.mxu0 %v1986
    %4313 = vmatprep.subr.bf16.mxu0 %v1995
    %4314 = vmatpush1.bf16.msra.mxu0 %v1994
    %4315 = vmatprep.subr.bf16.mxu0 %v2003
    %4316 = vmatpush1.bf16.msra.mxu0 %v2002
    %4317 = vmatprep.subr.bf16.mxu0 %v2011
    %4318 = vmatpush1.bf16.msra.mxu0 %v2010
    %4319 = vmatprep.subr.bf16.mxu0 %v2019
    %4320 = vmatpush1.bf16.msra.mxu0 %v2018
    %4321 = vmatprep.subr.bf16.mxu0 %v2027
    %4322 = vmatpush1.bf16.msra.mxu0 %v2026
    %4323 = vmatprep.subr.bf16.mxu0 %v2035
    %4324 = vmatpush1.bf16.msra.mxu0 %v2034
    %4325 = vmatprep.subr.bf16.mxu0 %v2043
    %4326 = vmatpush1.bf16.msra.mxu0 %v2042
    %4327 = vmatprep.subr.bf16.mxu0 %v2051
    %4328 = vmatpush1.bf16.msra.mxu0 %v2050
    %4329 = vmatprep.subr.bf16.mxu0 %v2059
    %4330 = vmatpush1.bf16.msra.mxu0 %v2058
    %4331 = vmatprep.subr.bf16.mxu0 %v2067
    %4332 = vmatpush1.bf16.msra.mxu0 %v2066
    %4333 = vmatprep.subr.bf16.mxu0 %v2075
    %4334 = vmatpush1.bf16.msra.mxu0 %v2074
    %4335 = vmatprep.subr.bf16.mxu0 %v2083
    %4336 = vmatpush1.bf16.msra.mxu0 %v2082
    %4337 = vmatprep.subr.bf16.mxu0 %v2091
    %4338 = vmatpush1.bf16.msra.mxu0 %v2090
    %4339 = vmatprep.subr.bf16.mxu0 %v2099
    %4340 = vmatpush1.bf16.msra.mxu0 %v2098
    %4341 = vmatprep.mubr.bf16.mxu0 %v4224
    %4342 = vmatmul.mubr.bf16.gmra.mrb[0].mxu0 %v4223
    %v4343 = vpop.f32.mrb[0].mxu0
    %v4344 = vadd.f32 0.0, %v4343
    %v4345 = vpop.f32.mrb[0].mxu0
    %v4346 = vadd.f32 0.0, %v4345
    %v4347 = vpop.f32.mrb[0].mxu0
    %v4348 = vpop.f32.mrb[0].mxu0
    %4349 = vdwg.mxu0
    %4350 = vmatprep.subr.bf16.mxu0 %v1981
    %4351 = vmatpush1.bf16.msra.mxu0 %v1980
    %4352 = vmatprep.subr.bf16.mxu0 %v1989
    %4353 = vmatpush1.bf16.msra.mxu0 %v1988
    %4354 = vmatprep.subr.bf16.mxu0 %v1997
    %4355 = vmatpush1.bf16.msra.mxu0 %v1996
    %4356 = vmatprep.subr.bf16.mxu0 %v2005
    %4357 = vmatpush1.bf16.msra.mxu0 %v2004
    %4358 = vmatprep.subr.bf16.mxu0 %v2013
    %4359 = vmatpush1.bf16.msra.mxu0 %v2012
    %4360 = vmatprep.subr.bf16.mxu0 %v2021
    %4361 = vmatpush1.bf16.msra.mxu0 %v2020
    %4362 = vmatprep.subr.bf16.mxu0 %v2029
    %4363 = vmatpush1.bf16.msra.mxu0 %v2028
    %4364 = vmatprep.subr.bf16.mxu0 %v2037
    %4365 = vmatpush1.bf16.msra.mxu0 %v2036
    %4366 = vmatprep.subr.bf16.mxu0 %v2045
    %4367 = vmatpush1.bf16.msra.mxu0 %v2044
    %4368 = vmatprep.subr.bf16.mxu0 %v2053
    %4369 = vmatpush1.bf16.msra.mxu0 %v2052
    %4370 = vmatprep.subr.bf16.mxu0 %v2061
    %4371 = vmatpush1.bf16.msra.mxu0 %v2060
    %4372 = vmatprep.subr.bf16.mxu0 %v2069
    %4373 = vmatpush1.bf16.msra.mxu0 %v2068
    %4374 = vmatprep.subr.bf16.mxu0 %v2077
    %4375 = vmatpush1.bf16.msra.mxu0 %v2076
    %4376 = vmatprep.subr.bf16.mxu0 %v2085
    %4377 = vmatpush1.bf16.msra.mxu0 %v2084
    %4378 = vmatprep.subr.bf16.mxu0 %v2093
    %4379 = vmatpush1.bf16.msra.mxu0 %v2092
    %4380 = vmatprep.subr.bf16.mxu0 %v2101
    %4381 = vmatpush1.bf16.msra.mxu0 %v2100
    %4382 = vmatprep.mubr.bf16.mxu0 %v4224
    %4383 = vmatmul.mubr.bf16.gmra.mrb[0].mxu0 %v4223
    %v4384 = vpop.f32.mrb[0].mxu0
    %v4385 = vadd.f32 0.0, %v4384
    %v4386 = vpop.f32.mrb[0].mxu0
    %v4387 = vadd.f32 0.0, %v4386
    %v4388 = vpop.f32.mrb[0].mxu0
    %v4389 = vpop.f32.mrb[0].mxu0
    %4390 = vdwg.mxu0
    %v4391 = vadd.f32 %v3748, %v4262
    %v4392 = vadd.f32 %v3750, %v4264
    %v4393 = vadd.f32 %v3789, %v4303
    %v4394 = vadd.f32 %v3791, %v4305
    %v4395 = vadd.f32 %v3830, %v4344
    %v4396 = vadd.f32 %v3832, %v4346
    %v4397 = vadd.f32 %v3871, %v4385
    %v4398 = vadd.f32 %v3873, %v4387
    %v4399 = vxor.u32 %v4391, 2147483648
    %v4400 = vxor.u32 %v4392, 2147483648
    %v4401 = vmul.f32 %v4399, 1.442695
    %v4402 = vpow.pop %v4401
    %v4403 = vmul.f32 %v4400, 1.442695
    %v4404 = vpow.pop %v4403
    %v4405 = vadd.f32 %v4402, 1.0
    %v4406 = vadd.f32 %v4404, 1.0
    %v4407 = vrcp.pop %v4405
    %v4408 = vmul.f32 1.0, %v4407
    %v4409 = vrcp.pop %v4406
    %v4410 = vmul.f32 1.0, %v4409
    %v4411 = vxor.u32 %v4393, 2147483648
    %v4412 = vxor.u32 %v4394, 2147483648
    %v4413 = vmul.f32 %v4411, 1.442695
    %v4414 = vpow.pop %v4413
    %v4415 = vmul.f32 %v4412, 1.442695
    %v4416 = vpow.pop %v4415
    %v4417 = vadd.f32 %v4414, 1.0
    %v4418 = vadd.f32 %v4416, 1.0
    %v4419 = vrcp.pop %v4417
    %v4420 = vmul.f32 1.0, %v4419
    %v4421 = vrcp.pop %v4418
    %v4422 = vmul.f32 1.0, %v4421
    %v4423 = vtanh.pop %v4395
    %v4424 = vtanh.pop %v4396
    %v4425 = vxor.u32 %v4397, 2147483648
    %v4426 = vxor.u32 %v4398, 2147483648
    %v4427 = vmul.f32 %v4425, 1.442695
    %v4428 = vpow.pop %v4427
    %v4429 = vmul.f32 %v4426, 1.442695
    %v4430 = vpow.pop %v4429
    %v4431 = vadd.f32 %v4428, 1.0
    %v4432 = vadd.f32 %v4430, 1.0
    %v4433 = vrcp.pop %v4431
    %v4434 = vmul.f32 1.0, %v4433
    %v4435 = vrcp.pop %v4432
    %v4436 = vmul.f32 1.0, %v4435
    %v4437 = vmul.f32 %v4420, %v3705
    %v4438 = vmul.f32 %v4422, %v3706
    %v4439 = vmul.f32 %v4408, %v4423
    %v4440 = vmul.f32 %v4410, %v4424
    %v4441 = vadd.f32 %v4437, %v4439
    %v4442 = vadd.f32 %v4438, %v4440
    %v4443 = vtanh.pop %v4441
    %v4444 = vtanh.pop %v4442
    %v4445 = vmul.f32 %v4434, %v4443
    %v4446 = vmul.f32 %v4436, %v4444
    %v4447 = vpack.c.bf16 %v4445, %v4445
    %v4448 = vpack.c.bf16 %v4446, %v4446
    %4449 = vmatprep.subr.bf16.mxu0 %v2104
    %4450 = vmatpush1.bf16.msra.mxu0 %v2103
    %4451 = vmatprep.subr.bf16.mxu0 %v2112
    %4452 = vmatpush1.bf16.msra.mxu0 %v2111
    %4453 = vmatprep.subr.bf16.mxu0 %v2120
    %4454 = vmatpush1.bf16.msra.mxu0 %v2119
    %4455 = vmatprep.subr.bf16.mxu0 %v2128
    %4456 = vmatpush1.bf16.msra.mxu0 %v2127
    %4457 = vmatprep.subr.bf16.mxu0 %v2136
    %4458 = vmatpush1.bf16.msra.mxu0 %v2135
    %4459 = vmatprep.subr.bf16.mxu0 %v2144
    %4460 = vmatpush1.bf16.msra.mxu0 %v2143
    %4461 = vmatprep.subr.bf16.mxu0 %v2152
    %4462 = vmatpush1.bf16.msra.mxu0 %v2151
    %4463 = vmatprep.subr.bf16.mxu0 %v2160
    %4464 = vmatpush1.bf16.msra.mxu0 %v2159
    %4465 = vmatprep.subr.bf16.mxu0 %v2168
    %4466 = vmatpush1.bf16.msra.mxu0 %v2167
    %4467 = vmatprep.subr.bf16.mxu0 %v2176
    %4468 = vmatpush1.bf16.msra.mxu0 %v2175
    %4469 = vmatprep.subr.bf16.mxu0 %v2184
    %4470 = vmatpush1.bf16.msra.mxu0 %v2183
    %4471 = vmatprep.subr.bf16.mxu0 %v2192
    %4472 = vmatpush1.bf16.msra.mxu0 %v2191
    %4473 = vmatprep.subr.bf16.mxu0 %v2200
    %4474 = vmatpush1.bf16.msra.mxu0 %v2199
    %4475 = vmatprep.subr.bf16.mxu0 %v2208
    %4476 = vmatpush1.bf16.msra.mxu0 %v2207
    %4477 = vmatprep.subr.bf16.mxu0 %v2216
    %4478 = vmatpush1.bf16.msra.mxu0 %v2215
    %4479 = vmatprep.subr.bf16.mxu0 %v2224
    %4480 = vmatpush1.bf16.msra.mxu0 %v2223
    %4481 = vmatprep.mubr.bf16.mxu0 %v4448
    %4482 = vmatmul.mubr.bf16.gmra.mrb[0].mxu0 %v4447
    %v4483 = vpop.f32.mrb[0].mxu0
    %v4484 = vadd.f32 %v2236, %v4483
    %v4485 = vpop.f32.mrb[0].mxu0
    %v4486 = vadd.f32 %v2240, %v4485
    %v4487 = vpop.f32.mrb[0].mxu0
    %v4488 = vpop.f32.mrb[0].mxu0
    %4489 = vdwg.mxu0
    %4490 = vmatprep.subr.bf16.mxu0 %v2106
    %4491 = vmatpush1.bf16.msra.mxu0 %v2105
    %4492 = vmatprep.subr.bf16.mxu0 %v2114
    %4493 = vmatpush1.bf16.msra.mxu0 %v2113
    %4494 = vmatprep.subr.bf16.mxu0 %v2122
    %4495 = vmatpush1.bf16.msra.mxu0 %v2121
    %4496 = vmatprep.subr.bf16.mxu0 %v2130
    %4497 = vmatpush1.bf16.msra.mxu0 %v2129
    %4498 = vmatprep.subr.bf16.mxu0 %v2138
    %4499 = vmatpush1.bf16.msra.mxu0 %v2137
    %4500 = vmatprep.subr.bf16.mxu0 %v2146
    %4501 = vmatpush1.bf16.msra.mxu0 %v2145
    %4502 = vmatprep.subr.bf16.mxu0 %v2154
    %4503 = vmatpush1.bf16.msra.mxu0 %v2153
    %4504 = vmatprep.subr.bf16.mxu0 %v2162
    %4505 = vmatpush1.bf16.msra.mxu0 %v2161
    %4506 = vmatprep.subr.bf16.mxu0 %v2170
    %4507 = vmatpush1.bf16.msra.mxu0 %v2169
    %4508 = vmatprep.subr.bf16.mxu0 %v2178
    %4509 = vmatpush1.bf16.msra.mxu0 %v2177
    %4510 = vmatprep.subr.bf16.mxu0 %v2186
    %4511 = vmatpush1.bf16.msra.mxu0 %v2185
    %4512 = vmatprep.subr.bf16.mxu0 %v2194
    %4513 = vmatpush1.bf16.msra.mxu0 %v2193
    %4514 = vmatprep.subr.bf16.mxu0 %v2202
    %4515 = vmatpush1.bf16.msra.mxu0 %v2201
    %4516 = vmatprep.subr.bf16.mxu0 %v2210
    %4517 = vmatpush1.bf16.msra.mxu0 %v2209
    %4518 = vmatprep.subr.bf16.mxu0 %v2218
    %4519 = vmatpush1.bf16.msra.mxu0 %v2217
    %4520 = vmatprep.subr.bf16.mxu0 %v2226
    %4521 = vmatpush1.bf16.msra.mxu0 %v2225
    %4522 = vmatprep.mubr.bf16.mxu0 %v4448
    %4523 = vmatmul.mubr.bf16.gmra.mrb[0].mxu0 %v4447
    %v4524 = vpop.f32.mrb[0].mxu0
    %v4525 = vadd.f32 %v2244, %v4524
    %v4526 = vpop.f32.mrb[0].mxu0
    %v4527 = vadd.f32 %v2248, %v4526
    %v4528 = vpop.f32.mrb[0].mxu0
    %v4529 = vpop.f32.mrb[0].mxu0
    %4530 = vdwg.mxu0
    %4531 = vmatprep.subr.bf16.mxu0 %v2108
    %4532 = vmatpush1.bf16.msra.mxu0 %v2107
    %4533 = vmatprep.subr.bf16.mxu0 %v2116
    %4534 = vmatpush1.bf16.msra.mxu0 %v2115
    %4535 = vmatprep.subr.bf16.mxu0 %v2124
    %4536 = vmatpush1.bf16.msra.mxu0 %v2123
    %4537 = vmatprep.subr.bf16.mxu0 %v2132
    %4538 = vmatpush1.bf16.msra.mxu0 %v2131
    %4539 = vmatprep.subr.bf16.mxu0 %v2140
    %4540 = vmatpush1.bf16.msra.mxu0 %v2139
    %4541 = vmatprep.subr.bf16.mxu0 %v2148
    %4542 = vmatpush1.bf16.msra.mxu0 %v2147
    %4543 = vmatprep.subr.bf16.mxu0 %v2156
    %4544 = vmatpush1.bf16.msra.mxu0 %v2155
    %4545 = vmatprep.subr.bf16.mxu0 %v2164
    %4546 = vmatpush1.bf16.msra.mxu0 %v2163
    %4547 = vmatprep.subr.bf16.mxu0 %v2172
    %4548 = vmatpush1.bf16.msra.mxu0 %v2171
    %4549 = vmatprep.subr.bf16.mxu0 %v2180
    %4550 = vmatpush1.bf16.msra.mxu0 %v2179
    %4551 = vmatprep.subr.bf16.mxu0 %v2188
    %4552 = vmatpush1.bf16.msra.mxu0 %v2187
    %4553 = vmatprep.subr.bf16.mxu0 %v2196
    %4554 = vmatpush1.bf16.msra.mxu0 %v2195
    %4555 = vmatprep.subr.bf16.mxu0 %v2204
    %4556 = vmatpush1.bf16.msra.mxu0 %v2203
    %4557 = vmatprep.subr.bf16.mxu0 %v2212
    %4558 = vmatpush1.bf16.msra.mxu0 %v2211
    %4559 = vmatprep.subr.bf16.mxu0 %v2220
    %4560 = vmatpush1.bf16.msra.mxu0 %v2219
    %4561 = vmatprep.subr.bf16.mxu0 %v2228
    %4562 = vmatpush1.bf16.msra.mxu0 %v2227
    %4563 = vmatprep.mubr.bf16.mxu0 %v4448
    %4564 = vmatmul.mubr.bf16.gmra.mrb[0].mxu0 %v4447
    %v4565 = vpop.f32.mrb[0].mxu0
    %v4566 = vadd.f32 %v2252, %v4565
    %v4567 = vpop.f32.mrb[0].mxu0
    %v4568 = vadd.f32 %v2256, %v4567
    %v4569 = vpop.f32.mrb[0].mxu0
    %v4570 = vpop.f32.mrb[0].mxu0
    %4571 = vdwg.mxu0
    %4572 = vmatprep.subr.bf16.mxu0 %v2110
    %4573 = vmatpush1.bf16.msra.mxu0 %v2109
    %4574 = vmatprep.subr.bf16.mxu0 %v2118
    %4575 = vmatpush1.bf16.msra.mxu0 %v2117
    %4576 = vmatprep.subr.bf16.mxu0 %v2126
    %4577 = vmatpush1.bf16.msra.mxu0 %v2125
    %4578 = vmatprep.subr.bf16.mxu0 %v2134
    %4579 = vmatpush1.bf16.msra.mxu0 %v2133
    %4580 = vmatprep.subr.bf16.mxu0 %v2142
    %4581 = vmatpush1.bf16.msra.mxu0 %v2141
    %4582 = vmatprep.subr.bf16.mxu0 %v2150
    %4583 = vmatpush1.bf16.msra.mxu0 %v2149
    %4584 = vmatprep.subr.bf16.mxu0 %v2158
    %4585 = vmatpush1.bf16.msra.mxu0 %v2157
    %4586 = vmatprep.subr.bf16.mxu0 %v2166
    %4587 = vmatpush1.bf16.msra.mxu0 %v2165
    %4588 = vmatprep.subr.bf16.mxu0 %v2174
    %4589 = vmatpush1.bf16.msra.mxu0 %v2173
    %4590 = vmatprep.subr.bf16.mxu0 %v2182
    %4591 = vmatpush1.bf16.msra.mxu0 %v2181
    %4592 = vmatprep.subr.bf16.mxu0 %v2190
    %4593 = vmatpush1.bf16.msra.mxu0 %v2189
    %4594 = vmatprep.subr.bf16.mxu0 %v2198
    %4595 = vmatpush1.bf16.msra.mxu0 %v2197
    %4596 = vmatprep.subr.bf16.mxu0 %v2206
    %4597 = vmatpush1.bf16.msra.mxu0 %v2205
    %4598 = vmatprep.subr.bf16.mxu0 %v2214
    %4599 = vmatpush1.bf16.msra.mxu0 %v2213
    %4600 = vmatprep.subr.bf16.mxu0 %v2222
    %4601 = vmatpush1.bf16.msra.mxu0 %v2221
    %4602 = vmatprep.subr.bf16.mxu0 %v2230
    %4603 = vmatpush1.bf16.msra.mxu0 %v2229
    %4604 = vmatprep.mubr.bf16.mxu0 %v4448
    %4605 = vmatmul.mubr.bf16.gmra.mrb[0].mxu0 %v4447
    %v4606 = vpop.f32.mrb[0].mxu0
    %v4607 = vadd.f32 %v2260, %v4606
    %v4608 = vpop.f32.mrb[0].mxu0
    %v4609 = vadd.f32 %v2264, %v4608
    %v4610 = vpop.f32.mrb[0].mxu0
    %v4611 = vpop.f32.mrb[0].mxu0
    %4612 = vdwg.mxu0
    %4613 = vmatprep.subr.bf16.mxu0 %v1846
    %4614 = vmatpush1.bf16.msra.mxu0 %v1845
    %4615 = vmatprep.subr.bf16.mxu0 %v1854
    %4616 = vmatpush1.bf16.msra.mxu0 %v1853
    %4617 = vmatprep.subr.bf16.mxu0 %v1862
    %4618 = vmatpush1.bf16.msra.mxu0 %v1861
    %4619 = vmatprep.subr.bf16.mxu0 %v1870
    %4620 = vmatpush1.bf16.msra.mxu0 %v1869
    %4621 = vmatprep.subr.bf16.mxu0 %v1878
    %4622 = vmatpush1.bf16.msra.mxu0 %v1877
    %4623 = vmatprep.subr.bf16.mxu0 %v1886
    %4624 = vmatpush1.bf16.msra.mxu0 %v1885
    %4625 = vmatprep.subr.bf16.mxu0 %v1894
    %4626 = vmatpush1.bf16.msra.mxu0 %v1893
    %4627 = vmatprep.subr.bf16.mxu0 %v1902
    %4628 = vmatpush1.bf16.msra.mxu0 %v1901
    %4629 = vmatprep.subr.bf16.mxu0 %v1910
    %4630 = vmatpush1.bf16.msra.mxu0 %v1909
    %4631 = vmatprep.subr.bf16.mxu0 %v1918
    %4632 = vmatpush1.bf16.msra.mxu0 %v1917
    %4633 = vmatprep.subr.bf16.mxu0 %v1926
    %4634 = vmatpush1.bf16.msra.mxu0 %v1925
    %4635 = vmatprep.subr.bf16.mxu0 %v1934
    %4636 = vmatpush1.bf16.msra.mxu0 %v1933
    %4637 = vmatprep.subr.bf16.mxu0 %v1942
    %4638 = vmatpush1.bf16.msra.mxu0 %v1941
    %4639 = vmatprep.subr.bf16.mxu0 %v1950
    %4640 = vmatpush1.bf16.msra.mxu0 %v1949
    %4641 = vmatprep.subr.bf16.mxu0 %v1958
    %4642 = vmatpush1.bf16.msra.mxu0 %v1957
    %4643 = vmatprep.subr.bf16.mxu0 %v1966
    %4644 = vmatpush1.bf16.msra.mxu0 %v1965
    %4645 = vmatprep.mubr.bf16.mxu0 %v4224
    %4646 = vmatmul.mubr.bf16.gmra.mrb[0].mxu0 %v4223
    %v4647 = vpop.f32.mrb[0].mxu0
    %v4648 = vadd.f32 0.0, %v4647
    %v4649 = vpop.f32.mrb[0].mxu0
    %v4650 = vadd.f32 0.0, %v4649
    %v4651 = vpop.f32.mrb[0].mxu0
    %v4652 = vpop.f32.mrb[0].mxu0
    %4653 = vdwg.mxu0
    %4654 = vmatprep.subr.bf16.mxu0 %v1848
    %4655 = vmatpush1.bf16.msra.mxu0 %v1847
    %4656 = vmatprep.subr.bf16.mxu0 %v1856
    %4657 = vmatpush1.bf16.msra.mxu0 %v1855
    %4658 = vmatprep.subr.bf16.mxu0 %v1864
    %4659 = vmatpush1.bf16.msra.mxu0 %v1863
    %4660 = vmatprep.subr.bf16.mxu0 %v1872
    %4661 = vmatpush1.bf16.msra.mxu0 %v1871
    %4662 = vmatprep.subr.bf16.mxu0 %v1880
    %4663 = vmatpush1.bf16.msra.mxu0 %v1879
    %4664 = vmatprep.subr.bf16.mxu0 %v1888
    %4665 = vmatpush1.bf16.msra.mxu0 %v1887
    %4666 = vmatprep.subr.bf16.mxu0 %v1896
    %4667 = vmatpush1.bf16.msra.mxu0 %v1895
    %4668 = vmatprep.subr.bf16.mxu0 %v1904
    %4669 = vmatpush1.bf16.msra.mxu0 %v1903
    %4670 = vmatprep.subr.bf16.mxu0 %v1912
    %4671 = vmatpush1.bf16.msra.mxu0 %v1911
    %4672 = vmatprep.subr.bf16.mxu0 %v1920
    %4673 = vmatpush1.bf16.msra.mxu0 %v1919
    %4674 = vmatprep.subr.bf16.mxu0 %v1928
    %4675 = vmatpush1.bf16.msra.mxu0 %v1927
    %4676 = vmatprep.subr.bf16.mxu0 %v1936
    %4677 = vmatpush1.bf16.msra.mxu0 %v1935
    %4678 = vmatprep.subr.bf16.mxu0 %v1944
    %4679 = vmatpush1.bf16.msra.mxu0 %v1943
    %4680 = vmatprep.subr.bf16.mxu0 %v1952
    %4681 = vmatpush1.bf16.msra.mxu0 %v1951
    %4682 = vmatprep.subr.bf16.mxu0 %v1960
    %4683 = vmatpush1.bf16.msra.mxu0 %v1959
    %4684 = vmatprep.subr.bf16.mxu0 %v1968
    %4685 = vmatpush1.bf16.msra.mxu0 %v1967
    %4686 = vmatprep.mubr.bf16.mxu0 %v4224
    %4687 = vmatmul.mubr.bf16.gmra.mrb[0].mxu0 %v4223
    %v4688 = vpop.f32.mrb[0].mxu0
    %v4689 = vadd.f32 0.0, %v4688
    %v4690 = vpop.f32.mrb[0].mxu0
    %v4691 = vadd.f32 0.0, %v4690
    %v4692 = vpop.f32.mrb[0].mxu0
    %v4693 = vpop.f32.mrb[0].mxu0
    %4694 = vdwg.mxu0
    %4695 = vmatprep.subr.bf16.mxu0 %v1850
    %4696 = vmatpush1.bf16.msra.mxu0 %v1849
    %4697 = vmatprep.subr.bf16.mxu0 %v1858
    %4698 = vmatpush1.bf16.msra.mxu0 %v1857
    %4699 = vmatprep.subr.bf16.mxu0 %v1866
    %4700 = vmatpush1.bf16.msra.mxu0 %v1865
    %4701 = vmatprep.subr.bf16.mxu0 %v1874
    %4702 = vmatpush1.bf16.msra.mxu0 %v1873
    %4703 = vmatprep.subr.bf16.mxu0 %v1882
    %4704 = vmatpush1.bf16.msra.mxu0 %v1881
    %4705 = vmatprep.subr.bf16.mxu0 %v1890
    %4706 = vmatpush1.bf16.msra.mxu0 %v1889
    %4707 = vmatprep.subr.bf16.mxu0 %v1898
    %4708 = vmatpush1.bf16.msra.mxu0 %v1897
    %4709 = vmatprep.subr.bf16.mxu0 %v1906
    %4710 = vmatpush1.bf16.msra.mxu0 %v1905
    %4711 = vmatprep.subr.bf16.mxu0 %v1914
    %4712 = vmatpush1.bf16.msra.mxu0 %v1913
    %4713 = vmatprep.subr.bf16.mxu0 %v1922
    %4714 = vmatpush1.bf16.msra.mxu0 %v1921
    %4715 = vmatprep.subr.bf16.mxu0 %v1930
    %4716 = vmatpush1.bf16.msra.mxu0 %v1929
    %4717 = vmatprep.subr.bf16.mxu0 %v1938
    %4718 = vmatpush1.bf16.msra.mxu0 %v1937
    %4719 = vmatprep.subr.bf16.mxu0 %v1946
    %4720 = vmatpush1.bf16.msra.mxu0 %v1945
    %4721 = vmatprep.subr.bf16.mxu0 %v1954
    %4722 = vmatpush1.bf16.msra.mxu0 %v1953
    %4723 = vmatprep.subr.bf16.mxu0 %v1962
    %4724 = vmatpush1.bf16.msra.mxu0 %v1961
    %4725 = vmatprep.subr.bf16.mxu0 %v1970
    %4726 = vmatpush1.bf16.msra.mxu0 %v1969
    %4727 = vmatprep.mubr.bf16.mxu0 %v4224
    %4728 = vmatmul.mubr.bf16.gmra.mrb[0].mxu0 %v4223
    %v4729 = vpop.f32.mrb[0].mxu0
    %v4730 = vadd.f32 0.0, %v4729
    %v4731 = vpop.f32.mrb[0].mxu0
    %v4732 = vadd.f32 0.0, %v4731
    %v4733 = vpop.f32.mrb[0].mxu0
    %v4734 = vpop.f32.mrb[0].mxu0
    %4735 = vdwg.mxu0
    %4736 = vmatprep.subr.bf16.mxu0 %v1852
    %4737 = vmatpush1.bf16.msra.mxu0 %v1851
    %4738 = vmatprep.subr.bf16.mxu0 %v1860
    %4739 = vmatpush1.bf16.msra.mxu0 %v1859
    %4740 = vmatprep.subr.bf16.mxu0 %v1868
    %4741 = vmatpush1.bf16.msra.mxu0 %v1867
    %4742 = vmatprep.subr.bf16.mxu0 %v1876
    %4743 = vmatpush1.bf16.msra.mxu0 %v1875
    %4744 = vmatprep.subr.bf16.mxu0 %v1884
    %4745 = vmatpush1.bf16.msra.mxu0 %v1883
    %4746 = vmatprep.subr.bf16.mxu0 %v1892
    %4747 = vmatpush1.bf16.msra.mxu0 %v1891
    %4748 = vmatprep.subr.bf16.mxu0 %v1900
    %4749 = vmatpush1.bf16.msra.mxu0 %v1899
    %4750 = vmatprep.subr.bf16.mxu0 %v1908
    %4751 = vmatpush1.bf16.msra.mxu0 %v1907
    %4752 = vmatprep.subr.bf16.mxu0 %v1916
    %4753 = vmatpush1.bf16.msra.mxu0 %v1915
    %4754 = vmatprep.subr.bf16.mxu0 %v1924
    %4755 = vmatpush1.bf16.msra.mxu0 %v1923
    %4756 = vmatprep.subr.bf16.mxu0 %v1932
    %4757 = vmatpush1.bf16.msra.mxu0 %v1931
    %4758 = vmatprep.subr.bf16.mxu0 %v1940
    %4759 = vmatpush1.bf16.msra.mxu0 %v1939
    %4760 = vmatprep.subr.bf16.mxu0 %v1948
    %4761 = vmatpush1.bf16.msra.mxu0 %v1947
    %4762 = vmatprep.subr.bf16.mxu0 %v1956
    %4763 = vmatpush1.bf16.msra.mxu0 %v1955
    %4764 = vmatprep.subr.bf16.mxu0 %v1964
    %4765 = vmatpush1.bf16.msra.mxu0 %v1963
    %4766 = vmatprep.subr.bf16.mxu0 %v1972
    %4767 = vmatpush1.bf16.msra.mxu0 %v1971
    %4768 = vmatprep.mubr.bf16.mxu0 %v4224
    %4769 = vmatmul.mubr.bf16.gmra.mrb[0].mxu0 %v4223
    %v4770 = vpop.f32.mrb[0].mxu0
    %v4771 = vadd.f32 0.0, %v4770
    %v4772 = vpop.f32.mrb[0].mxu0
    %v4773 = vadd.f32 0.0, %v4772
    %v4774 = vpop.f32.mrb[0].mxu0
    %v4775 = vpop.f32.mrb[0].mxu0
    %4776 = vdwg.mxu0
    %v4785 = vrot.slane %v4648, 5
    %v4786 = vrot.slane %v4650, 5
    %v4787 = vrot.slane %v4689, 5
    %v4788 = vrot.slane %v4691, 5
    %v4789 = vrot.slane %v4730, 5
    %v4790 = vrot.slane %v4732, 5
    %v4791 = vrot.slane %v4771, 5
    %v4792 = vrot.slane %v4773, 5
    %v4793 = vrot.slane %v4648, 6
    %v4794 = vrot.slane %v4650, 6
    %v4795 = vrot.slane %v4689, 6
    %v4796 = vrot.slane %v4691, 6
    %v4797 = vrot.slane %v4730, 6
    %v4798 = vrot.slane %v4732, 6
    %v4799 = vrot.slane %v4771, 6
    %v4800 = vrot.slane %v4773, 6
    %v4817 = vadd.f32 %v1703, %v4785
    %v4818 = vadd.f32 %v1705, %v4786
    %v4819 = vadd.f32 %v1746, %v4787
    %v4820 = vadd.f32 %v1748, %v4788
    %v4821 = vadd.f32 %v1789, %v4789
    %v4822 = vadd.f32 %v1791, %v4790
    %v4823 = vadd.f32 %v1832, %v4791
    %v4824 = vadd.f32 %v1834, %v4792
    %v4825 = vadd.f32 %v1707, %v4793
    %v4826 = vadd.f32 %v1709, %v4794
    %v4827 = vadd.f32 %v1750, %v4795
    %v4828 = vadd.f32 %v1752, %v4796
    %v4829 = vadd.f32 %v1793, %v4797
    %v4830 = vadd.f32 %v1795, %v4798
    %v4831 = vadd.f32 %v1836, %v4799
    %v4832 = vadd.f32 %v1838, %v4800
    %v4833 = vxor.u32 %v4817, 2147483648
    %v4834 = vxor.u32 %v4818, 2147483648
    %v4835 = vxor.u32 %v4825, 2147483648
    %v4836 = vxor.u32 %v4826, 2147483648
    %v4837 = vmul.f32 %v4833, 1.442695
    %v4838 = vpow.pop %v4837
    %v4839 = vmul.f32 %v4834, 1.442695
    %v4840 = vpow.pop %v4839
    %v4841 = vmul.f32 %v4835, 1.442695
    %v4842 = vpow.pop %v4841
    %v4843 = vmul.f32 %v4836, 1.442695
    %v4844 = vpow.pop %v4843
    %v4845 = vadd.f32 %v4838, 1.0
    %v4846 = vadd.f32 %v4840, 1.0
    %v4847 = vadd.f32 %v4842, 1.0
    %v4848 = vadd.f32 %v4844, 1.0
    %v4849 = vrcp.pop %v4845
    %v4850 = vmul.f32 1.0, %v4849
    %v4851 = vrcp.pop %v4846
    %v4852 = vmul.f32 1.0, %v4851
    %v4853 = vrcp.pop %v4847
    %v4854 = vmul.f32 1.0, %v4853
    %v4855 = vrcp.pop %v4848
    %v4856 = vmul.f32 1.0, %v4855
    %v4857 = vxor.u32 %v4819, 2147483648
    %v4858 = vxor.u32 %v4820, 2147483648
    %v4859 = vxor.u32 %v4827, 2147483648
    %v4860 = vxor.u32 %v4828, 2147483648
    %v4861 = vmul.f32 %v4857, 1.442695
    %v4862 = vpow.pop %v4861
    %v4863 = vmul.f32 %v4858, 1.442695
    %v4864 = vpow.pop %v4863
    %v4865 = vmul.f32 %v4859, 1.442695
    %v4866 = vpow.pop %v4865
    %v4867 = vmul.f32 %v4860, 1.442695
    %v4868 = vpow.pop %v4867
    %v4869 = vadd.f32 %v4862, 1.0
    %v4870 = vadd.f32 %v4864, 1.0
    %v4871 = vadd.f32 %v4866, 1.0
    %v4872 = vadd.f32 %v4868, 1.0
    %v4873 = vrcp.pop %v4869
    %v4874 = vmul.f32 1.0, %v4873
    %v4875 = vrcp.pop %v4870
    %v4876 = vmul.f32 1.0, %v4875
    %v4877 = vrcp.pop %v4871
    %v4878 = vmul.f32 1.0, %v4877
    %v4879 = vrcp.pop %v4872
    %v4880 = vmul.f32 1.0, %v4879
    %v4881 = vtanh.pop %v4821
    %v4882 = vtanh.pop %v4822
    %v4883 = vtanh.pop %v4829
    %v4884 = vtanh.pop %v4830
    %v4885 = vxor.u32 %v4823, 2147483648
    %v4886 = vxor.u32 %v4824, 2147483648
    %v4887 = vxor.u32 %v4831, 2147483648
    %v4888 = vxor.u32 %v4832, 2147483648
    %v4889 = vmul.f32 %v4885, 1.442695
    %v4890 = vpow.pop %v4889
    %v4891 = vmul.f32 %v4886, 1.442695
    %v4892 = vpow.pop %v4891
    %v4893 = vmul.f32 %v4887, 1.442695
    %v4894 = vpow.pop %v4893
    %v4895 = vmul.f32 %v4888, 1.442695
    %v4896 = vpow.pop %v4895
    %v4897 = vadd.f32 %v4890, 1.0
    %v4898 = vadd.f32 %v4892, 1.0
    %v4899 = vadd.f32 %v4894, 1.0
    %v4900 = vadd.f32 %v4896, 1.0
    %v4901 = vrcp.pop %v4897
    %v4902 = vmul.f32 1.0, %v4901
    %v4903 = vrcp.pop %v4898
    %v4904 = vmul.f32 1.0, %v4903
    %v4905 = vrcp.pop %v4899
    %v4906 = vmul.f32 1.0, %v4905
    %v4907 = vrcp.pop %v4900
    %v4908 = vmul.f32 1.0, %v4907
    %v4913 = vrot.slane %v4193, 7
    %v4914 = vrot.slane %v4194, 7
    %v4915 = vrot.slane %v4195, 7
    %v4916 = vrot.slane %v4196, 7
    %v4921 = vmul.f32 %v4874, %v4913
    %v4922 = vmul.f32 %v4876, %v4914
    %v4923 = vmul.f32 %v4878, %v4915
    %v4924 = vmul.f32 %v4880, %v4916
    %v4925 = vmul.f32 %v4850, %v4881
    %v4926 = vmul.f32 %v4852, %v4882
    %v4927 = vmul.f32 %v4854, %v4883
    %v4928 = vmul.f32 %v4856, %v4884
    %v4929 = vadd.f32 %v4921, %v4925
    %v4930 = vadd.f32 %v4922, %v4926
    %v4931 = vadd.f32 %v4923, %v4927
    %v4932 = vadd.f32 %v4924, %v4928
    %v4933 = vtanh.pop %v4929
    %v4934 = vtanh.pop %v4930
    %v4935 = vtanh.pop %v4931
    %v4936 = vtanh.pop %v4932
    %v4937 = vmul.f32 %v4902, %v4933
    %v4938 = vmul.f32 %v4904, %v4934
    %v4939 = vmul.f32 %v4906, %v4935
    %v4940 = vmul.f32 %v4908, %v4936
    %v4941 = vpack.c.bf16 %v4937, %v4937
    %v4942 = vpack.c.bf16 %v4938, %v4938
    %v4943 = vpack.c.bf16 %v4939, %v4939
    %v4944 = vpack.c.bf16 %v4940, %v4940
    %v4949 = vunpack.c.l.b16 %v4941
    %v4950 = vunpack.c.l.b16 %v4942
    %v4951 = vunpack.c.l.b16 %v4943
    %v4952 = vunpack.c.l.b16 %v4944
    %v4953 = vrot.slane %v4949, 3
    %v4954 = vrot.slane %v4951, 2
    %v4955 = vsel %vm894, %v4954, %v4953
    %v4956 = vrot.slane %v4950, 3
    %v4957 = vrot.slane %v4952, 2
    %v4958 = vsel %vm894, %v4957, %v4956
    %v4959 = vpack.c.b16 %v4955, %v4955
    %v4960 = vpack.c.b16 %v4958, %v4958
    %4963 = vmatprep.subr.bf16.mxu0 %v1975
    %4964 = vmatpush1.bf16.msra.mxu0 %v1974
    %4965 = vmatprep.subr.bf16.mxu0 %v1983
    %4966 = vmatpush1.bf16.msra.mxu0 %v1982
    %4967 = vmatprep.subr.bf16.mxu0 %v1991
    %4968 = vmatpush1.bf16.msra.mxu0 %v1990
    %4969 = vmatprep.subr.bf16.mxu0 %v1999
    %4970 = vmatpush1.bf16.msra.mxu0 %v1998
    %4971 = vmatprep.subr.bf16.mxu0 %v2007
    %4972 = vmatpush1.bf16.msra.mxu0 %v2006
    %4973 = vmatprep.subr.bf16.mxu0 %v2015
    %4974 = vmatpush1.bf16.msra.mxu0 %v2014
    %4975 = vmatprep.subr.bf16.mxu0 %v2023
    %4976 = vmatpush1.bf16.msra.mxu0 %v2022
    %4977 = vmatprep.subr.bf16.mxu0 %v2031
    %4978 = vmatpush1.bf16.msra.mxu0 %v2030
    %4979 = vmatprep.subr.bf16.mxu0 %v2039
    %4980 = vmatpush1.bf16.msra.mxu0 %v2038
    %4981 = vmatprep.subr.bf16.mxu0 %v2047
    %4982 = vmatpush1.bf16.msra.mxu0 %v2046
    %4983 = vmatprep.subr.bf16.mxu0 %v2055
    %4984 = vmatpush1.bf16.msra.mxu0 %v2054
    %4985 = vmatprep.subr.bf16.mxu0 %v2063
    %4986 = vmatpush1.bf16.msra.mxu0 %v2062
    %4987 = vmatprep.subr.bf16.mxu0 %v2071
    %4988 = vmatpush1.bf16.msra.mxu0 %v2070
    %4989 = vmatprep.subr.bf16.mxu0 %v2079
    %4990 = vmatpush1.bf16.msra.mxu0 %v2078
    %4991 = vmatprep.subr.bf16.mxu0 %v2087
    %4992 = vmatpush1.bf16.msra.mxu0 %v2086
    %4993 = vmatprep.subr.bf16.mxu0 %v2095
    %4994 = vmatpush1.bf16.msra.mxu0 %v2094
    %4995 = vmatprep.mubr.bf16.mxu0 %v4960
    %4996 = vmatmul.mubr.bf16.gmra.mrb[0].mxu0 %v4959
    %v4997 = vpop.f32.mrb[0].mxu0
    %v4998 = vadd.f32 0.0, %v4997
    %v4999 = vpop.f32.mrb[0].mxu0
    %v5000 = vadd.f32 0.0, %v4999
    %v5001 = vpop.f32.mrb[0].mxu0
    %v5002 = vpop.f32.mrb[0].mxu0
    %5003 = vdwg.mxu0
    %5004 = vmatprep.subr.bf16.mxu0 %v1977
    %5005 = vmatpush1.bf16.msra.mxu0 %v1976
    %5006 = vmatprep.subr.bf16.mxu0 %v1985
    %5007 = vmatpush1.bf16.msra.mxu0 %v1984
    %5008 = vmatprep.subr.bf16.mxu0 %v1993
    %5009 = vmatpush1.bf16.msra.mxu0 %v1992
    %5010 = vmatprep.subr.bf16.mxu0 %v2001
    %5011 = vmatpush1.bf16.msra.mxu0 %v2000
    %5012 = vmatprep.subr.bf16.mxu0 %v2009
    %5013 = vmatpush1.bf16.msra.mxu0 %v2008
    %5014 = vmatprep.subr.bf16.mxu0 %v2017
    %5015 = vmatpush1.bf16.msra.mxu0 %v2016
    %5016 = vmatprep.subr.bf16.mxu0 %v2025
    %5017 = vmatpush1.bf16.msra.mxu0 %v2024
    %5018 = vmatprep.subr.bf16.mxu0 %v2033
    %5019 = vmatpush1.bf16.msra.mxu0 %v2032
    %5020 = vmatprep.subr.bf16.mxu0 %v2041
    %5021 = vmatpush1.bf16.msra.mxu0 %v2040
    %5022 = vmatprep.subr.bf16.mxu0 %v2049
    %5023 = vmatpush1.bf16.msra.mxu0 %v2048
    %5024 = vmatprep.subr.bf16.mxu0 %v2057
    %5025 = vmatpush1.bf16.msra.mxu0 %v2056
    %5026 = vmatprep.subr.bf16.mxu0 %v2065
    %5027 = vmatpush1.bf16.msra.mxu0 %v2064
    %5028 = vmatprep.subr.bf16.mxu0 %v2073
    %5029 = vmatpush1.bf16.msra.mxu0 %v2072
    %5030 = vmatprep.subr.bf16.mxu0 %v2081
    %5031 = vmatpush1.bf16.msra.mxu0 %v2080
    %5032 = vmatprep.subr.bf16.mxu0 %v2089
    %5033 = vmatpush1.bf16.msra.mxu0 %v2088
    %5034 = vmatprep.subr.bf16.mxu0 %v2097
    %5035 = vmatpush1.bf16.msra.mxu0 %v2096
    %5036 = vmatprep.mubr.bf16.mxu0 %v4960
    %5037 = vmatmul.mubr.bf16.gmra.mrb[0].mxu0 %v4959
    %v5038 = vpop.f32.mrb[0].mxu0
    %v5039 = vadd.f32 0.0, %v5038
    %v5040 = vpop.f32.mrb[0].mxu0
    %v5041 = vadd.f32 0.0, %v5040
    %v5042 = vpop.f32.mrb[0].mxu0
    %v5043 = vpop.f32.mrb[0].mxu0
    %5044 = vdwg.mxu0
    %5045 = vmatprep.subr.bf16.mxu0 %v1979
    %5046 = vmatpush1.bf16.msra.mxu0 %v1978
    %5047 = vmatprep.subr.bf16.mxu0 %v1987
    %5048 = vmatpush1.bf16.msra.mxu0 %v1986
    %5049 = vmatprep.subr.bf16.mxu0 %v1995
    %5050 = vmatpush1.bf16.msra.mxu0 %v1994
    %5051 = vmatprep.subr.bf16.mxu0 %v2003
    %5052 = vmatpush1.bf16.msra.mxu0 %v2002
    %5053 = vmatprep.subr.bf16.mxu0 %v2011
    %5054 = vmatpush1.bf16.msra.mxu0 %v2010
    %5055 = vmatprep.subr.bf16.mxu0 %v2019
    %5056 = vmatpush1.bf16.msra.mxu0 %v2018
    %5057 = vmatprep.subr.bf16.mxu0 %v2027
    %5058 = vmatpush1.bf16.msra.mxu0 %v2026
    %5059 = vmatprep.subr.bf16.mxu0 %v2035
    %5060 = vmatpush1.bf16.msra.mxu0 %v2034
    %5061 = vmatprep.subr.bf16.mxu0 %v2043
    %5062 = vmatpush1.bf16.msra.mxu0 %v2042
    %5063 = vmatprep.subr.bf16.mxu0 %v2051
    %5064 = vmatpush1.bf16.msra.mxu0 %v2050
    %5065 = vmatprep.subr.bf16.mxu0 %v2059
    %5066 = vmatpush1.bf16.msra.mxu0 %v2058
    %5067 = vmatprep.subr.bf16.mxu0 %v2067
    %5068 = vmatpush1.bf16.msra.mxu0 %v2066
    %5069 = vmatprep.subr.bf16.mxu0 %v2075
    %5070 = vmatpush1.bf16.msra.mxu0 %v2074
    %5071 = vmatprep.subr.bf16.mxu0 %v2083
    %5072 = vmatpush1.bf16.msra.mxu0 %v2082
    %5073 = vmatprep.subr.bf16.mxu0 %v2091
    %5074 = vmatpush1.bf16.msra.mxu0 %v2090
    %5075 = vmatprep.subr.bf16.mxu0 %v2099
    %5076 = vmatpush1.bf16.msra.mxu0 %v2098
    %5077 = vmatprep.mubr.bf16.mxu0 %v4960
    %5078 = vmatmul.mubr.bf16.gmra.mrb[0].mxu0 %v4959
    %v5079 = vpop.f32.mrb[0].mxu0
    %v5080 = vadd.f32 0.0, %v5079
    %v5081 = vpop.f32.mrb[0].mxu0
    %v5082 = vadd.f32 0.0, %v5081
    %v5083 = vpop.f32.mrb[0].mxu0
    %v5084 = vpop.f32.mrb[0].mxu0
    %5085 = vdwg.mxu0
    %5086 = vmatprep.subr.bf16.mxu0 %v1981
    %5087 = vmatpush1.bf16.msra.mxu0 %v1980
    %5088 = vmatprep.subr.bf16.mxu0 %v1989
    %5089 = vmatpush1.bf16.msra.mxu0 %v1988
    %5090 = vmatprep.subr.bf16.mxu0 %v1997
    %5091 = vmatpush1.bf16.msra.mxu0 %v1996
    %5092 = vmatprep.subr.bf16.mxu0 %v2005
    %5093 = vmatpush1.bf16.msra.mxu0 %v2004
    %5094 = vmatprep.subr.bf16.mxu0 %v2013
    %5095 = vmatpush1.bf16.msra.mxu0 %v2012
    %5096 = vmatprep.subr.bf16.mxu0 %v2021
    %5097 = vmatpush1.bf16.msra.mxu0 %v2020
    %5098 = vmatprep.subr.bf16.mxu0 %v2029
    %5099 = vmatpush1.bf16.msra.mxu0 %v2028
    %5100 = vmatprep.subr.bf16.mxu0 %v2037
    %5101 = vmatpush1.bf16.msra.mxu0 %v2036
    %5102 = vmatprep.subr.bf16.mxu0 %v2045
    %5103 = vmatpush1.bf16.msra.mxu0 %v2044
    %5104 = vmatprep.subr.bf16.mxu0 %v2053
    %5105 = vmatpush1.bf16.msra.mxu0 %v2052
    %5106 = vmatprep.subr.bf16.mxu0 %v2061
    %5107 = vmatpush1.bf16.msra.mxu0 %v2060
    %5108 = vmatprep.subr.bf16.mxu0 %v2069
    %5109 = vmatpush1.bf16.msra.mxu0 %v2068
    %5110 = vmatprep.subr.bf16.mxu0 %v2077
    %5111 = vmatpush1.bf16.msra.mxu0 %v2076
    %5112 = vmatprep.subr.bf16.mxu0 %v2085
    %5113 = vmatpush1.bf16.msra.mxu0 %v2084
    %5114 = vmatprep.subr.bf16.mxu0 %v2093
    %5115 = vmatpush1.bf16.msra.mxu0 %v2092
    %5116 = vmatprep.subr.bf16.mxu0 %v2101
    %5117 = vmatpush1.bf16.msra.mxu0 %v2100
    %5118 = vmatprep.mubr.bf16.mxu0 %v4960
    %5119 = vmatmul.mubr.bf16.gmra.mrb[0].mxu0 %v4959
    %v5120 = vpop.f32.mrb[0].mxu0
    %v5121 = vadd.f32 0.0, %v5120
    %v5122 = vpop.f32.mrb[0].mxu0
    %v5123 = vadd.f32 0.0, %v5122
    %v5124 = vpop.f32.mrb[0].mxu0
    %v5125 = vpop.f32.mrb[0].mxu0
    %5126 = vdwg.mxu0
    %v5127 = vadd.f32 %v4484, %v4998
    %v5128 = vadd.f32 %v4486, %v5000
    %v5129 = vadd.f32 %v4525, %v5039
    %v5130 = vadd.f32 %v4527, %v5041
    %v5131 = vadd.f32 %v4566, %v5080
    %v5132 = vadd.f32 %v4568, %v5082
    %v5133 = vadd.f32 %v4607, %v5121
    %v5134 = vadd.f32 %v4609, %v5123
    %v5135 = vxor.u32 %v5127, 2147483648
    %v5136 = vxor.u32 %v5128, 2147483648
    %v5137 = vmul.f32 %v5135, 1.442695
    %v5138 = vpow.pop %v5137
    %v5139 = vmul.f32 %v5136, 1.442695
    %v5140 = vpow.pop %v5139
    %v5141 = vadd.f32 %v5138, 1.0
    %v5142 = vadd.f32 %v5140, 1.0
    %v5143 = vrcp.pop %v5141
    %v5144 = vmul.f32 1.0, %v5143
    %v5145 = vrcp.pop %v5142
    %v5146 = vmul.f32 1.0, %v5145
    %v5147 = vxor.u32 %v5129, 2147483648
    %v5148 = vxor.u32 %v5130, 2147483648
    %v5149 = vmul.f32 %v5147, 1.442695
    %v5150 = vpow.pop %v5149
    %v5151 = vmul.f32 %v5148, 1.442695
    %v5152 = vpow.pop %v5151
    %v5153 = vadd.f32 %v5150, 1.0
    %v5154 = vadd.f32 %v5152, 1.0
    %v5155 = vrcp.pop %v5153
    %v5156 = vmul.f32 1.0, %v5155
    %v5157 = vrcp.pop %v5154
    %v5158 = vmul.f32 1.0, %v5157
    %v5159 = vtanh.pop %v5131
    %v5160 = vtanh.pop %v5132
    %v5161 = vxor.u32 %v5133, 2147483648
    %v5162 = vxor.u32 %v5134, 2147483648
    %v5163 = vmul.f32 %v5161, 1.442695
    %v5164 = vpow.pop %v5163
    %v5165 = vmul.f32 %v5162, 1.442695
    %v5166 = vpow.pop %v5165
    %v5167 = vadd.f32 %v5164, 1.0
    %v5168 = vadd.f32 %v5166, 1.0
    %v5169 = vrcp.pop %v5167
    %v5170 = vmul.f32 1.0, %v5169
    %v5171 = vrcp.pop %v5168
    %v5172 = vmul.f32 1.0, %v5171
    %v5173 = vmul.f32 %v5156, %v4441
    %v5174 = vmul.f32 %v5158, %v4442
    %v5175 = vmul.f32 %v5144, %v5159
    %v5176 = vmul.f32 %v5146, %v5160
    %v5177 = vadd.f32 %v5173, %v5175
    %v5178 = vadd.f32 %v5174, %v5176
    %v5179 = vtanh.pop %v5177
    %v5180 = vtanh.pop %v5178
    %v5181 = vmul.f32 %v5170, %v5179
    %v5182 = vmul.f32 %v5172, %v5180
    %v5183 = vpack.c.bf16 %v5181, %v5181
    %v5184 = vpack.c.bf16 %v5182, %v5182
    %5185 = vmatprep.subr.bf16.mxu0 %v2104
    %5186 = vmatpush1.bf16.msra.mxu0 %v2103
    %5187 = vmatprep.subr.bf16.mxu0 %v2112
    %5188 = vmatpush1.bf16.msra.mxu0 %v2111
    %5189 = vmatprep.subr.bf16.mxu0 %v2120
    %5190 = vmatpush1.bf16.msra.mxu0 %v2119
    %5191 = vmatprep.subr.bf16.mxu0 %v2128
    %5192 = vmatpush1.bf16.msra.mxu0 %v2127
    %5193 = vmatprep.subr.bf16.mxu0 %v2136
    %5194 = vmatpush1.bf16.msra.mxu0 %v2135
    %5195 = vmatprep.subr.bf16.mxu0 %v2144
    %5196 = vmatpush1.bf16.msra.mxu0 %v2143
    %5197 = vmatprep.subr.bf16.mxu0 %v2152
    %5198 = vmatpush1.bf16.msra.mxu0 %v2151
    %5199 = vmatprep.subr.bf16.mxu0 %v2160
    %5200 = vmatpush1.bf16.msra.mxu0 %v2159
    %5201 = vmatprep.subr.bf16.mxu0 %v2168
    %5202 = vmatpush1.bf16.msra.mxu0 %v2167
    %5203 = vmatprep.subr.bf16.mxu0 %v2176
    %5204 = vmatpush1.bf16.msra.mxu0 %v2175
    %5205 = vmatprep.subr.bf16.mxu0 %v2184
    %5206 = vmatpush1.bf16.msra.mxu0 %v2183
    %5207 = vmatprep.subr.bf16.mxu0 %v2192
    %5208 = vmatpush1.bf16.msra.mxu0 %v2191
    %5209 = vmatprep.subr.bf16.mxu0 %v2200
    %5210 = vmatpush1.bf16.msra.mxu0 %v2199
    %5211 = vmatprep.subr.bf16.mxu0 %v2208
    %5212 = vmatpush1.bf16.msra.mxu0 %v2207
    %5213 = vmatprep.subr.bf16.mxu0 %v2216
    %5214 = vmatpush1.bf16.msra.mxu0 %v2215
    %5215 = vmatprep.subr.bf16.mxu0 %v2224
    %5216 = vmatpush1.bf16.msra.mxu0 %v2223
    %5217 = vmatprep.mubr.bf16.mxu0 %v5184
    %5218 = vmatmul.mubr.bf16.gmra.mrb[0].mxu0 %v5183
    %v5219 = vpop.f32.mrb[0].mxu0
    %v5220 = vadd.f32 %v2236, %v5219
    %v5221 = vpop.f32.mrb[0].mxu0
    %v5222 = vadd.f32 %v2240, %v5221
    %v5223 = vpop.f32.mrb[0].mxu0
    %v5224 = vpop.f32.mrb[0].mxu0
    %5225 = vdwg.mxu0
    %5226 = vmatprep.subr.bf16.mxu0 %v2106
    %5227 = vmatpush1.bf16.msra.mxu0 %v2105
    %5228 = vmatprep.subr.bf16.mxu0 %v2114
    %5229 = vmatpush1.bf16.msra.mxu0 %v2113
    %5230 = vmatprep.subr.bf16.mxu0 %v2122
    %5231 = vmatpush1.bf16.msra.mxu0 %v2121
    %5232 = vmatprep.subr.bf16.mxu0 %v2130
    %5233 = vmatpush1.bf16.msra.mxu0 %v2129
    %5234 = vmatprep.subr.bf16.mxu0 %v2138
    %5235 = vmatpush1.bf16.msra.mxu0 %v2137
    %5236 = vmatprep.subr.bf16.mxu0 %v2146
    %5237 = vmatpush1.bf16.msra.mxu0 %v2145
    %5238 = vmatprep.subr.bf16.mxu0 %v2154
    %5239 = vmatpush1.bf16.msra.mxu0 %v2153
    %5240 = vmatprep.subr.bf16.mxu0 %v2162
    %5241 = vmatpush1.bf16.msra.mxu0 %v2161
    %5242 = vmatprep.subr.bf16.mxu0 %v2170
    %5243 = vmatpush1.bf16.msra.mxu0 %v2169
    %5244 = vmatprep.subr.bf16.mxu0 %v2178
    %5245 = vmatpush1.bf16.msra.mxu0 %v2177
    %5246 = vmatprep.subr.bf16.mxu0 %v2186
    %5247 = vmatpush1.bf16.msra.mxu0 %v2185
    %5248 = vmatprep.subr.bf16.mxu0 %v2194
    %5249 = vmatpush1.bf16.msra.mxu0 %v2193
    %5250 = vmatprep.subr.bf16.mxu0 %v2202
    %5251 = vmatpush1.bf16.msra.mxu0 %v2201
    %5252 = vmatprep.subr.bf16.mxu0 %v2210
    %5253 = vmatpush1.bf16.msra.mxu0 %v2209
    %5254 = vmatprep.subr.bf16.mxu0 %v2218
    %5255 = vmatpush1.bf16.msra.mxu0 %v2217
    %5256 = vmatprep.subr.bf16.mxu0 %v2226
    %5257 = vmatpush1.bf16.msra.mxu0 %v2225
    %5258 = vmatprep.mubr.bf16.mxu0 %v5184
    %5259 = vmatmul.mubr.bf16.gmra.mrb[0].mxu0 %v5183
    %v5260 = vpop.f32.mrb[0].mxu0
    %v5261 = vadd.f32 %v2244, %v5260
    %v5262 = vpop.f32.mrb[0].mxu0
    %v5263 = vadd.f32 %v2248, %v5262
    %v5264 = vpop.f32.mrb[0].mxu0
    %v5265 = vpop.f32.mrb[0].mxu0
    %5266 = vdwg.mxu0
    %5267 = vmatprep.subr.bf16.mxu0 %v2108
    %5268 = vmatpush1.bf16.msra.mxu0 %v2107
    %5269 = vmatprep.subr.bf16.mxu0 %v2116
    %5270 = vmatpush1.bf16.msra.mxu0 %v2115
    %5271 = vmatprep.subr.bf16.mxu0 %v2124
    %5272 = vmatpush1.bf16.msra.mxu0 %v2123
    %5273 = vmatprep.subr.bf16.mxu0 %v2132
    %5274 = vmatpush1.bf16.msra.mxu0 %v2131
    %5275 = vmatprep.subr.bf16.mxu0 %v2140
    %5276 = vmatpush1.bf16.msra.mxu0 %v2139
    %5277 = vmatprep.subr.bf16.mxu0 %v2148
    %5278 = vmatpush1.bf16.msra.mxu0 %v2147
    %5279 = vmatprep.subr.bf16.mxu0 %v2156
    %5280 = vmatpush1.bf16.msra.mxu0 %v2155
    %5281 = vmatprep.subr.bf16.mxu0 %v2164
    %5282 = vmatpush1.bf16.msra.mxu0 %v2163
    %5283 = vmatprep.subr.bf16.mxu0 %v2172
    %5284 = vmatpush1.bf16.msra.mxu0 %v2171
    %5285 = vmatprep.subr.bf16.mxu0 %v2180
    %5286 = vmatpush1.bf16.msra.mxu0 %v2179
    %5287 = vmatprep.subr.bf16.mxu0 %v2188
    %5288 = vmatpush1.bf16.msra.mxu0 %v2187
    %5289 = vmatprep.subr.bf16.mxu0 %v2196
    %5290 = vmatpush1.bf16.msra.mxu0 %v2195
    %5291 = vmatprep.subr.bf16.mxu0 %v2204
    %5292 = vmatpush1.bf16.msra.mxu0 %v2203
    %5293 = vmatprep.subr.bf16.mxu0 %v2212
    %5294 = vmatpush1.bf16.msra.mxu0 %v2211
    %5295 = vmatprep.subr.bf16.mxu0 %v2220
    %5296 = vmatpush1.bf16.msra.mxu0 %v2219
    %5297 = vmatprep.subr.bf16.mxu0 %v2228
    %5298 = vmatpush1.bf16.msra.mxu0 %v2227
    %5299 = vmatprep.mubr.bf16.mxu0 %v5184
    %5300 = vmatmul.mubr.bf16.gmra.mrb[0].mxu0 %v5183
    %v5301 = vpop.f32.mrb[0].mxu0
    %v5302 = vadd.f32 %v2252, %v5301
    %v5303 = vpop.f32.mrb[0].mxu0
    %v5304 = vadd.f32 %v2256, %v5303
    %v5305 = vpop.f32.mrb[0].mxu0
    %v5306 = vpop.f32.mrb[0].mxu0
    %5307 = vdwg.mxu0
    %5308 = vmatprep.subr.bf16.mxu0 %v2110
    %5309 = vmatpush1.bf16.msra.mxu0 %v2109
    %5310 = vmatprep.subr.bf16.mxu0 %v2118
    %5311 = vmatpush1.bf16.msra.mxu0 %v2117
    %5312 = vmatprep.subr.bf16.mxu0 %v2126
    %5313 = vmatpush1.bf16.msra.mxu0 %v2125
    %5314 = vmatprep.subr.bf16.mxu0 %v2134
    %5315 = vmatpush1.bf16.msra.mxu0 %v2133
    %5316 = vmatprep.subr.bf16.mxu0 %v2142
    %5317 = vmatpush1.bf16.msra.mxu0 %v2141
    %5318 = vmatprep.subr.bf16.mxu0 %v2150
    %5319 = vmatpush1.bf16.msra.mxu0 %v2149
    %5320 = vmatprep.subr.bf16.mxu0 %v2158
    %5321 = vmatpush1.bf16.msra.mxu0 %v2157
    %5322 = vmatprep.subr.bf16.mxu0 %v2166
    %5323 = vmatpush1.bf16.msra.mxu0 %v2165
    %5324 = vmatprep.subr.bf16.mxu0 %v2174
    %5325 = vmatpush1.bf16.msra.mxu0 %v2173
    %5326 = vmatprep.subr.bf16.mxu0 %v2182
    %5327 = vmatpush1.bf16.msra.mxu0 %v2181
    %5328 = vmatprep.subr.bf16.mxu0 %v2190
    %5329 = vmatpush1.bf16.msra.mxu0 %v2189
    %5330 = vmatprep.subr.bf16.mxu0 %v2198
    %5331 = vmatpush1.bf16.msra.mxu0 %v2197
    %5332 = vmatprep.subr.bf16.mxu0 %v2206
    %5333 = vmatpush1.bf16.msra.mxu0 %v2205
    %5334 = vmatprep.subr.bf16.mxu0 %v2214
    %5335 = vmatpush1.bf16.msra.mxu0 %v2213
    %5336 = vmatprep.subr.bf16.mxu0 %v2222
    %5337 = vmatpush1.bf16.msra.mxu0 %v2221
    %5338 = vmatprep.subr.bf16.mxu0 %v2230
    %5339 = vmatpush1.bf16.msra.mxu0 %v2229
    %5340 = vmatprep.mubr.bf16.mxu0 %v5184
    %5341 = vmatmul.mubr.bf16.gmra.mrb[0].mxu0 %v5183
    %v5342 = vpop.f32.mrb[0].mxu0
    %v5343 = vadd.f32 %v2260, %v5342
    %v5344 = vpop.f32.mrb[0].mxu0
    %v5345 = vadd.f32 %v2264, %v5344
    %v5346 = vpop.f32.mrb[0].mxu0
    %v5347 = vpop.f32.mrb[0].mxu0
    %5348 = vdwg.mxu0
    %5349 = vmatprep.subr.bf16.mxu0 %v1846
    %5350 = vmatpush1.bf16.msra.mxu0 %v1845
    %5351 = vmatprep.subr.bf16.mxu0 %v1854
    %5352 = vmatpush1.bf16.msra.mxu0 %v1853
    %5353 = vmatprep.subr.bf16.mxu0 %v1862
    %5354 = vmatpush1.bf16.msra.mxu0 %v1861
    %5355 = vmatprep.subr.bf16.mxu0 %v1870
    %5356 = vmatpush1.bf16.msra.mxu0 %v1869
    %5357 = vmatprep.subr.bf16.mxu0 %v1878
    %5358 = vmatpush1.bf16.msra.mxu0 %v1877
    %5359 = vmatprep.subr.bf16.mxu0 %v1886
    %5360 = vmatpush1.bf16.msra.mxu0 %v1885
    %5361 = vmatprep.subr.bf16.mxu0 %v1894
    %5362 = vmatpush1.bf16.msra.mxu0 %v1893
    %5363 = vmatprep.subr.bf16.mxu0 %v1902
    %5364 = vmatpush1.bf16.msra.mxu0 %v1901
    %5365 = vmatprep.subr.bf16.mxu0 %v1910
    %5366 = vmatpush1.bf16.msra.mxu0 %v1909
    %5367 = vmatprep.subr.bf16.mxu0 %v1918
    %5368 = vmatpush1.bf16.msra.mxu0 %v1917
    %5369 = vmatprep.subr.bf16.mxu0 %v1926
    %5370 = vmatpush1.bf16.msra.mxu0 %v1925
    %5371 = vmatprep.subr.bf16.mxu0 %v1934
    %5372 = vmatpush1.bf16.msra.mxu0 %v1933
    %5373 = vmatprep.subr.bf16.mxu0 %v1942
    %5374 = vmatpush1.bf16.msra.mxu0 %v1941
    %5375 = vmatprep.subr.bf16.mxu0 %v1950
    %5376 = vmatpush1.bf16.msra.mxu0 %v1949
    %5377 = vmatprep.subr.bf16.mxu0 %v1958
    %5378 = vmatpush1.bf16.msra.mxu0 %v1957
    %5379 = vmatprep.subr.bf16.mxu0 %v1966
    %5380 = vmatpush1.bf16.msra.mxu0 %v1965
    %5381 = vmatprep.mubr.bf16.mxu0 %v4960
    %5382 = vmatmul.mubr.bf16.gmra.mrb[0].mxu0 %v4959
    %v5383 = vpop.f32.mrb[0].mxu0
    %v5384 = vadd.f32 0.0, %v5383
    %v5385 = vpop.f32.mrb[0].mxu0
    %v5386 = vadd.f32 0.0, %v5385
    %v5387 = vpop.f32.mrb[0].mxu0
    %v5388 = vpop.f32.mrb[0].mxu0
    %5389 = vdwg.mxu0
    %5390 = vmatprep.subr.bf16.mxu0 %v1848
    %5391 = vmatpush1.bf16.msra.mxu0 %v1847
    %5392 = vmatprep.subr.bf16.mxu0 %v1856
    %5393 = vmatpush1.bf16.msra.mxu0 %v1855
    %5394 = vmatprep.subr.bf16.mxu0 %v1864
    %5395 = vmatpush1.bf16.msra.mxu0 %v1863
    %5396 = vmatprep.subr.bf16.mxu0 %v1872
    %5397 = vmatpush1.bf16.msra.mxu0 %v1871
    %5398 = vmatprep.subr.bf16.mxu0 %v1880
    %5399 = vmatpush1.bf16.msra.mxu0 %v1879
    %5400 = vmatprep.subr.bf16.mxu0 %v1888
    %5401 = vmatpush1.bf16.msra.mxu0 %v1887
    %5402 = vmatprep.subr.bf16.mxu0 %v1896
    %5403 = vmatpush1.bf16.msra.mxu0 %v1895
    %5404 = vmatprep.subr.bf16.mxu0 %v1904
    %5405 = vmatpush1.bf16.msra.mxu0 %v1903
    %5406 = vmatprep.subr.bf16.mxu0 %v1912
    %5407 = vmatpush1.bf16.msra.mxu0 %v1911
    %5408 = vmatprep.subr.bf16.mxu0 %v1920
    %5409 = vmatpush1.bf16.msra.mxu0 %v1919
    %5410 = vmatprep.subr.bf16.mxu0 %v1928
    %5411 = vmatpush1.bf16.msra.mxu0 %v1927
    %5412 = vmatprep.subr.bf16.mxu0 %v1936
    %5413 = vmatpush1.bf16.msra.mxu0 %v1935
    %5414 = vmatprep.subr.bf16.mxu0 %v1944
    %5415 = vmatpush1.bf16.msra.mxu0 %v1943
    %5416 = vmatprep.subr.bf16.mxu0 %v1952
    %5417 = vmatpush1.bf16.msra.mxu0 %v1951
    %5418 = vmatprep.subr.bf16.mxu0 %v1960
    %5419 = vmatpush1.bf16.msra.mxu0 %v1959
    %5420 = vmatprep.subr.bf16.mxu0 %v1968
    %5421 = vmatpush1.bf16.msra.mxu0 %v1967
    %5422 = vmatprep.mubr.bf16.mxu0 %v4960
    %5423 = vmatmul.mubr.bf16.gmra.mrb[0].mxu0 %v4959
    %v5424 = vpop.f32.mrb[0].mxu0
    %v5425 = vadd.f32 0.0, %v5424
    %v5426 = vpop.f32.mrb[0].mxu0
    %v5427 = vadd.f32 0.0, %v5426
    %v5428 = vpop.f32.mrb[0].mxu0
    %v5429 = vpop.f32.mrb[0].mxu0
    %5430 = vdwg.mxu0
    %5431 = vmatprep.subr.bf16.mxu0 %v1850
    %5432 = vmatpush1.bf16.msra.mxu0 %v1849
    %5433 = vmatprep.subr.bf16.mxu0 %v1858
    %5434 = vmatpush1.bf16.msra.mxu0 %v1857
    %5435 = vmatprep.subr.bf16.mxu0 %v1866
    %5436 = vmatpush1.bf16.msra.mxu0 %v1865
    %5437 = vmatprep.subr.bf16.mxu0 %v1874
    %5438 = vmatpush1.bf16.msra.mxu0 %v1873
    %5439 = vmatprep.subr.bf16.mxu0 %v1882
    %5440 = vmatpush1.bf16.msra.mxu0 %v1881
    %5441 = vmatprep.subr.bf16.mxu0 %v1890
    %5442 = vmatpush1.bf16.msra.mxu0 %v1889
    %5443 = vmatprep.subr.bf16.mxu0 %v1898
    %5444 = vmatpush1.bf16.msra.mxu0 %v1897
    %5445 = vmatprep.subr.bf16.mxu0 %v1906
    %5446 = vmatpush1.bf16.msra.mxu0 %v1905
    %5447 = vmatprep.subr.bf16.mxu0 %v1914
    %5448 = vmatpush1.bf16.msra.mxu0 %v1913
    %5449 = vmatprep.subr.bf16.mxu0 %v1922
    %5450 = vmatpush1.bf16.msra.mxu0 %v1921
    %5451 = vmatprep.subr.bf16.mxu0 %v1930
    %5452 = vmatpush1.bf16.msra.mxu0 %v1929
    %5453 = vmatprep.subr.bf16.mxu0 %v1938
    %5454 = vmatpush1.bf16.msra.mxu0 %v1937
    %5455 = vmatprep.subr.bf16.mxu0 %v1946
    %5456 = vmatpush1.bf16.msra.mxu0 %v1945
    %5457 = vmatprep.subr.bf16.mxu0 %v1954
    %5458 = vmatpush1.bf16.msra.mxu0 %v1953
    %5459 = vmatprep.subr.bf16.mxu0 %v1962
    %5460 = vmatpush1.bf16.msra.mxu0 %v1961
    %5461 = vmatprep.subr.bf16.mxu0 %v1970
    %5462 = vmatpush1.bf16.msra.mxu0 %v1969
    %5463 = vmatprep.mubr.bf16.mxu0 %v4960
    %5464 = vmatmul.mubr.bf16.gmra.mrb[0].mxu0 %v4959
    %v5465 = vpop.f32.mrb[0].mxu0
    %v5466 = vadd.f32 0.0, %v5465
    %v5467 = vpop.f32.mrb[0].mxu0
    %v5468 = vadd.f32 0.0, %v5467
    %v5469 = vpop.f32.mrb[0].mxu0
    %v5470 = vpop.f32.mrb[0].mxu0
    %5471 = vdwg.mxu0
    %5472 = vmatprep.subr.bf16.mxu0 %v1852
    %5473 = vmatpush1.bf16.msra.mxu0 %v1851
    %5474 = vmatprep.subr.bf16.mxu0 %v1860
    %5475 = vmatpush1.bf16.msra.mxu0 %v1859
    %5476 = vmatprep.subr.bf16.mxu0 %v1868
    %5477 = vmatpush1.bf16.msra.mxu0 %v1867
    %5478 = vmatprep.subr.bf16.mxu0 %v1876
    %5479 = vmatpush1.bf16.msra.mxu0 %v1875
    %5480 = vmatprep.subr.bf16.mxu0 %v1884
    %5481 = vmatpush1.bf16.msra.mxu0 %v1883
    %5482 = vmatprep.subr.bf16.mxu0 %v1892
    %5483 = vmatpush1.bf16.msra.mxu0 %v1891
    %5484 = vmatprep.subr.bf16.mxu0 %v1900
    %5485 = vmatpush1.bf16.msra.mxu0 %v1899
    %5486 = vmatprep.subr.bf16.mxu0 %v1908
    %5487 = vmatpush1.bf16.msra.mxu0 %v1907
    %5488 = vmatprep.subr.bf16.mxu0 %v1916
    %5489 = vmatpush1.bf16.msra.mxu0 %v1915
    %5490 = vmatprep.subr.bf16.mxu0 %v1924
    %5491 = vmatpush1.bf16.msra.mxu0 %v1923
    %5492 = vmatprep.subr.bf16.mxu0 %v1932
    %5493 = vmatpush1.bf16.msra.mxu0 %v1931
    %5494 = vmatprep.subr.bf16.mxu0 %v1940
    %5495 = vmatpush1.bf16.msra.mxu0 %v1939
    %5496 = vmatprep.subr.bf16.mxu0 %v1948
    %5497 = vmatpush1.bf16.msra.mxu0 %v1947
    %5498 = vmatprep.subr.bf16.mxu0 %v1956
    %5499 = vmatpush1.bf16.msra.mxu0 %v1955
    %5500 = vmatprep.subr.bf16.mxu0 %v1964
    %5501 = vmatpush1.bf16.msra.mxu0 %v1963
    %5502 = vmatprep.subr.bf16.mxu0 %v1972
    %5503 = vmatpush1.bf16.msra.mxu0 %v1971
    %5504 = vmatprep.mubr.bf16.mxu0 %v4960
    %5505 = vmatmul.mubr.bf16.gmra.mrb[0].mxu0 %v4959
    %v5506 = vpop.f32.mrb[0].mxu0
    %v5507 = vadd.f32 0.0, %v5506
    %v5508 = vpop.f32.mrb[0].mxu0
    %v5509 = vadd.f32 0.0, %v5508
    %v5510 = vpop.f32.mrb[0].mxu0
    %v5511 = vpop.f32.mrb[0].mxu0
    %5512 = vdwg.mxu0
    %v5521 = vrot.slane %v5384, 4
    %v5522 = vrot.slane %v5386, 4
    %v5523 = vrot.slane %v5425, 4
    %v5524 = vrot.slane %v5427, 4
    %v5525 = vrot.slane %v5466, 4
    %v5526 = vrot.slane %v5468, 4
    %v5527 = vrot.slane %v5507, 4
    %v5528 = vrot.slane %v5509, 4
    %v5529 = vrot.slane %v5384, 5
    %v5530 = vrot.slane %v5386, 5
    %v5531 = vrot.slane %v5425, 5
    %v5532 = vrot.slane %v5427, 5
    %v5533 = vrot.slane %v5466, 5
    %v5534 = vrot.slane %v5468, 5
    %v5535 = vrot.slane %v5507, 5
    %v5536 = vrot.slane %v5509, 5
    %v5553 = vadd.f32 %v1703, %v5521
    %v5554 = vadd.f32 %v1705, %v5522
    %v5555 = vadd.f32 %v1746, %v5523
    %v5556 = vadd.f32 %v1748, %v5524
    %v5557 = vadd.f32 %v1789, %v5525
    %v5558 = vadd.f32 %v1791, %v5526
    %v5559 = vadd.f32 %v1832, %v5527
    %v5560 = vadd.f32 %v1834, %v5528
    %v5561 = vadd.f32 %v1707, %v5529
    %v5562 = vadd.f32 %v1709, %v5530
    %v5563 = vadd.f32 %v1750, %v5531
    %v5564 = vadd.f32 %v1752, %v5532
    %v5565 = vadd.f32 %v1793, %v5533
    %v5566 = vadd.f32 %v1795, %v5534
    %v5567 = vadd.f32 %v1836, %v5535
    %v5568 = vadd.f32 %v1838, %v5536
    %v5569 = vxor.u32 %v5553, 2147483648
    %v5570 = vxor.u32 %v5554, 2147483648
    %v5571 = vxor.u32 %v5561, 2147483648
    %v5572 = vxor.u32 %v5562, 2147483648
    %v5573 = vmul.f32 %v5569, 1.442695
    %v5574 = vpow.pop %v5573
    %v5575 = vmul.f32 %v5570, 1.442695
    %v5576 = vpow.pop %v5575
    %v5577 = vmul.f32 %v5571, 1.442695
    %v5578 = vpow.pop %v5577
    %v5579 = vmul.f32 %v5572, 1.442695
    %v5580 = vpow.pop %v5579
    %v5581 = vadd.f32 %v5574, 1.0
    %v5582 = vadd.f32 %v5576, 1.0
    %v5583 = vadd.f32 %v5578, 1.0
    %v5584 = vadd.f32 %v5580, 1.0
    %v5585 = vrcp.pop %v5581
    %v5586 = vmul.f32 1.0, %v5585
    %v5587 = vrcp.pop %v5582
    %v5588 = vmul.f32 1.0, %v5587
    %v5589 = vrcp.pop %v5583
    %v5590 = vmul.f32 1.0, %v5589
    %v5591 = vrcp.pop %v5584
    %v5592 = vmul.f32 1.0, %v5591
    %v5593 = vxor.u32 %v5555, 2147483648
    %v5594 = vxor.u32 %v5556, 2147483648
    %v5595 = vxor.u32 %v5563, 2147483648
    %v5596 = vxor.u32 %v5564, 2147483648
    %v5597 = vmul.f32 %v5593, 1.442695
    %v5598 = vpow.pop %v5597
    %v5599 = vmul.f32 %v5594, 1.442695
    %v5600 = vpow.pop %v5599
    %v5601 = vmul.f32 %v5595, 1.442695
    %v5602 = vpow.pop %v5601
    %v5603 = vmul.f32 %v5596, 1.442695
    %v5604 = vpow.pop %v5603
    %v5605 = vadd.f32 %v5598, 1.0
    %v5606 = vadd.f32 %v5600, 1.0
    %v5607 = vadd.f32 %v5602, 1.0
    %v5608 = vadd.f32 %v5604, 1.0
    %v5609 = vrcp.pop %v5605
    %v5610 = vmul.f32 1.0, %v5609
    %v5611 = vrcp.pop %v5606
    %v5612 = vmul.f32 1.0, %v5611
    %v5613 = vrcp.pop %v5607
    %v5614 = vmul.f32 1.0, %v5613
    %v5615 = vrcp.pop %v5608
    %v5616 = vmul.f32 1.0, %v5615
    %v5617 = vtanh.pop %v5557
    %v5618 = vtanh.pop %v5558
    %v5619 = vtanh.pop %v5565
    %v5620 = vtanh.pop %v5566
    %v5621 = vxor.u32 %v5559, 2147483648
    %v5622 = vxor.u32 %v5560, 2147483648
    %v5623 = vxor.u32 %v5567, 2147483648
    %v5624 = vxor.u32 %v5568, 2147483648
    %v5625 = vmul.f32 %v5621, 1.442695
    %v5626 = vpow.pop %v5625
    %v5627 = vmul.f32 %v5622, 1.442695
    %v5628 = vpow.pop %v5627
    %v5629 = vmul.f32 %v5623, 1.442695
    %v5630 = vpow.pop %v5629
    %v5631 = vmul.f32 %v5624, 1.442695
    %v5632 = vpow.pop %v5631
    %v5633 = vadd.f32 %v5626, 1.0
    %v5634 = vadd.f32 %v5628, 1.0
    %v5635 = vadd.f32 %v5630, 1.0
    %v5636 = vadd.f32 %v5632, 1.0
    %v5637 = vrcp.pop %v5633
    %v5638 = vmul.f32 1.0, %v5637
    %v5639 = vrcp.pop %v5634
    %v5640 = vmul.f32 1.0, %v5639
    %v5641 = vrcp.pop %v5635
    %v5642 = vmul.f32 1.0, %v5641
    %v5643 = vrcp.pop %v5636
    %v5644 = vmul.f32 1.0, %v5643
    %v5649 = vrot.slane %v4929, 7
    %v5650 = vrot.slane %v4930, 7
    %v5651 = vrot.slane %v4931, 7
    %v5652 = vrot.slane %v4932, 7
    %v5657 = vmul.f32 %v5610, %v5649
    %v5658 = vmul.f32 %v5612, %v5650
    %v5659 = vmul.f32 %v5614, %v5651
    %v5660 = vmul.f32 %v5616, %v5652
    %v5661 = vmul.f32 %v5586, %v5617
    %v5662 = vmul.f32 %v5588, %v5618
    %v5663 = vmul.f32 %v5590, %v5619
    %v5664 = vmul.f32 %v5592, %v5620
    %v5665 = vadd.f32 %v5657, %v5661
    %v5666 = vadd.f32 %v5658, %v5662
    %v5667 = vadd.f32 %v5659, %v5663
    %v5668 = vadd.f32 %v5660, %v5664
    %v5669 = vtanh.pop %v5665
    %v5670 = vtanh.pop %v5666
    %v5671 = vtanh.pop %v5667
    %v5672 = vtanh.pop %v5668
    %v5673 = vmul.f32 %v5638, %v5669
    %v5674 = vmul.f32 %v5640, %v5670
    %v5675 = vmul.f32 %v5642, %v5671
    %v5676 = vmul.f32 %v5644, %v5672
    %v5677 = vpack.c.bf16 %v5673, %v5673
    %v5678 = vpack.c.bf16 %v5674, %v5674
    %v5679 = vpack.c.bf16 %v5675, %v5675
    %v5680 = vpack.c.bf16 %v5676, %v5676
    %v5685 = vunpack.c.l.b16 %v5677
    %v5686 = vunpack.c.l.b16 %v5678
    %v5687 = vunpack.c.l.b16 %v5679
    %v5688 = vunpack.c.l.b16 %v5680
    %v5689 = vrot.slane %v5685, 4
    %v5690 = vrot.slane %v5687, 3
    %v5691 = vsel %vm894, %v5690, %v5689
    %v5692 = vrot.slane %v5686, 4
    %v5693 = vrot.slane %v5688, 3
    %v5694 = vsel %vm894, %v5693, %v5692
    %v5695 = vpack.c.b16 %v5691, %v5691
    %v5696 = vpack.c.b16 %v5694, %v5694
    %5699 = vmatprep.subr.bf16.mxu0 %v1975
    %5700 = vmatpush1.bf16.msra.mxu0 %v1974
    %5701 = vmatprep.subr.bf16.mxu0 %v1983
    %5702 = vmatpush1.bf16.msra.mxu0 %v1982
    %5703 = vmatprep.subr.bf16.mxu0 %v1991
    %5704 = vmatpush1.bf16.msra.mxu0 %v1990
    %5705 = vmatprep.subr.bf16.mxu0 %v1999
    %5706 = vmatpush1.bf16.msra.mxu0 %v1998
    %5707 = vmatprep.subr.bf16.mxu0 %v2007
    %5708 = vmatpush1.bf16.msra.mxu0 %v2006
    %5709 = vmatprep.subr.bf16.mxu0 %v2015
    %5710 = vmatpush1.bf16.msra.mxu0 %v2014
    %5711 = vmatprep.subr.bf16.mxu0 %v2023
    %5712 = vmatpush1.bf16.msra.mxu0 %v2022
    %5713 = vmatprep.subr.bf16.mxu0 %v2031
    %5714 = vmatpush1.bf16.msra.mxu0 %v2030
    %5715 = vmatprep.subr.bf16.mxu0 %v2039
    %5716 = vmatpush1.bf16.msra.mxu0 %v2038
    %5717 = vmatprep.subr.bf16.mxu0 %v2047
    %5718 = vmatpush1.bf16.msra.mxu0 %v2046
    %5719 = vmatprep.subr.bf16.mxu0 %v2055
    %5720 = vmatpush1.bf16.msra.mxu0 %v2054
    %5721 = vmatprep.subr.bf16.mxu0 %v2063
    %5722 = vmatpush1.bf16.msra.mxu0 %v2062
    %5723 = vmatprep.subr.bf16.mxu0 %v2071
    %5724 = vmatpush1.bf16.msra.mxu0 %v2070
    %5725 = vmatprep.subr.bf16.mxu0 %v2079
    %5726 = vmatpush1.bf16.msra.mxu0 %v2078
    %5727 = vmatprep.subr.bf16.mxu0 %v2087
    %5728 = vmatpush1.bf16.msra.mxu0 %v2086
    %5729 = vmatprep.subr.bf16.mxu0 %v2095
    %5730 = vmatpush1.bf16.msra.mxu0 %v2094
    %5731 = vmatprep.mubr.bf16.mxu0 %v5696
    %5732 = vmatmul.mubr.bf16.gmra.mrb[0].mxu0 %v5695
    %v5733 = vpop.f32.mrb[0].mxu0
    %v5734 = vadd.f32 0.0, %v5733
    %v5735 = vpop.f32.mrb[0].mxu0
    %v5736 = vadd.f32 0.0, %v5735
    %v5737 = vpop.f32.mrb[0].mxu0
    %v5738 = vpop.f32.mrb[0].mxu0
    %5739 = vdwg.mxu0
    %5740 = vmatprep.subr.bf16.mxu0 %v1977
    %5741 = vmatpush1.bf16.msra.mxu0 %v1976
    %5742 = vmatprep.subr.bf16.mxu0 %v1985
    %5743 = vmatpush1.bf16.msra.mxu0 %v1984
    %5744 = vmatprep.subr.bf16.mxu0 %v1993
    %5745 = vmatpush1.bf16.msra.mxu0 %v1992
    %5746 = vmatprep.subr.bf16.mxu0 %v2001
    %5747 = vmatpush1.bf16.msra.mxu0 %v2000
    %5748 = vmatprep.subr.bf16.mxu0 %v2009
    %5749 = vmatpush1.bf16.msra.mxu0 %v2008
    %5750 = vmatprep.subr.bf16.mxu0 %v2017
    %5751 = vmatpush1.bf16.msra.mxu0 %v2016
    %5752 = vmatprep.subr.bf16.mxu0 %v2025
    %5753 = vmatpush1.bf16.msra.mxu0 %v2024
    %5754 = vmatprep.subr.bf16.mxu0 %v2033
    %5755 = vmatpush1.bf16.msra.mxu0 %v2032
    %5756 = vmatprep.subr.bf16.mxu0 %v2041
    %5757 = vmatpush1.bf16.msra.mxu0 %v2040
    %5758 = vmatprep.subr.bf16.mxu0 %v2049
    %5759 = vmatpush1.bf16.msra.mxu0 %v2048
    %5760 = vmatprep.subr.bf16.mxu0 %v2057
    %5761 = vmatpush1.bf16.msra.mxu0 %v2056
    %5762 = vmatprep.subr.bf16.mxu0 %v2065
    %5763 = vmatpush1.bf16.msra.mxu0 %v2064
    %5764 = vmatprep.subr.bf16.mxu0 %v2073
    %5765 = vmatpush1.bf16.msra.mxu0 %v2072
    %5766 = vmatprep.subr.bf16.mxu0 %v2081
    %5767 = vmatpush1.bf16.msra.mxu0 %v2080
    %5768 = vmatprep.subr.bf16.mxu0 %v2089
    %5769 = vmatpush1.bf16.msra.mxu0 %v2088
    %5770 = vmatprep.subr.bf16.mxu0 %v2097
    %5771 = vmatpush1.bf16.msra.mxu0 %v2096
    %5772 = vmatprep.mubr.bf16.mxu0 %v5696
    %5773 = vmatmul.mubr.bf16.gmra.mrb[0].mxu0 %v5695
    %v5774 = vpop.f32.mrb[0].mxu0
    %v5775 = vadd.f32 0.0, %v5774
    %v5776 = vpop.f32.mrb[0].mxu0
    %v5777 = vadd.f32 0.0, %v5776
    %v5778 = vpop.f32.mrb[0].mxu0
    %v5779 = vpop.f32.mrb[0].mxu0
    %5780 = vdwg.mxu0
    %5781 = vmatprep.subr.bf16.mxu0 %v1979
    %5782 = vmatpush1.bf16.msra.mxu0 %v1978
    %5783 = vmatprep.subr.bf16.mxu0 %v1987
    %5784 = vmatpush1.bf16.msra.mxu0 %v1986
    %5785 = vmatprep.subr.bf16.mxu0 %v1995
    %5786 = vmatpush1.bf16.msra.mxu0 %v1994
    %5787 = vmatprep.subr.bf16.mxu0 %v2003
    %5788 = vmatpush1.bf16.msra.mxu0 %v2002
    %5789 = vmatprep.subr.bf16.mxu0 %v2011
    %5790 = vmatpush1.bf16.msra.mxu0 %v2010
    %5791 = vmatprep.subr.bf16.mxu0 %v2019
    %5792 = vmatpush1.bf16.msra.mxu0 %v2018
    %5793 = vmatprep.subr.bf16.mxu0 %v2027
    %5794 = vmatpush1.bf16.msra.mxu0 %v2026
    %5795 = vmatprep.subr.bf16.mxu0 %v2035
    %5796 = vmatpush1.bf16.msra.mxu0 %v2034
    %5797 = vmatprep.subr.bf16.mxu0 %v2043
    %5798 = vmatpush1.bf16.msra.mxu0 %v2042
    %5799 = vmatprep.subr.bf16.mxu0 %v2051
    %5800 = vmatpush1.bf16.msra.mxu0 %v2050
    %5801 = vmatprep.subr.bf16.mxu0 %v2059
    %5802 = vmatpush1.bf16.msra.mxu0 %v2058
    %5803 = vmatprep.subr.bf16.mxu0 %v2067
    %5804 = vmatpush1.bf16.msra.mxu0 %v2066
    %5805 = vmatprep.subr.bf16.mxu0 %v2075
    %5806 = vmatpush1.bf16.msra.mxu0 %v2074
    %5807 = vmatprep.subr.bf16.mxu0 %v2083
    %5808 = vmatpush1.bf16.msra.mxu0 %v2082
    %5809 = vmatprep.subr.bf16.mxu0 %v2091
    %5810 = vmatpush1.bf16.msra.mxu0 %v2090
    %5811 = vmatprep.subr.bf16.mxu0 %v2099
    %5812 = vmatpush1.bf16.msra.mxu0 %v2098
    %5813 = vmatprep.mubr.bf16.mxu0 %v5696
    %5814 = vmatmul.mubr.bf16.gmra.mrb[0].mxu0 %v5695
    %v5815 = vpop.f32.mrb[0].mxu0
    %v5816 = vadd.f32 0.0, %v5815
    %v5817 = vpop.f32.mrb[0].mxu0
    %v5818 = vadd.f32 0.0, %v5817
    %v5819 = vpop.f32.mrb[0].mxu0
    %v5820 = vpop.f32.mrb[0].mxu0
    %5821 = vdwg.mxu0
    %5822 = vmatprep.subr.bf16.mxu0 %v1981
    %5823 = vmatpush1.bf16.msra.mxu0 %v1980
    %5824 = vmatprep.subr.bf16.mxu0 %v1989
    %5825 = vmatpush1.bf16.msra.mxu0 %v1988
    %5826 = vmatprep.subr.bf16.mxu0 %v1997
    %5827 = vmatpush1.bf16.msra.mxu0 %v1996
    %5828 = vmatprep.subr.bf16.mxu0 %v2005
    %5829 = vmatpush1.bf16.msra.mxu0 %v2004
    %5830 = vmatprep.subr.bf16.mxu0 %v2013
    %5831 = vmatpush1.bf16.msra.mxu0 %v2012
    %5832 = vmatprep.subr.bf16.mxu0 %v2021
    %5833 = vmatpush1.bf16.msra.mxu0 %v2020
    %5834 = vmatprep.subr.bf16.mxu0 %v2029
    %5835 = vmatpush1.bf16.msra.mxu0 %v2028
    %5836 = vmatprep.subr.bf16.mxu0 %v2037
    %5837 = vmatpush1.bf16.msra.mxu0 %v2036
    %5838 = vmatprep.subr.bf16.mxu0 %v2045
    %5839 = vmatpush1.bf16.msra.mxu0 %v2044
    %5840 = vmatprep.subr.bf16.mxu0 %v2053
    %5841 = vmatpush1.bf16.msra.mxu0 %v2052
    %5842 = vmatprep.subr.bf16.mxu0 %v2061
    %5843 = vmatpush1.bf16.msra.mxu0 %v2060
    %5844 = vmatprep.subr.bf16.mxu0 %v2069
    %5845 = vmatpush1.bf16.msra.mxu0 %v2068
    %5846 = vmatprep.subr.bf16.mxu0 %v2077
    %5847 = vmatpush1.bf16.msra.mxu0 %v2076
    %5848 = vmatprep.subr.bf16.mxu0 %v2085
    %5849 = vmatpush1.bf16.msra.mxu0 %v2084
    %5850 = vmatprep.subr.bf16.mxu0 %v2093
    %5851 = vmatpush1.bf16.msra.mxu0 %v2092
    %5852 = vmatprep.subr.bf16.mxu0 %v2101
    %5853 = vmatpush1.bf16.msra.mxu0 %v2100
    %5854 = vmatprep.mubr.bf16.mxu0 %v5696
    %5855 = vmatmul.mubr.bf16.gmra.mrb[0].mxu0 %v5695
    %v5856 = vpop.f32.mrb[0].mxu0
    %v5857 = vadd.f32 0.0, %v5856
    %v5858 = vpop.f32.mrb[0].mxu0
    %v5859 = vadd.f32 0.0, %v5858
    %v5860 = vpop.f32.mrb[0].mxu0
    %v5861 = vpop.f32.mrb[0].mxu0
    %5862 = vdwg.mxu0
    %v5863 = vadd.f32 %v5220, %v5734
    %v5864 = vadd.f32 %v5222, %v5736
    %v5865 = vadd.f32 %v5261, %v5775
    %v5866 = vadd.f32 %v5263, %v5777
    %v5867 = vadd.f32 %v5302, %v5816
    %v5868 = vadd.f32 %v5304, %v5818
    %v5869 = vadd.f32 %v5343, %v5857
    %v5870 = vadd.f32 %v5345, %v5859
    %v5871 = vxor.u32 %v5863, 2147483648
    %v5872 = vxor.u32 %v5864, 2147483648
    %v5873 = vmul.f32 %v5871, 1.442695
    %v5874 = vpow.pop %v5873
    %v5875 = vmul.f32 %v5872, 1.442695
    %v5876 = vpow.pop %v5875
    %v5877 = vadd.f32 %v5874, 1.0
    %v5878 = vadd.f32 %v5876, 1.0
    %v5879 = vrcp.pop %v5877
    %v5880 = vmul.f32 1.0, %v5879
    %v5881 = vrcp.pop %v5878
    %v5882 = vmul.f32 1.0, %v5881
    %v5883 = vxor.u32 %v5865, 2147483648
    %v5884 = vxor.u32 %v5866, 2147483648
    %v5885 = vmul.f32 %v5883, 1.442695
    %v5886 = vpow.pop %v5885
    %v5887 = vmul.f32 %v5884, 1.442695
    %v5888 = vpow.pop %v5887
    %v5889 = vadd.f32 %v5886, 1.0
    %v5890 = vadd.f32 %v5888, 1.0
    %v5891 = vrcp.pop %v5889
    %v5892 = vmul.f32 1.0, %v5891
    %v5893 = vrcp.pop %v5890
    %v5894 = vmul.f32 1.0, %v5893
    %v5895 = vtanh.pop %v5867
    %v5896 = vtanh.pop %v5868
    %v5897 = vxor.u32 %v5869, 2147483648
    %v5898 = vxor.u32 %v5870, 2147483648
    %v5899 = vmul.f32 %v5897, 1.442695
    %v5900 = vpow.pop %v5899
    %v5901 = vmul.f32 %v5898, 1.442695
    %v5902 = vpow.pop %v5901
    %v5903 = vadd.f32 %v5900, 1.0
    %v5904 = vadd.f32 %v5902, 1.0
    %v5905 = vrcp.pop %v5903
    %v5906 = vmul.f32 1.0, %v5905
    %v5907 = vrcp.pop %v5904
    %v5908 = vmul.f32 1.0, %v5907
    %v5909 = vmul.f32 %v5892, %v5177
    %v5910 = vmul.f32 %v5894, %v5178
    %v5911 = vmul.f32 %v5880, %v5895
    %v5912 = vmul.f32 %v5882, %v5896
    %v5913 = vadd.f32 %v5909, %v5911
    %v5914 = vadd.f32 %v5910, %v5912
    %v5915 = vtanh.pop %v5913
    %v5916 = vtanh.pop %v5914
    %v5917 = vmul.f32 %v5906, %v5915
    %v5918 = vmul.f32 %v5908, %v5916
    %v5919 = vpack.c.bf16 %v5917, %v5917
    %v5920 = vpack.c.bf16 %v5918, %v5918
    %5921 = vmatprep.subr.bf16.mxu0 %v2104
    %5922 = vmatpush1.bf16.msra.mxu0 %v2103
    %5923 = vmatprep.subr.bf16.mxu0 %v2112
    %5924 = vmatpush1.bf16.msra.mxu0 %v2111
    %5925 = vmatprep.subr.bf16.mxu0 %v2120
    %5926 = vmatpush1.bf16.msra.mxu0 %v2119
    %5927 = vmatprep.subr.bf16.mxu0 %v2128
    %5928 = vmatpush1.bf16.msra.mxu0 %v2127
    %5929 = vmatprep.subr.bf16.mxu0 %v2136
    %5930 = vmatpush1.bf16.msra.mxu0 %v2135
    %5931 = vmatprep.subr.bf16.mxu0 %v2144
    %5932 = vmatpush1.bf16.msra.mxu0 %v2143
    %5933 = vmatprep.subr.bf16.mxu0 %v2152
    %5934 = vmatpush1.bf16.msra.mxu0 %v2151
    %5935 = vmatprep.subr.bf16.mxu0 %v2160
    %5936 = vmatpush1.bf16.msra.mxu0 %v2159
    %5937 = vmatprep.subr.bf16.mxu0 %v2168
    %5938 = vmatpush1.bf16.msra.mxu0 %v2167
    %5939 = vmatprep.subr.bf16.mxu0 %v2176
    %5940 = vmatpush1.bf16.msra.mxu0 %v2175
    %5941 = vmatprep.subr.bf16.mxu0 %v2184
    %5942 = vmatpush1.bf16.msra.mxu0 %v2183
    %5943 = vmatprep.subr.bf16.mxu0 %v2192
    %5944 = vmatpush1.bf16.msra.mxu0 %v2191
    %5945 = vmatprep.subr.bf16.mxu0 %v2200
    %5946 = vmatpush1.bf16.msra.mxu0 %v2199
    %5947 = vmatprep.subr.bf16.mxu0 %v2208
    %5948 = vmatpush1.bf16.msra.mxu0 %v2207
    %5949 = vmatprep.subr.bf16.mxu0 %v2216
    %5950 = vmatpush1.bf16.msra.mxu0 %v2215
    %5951 = vmatprep.subr.bf16.mxu0 %v2224
    %5952 = vmatpush1.bf16.msra.mxu0 %v2223
    %5953 = vmatprep.mubr.bf16.mxu0 %v5920
    %5954 = vmatmul.mubr.bf16.gmra.mrb[0].mxu0 %v5919
    %v5955 = vpop.f32.mrb[0].mxu0
    %v5956 = vadd.f32 %v2236, %v5955
    %v5957 = vpop.f32.mrb[0].mxu0
    %v5958 = vadd.f32 %v2240, %v5957
    %v5959 = vpop.f32.mrb[0].mxu0
    %v5960 = vpop.f32.mrb[0].mxu0
    %5961 = vdwg.mxu0
    %5962 = vmatprep.subr.bf16.mxu0 %v2106
    %5963 = vmatpush1.bf16.msra.mxu0 %v2105
    %5964 = vmatprep.subr.bf16.mxu0 %v2114
    %5965 = vmatpush1.bf16.msra.mxu0 %v2113
    %5966 = vmatprep.subr.bf16.mxu0 %v2122
    %5967 = vmatpush1.bf16.msra.mxu0 %v2121
    %5968 = vmatprep.subr.bf16.mxu0 %v2130
    %5969 = vmatpush1.bf16.msra.mxu0 %v2129
    %5970 = vmatprep.subr.bf16.mxu0 %v2138
    %5971 = vmatpush1.bf16.msra.mxu0 %v2137
    %5972 = vmatprep.subr.bf16.mxu0 %v2146
    %5973 = vmatpush1.bf16.msra.mxu0 %v2145
    %5974 = vmatprep.subr.bf16.mxu0 %v2154
    %5975 = vmatpush1.bf16.msra.mxu0 %v2153
    %5976 = vmatprep.subr.bf16.mxu0 %v2162
    %5977 = vmatpush1.bf16.msra.mxu0 %v2161
    %5978 = vmatprep.subr.bf16.mxu0 %v2170
    %5979 = vmatpush1.bf16.msra.mxu0 %v2169
    %5980 = vmatprep.subr.bf16.mxu0 %v2178
    %5981 = vmatpush1.bf16.msra.mxu0 %v2177
    %5982 = vmatprep.subr.bf16.mxu0 %v2186
    %5983 = vmatpush1.bf16.msra.mxu0 %v2185
    %5984 = vmatprep.subr.bf16.mxu0 %v2194
    %5985 = vmatpush1.bf16.msra.mxu0 %v2193
    %5986 = vmatprep.subr.bf16.mxu0 %v2202
    %5987 = vmatpush1.bf16.msra.mxu0 %v2201
    %5988 = vmatprep.subr.bf16.mxu0 %v2210
    %5989 = vmatpush1.bf16.msra.mxu0 %v2209
    %5990 = vmatprep.subr.bf16.mxu0 %v2218
    %5991 = vmatpush1.bf16.msra.mxu0 %v2217
    %5992 = vmatprep.subr.bf16.mxu0 %v2226
    %5993 = vmatpush1.bf16.msra.mxu0 %v2225
    %5994 = vmatprep.mubr.bf16.mxu0 %v5920
    %5995 = vmatmul.mubr.bf16.gmra.mrb[0].mxu0 %v5919
    %v5996 = vpop.f32.mrb[0].mxu0
    %v5997 = vadd.f32 %v2244, %v5996
    %v5998 = vpop.f32.mrb[0].mxu0
    %v5999 = vadd.f32 %v2248, %v5998
    %v6000 = vpop.f32.mrb[0].mxu0
    %v6001 = vpop.f32.mrb[0].mxu0
    %6002 = vdwg.mxu0
    %6003 = vmatprep.subr.bf16.mxu0 %v2108
    %6004 = vmatpush1.bf16.msra.mxu0 %v2107
    %6005 = vmatprep.subr.bf16.mxu0 %v2116
    %6006 = vmatpush1.bf16.msra.mxu0 %v2115
    %6007 = vmatprep.subr.bf16.mxu0 %v2124
    %6008 = vmatpush1.bf16.msra.mxu0 %v2123
    %6009 = vmatprep.subr.bf16.mxu0 %v2132
    %6010 = vmatpush1.bf16.msra.mxu0 %v2131
    %6011 = vmatprep.subr.bf16.mxu0 %v2140
    %6012 = vmatpush1.bf16.msra.mxu0 %v2139
    %6013 = vmatprep.subr.bf16.mxu0 %v2148
    %6014 = vmatpush1.bf16.msra.mxu0 %v2147
    %6015 = vmatprep.subr.bf16.mxu0 %v2156
    %6016 = vmatpush1.bf16.msra.mxu0 %v2155
    %6017 = vmatprep.subr.bf16.mxu0 %v2164
    %6018 = vmatpush1.bf16.msra.mxu0 %v2163
    %6019 = vmatprep.subr.bf16.mxu0 %v2172
    %6020 = vmatpush1.bf16.msra.mxu0 %v2171
    %6021 = vmatprep.subr.bf16.mxu0 %v2180
    %6022 = vmatpush1.bf16.msra.mxu0 %v2179
    %6023 = vmatprep.subr.bf16.mxu0 %v2188
    %6024 = vmatpush1.bf16.msra.mxu0 %v2187
    %6025 = vmatprep.subr.bf16.mxu0 %v2196
    %6026 = vmatpush1.bf16.msra.mxu0 %v2195
    %6027 = vmatprep.subr.bf16.mxu0 %v2204
    %6028 = vmatpush1.bf16.msra.mxu0 %v2203
    %6029 = vmatprep.subr.bf16.mxu0 %v2212
    %6030 = vmatpush1.bf16.msra.mxu0 %v2211
    %6031 = vmatprep.subr.bf16.mxu0 %v2220
    %6032 = vmatpush1.bf16.msra.mxu0 %v2219
    %6033 = vmatprep.subr.bf16.mxu0 %v2228
    %6034 = vmatpush1.bf16.msra.mxu0 %v2227
    %6035 = vmatprep.mubr.bf16.mxu0 %v5920
    %6036 = vmatmul.mubr.bf16.gmra.mrb[0].mxu0 %v5919
    %v6037 = vpop.f32.mrb[0].mxu0
    %v6038 = vadd.f32 %v2252, %v6037
    %v6039 = vpop.f32.mrb[0].mxu0
    %v6040 = vadd.f32 %v2256, %v6039
    %v6041 = vpop.f32.mrb[0].mxu0
    %v6042 = vpop.f32.mrb[0].mxu0
    %6043 = vdwg.mxu0
    %6044 = vmatprep.subr.bf16.mxu0 %v2110
    %6045 = vmatpush1.bf16.msra.mxu0 %v2109
    %6046 = vmatprep.subr.bf16.mxu0 %v2118
    %6047 = vmatpush1.bf16.msra.mxu0 %v2117
    %6048 = vmatprep.subr.bf16.mxu0 %v2126
    %6049 = vmatpush1.bf16.msra.mxu0 %v2125
    %6050 = vmatprep.subr.bf16.mxu0 %v2134
    %6051 = vmatpush1.bf16.msra.mxu0 %v2133
    %6052 = vmatprep.subr.bf16.mxu0 %v2142
    %6053 = vmatpush1.bf16.msra.mxu0 %v2141
    %6054 = vmatprep.subr.bf16.mxu0 %v2150
    %6055 = vmatpush1.bf16.msra.mxu0 %v2149
    %6056 = vmatprep.subr.bf16.mxu0 %v2158
    %6057 = vmatpush1.bf16.msra.mxu0 %v2157
    %6058 = vmatprep.subr.bf16.mxu0 %v2166
    %6059 = vmatpush1.bf16.msra.mxu0 %v2165
    %6060 = vmatprep.subr.bf16.mxu0 %v2174
    %6061 = vmatpush1.bf16.msra.mxu0 %v2173
    %6062 = vmatprep.subr.bf16.mxu0 %v2182
    %6063 = vmatpush1.bf16.msra.mxu0 %v2181
    %6064 = vmatprep.subr.bf16.mxu0 %v2190
    %6065 = vmatpush1.bf16.msra.mxu0 %v2189
    %6066 = vmatprep.subr.bf16.mxu0 %v2198
    %6067 = vmatpush1.bf16.msra.mxu0 %v2197
    %6068 = vmatprep.subr.bf16.mxu0 %v2206
    %6069 = vmatpush1.bf16.msra.mxu0 %v2205
    %6070 = vmatprep.subr.bf16.mxu0 %v2214
    %6071 = vmatpush1.bf16.msra.mxu0 %v2213
    %6072 = vmatprep.subr.bf16.mxu0 %v2222
    %6073 = vmatpush1.bf16.msra.mxu0 %v2221
    %6074 = vmatprep.subr.bf16.mxu0 %v2230
    %6075 = vmatpush1.bf16.msra.mxu0 %v2229
    %6076 = vmatprep.mubr.bf16.mxu0 %v5920
    %6077 = vmatmul.mubr.bf16.gmra.mrb[0].mxu0 %v5919
    %v6078 = vpop.f32.mrb[0].mxu0
    %v6079 = vadd.f32 %v2260, %v6078
    %v6080 = vpop.f32.mrb[0].mxu0
    %v6081 = vadd.f32 %v2264, %v6080
    %v6082 = vpop.f32.mrb[0].mxu0
    %v6083 = vpop.f32.mrb[0].mxu0
    %6084 = vdwg.mxu0
    %6085 = vmatprep.subr.bf16.mxu0 %v1846
    %6086 = vmatpush1.bf16.msra.mxu0 %v1845
    %6087 = vmatprep.subr.bf16.mxu0 %v1854
    %6088 = vmatpush1.bf16.msra.mxu0 %v1853
    %6089 = vmatprep.subr.bf16.mxu0 %v1862
    %6090 = vmatpush1.bf16.msra.mxu0 %v1861
    %6091 = vmatprep.subr.bf16.mxu0 %v1870
    %6092 = vmatpush1.bf16.msra.mxu0 %v1869
    %6093 = vmatprep.subr.bf16.mxu0 %v1878
    %6094 = vmatpush1.bf16.msra.mxu0 %v1877
    %6095 = vmatprep.subr.bf16.mxu0 %v1886
    %6096 = vmatpush1.bf16.msra.mxu0 %v1885
    %6097 = vmatprep.subr.bf16.mxu0 %v1894
    %6098 = vmatpush1.bf16.msra.mxu0 %v1893
    %6099 = vmatprep.subr.bf16.mxu0 %v1902
    %6100 = vmatpush1.bf16.msra.mxu0 %v1901
    %6101 = vmatprep.subr.bf16.mxu0 %v1910
    %6102 = vmatpush1.bf16.msra.mxu0 %v1909
    %6103 = vmatprep.subr.bf16.mxu0 %v1918
    %6104 = vmatpush1.bf16.msra.mxu0 %v1917
    %6105 = vmatprep.subr.bf16.mxu0 %v1926
    %6106 = vmatpush1.bf16.msra.mxu0 %v1925
    %6107 = vmatprep.subr.bf16.mxu0 %v1934
    %6108 = vmatpush1.bf16.msra.mxu0 %v1933
    %6109 = vmatprep.subr.bf16.mxu0 %v1942
    %6110 = vmatpush1.bf16.msra.mxu0 %v1941
    %6111 = vmatprep.subr.bf16.mxu0 %v1950
    %6112 = vmatpush1.bf16.msra.mxu0 %v1949
    %6113 = vmatprep.subr.bf16.mxu0 %v1958
    %6114 = vmatpush1.bf16.msra.mxu0 %v1957
    %6115 = vmatprep.subr.bf16.mxu0 %v1966
    %6116 = vmatpush1.bf16.msra.mxu0 %v1965
    %6117 = vmatprep.mubr.bf16.mxu0 %v5696
    %6118 = vmatmul.mubr.bf16.gmra.mrb[0].mxu0 %v5695
    %v6119 = vpop.f32.mrb[0].mxu0
    %v6120 = vadd.f32 0.0, %v6119
    %v6121 = vpop.f32.mrb[0].mxu0
    %v6122 = vadd.f32 0.0, %v6121
    %v6123 = vpop.f32.mrb[0].mxu0
    %v6124 = vpop.f32.mrb[0].mxu0
    %6125 = vdwg.mxu0
    %6126 = vmatprep.subr.bf16.mxu0 %v1848
    %6127 = vmatpush1.bf16.msra.mxu0 %v1847
    %6128 = vmatprep.subr.bf16.mxu0 %v1856
    %6129 = vmatpush1.bf16.msra.mxu0 %v1855
    %6130 = vmatprep.subr.bf16.mxu0 %v1864
    %6131 = vmatpush1.bf16.msra.mxu0 %v1863
    %6132 = vmatprep.subr.bf16.mxu0 %v1872
    %6133 = vmatpush1.bf16.msra.mxu0 %v1871
    %6134 = vmatprep.subr.bf16.mxu0 %v1880
    %6135 = vmatpush1.bf16.msra.mxu0 %v1879
    %6136 = vmatprep.subr.bf16.mxu0 %v1888
    %6137 = vmatpush1.bf16.msra.mxu0 %v1887
    %6138 = vmatprep.subr.bf16.mxu0 %v1896
    %6139 = vmatpush1.bf16.msra.mxu0 %v1895
    %6140 = vmatprep.subr.bf16.mxu0 %v1904
    %6141 = vmatpush1.bf16.msra.mxu0 %v1903
    %6142 = vmatprep.subr.bf16.mxu0 %v1912
    %6143 = vmatpush1.bf16.msra.mxu0 %v1911
    %6144 = vmatprep.subr.bf16.mxu0 %v1920
    %6145 = vmatpush1.bf16.msra.mxu0 %v1919
    %6146 = vmatprep.subr.bf16.mxu0 %v1928
    %6147 = vmatpush1.bf16.msra.mxu0 %v1927
    %6148 = vmatprep.subr.bf16.mxu0 %v1936
    %6149 = vmatpush1.bf16.msra.mxu0 %v1935
    %6150 = vmatprep.subr.bf16.mxu0 %v1944
    %6151 = vmatpush1.bf16.msra.mxu0 %v1943
    %6152 = vmatprep.subr.bf16.mxu0 %v1952
    %6153 = vmatpush1.bf16.msra.mxu0 %v1951
    %6154 = vmatprep.subr.bf16.mxu0 %v1960
    %6155 = vmatpush1.bf16.msra.mxu0 %v1959
    %6156 = vmatprep.subr.bf16.mxu0 %v1968
    %6157 = vmatpush1.bf16.msra.mxu0 %v1967
    %6158 = vmatprep.mubr.bf16.mxu0 %v5696
    %6159 = vmatmul.mubr.bf16.gmra.mrb[0].mxu0 %v5695
    %v6160 = vpop.f32.mrb[0].mxu0
    %v6161 = vadd.f32 0.0, %v6160
    %v6162 = vpop.f32.mrb[0].mxu0
    %v6163 = vadd.f32 0.0, %v6162
    %v6164 = vpop.f32.mrb[0].mxu0
    %v6165 = vpop.f32.mrb[0].mxu0
    %6166 = vdwg.mxu0
    %6167 = vmatprep.subr.bf16.mxu0 %v1850
    %6168 = vmatpush1.bf16.msra.mxu0 %v1849
    %6169 = vmatprep.subr.bf16.mxu0 %v1858
    %6170 = vmatpush1.bf16.msra.mxu0 %v1857
    %6171 = vmatprep.subr.bf16.mxu0 %v1866
    %6172 = vmatpush1.bf16.msra.mxu0 %v1865
    %6173 = vmatprep.subr.bf16.mxu0 %v1874
    %6174 = vmatpush1.bf16.msra.mxu0 %v1873
    %6175 = vmatprep.subr.bf16.mxu0 %v1882
    %6176 = vmatpush1.bf16.msra.mxu0 %v1881
    %6177 = vmatprep.subr.bf16.mxu0 %v1890
    %6178 = vmatpush1.bf16.msra.mxu0 %v1889
    %6179 = vmatprep.subr.bf16.mxu0 %v1898
    %6180 = vmatpush1.bf16.msra.mxu0 %v1897
    %6181 = vmatprep.subr.bf16.mxu0 %v1906
    %6182 = vmatpush1.bf16.msra.mxu0 %v1905
    %6183 = vmatprep.subr.bf16.mxu0 %v1914
    %6184 = vmatpush1.bf16.msra.mxu0 %v1913
    %6185 = vmatprep.subr.bf16.mxu0 %v1922
    %6186 = vmatpush1.bf16.msra.mxu0 %v1921
    %6187 = vmatprep.subr.bf16.mxu0 %v1930
    %6188 = vmatpush1.bf16.msra.mxu0 %v1929
    %6189 = vmatprep.subr.bf16.mxu0 %v1938
    %6190 = vmatpush1.bf16.msra.mxu0 %v1937
    %6191 = vmatprep.subr.bf16.mxu0 %v1946
    %6192 = vmatpush1.bf16.msra.mxu0 %v1945
    %6193 = vmatprep.subr.bf16.mxu0 %v1954
    %6194 = vmatpush1.bf16.msra.mxu0 %v1953
    %6195 = vmatprep.subr.bf16.mxu0 %v1962
    %6196 = vmatpush1.bf16.msra.mxu0 %v1961
    %6197 = vmatprep.subr.bf16.mxu0 %v1970
    %6198 = vmatpush1.bf16.msra.mxu0 %v1969
    %6199 = vmatprep.mubr.bf16.mxu0 %v5696
    %6200 = vmatmul.mubr.bf16.gmra.mrb[0].mxu0 %v5695
    %v6201 = vpop.f32.mrb[0].mxu0
    %v6202 = vadd.f32 0.0, %v6201
    %v6203 = vpop.f32.mrb[0].mxu0
    %v6204 = vadd.f32 0.0, %v6203
    %v6205 = vpop.f32.mrb[0].mxu0
    %v6206 = vpop.f32.mrb[0].mxu0
    %6207 = vdwg.mxu0
    %6208 = vmatprep.subr.bf16.mxu0 %v1852
    %6209 = vmatpush1.bf16.msra.mxu0 %v1851
    %6210 = vmatprep.subr.bf16.mxu0 %v1860
    %6211 = vmatpush1.bf16.msra.mxu0 %v1859
    %6212 = vmatprep.subr.bf16.mxu0 %v1868
    %6213 = vmatpush1.bf16.msra.mxu0 %v1867
    %6214 = vmatprep.subr.bf16.mxu0 %v1876
    %6215 = vmatpush1.bf16.msra.mxu0 %v1875
    %6216 = vmatprep.subr.bf16.mxu0 %v1884
    %6217 = vmatpush1.bf16.msra.mxu0 %v1883
    %6218 = vmatprep.subr.bf16.mxu0 %v1892
    %6219 = vmatpush1.bf16.msra.mxu0 %v1891
    %6220 = vmatprep.subr.bf16.mxu0 %v1900
    %6221 = vmatpush1.bf16.msra.mxu0 %v1899
    %6222 = vmatprep.subr.bf16.mxu0 %v1908
    %6223 = vmatpush1.bf16.msra.mxu0 %v1907
    %6224 = vmatprep.subr.bf16.mxu0 %v1916
    %6225 = vmatpush1.bf16.msra.mxu0 %v1915
    %6226 = vmatprep.subr.bf16.mxu0 %v1924
    %6227 = vmatpush1.bf16.msra.mxu0 %v1923
    %6228 = vmatprep.subr.bf16.mxu0 %v1932
    %6229 = vmatpush1.bf16.msra.mxu0 %v1931
    %6230 = vmatprep.subr.bf16.mxu0 %v1940
    %6231 = vmatpush1.bf16.msra.mxu0 %v1939
    %6232 = vmatprep.subr.bf16.mxu0 %v1948
    %6233 = vmatpush1.bf16.msra.mxu0 %v1947
    %6234 = vmatprep.subr.bf16.mxu0 %v1956
    %6235 = vmatpush1.bf16.msra.mxu0 %v1955
    %6236 = vmatprep.subr.bf16.mxu0 %v1964
    %6237 = vmatpush1.bf16.msra.mxu0 %v1963
    %6238 = vmatprep.subr.bf16.mxu0 %v1972
    %6239 = vmatpush1.bf16.msra.mxu0 %v1971
    %6240 = vmatprep.mubr.bf16.mxu0 %v5696
    %6241 = vmatmul.mubr.bf16.gmra.mrb[0].mxu0 %v5695
    %v6242 = vpop.f32.mrb[0].mxu0
    %v6243 = vadd.f32 0.0, %v6242
    %v6244 = vpop.f32.mrb[0].mxu0
    %v6245 = vadd.f32 0.0, %v6244
    %v6246 = vpop.f32.mrb[0].mxu0
    %v6247 = vpop.f32.mrb[0].mxu0
    %6248 = vdwg.mxu0
    %v6257 = vrot.slane %v6120, 3
    %v6258 = vrot.slane %v6122, 3
    %v6259 = vrot.slane %v6161, 3
    %v6260 = vrot.slane %v6163, 3
    %v6261 = vrot.slane %v6202, 3
    %v6262 = vrot.slane %v6204, 3
    %v6263 = vrot.slane %v6243, 3
    %v6264 = vrot.slane %v6245, 3
    %v6265 = vrot.slane %v6120, 4
    %v6266 = vrot.slane %v6122, 4
    %v6267 = vrot.slane %v6161, 4
    %v6268 = vrot.slane %v6163, 4
    %v6269 = vrot.slane %v6202, 4
    %v6270 = vrot.slane %v6204, 4
    %v6271 = vrot.slane %v6243, 4
    %v6272 = vrot.slane %v6245, 4
    %v6289 = vadd.f32 %v1703, %v6257
    %v6290 = vadd.f32 %v1705, %v6258
    %v6291 = vadd.f32 %v1746, %v6259
    %v6292 = vadd.f32 %v1748, %v6260
    %v6293 = vadd.f32 %v1789, %v6261
    %v6294 = vadd.f32 %v1791, %v6262
    %v6295 = vadd.f32 %v1832, %v6263
    %v6296 = vadd.f32 %v1834, %v6264
    %v6297 = vadd.f32 %v1707, %v6265
    %v6298 = vadd.f32 %v1709, %v6266
    %v6299 = vadd.f32 %v1750, %v6267
    %v6300 = vadd.f32 %v1752, %v6268
    %v6301 = vadd.f32 %v1793, %v6269
    %v6302 = vadd.f32 %v1795, %v6270
    %v6303 = vadd.f32 %v1836, %v6271
    %v6304 = vadd.f32 %v1838, %v6272
    %v6305 = vxor.u32 %v6289, 2147483648
    %v6306 = vxor.u32 %v6290, 2147483648
    %v6307 = vxor.u32 %v6297, 2147483648
    %v6308 = vxor.u32 %v6298, 2147483648
    %v6309 = vmul.f32 %v6305, 1.442695
    %v6310 = vpow.pop %v6309
    %v6311 = vmul.f32 %v6306, 1.442695
    %v6312 = vpow.pop %v6311
    %v6313 = vmul.f32 %v6307, 1.442695
    %v6314 = vpow.pop %v6313
    %v6315 = vmul.f32 %v6308, 1.442695
    %v6316 = vpow.pop %v6315
    %v6317 = vadd.f32 %v6310, 1.0
    %v6318 = vadd.f32 %v6312, 1.0
    %v6319 = vadd.f32 %v6314, 1.0
    %v6320 = vadd.f32 %v6316, 1.0
    %v6321 = vrcp.pop %v6317
    %v6322 = vmul.f32 1.0, %v6321
    %v6323 = vrcp.pop %v6318
    %v6324 = vmul.f32 1.0, %v6323
    %v6325 = vrcp.pop %v6319
    %v6326 = vmul.f32 1.0, %v6325
    %v6327 = vrcp.pop %v6320
    %v6328 = vmul.f32 1.0, %v6327
    %v6329 = vxor.u32 %v6291, 2147483648
    %v6330 = vxor.u32 %v6292, 2147483648
    %v6331 = vxor.u32 %v6299, 2147483648
    %v6332 = vxor.u32 %v6300, 2147483648
    %v6333 = vmul.f32 %v6329, 1.442695
    %v6334 = vpow.pop %v6333
    %v6335 = vmul.f32 %v6330, 1.442695
    %v6336 = vpow.pop %v6335
    %v6337 = vmul.f32 %v6331, 1.442695
    %v6338 = vpow.pop %v6337
    %v6339 = vmul.f32 %v6332, 1.442695
    %v6340 = vpow.pop %v6339
    %v6341 = vadd.f32 %v6334, 1.0
    %v6342 = vadd.f32 %v6336, 1.0
    %v6343 = vadd.f32 %v6338, 1.0
    %v6344 = vadd.f32 %v6340, 1.0
    %v6345 = vrcp.pop %v6341
    %v6346 = vmul.f32 1.0, %v6345
    %v6347 = vrcp.pop %v6342
    %v6348 = vmul.f32 1.0, %v6347
    %v6349 = vrcp.pop %v6343
    %v6350 = vmul.f32 1.0, %v6349
    %v6351 = vrcp.pop %v6344
    %v6352 = vmul.f32 1.0, %v6351
    %v6353 = vtanh.pop %v6293
    %v6354 = vtanh.pop %v6294
    %v6355 = vtanh.pop %v6301
    %v6356 = vtanh.pop %v6302
    %v6357 = vxor.u32 %v6295, 2147483648
    %v6358 = vxor.u32 %v6296, 2147483648
    %v6359 = vxor.u32 %v6303, 2147483648
    %v6360 = vxor.u32 %v6304, 2147483648
    %v6361 = vmul.f32 %v6357, 1.442695
    %v6362 = vpow.pop %v6361
    %v6363 = vmul.f32 %v6358, 1.442695
    %v6364 = vpow.pop %v6363
    %v6365 = vmul.f32 %v6359, 1.442695
    %v6366 = vpow.pop %v6365
    %v6367 = vmul.f32 %v6360, 1.442695
    %v6368 = vpow.pop %v6367
    %v6369 = vadd.f32 %v6362, 1.0
    %v6370 = vadd.f32 %v6364, 1.0
    %v6371 = vadd.f32 %v6366, 1.0
    %v6372 = vadd.f32 %v6368, 1.0
    %v6373 = vrcp.pop %v6369
    %v6374 = vmul.f32 1.0, %v6373
    %v6375 = vrcp.pop %v6370
    %v6376 = vmul.f32 1.0, %v6375
    %v6377 = vrcp.pop %v6371
    %v6378 = vmul.f32 1.0, %v6377
    %v6379 = vrcp.pop %v6372
    %v6380 = vmul.f32 1.0, %v6379
    %v6385 = vrot.slane %v5665, 7
    %v6386 = vrot.slane %v5666, 7
    %v6387 = vrot.slane %v5667, 7
    %v6388 = vrot.slane %v5668, 7
    %v6393 = vmul.f32 %v6346, %v6385
    %v6394 = vmul.f32 %v6348, %v6386
    %v6395 = vmul.f32 %v6350, %v6387
    %v6396 = vmul.f32 %v6352, %v6388
    %v6397 = vmul.f32 %v6322, %v6353
    %v6398 = vmul.f32 %v6324, %v6354
    %v6399 = vmul.f32 %v6326, %v6355
    %v6400 = vmul.f32 %v6328, %v6356
    %v6401 = vadd.f32 %v6393, %v6397
    %v6402 = vadd.f32 %v6394, %v6398
    %v6403 = vadd.f32 %v6395, %v6399
    %v6404 = vadd.f32 %v6396, %v6400
    %v6405 = vtanh.pop %v6401
    %v6406 = vtanh.pop %v6402
    %v6407 = vtanh.pop %v6403
    %v6408 = vtanh.pop %v6404
    %v6409 = vmul.f32 %v6374, %v6405
    %v6410 = vmul.f32 %v6376, %v6406
    %v6411 = vmul.f32 %v6378, %v6407
    %v6412 = vmul.f32 %v6380, %v6408
    %v6413 = vpack.c.bf16 %v6409, %v6409
    %v6414 = vpack.c.bf16 %v6410, %v6410
    %v6415 = vpack.c.bf16 %v6411, %v6411
    %v6416 = vpack.c.bf16 %v6412, %v6412
    %v6421 = vunpack.c.l.b16 %v6413
    %v6422 = vunpack.c.l.b16 %v6414
    %v6423 = vunpack.c.l.b16 %v6415
    %v6424 = vunpack.c.l.b16 %v6416
    %v6425 = vrot.slane %v6421, 5
    %v6426 = vrot.slane %v6423, 4
    %v6427 = vsel %vm894, %v6426, %v6425
    %v6428 = vrot.slane %v6422, 5
    %v6429 = vrot.slane %v6424, 4
    %v6430 = vsel %vm894, %v6429, %v6428
    %v6431 = vpack.c.b16 %v6427, %v6427
    %v6432 = vpack.c.b16 %v6430, %v6430
    %6435 = vmatprep.subr.bf16.mxu0 %v1975
    %6436 = vmatpush1.bf16.msra.mxu0 %v1974
    %6437 = vmatprep.subr.bf16.mxu0 %v1983
    %6438 = vmatpush1.bf16.msra.mxu0 %v1982
    %6439 = vmatprep.subr.bf16.mxu0 %v1991
    %6440 = vmatpush1.bf16.msra.mxu0 %v1990
    %6441 = vmatprep.subr.bf16.mxu0 %v1999
    %6442 = vmatpush1.bf16.msra.mxu0 %v1998
    %6443 = vmatprep.subr.bf16.mxu0 %v2007
    %6444 = vmatpush1.bf16.msra.mxu0 %v2006
    %6445 = vmatprep.subr.bf16.mxu0 %v2015
    %6446 = vmatpush1.bf16.msra.mxu0 %v2014
    %6447 = vmatprep.subr.bf16.mxu0 %v2023
    %6448 = vmatpush1.bf16.msra.mxu0 %v2022
    %6449 = vmatprep.subr.bf16.mxu0 %v2031
    %6450 = vmatpush1.bf16.msra.mxu0 %v2030
    %6451 = vmatprep.subr.bf16.mxu0 %v2039
    %6452 = vmatpush1.bf16.msra.mxu0 %v2038
    %6453 = vmatprep.subr.bf16.mxu0 %v2047
    %6454 = vmatpush1.bf16.msra.mxu0 %v2046
    %6455 = vmatprep.subr.bf16.mxu0 %v2055
    %6456 = vmatpush1.bf16.msra.mxu0 %v2054
    %6457 = vmatprep.subr.bf16.mxu0 %v2063
    %6458 = vmatpush1.bf16.msra.mxu0 %v2062
    %6459 = vmatprep.subr.bf16.mxu0 %v2071
    %6460 = vmatpush1.bf16.msra.mxu0 %v2070
    %6461 = vmatprep.subr.bf16.mxu0 %v2079
    %6462 = vmatpush1.bf16.msra.mxu0 %v2078
    %6463 = vmatprep.subr.bf16.mxu0 %v2087
    %6464 = vmatpush1.bf16.msra.mxu0 %v2086
    %6465 = vmatprep.subr.bf16.mxu0 %v2095
    %6466 = vmatpush1.bf16.msra.mxu0 %v2094
    %6467 = vmatprep.mubr.bf16.mxu0 %v6432
    %6468 = vmatmul.mubr.bf16.gmra.mrb[0].mxu0 %v6431
    %v6469 = vpop.f32.mrb[0].mxu0
    %v6470 = vadd.f32 0.0, %v6469
    %v6471 = vpop.f32.mrb[0].mxu0
    %v6472 = vadd.f32 0.0, %v6471
    %v6473 = vpop.f32.mrb[0].mxu0
    %v6474 = vpop.f32.mrb[0].mxu0
    %6475 = vdwg.mxu0
    %6476 = vmatprep.subr.bf16.mxu0 %v1977
    %6477 = vmatpush1.bf16.msra.mxu0 %v1976
    %6478 = vmatprep.subr.bf16.mxu0 %v1985
    %6479 = vmatpush1.bf16.msra.mxu0 %v1984
    %6480 = vmatprep.subr.bf16.mxu0 %v1993
    %6481 = vmatpush1.bf16.msra.mxu0 %v1992
    %6482 = vmatprep.subr.bf16.mxu0 %v2001
    %6483 = vmatpush1.bf16.msra.mxu0 %v2000
    %6484 = vmatprep.subr.bf16.mxu0 %v2009
    %6485 = vmatpush1.bf16.msra.mxu0 %v2008
    %6486 = vmatprep.subr.bf16.mxu0 %v2017
    %6487 = vmatpush1.bf16.msra.mxu0 %v2016
    %6488 = vmatprep.subr.bf16.mxu0 %v2025
    %6489 = vmatpush1.bf16.msra.mxu0 %v2024
    %6490 = vmatprep.subr.bf16.mxu0 %v2033
    %6491 = vmatpush1.bf16.msra.mxu0 %v2032
    %6492 = vmatprep.subr.bf16.mxu0 %v2041
    %6493 = vmatpush1.bf16.msra.mxu0 %v2040
    %6494 = vmatprep.subr.bf16.mxu0 %v2049
    %6495 = vmatpush1.bf16.msra.mxu0 %v2048
    %6496 = vmatprep.subr.bf16.mxu0 %v2057
    %6497 = vmatpush1.bf16.msra.mxu0 %v2056
    %6498 = vmatprep.subr.bf16.mxu0 %v2065
    %6499 = vmatpush1.bf16.msra.mxu0 %v2064
    %6500 = vmatprep.subr.bf16.mxu0 %v2073
    %6501 = vmatpush1.bf16.msra.mxu0 %v2072
    %6502 = vmatprep.subr.bf16.mxu0 %v2081
    %6503 = vmatpush1.bf16.msra.mxu0 %v2080
    %6504 = vmatprep.subr.bf16.mxu0 %v2089
    %6505 = vmatpush1.bf16.msra.mxu0 %v2088
    %6506 = vmatprep.subr.bf16.mxu0 %v2097
    %6507 = vmatpush1.bf16.msra.mxu0 %v2096
    %6508 = vmatprep.mubr.bf16.mxu0 %v6432
    %6509 = vmatmul.mubr.bf16.gmra.mrb[0].mxu0 %v6431
    %v6510 = vpop.f32.mrb[0].mxu0
    %v6511 = vadd.f32 0.0, %v6510
    %v6512 = vpop.f32.mrb[0].mxu0
    %v6513 = vadd.f32 0.0, %v6512
    %v6514 = vpop.f32.mrb[0].mxu0
    %v6515 = vpop.f32.mrb[0].mxu0
    %6516 = vdwg.mxu0
    %6517 = vmatprep.subr.bf16.mxu0 %v1979
    %6518 = vmatpush1.bf16.msra.mxu0 %v1978
    %6519 = vmatprep.subr.bf16.mxu0 %v1987
    %6520 = vmatpush1.bf16.msra.mxu0 %v1986
    %6521 = vmatprep.subr.bf16.mxu0 %v1995
    %6522 = vmatpush1.bf16.msra.mxu0 %v1994
    %6523 = vmatprep.subr.bf16.mxu0 %v2003
    %6524 = vmatpush1.bf16.msra.mxu0 %v2002
    %6525 = vmatprep.subr.bf16.mxu0 %v2011
    %6526 = vmatpush1.bf16.msra.mxu0 %v2010
    %6527 = vmatprep.subr.bf16.mxu0 %v2019
    %6528 = vmatpush1.bf16.msra.mxu0 %v2018
    %6529 = vmatprep.subr.bf16.mxu0 %v2027
    %6530 = vmatpush1.bf16.msra.mxu0 %v2026
    %6531 = vmatprep.subr.bf16.mxu0 %v2035
    %6532 = vmatpush1.bf16.msra.mxu0 %v2034
    %6533 = vmatprep.subr.bf16.mxu0 %v2043
    %6534 = vmatpush1.bf16.msra.mxu0 %v2042
    %6535 = vmatprep.subr.bf16.mxu0 %v2051
    %6536 = vmatpush1.bf16.msra.mxu0 %v2050
    %6537 = vmatprep.subr.bf16.mxu0 %v2059
    %6538 = vmatpush1.bf16.msra.mxu0 %v2058
    %6539 = vmatprep.subr.bf16.mxu0 %v2067
    %6540 = vmatpush1.bf16.msra.mxu0 %v2066
    %6541 = vmatprep.subr.bf16.mxu0 %v2075
    %6542 = vmatpush1.bf16.msra.mxu0 %v2074
    %6543 = vmatprep.subr.bf16.mxu0 %v2083
    %6544 = vmatpush1.bf16.msra.mxu0 %v2082
    %6545 = vmatprep.subr.bf16.mxu0 %v2091
    %6546 = vmatpush1.bf16.msra.mxu0 %v2090
    %6547 = vmatprep.subr.bf16.mxu0 %v2099
    %6548 = vmatpush1.bf16.msra.mxu0 %v2098
    %6549 = vmatprep.mubr.bf16.mxu0 %v6432
    %6550 = vmatmul.mubr.bf16.gmra.mrb[0].mxu0 %v6431
    %v6551 = vpop.f32.mrb[0].mxu0
    %v6552 = vadd.f32 0.0, %v6551
    %v6553 = vpop.f32.mrb[0].mxu0
    %v6554 = vadd.f32 0.0, %v6553
    %v6555 = vpop.f32.mrb[0].mxu0
    %v6556 = vpop.f32.mrb[0].mxu0
    %6557 = vdwg.mxu0
    %6558 = vmatprep.subr.bf16.mxu0 %v1981
    %6559 = vmatpush1.bf16.msra.mxu0 %v1980
    %6560 = vmatprep.subr.bf16.mxu0 %v1989
    %6561 = vmatpush1.bf16.msra.mxu0 %v1988
    %6562 = vmatprep.subr.bf16.mxu0 %v1997
    %6563 = vmatpush1.bf16.msra.mxu0 %v1996
    %6564 = vmatprep.subr.bf16.mxu0 %v2005
    %6565 = vmatpush1.bf16.msra.mxu0 %v2004
    %6566 = vmatprep.subr.bf16.mxu0 %v2013
    %6567 = vmatpush1.bf16.msra.mxu0 %v2012
    %6568 = vmatprep.subr.bf16.mxu0 %v2021
    %6569 = vmatpush1.bf16.msra.mxu0 %v2020
    %6570 = vmatprep.subr.bf16.mxu0 %v2029
    %6571 = vmatpush1.bf16.msra.mxu0 %v2028
    %6572 = vmatprep.subr.bf16.mxu0 %v2037
    %6573 = vmatpush1.bf16.msra.mxu0 %v2036
    %6574 = vmatprep.subr.bf16.mxu0 %v2045
    %6575 = vmatpush1.bf16.msra.mxu0 %v2044
    %6576 = vmatprep.subr.bf16.mxu0 %v2053
    %6577 = vmatpush1.bf16.msra.mxu0 %v2052
    %6578 = vmatprep.subr.bf16.mxu0 %v2061
    %6579 = vmatpush1.bf16.msra.mxu0 %v2060
    %6580 = vmatprep.subr.bf16.mxu0 %v2069
    %6581 = vmatpush1.bf16.msra.mxu0 %v2068
    %6582 = vmatprep.subr.bf16.mxu0 %v2077
    %6583 = vmatpush1.bf16.msra.mxu0 %v2076
    %6584 = vmatprep.subr.bf16.mxu0 %v2085
    %6585 = vmatpush1.bf16.msra.mxu0 %v2084
    %6586 = vmatprep.subr.bf16.mxu0 %v2093
    %6587 = vmatpush1.bf16.msra.mxu0 %v2092
    %6588 = vmatprep.subr.bf16.mxu0 %v2101
    %6589 = vmatpush1.bf16.msra.mxu0 %v2100
    %6590 = vmatprep.mubr.bf16.mxu0 %v6432
    %6591 = vmatmul.mubr.bf16.gmra.mrb[0].mxu0 %v6431
    %v6592 = vpop.f32.mrb[0].mxu0
    %v6593 = vadd.f32 0.0, %v6592
    %v6594 = vpop.f32.mrb[0].mxu0
    %v6595 = vadd.f32 0.0, %v6594
    %v6596 = vpop.f32.mrb[0].mxu0
    %v6597 = vpop.f32.mrb[0].mxu0
    %6598 = vdwg.mxu0
    %v6599 = vadd.f32 %v5956, %v6470
    %v6600 = vadd.f32 %v5958, %v6472
    %v6601 = vadd.f32 %v5997, %v6511
    %v6602 = vadd.f32 %v5999, %v6513
    %v6603 = vadd.f32 %v6038, %v6552
    %v6604 = vadd.f32 %v6040, %v6554
    %v6605 = vadd.f32 %v6079, %v6593
    %v6606 = vadd.f32 %v6081, %v6595
    %v6607 = vxor.u32 %v6599, 2147483648
    %v6608 = vxor.u32 %v6600, 2147483648
    %v6609 = vmul.f32 %v6607, 1.442695
    %v6610 = vpow.pop %v6609
    %v6611 = vmul.f32 %v6608, 1.442695
    %v6612 = vpow.pop %v6611
    %v6613 = vadd.f32 %v6610, 1.0
    %v6614 = vadd.f32 %v6612, 1.0
    %v6615 = vrcp.pop %v6613
    %v6616 = vmul.f32 1.0, %v6615
    %v6617 = vrcp.pop %v6614
    %v6618 = vmul.f32 1.0, %v6617
    %v6619 = vxor.u32 %v6601, 2147483648
    %v6620 = vxor.u32 %v6602, 2147483648
    %v6621 = vmul.f32 %v6619, 1.442695
    %v6622 = vpow.pop %v6621
    %v6623 = vmul.f32 %v6620, 1.442695
    %v6624 = vpow.pop %v6623
    %v6625 = vadd.f32 %v6622, 1.0
    %v6626 = vadd.f32 %v6624, 1.0
    %v6627 = vrcp.pop %v6625
    %v6628 = vmul.f32 1.0, %v6627
    %v6629 = vrcp.pop %v6626
    %v6630 = vmul.f32 1.0, %v6629
    %v6631 = vtanh.pop %v6603
    %v6632 = vtanh.pop %v6604
    %v6633 = vxor.u32 %v6605, 2147483648
    %v6634 = vxor.u32 %v6606, 2147483648
    %v6635 = vmul.f32 %v6633, 1.442695
    %v6636 = vpow.pop %v6635
    %v6637 = vmul.f32 %v6634, 1.442695
    %v6638 = vpow.pop %v6637
    %v6639 = vadd.f32 %v6636, 1.0
    %v6640 = vadd.f32 %v6638, 1.0
    %v6641 = vrcp.pop %v6639
    %v6642 = vmul.f32 1.0, %v6641
    %v6643 = vrcp.pop %v6640
    %v6644 = vmul.f32 1.0, %v6643
    %v6645 = vmul.f32 %v6628, %v5913
    %v6646 = vmul.f32 %v6630, %v5914
    %v6647 = vmul.f32 %v6616, %v6631
    %v6648 = vmul.f32 %v6618, %v6632
    %v6649 = vadd.f32 %v6645, %v6647
    %v6650 = vadd.f32 %v6646, %v6648
    %v6651 = vtanh.pop %v6649
    %v6652 = vtanh.pop %v6650
    %v6653 = vmul.f32 %v6642, %v6651
    %v6654 = vmul.f32 %v6644, %v6652
    %v6655 = vpack.c.bf16 %v6653, %v6653
    %v6656 = vpack.c.bf16 %v6654, %v6654
    %6657 = vmatprep.subr.bf16.mxu0 %v2104
    %6658 = vmatpush1.bf16.msra.mxu0 %v2103
    %6659 = vmatprep.subr.bf16.mxu0 %v2112
    %6660 = vmatpush1.bf16.msra.mxu0 %v2111
    %6661 = vmatprep.subr.bf16.mxu0 %v2120
    %6662 = vmatpush1.bf16.msra.mxu0 %v2119
    %6663 = vmatprep.subr.bf16.mxu0 %v2128
    %6664 = vmatpush1.bf16.msra.mxu0 %v2127
    %6665 = vmatprep.subr.bf16.mxu0 %v2136
    %6666 = vmatpush1.bf16.msra.mxu0 %v2135
    %6667 = vmatprep.subr.bf16.mxu0 %v2144
    %6668 = vmatpush1.bf16.msra.mxu0 %v2143
    %6669 = vmatprep.subr.bf16.mxu0 %v2152
    %6670 = vmatpush1.bf16.msra.mxu0 %v2151
    %6671 = vmatprep.subr.bf16.mxu0 %v2160
    %6672 = vmatpush1.bf16.msra.mxu0 %v2159
    %6673 = vmatprep.subr.bf16.mxu0 %v2168
    %6674 = vmatpush1.bf16.msra.mxu0 %v2167
    %6675 = vmatprep.subr.bf16.mxu0 %v2176
    %6676 = vmatpush1.bf16.msra.mxu0 %v2175
    %6677 = vmatprep.subr.bf16.mxu0 %v2184
    %6678 = vmatpush1.bf16.msra.mxu0 %v2183
    %6679 = vmatprep.subr.bf16.mxu0 %v2192
    %6680 = vmatpush1.bf16.msra.mxu0 %v2191
    %6681 = vmatprep.subr.bf16.mxu0 %v2200
    %6682 = vmatpush1.bf16.msra.mxu0 %v2199
    %6683 = vmatprep.subr.bf16.mxu0 %v2208
    %6684 = vmatpush1.bf16.msra.mxu0 %v2207
    %6685 = vmatprep.subr.bf16.mxu0 %v2216
    %6686 = vmatpush1.bf16.msra.mxu0 %v2215
    %6687 = vmatprep.subr.bf16.mxu0 %v2224
    %6688 = vmatpush1.bf16.msra.mxu0 %v2223
    %6689 = vmatprep.mubr.bf16.mxu0 %v6656
    %6690 = vmatmul.mubr.bf16.gmra.mrb[0].mxu0 %v6655
    %v6691 = vpop.f32.mrb[0].mxu0
    %v6692 = vadd.f32 %v2236, %v6691
    %v6693 = vpop.f32.mrb[0].mxu0
    %v6694 = vadd.f32 %v2240, %v6693
    %v6695 = vpop.f32.mrb[0].mxu0
    %v6696 = vpop.f32.mrb[0].mxu0
    %6697 = vdwg.mxu0
    %6698 = vmatprep.subr.bf16.mxu0 %v2106
    %6699 = vmatpush1.bf16.msra.mxu0 %v2105
    %6700 = vmatprep.subr.bf16.mxu0 %v2114
    %6701 = vmatpush1.bf16.msra.mxu0 %v2113
    %6702 = vmatprep.subr.bf16.mxu0 %v2122
    %6703 = vmatpush1.bf16.msra.mxu0 %v2121
    %6704 = vmatprep.subr.bf16.mxu0 %v2130
    %6705 = vmatpush1.bf16.msra.mxu0 %v2129
    %6706 = vmatprep.subr.bf16.mxu0 %v2138
    %6707 = vmatpush1.bf16.msra.mxu0 %v2137
    %6708 = vmatprep.subr.bf16.mxu0 %v2146
    %6709 = vmatpush1.bf16.msra.mxu0 %v2145
    %6710 = vmatprep.subr.bf16.mxu0 %v2154
    %6711 = vmatpush1.bf16.msra.mxu0 %v2153
    %6712 = vmatprep.subr.bf16.mxu0 %v2162
    %6713 = vmatpush1.bf16.msra.mxu0 %v2161
    %6714 = vmatprep.subr.bf16.mxu0 %v2170
    %6715 = vmatpush1.bf16.msra.mxu0 %v2169
    %6716 = vmatprep.subr.bf16.mxu0 %v2178
    %6717 = vmatpush1.bf16.msra.mxu0 %v2177
    %6718 = vmatprep.subr.bf16.mxu0 %v2186
    %6719 = vmatpush1.bf16.msra.mxu0 %v2185
    %6720 = vmatprep.subr.bf16.mxu0 %v2194
    %6721 = vmatpush1.bf16.msra.mxu0 %v2193
    %6722 = vmatprep.subr.bf16.mxu0 %v2202
    %6723 = vmatpush1.bf16.msra.mxu0 %v2201
    %6724 = vmatprep.subr.bf16.mxu0 %v2210
    %6725 = vmatpush1.bf16.msra.mxu0 %v2209
    %6726 = vmatprep.subr.bf16.mxu0 %v2218
    %6727 = vmatpush1.bf16.msra.mxu0 %v2217
    %6728 = vmatprep.subr.bf16.mxu0 %v2226
    %6729 = vmatpush1.bf16.msra.mxu0 %v2225
    %6730 = vmatprep.mubr.bf16.mxu0 %v6656
    %6731 = vmatmul.mubr.bf16.gmra.mrb[0].mxu0 %v6655
    %v6732 = vpop.f32.mrb[0].mxu0
    %v6733 = vadd.f32 %v2244, %v6732
    %v6734 = vpop.f32.mrb[0].mxu0
    %v6735 = vadd.f32 %v2248, %v6734
    %v6736 = vpop.f32.mrb[0].mxu0
    %v6737 = vpop.f32.mrb[0].mxu0
    %6738 = vdwg.mxu0
    %6739 = vmatprep.subr.bf16.mxu0 %v2108
    %6740 = vmatpush1.bf16.msra.mxu0 %v2107
    %6741 = vmatprep.subr.bf16.mxu0 %v2116
    %6742 = vmatpush1.bf16.msra.mxu0 %v2115
    %6743 = vmatprep.subr.bf16.mxu0 %v2124
    %6744 = vmatpush1.bf16.msra.mxu0 %v2123
    %6745 = vmatprep.subr.bf16.mxu0 %v2132
    %6746 = vmatpush1.bf16.msra.mxu0 %v2131
    %6747 = vmatprep.subr.bf16.mxu0 %v2140
    %6748 = vmatpush1.bf16.msra.mxu0 %v2139
    %6749 = vmatprep.subr.bf16.mxu0 %v2148
    %6750 = vmatpush1.bf16.msra.mxu0 %v2147
    %6751 = vmatprep.subr.bf16.mxu0 %v2156
    %6752 = vmatpush1.bf16.msra.mxu0 %v2155
    %6753 = vmatprep.subr.bf16.mxu0 %v2164
    %6754 = vmatpush1.bf16.msra.mxu0 %v2163
    %6755 = vmatprep.subr.bf16.mxu0 %v2172
    %6756 = vmatpush1.bf16.msra.mxu0 %v2171
    %6757 = vmatprep.subr.bf16.mxu0 %v2180
    %6758 = vmatpush1.bf16.msra.mxu0 %v2179
    %6759 = vmatprep.subr.bf16.mxu0 %v2188
    %6760 = vmatpush1.bf16.msra.mxu0 %v2187
    %6761 = vmatprep.subr.bf16.mxu0 %v2196
    %6762 = vmatpush1.bf16.msra.mxu0 %v2195
    %6763 = vmatprep.subr.bf16.mxu0 %v2204
    %6764 = vmatpush1.bf16.msra.mxu0 %v2203
    %6765 = vmatprep.subr.bf16.mxu0 %v2212
    %6766 = vmatpush1.bf16.msra.mxu0 %v2211
    %6767 = vmatprep.subr.bf16.mxu0 %v2220
    %6768 = vmatpush1.bf16.msra.mxu0 %v2219
    %6769 = vmatprep.subr.bf16.mxu0 %v2228
    %6770 = vmatpush1.bf16.msra.mxu0 %v2227
    %6771 = vmatprep.mubr.bf16.mxu0 %v6656
    %6772 = vmatmul.mubr.bf16.gmra.mrb[0].mxu0 %v6655
    %v6773 = vpop.f32.mrb[0].mxu0
    %v6774 = vadd.f32 %v2252, %v6773
    %v6775 = vpop.f32.mrb[0].mxu0
    %v6776 = vadd.f32 %v2256, %v6775
    %v6777 = vpop.f32.mrb[0].mxu0
    %v6778 = vpop.f32.mrb[0].mxu0
    %6779 = vdwg.mxu0
    %6780 = vmatprep.subr.bf16.mxu0 %v2110
    %6781 = vmatpush1.bf16.msra.mxu0 %v2109
    %6782 = vmatprep.subr.bf16.mxu0 %v2118
    %6783 = vmatpush1.bf16.msra.mxu0 %v2117
    %6784 = vmatprep.subr.bf16.mxu0 %v2126
    %6785 = vmatpush1.bf16.msra.mxu0 %v2125
    %6786 = vmatprep.subr.bf16.mxu0 %v2134
    %6787 = vmatpush1.bf16.msra.mxu0 %v2133
    %6788 = vmatprep.subr.bf16.mxu0 %v2142
    %6789 = vmatpush1.bf16.msra.mxu0 %v2141
    %6790 = vmatprep.subr.bf16.mxu0 %v2150
    %6791 = vmatpush1.bf16.msra.mxu0 %v2149
    %6792 = vmatprep.subr.bf16.mxu0 %v2158
    %6793 = vmatpush1.bf16.msra.mxu0 %v2157
    %6794 = vmatprep.subr.bf16.mxu0 %v2166
    %6795 = vmatpush1.bf16.msra.mxu0 %v2165
    %6796 = vmatprep.subr.bf16.mxu0 %v2174
    %6797 = vmatpush1.bf16.msra.mxu0 %v2173
    %6798 = vmatprep.subr.bf16.mxu0 %v2182
    %6799 = vmatpush1.bf16.msra.mxu0 %v2181
    %6800 = vmatprep.subr.bf16.mxu0 %v2190
    %6801 = vmatpush1.bf16.msra.mxu0 %v2189
    %6802 = vmatprep.subr.bf16.mxu0 %v2198
    %6803 = vmatpush1.bf16.msra.mxu0 %v2197
    %6804 = vmatprep.subr.bf16.mxu0 %v2206
    %6805 = vmatpush1.bf16.msra.mxu0 %v2205
    %6806 = vmatprep.subr.bf16.mxu0 %v2214
    %6807 = vmatpush1.bf16.msra.mxu0 %v2213
    %6808 = vmatprep.subr.bf16.mxu0 %v2222
    %6809 = vmatpush1.bf16.msra.mxu0 %v2221
    %6810 = vmatprep.subr.bf16.mxu0 %v2230
    %6811 = vmatpush1.bf16.msra.mxu0 %v2229
    %6812 = vmatprep.mubr.bf16.mxu0 %v6656
    %6813 = vmatmul.mubr.bf16.gmra.mrb[0].mxu0 %v6655
    %v6814 = vpop.f32.mrb[0].mxu0
    %v6815 = vadd.f32 %v2260, %v6814
    %v6816 = vpop.f32.mrb[0].mxu0
    %v6817 = vadd.f32 %v2264, %v6816
    %v6818 = vpop.f32.mrb[0].mxu0
    %v6819 = vpop.f32.mrb[0].mxu0
    %6820 = vdwg.mxu0
    %6821 = vmatprep.subr.bf16.mxu0 %v1846
    %6822 = vmatpush1.bf16.msra.mxu0 %v1845
    %6823 = vmatprep.subr.bf16.mxu0 %v1854
    %6824 = vmatpush1.bf16.msra.mxu0 %v1853
    %6825 = vmatprep.subr.bf16.mxu0 %v1862
    %6826 = vmatpush1.bf16.msra.mxu0 %v1861
    %6827 = vmatprep.subr.bf16.mxu0 %v1870
    %6828 = vmatpush1.bf16.msra.mxu0 %v1869
    %6829 = vmatprep.subr.bf16.mxu0 %v1878
    %6830 = vmatpush1.bf16.msra.mxu0 %v1877
    %6831 = vmatprep.subr.bf16.mxu0 %v1886
    %6832 = vmatpush1.bf16.msra.mxu0 %v1885
    %6833 = vmatprep.subr.bf16.mxu0 %v1894
    %6834 = vmatpush1.bf16.msra.mxu0 %v1893
    %6835 = vmatprep.subr.bf16.mxu0 %v1902
    %6836 = vmatpush1.bf16.msra.mxu0 %v1901
    %6837 = vmatprep.subr.bf16.mxu0 %v1910
    %6838 = vmatpush1.bf16.msra.mxu0 %v1909
    %6839 = vmatprep.subr.bf16.mxu0 %v1918
    %6840 = vmatpush1.bf16.msra.mxu0 %v1917
    %6841 = vmatprep.subr.bf16.mxu0 %v1926
    %6842 = vmatpush1.bf16.msra.mxu0 %v1925
    %6843 = vmatprep.subr.bf16.mxu0 %v1934
    %6844 = vmatpush1.bf16.msra.mxu0 %v1933
    %6845 = vmatprep.subr.bf16.mxu0 %v1942
    %6846 = vmatpush1.bf16.msra.mxu0 %v1941
    %6847 = vmatprep.subr.bf16.mxu0 %v1950
    %6848 = vmatpush1.bf16.msra.mxu0 %v1949
    %6849 = vmatprep.subr.bf16.mxu0 %v1958
    %6850 = vmatpush1.bf16.msra.mxu0 %v1957
    %6851 = vmatprep.subr.bf16.mxu0 %v1966
    %6852 = vmatpush1.bf16.msra.mxu0 %v1965
    %6853 = vmatprep.mubr.bf16.mxu0 %v6432
    %6854 = vmatmul.mubr.bf16.gmra.mrb[0].mxu0 %v6431
    %v6855 = vpop.f32.mrb[0].mxu0
    %v6856 = vadd.f32 0.0, %v6855
    %v6857 = vpop.f32.mrb[0].mxu0
    %v6858 = vadd.f32 0.0, %v6857
    %v6859 = vpop.f32.mrb[0].mxu0
    %v6860 = vpop.f32.mrb[0].mxu0
    %6861 = vdwg.mxu0
    %6862 = vmatprep.subr.bf16.mxu0 %v1848
    %6863 = vmatpush1.bf16.msra.mxu0 %v1847
    %6864 = vmatprep.subr.bf16.mxu0 %v1856
    %6865 = vmatpush1.bf16.msra.mxu0 %v1855
    %6866 = vmatprep.subr.bf16.mxu0 %v1864
    %6867 = vmatpush1.bf16.msra.mxu0 %v1863
    %6868 = vmatprep.subr.bf16.mxu0 %v1872
    %6869 = vmatpush1.bf16.msra.mxu0 %v1871
    %6870 = vmatprep.subr.bf16.mxu0 %v1880
    %6871 = vmatpush1.bf16.msra.mxu0 %v1879
    %6872 = vmatprep.subr.bf16.mxu0 %v1888
    %6873 = vmatpush1.bf16.msra.mxu0 %v1887
    %6874 = vmatprep.subr.bf16.mxu0 %v1896
    %6875 = vmatpush1.bf16.msra.mxu0 %v1895
    %6876 = vmatprep.subr.bf16.mxu0 %v1904
    %6877 = vmatpush1.bf16.msra.mxu0 %v1903
    %6878 = vmatprep.subr.bf16.mxu0 %v1912
    %6879 = vmatpush1.bf16.msra.mxu0 %v1911
    %6880 = vmatprep.subr.bf16.mxu0 %v1920
    %6881 = vmatpush1.bf16.msra.mxu0 %v1919
    %6882 = vmatprep.subr.bf16.mxu0 %v1928
    %6883 = vmatpush1.bf16.msra.mxu0 %v1927
    %6884 = vmatprep.subr.bf16.mxu0 %v1936
    %6885 = vmatpush1.bf16.msra.mxu0 %v1935
    %6886 = vmatprep.subr.bf16.mxu0 %v1944
    %6887 = vmatpush1.bf16.msra.mxu0 %v1943
    %6888 = vmatprep.subr.bf16.mxu0 %v1952
    %6889 = vmatpush1.bf16.msra.mxu0 %v1951
    %6890 = vmatprep.subr.bf16.mxu0 %v1960
    %6891 = vmatpush1.bf16.msra.mxu0 %v1959
    %6892 = vmatprep.subr.bf16.mxu0 %v1968
    %6893 = vmatpush1.bf16.msra.mxu0 %v1967
    %6894 = vmatprep.mubr.bf16.mxu0 %v6432
    %6895 = vmatmul.mubr.bf16.gmra.mrb[0].mxu0 %v6431
    %v6896 = vpop.f32.mrb[0].mxu0
    %v6897 = vadd.f32 0.0, %v6896
    %v6898 = vpop.f32.mrb[0].mxu0
    %v6899 = vadd.f32 0.0, %v6898
    %v6900 = vpop.f32.mrb[0].mxu0
    %v6901 = vpop.f32.mrb[0].mxu0
    %6902 = vdwg.mxu0
    %6903 = vmatprep.subr.bf16.mxu0 %v1850
    %6904 = vmatpush1.bf16.msra.mxu0 %v1849
    %6905 = vmatprep.subr.bf16.mxu0 %v1858
    %6906 = vmatpush1.bf16.msra.mxu0 %v1857
    %6907 = vmatprep.subr.bf16.mxu0 %v1866
    %6908 = vmatpush1.bf16.msra.mxu0 %v1865
    %6909 = vmatprep.subr.bf16.mxu0 %v1874
    %6910 = vmatpush1.bf16.msra.mxu0 %v1873
    %6911 = vmatprep.subr.bf16.mxu0 %v1882
    %6912 = vmatpush1.bf16.msra.mxu0 %v1881
    %6913 = vmatprep.subr.bf16.mxu0 %v1890
    %6914 = vmatpush1.bf16.msra.mxu0 %v1889
    %6915 = vmatprep.subr.bf16.mxu0 %v1898
    %6916 = vmatpush1.bf16.msra.mxu0 %v1897
    %6917 = vmatprep.subr.bf16.mxu0 %v1906
    %6918 = vmatpush1.bf16.msra.mxu0 %v1905
    %6919 = vmatprep.subr.bf16.mxu0 %v1914
    %6920 = vmatpush1.bf16.msra.mxu0 %v1913
    %6921 = vmatprep.subr.bf16.mxu0 %v1922
    %6922 = vmatpush1.bf16.msra.mxu0 %v1921
    %6923 = vmatprep.subr.bf16.mxu0 %v1930
    %6924 = vmatpush1.bf16.msra.mxu0 %v1929
    %6925 = vmatprep.subr.bf16.mxu0 %v1938
    %6926 = vmatpush1.bf16.msra.mxu0 %v1937
    %6927 = vmatprep.subr.bf16.mxu0 %v1946
    %6928 = vmatpush1.bf16.msra.mxu0 %v1945
    %6929 = vmatprep.subr.bf16.mxu0 %v1954
    %6930 = vmatpush1.bf16.msra.mxu0 %v1953
    %6931 = vmatprep.subr.bf16.mxu0 %v1962
    %6932 = vmatpush1.bf16.msra.mxu0 %v1961
    %6933 = vmatprep.subr.bf16.mxu0 %v1970
    %6934 = vmatpush1.bf16.msra.mxu0 %v1969
    %6935 = vmatprep.mubr.bf16.mxu0 %v6432
    %6936 = vmatmul.mubr.bf16.gmra.mrb[0].mxu0 %v6431
    %v6937 = vpop.f32.mrb[0].mxu0
    %v6938 = vadd.f32 0.0, %v6937
    %v6939 = vpop.f32.mrb[0].mxu0
    %v6940 = vadd.f32 0.0, %v6939
    %v6941 = vpop.f32.mrb[0].mxu0
    %v6942 = vpop.f32.mrb[0].mxu0
    %6943 = vdwg.mxu0
    %6944 = vmatprep.subr.bf16.mxu0 %v1852
    %6945 = vmatpush1.bf16.msra.mxu0 %v1851
    %6946 = vmatprep.subr.bf16.mxu0 %v1860
    %6947 = vmatpush1.bf16.msra.mxu0 %v1859
    %6948 = vmatprep.subr.bf16.mxu0 %v1868
    %6949 = vmatpush1.bf16.msra.mxu0 %v1867
    %6950 = vmatprep.subr.bf16.mxu0 %v1876
    %6951 = vmatpush1.bf16.msra.mxu0 %v1875
    %6952 = vmatprep.subr.bf16.mxu0 %v1884
    %6953 = vmatpush1.bf16.msra.mxu0 %v1883
    %6954 = vmatprep.subr.bf16.mxu0 %v1892
    %6955 = vmatpush1.bf16.msra.mxu0 %v1891
    %6956 = vmatprep.subr.bf16.mxu0 %v1900
    %6957 = vmatpush1.bf16.msra.mxu0 %v1899
    %6958 = vmatprep.subr.bf16.mxu0 %v1908
    %6959 = vmatpush1.bf16.msra.mxu0 %v1907
    %6960 = vmatprep.subr.bf16.mxu0 %v1916
    %6961 = vmatpush1.bf16.msra.mxu0 %v1915
    %6962 = vmatprep.subr.bf16.mxu0 %v1924
    %6963 = vmatpush1.bf16.msra.mxu0 %v1923
    %6964 = vmatprep.subr.bf16.mxu0 %v1932
    %6965 = vmatpush1.bf16.msra.mxu0 %v1931
    %6966 = vmatprep.subr.bf16.mxu0 %v1940
    %6967 = vmatpush1.bf16.msra.mxu0 %v1939
    %6968 = vmatprep.subr.bf16.mxu0 %v1948
    %6969 = vmatpush1.bf16.msra.mxu0 %v1947
    %6970 = vmatprep.subr.bf16.mxu0 %v1956
    %6971 = vmatpush1.bf16.msra.mxu0 %v1955
    %6972 = vmatprep.subr.bf16.mxu0 %v1964
    %6973 = vmatpush1.bf16.msra.mxu0 %v1963
    %6974 = vmatprep.subr.bf16.mxu0 %v1972
    %6975 = vmatpush1.bf16.msra.mxu0 %v1971
    %6976 = vmatprep.mubr.bf16.mxu0 %v6432
    %6977 = vmatmul.mubr.bf16.gmra.mrb[0].mxu0 %v6431
    %v6978 = vpop.f32.mrb[0].mxu0
    %v6979 = vadd.f32 0.0, %v6978
    %v6980 = vpop.f32.mrb[0].mxu0
    %v6981 = vadd.f32 0.0, %v6980
    %v6982 = vpop.f32.mrb[0].mxu0
    %v6983 = vpop.f32.mrb[0].mxu0
    %6984 = vdwg.mxu0
    %v6993 = vrot.slane %v6856, 2
    %v6994 = vrot.slane %v6858, 2
    %v6995 = vrot.slane %v6897, 2
    %v6996 = vrot.slane %v6899, 2
    %v6997 = vrot.slane %v6938, 2
    %v6998 = vrot.slane %v6940, 2
    %v6999 = vrot.slane %v6979, 2
    %v7000 = vrot.slane %v6981, 2
    %v7001 = vrot.slane %v6856, 3
    %v7002 = vrot.slane %v6858, 3
    %v7003 = vrot.slane %v6897, 3
    %v7004 = vrot.slane %v6899, 3
    %v7005 = vrot.slane %v6938, 3
    %v7006 = vrot.slane %v6940, 3
    %v7007 = vrot.slane %v6979, 3
    %v7008 = vrot.slane %v6981, 3
    %v7025 = vadd.f32 %v1703, %v6993
    %v7026 = vadd.f32 %v1705, %v6994
    %v7027 = vadd.f32 %v1746, %v6995
    %v7028 = vadd.f32 %v1748, %v6996
    %v7029 = vadd.f32 %v1789, %v6997
    %v7030 = vadd.f32 %v1791, %v6998
    %v7031 = vadd.f32 %v1832, %v6999
    %v7032 = vadd.f32 %v1834, %v7000
    %v7033 = vadd.f32 %v1707, %v7001
    %v7034 = vadd.f32 %v1709, %v7002
    %v7035 = vadd.f32 %v1750, %v7003
    %v7036 = vadd.f32 %v1752, %v7004
    %v7037 = vadd.f32 %v1793, %v7005
    %v7038 = vadd.f32 %v1795, %v7006
    %v7039 = vadd.f32 %v1836, %v7007
    %v7040 = vadd.f32 %v1838, %v7008
    %v7041 = vxor.u32 %v7025, 2147483648
    %v7042 = vxor.u32 %v7026, 2147483648
    %v7043 = vxor.u32 %v7033, 2147483648
    %v7044 = vxor.u32 %v7034, 2147483648
    %v7045 = vmul.f32 %v7041, 1.442695
    %v7046 = vpow.pop %v7045
    %v7047 = vmul.f32 %v7042, 1.442695
    %v7048 = vpow.pop %v7047
    %v7049 = vmul.f32 %v7043, 1.442695
    %v7050 = vpow.pop %v7049
    %v7051 = vmul.f32 %v7044, 1.442695
    %v7052 = vpow.pop %v7051
    %v7053 = vadd.f32 %v7046, 1.0
    %v7054 = vadd.f32 %v7048, 1.0
    %v7055 = vadd.f32 %v7050, 1.0
    %v7056 = vadd.f32 %v7052, 1.0
    %v7057 = vrcp.pop %v7053
    %v7058 = vmul.f32 1.0, %v7057
    %v7059 = vrcp.pop %v7054
    %v7060 = vmul.f32 1.0, %v7059
    %v7061 = vrcp.pop %v7055
    %v7062 = vmul.f32 1.0, %v7061
    %v7063 = vrcp.pop %v7056
    %v7064 = vmul.f32 1.0, %v7063
    %v7065 = vxor.u32 %v7027, 2147483648
    %v7066 = vxor.u32 %v7028, 2147483648
    %v7067 = vxor.u32 %v7035, 2147483648
    %v7068 = vxor.u32 %v7036, 2147483648
    %v7069 = vmul.f32 %v7065, 1.442695
    %v7070 = vpow.pop %v7069
    %v7071 = vmul.f32 %v7066, 1.442695
    %v7072 = vpow.pop %v7071
    %v7073 = vmul.f32 %v7067, 1.442695
    %v7074 = vpow.pop %v7073
    %v7075 = vmul.f32 %v7068, 1.442695
    %v7076 = vpow.pop %v7075
    %v7077 = vadd.f32 %v7070, 1.0
    %v7078 = vadd.f32 %v7072, 1.0
    %v7079 = vadd.f32 %v7074, 1.0
    %v7080 = vadd.f32 %v7076, 1.0
    %v7081 = vrcp.pop %v7077
    %v7082 = vmul.f32 1.0, %v7081
    %v7083 = vrcp.pop %v7078
    %v7084 = vmul.f32 1.0, %v7083
    %v7085 = vrcp.pop %v7079
    %v7086 = vmul.f32 1.0, %v7085
    %v7087 = vrcp.pop %v7080
    %v7088 = vmul.f32 1.0, %v7087
    %v7089 = vtanh.pop %v7029
    %v7090 = vtanh.pop %v7030
    %v7091 = vtanh.pop %v7037
    %v7092 = vtanh.pop %v7038
    %v7093 = vxor.u32 %v7031, 2147483648
    %v7094 = vxor.u32 %v7032, 2147483648
    %v7095 = vxor.u32 %v7039, 2147483648
    %v7096 = vxor.u32 %v7040, 2147483648
    %v7097 = vmul.f32 %v7093, 1.442695
    %v7098 = vpow.pop %v7097
    %v7099 = vmul.f32 %v7094, 1.442695
    %v7100 = vpow.pop %v7099
    %v7101 = vmul.f32 %v7095, 1.442695
    %v7102 = vpow.pop %v7101
    %v7103 = vmul.f32 %v7096, 1.442695
    %v7104 = vpow.pop %v7103
    %v7105 = vadd.f32 %v7098, 1.0
    %v7106 = vadd.f32 %v7100, 1.0
    %v7107 = vadd.f32 %v7102, 1.0
    %v7108 = vadd.f32 %v7104, 1.0
    %v7109 = vrcp.pop %v7105
    %v7110 = vmul.f32 1.0, %v7109
    %v7111 = vrcp.pop %v7106
    %v7112 = vmul.f32 1.0, %v7111
    %v7113 = vrcp.pop %v7107
    %v7114 = vmul.f32 1.0, %v7113
    %v7115 = vrcp.pop %v7108
    %v7116 = vmul.f32 1.0, %v7115
    %v7121 = vrot.slane %v6401, 7
    %v7122 = vrot.slane %v6402, 7
    %v7123 = vrot.slane %v6403, 7
    %v7124 = vrot.slane %v6404, 7
    %v7129 = vmul.f32 %v7082, %v7121
    %v7130 = vmul.f32 %v7084, %v7122
    %v7131 = vmul.f32 %v7086, %v7123
    %v7132 = vmul.f32 %v7088, %v7124
    %v7133 = vmul.f32 %v7058, %v7089
    %v7134 = vmul.f32 %v7060, %v7090
    %v7135 = vmul.f32 %v7062, %v7091
    %v7136 = vmul.f32 %v7064, %v7092
    %v7137 = vadd.f32 %v7129, %v7133
    %v7138 = vadd.f32 %v7130, %v7134
    %v7139 = vadd.f32 %v7131, %v7135
    %v7140 = vadd.f32 %v7132, %v7136
    %v7141 = vtanh.pop %v7137
    %v7142 = vtanh.pop %v7138
    %v7143 = vtanh.pop %v7139
    %v7144 = vtanh.pop %v7140
    %v7145 = vmul.f32 %v7110, %v7141
    %v7146 = vmul.f32 %v7112, %v7142
    %v7147 = vmul.f32 %v7114, %v7143
    %v7148 = vmul.f32 %v7116, %v7144
    %v7149 = vpack.c.bf16 %v7145, %v7145
    %v7150 = vpack.c.bf16 %v7146, %v7146
    %v7151 = vpack.c.bf16 %v7147, %v7147
    %v7152 = vpack.c.bf16 %v7148, %v7148
    %v7157 = vunpack.c.l.b16 %v7149
    %v7158 = vunpack.c.l.b16 %v7150
    %v7159 = vunpack.c.l.b16 %v7151
    %v7160 = vunpack.c.l.b16 %v7152
    %v7161 = vrot.slane %v7157, 6
    %v7162 = vrot.slane %v7159, 5
    %v7163 = vsel %vm894, %v7162, %v7161
    %v7164 = vrot.slane %v7158, 6
    %v7165 = vrot.slane %v7160, 5
    %v7166 = vsel %vm894, %v7165, %v7164
    %v7167 = vpack.c.b16 %v7163, %v7163
    %v7168 = vpack.c.b16 %v7166, %v7166
    %7171 = vmatprep.subr.bf16.mxu0 %v1975
    %7172 = vmatpush1.bf16.msra.mxu0 %v1974
    %7173 = vmatprep.subr.bf16.mxu0 %v1983
    %7174 = vmatpush1.bf16.msra.mxu0 %v1982
    %7175 = vmatprep.subr.bf16.mxu0 %v1991
    %7176 = vmatpush1.bf16.msra.mxu0 %v1990
    %7177 = vmatprep.subr.bf16.mxu0 %v1999
    %7178 = vmatpush1.bf16.msra.mxu0 %v1998
    %7179 = vmatprep.subr.bf16.mxu0 %v2007
    %7180 = vmatpush1.bf16.msra.mxu0 %v2006
    %7181 = vmatprep.subr.bf16.mxu0 %v2015
    %7182 = vmatpush1.bf16.msra.mxu0 %v2014
    %7183 = vmatprep.subr.bf16.mxu0 %v2023
    %7184 = vmatpush1.bf16.msra.mxu0 %v2022
    %7185 = vmatprep.subr.bf16.mxu0 %v2031
    %7186 = vmatpush1.bf16.msra.mxu0 %v2030
    %7187 = vmatprep.subr.bf16.mxu0 %v2039
    %7188 = vmatpush1.bf16.msra.mxu0 %v2038
    %7189 = vmatprep.subr.bf16.mxu0 %v2047
    %7190 = vmatpush1.bf16.msra.mxu0 %v2046
    %7191 = vmatprep.subr.bf16.mxu0 %v2055
    %7192 = vmatpush1.bf16.msra.mxu0 %v2054
    %7193 = vmatprep.subr.bf16.mxu0 %v2063
    %7194 = vmatpush1.bf16.msra.mxu0 %v2062
    %7195 = vmatprep.subr.bf16.mxu0 %v2071
    %7196 = vmatpush1.bf16.msra.mxu0 %v2070
    %7197 = vmatprep.subr.bf16.mxu0 %v2079
    %7198 = vmatpush1.bf16.msra.mxu0 %v2078
    %7199 = vmatprep.subr.bf16.mxu0 %v2087
    %7200 = vmatpush1.bf16.msra.mxu0 %v2086
    %7201 = vmatprep.subr.bf16.mxu0 %v2095
    %7202 = vmatpush1.bf16.msra.mxu0 %v2094
    %7203 = vmatprep.mubr.bf16.mxu0 %v7168
    %7204 = vmatmul.mubr.bf16.gmra.mrb[0].mxu0 %v7167
    %v7205 = vpop.f32.mrb[0].mxu0
    %v7206 = vadd.f32 0.0, %v7205
    %v7207 = vpop.f32.mrb[0].mxu0
    %v7208 = vadd.f32 0.0, %v7207
    %v7209 = vpop.f32.mrb[0].mxu0
    %v7210 = vpop.f32.mrb[0].mxu0
    %7211 = vdwg.mxu0
    %7212 = vmatprep.subr.bf16.mxu0 %v1977
    %7213 = vmatpush1.bf16.msra.mxu0 %v1976
    %7214 = vmatprep.subr.bf16.mxu0 %v1985
    %7215 = vmatpush1.bf16.msra.mxu0 %v1984
    %7216 = vmatprep.subr.bf16.mxu0 %v1993
    %7217 = vmatpush1.bf16.msra.mxu0 %v1992
    %7218 = vmatprep.subr.bf16.mxu0 %v2001
    %7219 = vmatpush1.bf16.msra.mxu0 %v2000
    %7220 = vmatprep.subr.bf16.mxu0 %v2009
    %7221 = vmatpush1.bf16.msra.mxu0 %v2008
    %7222 = vmatprep.subr.bf16.mxu0 %v2017
    %7223 = vmatpush1.bf16.msra.mxu0 %v2016
    %7224 = vmatprep.subr.bf16.mxu0 %v2025
    %7225 = vmatpush1.bf16.msra.mxu0 %v2024
    %7226 = vmatprep.subr.bf16.mxu0 %v2033
    %7227 = vmatpush1.bf16.msra.mxu0 %v2032
    %7228 = vmatprep.subr.bf16.mxu0 %v2041
    %7229 = vmatpush1.bf16.msra.mxu0 %v2040
    %7230 = vmatprep.subr.bf16.mxu0 %v2049
    %7231 = vmatpush1.bf16.msra.mxu0 %v2048
    %7232 = vmatprep.subr.bf16.mxu0 %v2057
    %7233 = vmatpush1.bf16.msra.mxu0 %v2056
    %7234 = vmatprep.subr.bf16.mxu0 %v2065
    %7235 = vmatpush1.bf16.msra.mxu0 %v2064
    %7236 = vmatprep.subr.bf16.mxu0 %v2073
    %7237 = vmatpush1.bf16.msra.mxu0 %v2072
    %7238 = vmatprep.subr.bf16.mxu0 %v2081
    %7239 = vmatpush1.bf16.msra.mxu0 %v2080
    %7240 = vmatprep.subr.bf16.mxu0 %v2089
    %7241 = vmatpush1.bf16.msra.mxu0 %v2088
    %7242 = vmatprep.subr.bf16.mxu0 %v2097
    %7243 = vmatpush1.bf16.msra.mxu0 %v2096
    %7244 = vmatprep.mubr.bf16.mxu0 %v7168
    %7245 = vmatmul.mubr.bf16.gmra.mrb[0].mxu0 %v7167
    %v7246 = vpop.f32.mrb[0].mxu0
    %v7247 = vadd.f32 0.0, %v7246
    %v7248 = vpop.f32.mrb[0].mxu0
    %v7249 = vadd.f32 0.0, %v7248
    %v7250 = vpop.f32.mrb[0].mxu0
    %v7251 = vpop.f32.mrb[0].mxu0
    %7252 = vdwg.mxu0
    %7253 = vmatprep.subr.bf16.mxu0 %v1979
    %7254 = vmatpush1.bf16.msra.mxu0 %v1978
    %7255 = vmatprep.subr.bf16.mxu0 %v1987
    %7256 = vmatpush1.bf16.msra.mxu0 %v1986
    %7257 = vmatprep.subr.bf16.mxu0 %v1995
    %7258 = vmatpush1.bf16.msra.mxu0 %v1994
    %7259 = vmatprep.subr.bf16.mxu0 %v2003
    %7260 = vmatpush1.bf16.msra.mxu0 %v2002
    %7261 = vmatprep.subr.bf16.mxu0 %v2011
    %7262 = vmatpush1.bf16.msra.mxu0 %v2010
    %7263 = vmatprep.subr.bf16.mxu0 %v2019
    %7264 = vmatpush1.bf16.msra.mxu0 %v2018
    %7265 = vmatprep.subr.bf16.mxu0 %v2027
    %7266 = vmatpush1.bf16.msra.mxu0 %v2026
    %7267 = vmatprep.subr.bf16.mxu0 %v2035
    %7268 = vmatpush1.bf16.msra.mxu0 %v2034
    %7269 = vmatprep.subr.bf16.mxu0 %v2043
    %7270 = vmatpush1.bf16.msra.mxu0 %v2042
    %7271 = vmatprep.subr.bf16.mxu0 %v2051
    %7272 = vmatpush1.bf16.msra.mxu0 %v2050
    %7273 = vmatprep.subr.bf16.mxu0 %v2059
    %7274 = vmatpush1.bf16.msra.mxu0 %v2058
    %7275 = vmatprep.subr.bf16.mxu0 %v2067
    %7276 = vmatpush1.bf16.msra.mxu0 %v2066
    %7277 = vmatprep.subr.bf16.mxu0 %v2075
    %7278 = vmatpush1.bf16.msra.mxu0 %v2074
    %7279 = vmatprep.subr.bf16.mxu0 %v2083
    %7280 = vmatpush1.bf16.msra.mxu0 %v2082
    %7281 = vmatprep.subr.bf16.mxu0 %v2091
    %7282 = vmatpush1.bf16.msra.mxu0 %v2090
    %7283 = vmatprep.subr.bf16.mxu0 %v2099
    %7284 = vmatpush1.bf16.msra.mxu0 %v2098
    %7285 = vmatprep.mubr.bf16.mxu0 %v7168
    %7286 = vmatmul.mubr.bf16.gmra.mrb[0].mxu0 %v7167
    %v7287 = vpop.f32.mrb[0].mxu0
    %v7288 = vadd.f32 0.0, %v7287
    %v7289 = vpop.f32.mrb[0].mxu0
    %v7290 = vadd.f32 0.0, %v7289
    %v7291 = vpop.f32.mrb[0].mxu0
    %v7292 = vpop.f32.mrb[0].mxu0
    %7293 = vdwg.mxu0
    %7294 = vmatprep.subr.bf16.mxu0 %v1981
    %7295 = vmatpush1.bf16.msra.mxu0 %v1980
    %7296 = vmatprep.subr.bf16.mxu0 %v1989
    %7297 = vmatpush1.bf16.msra.mxu0 %v1988
    %7298 = vmatprep.subr.bf16.mxu0 %v1997
    %7299 = vmatpush1.bf16.msra.mxu0 %v1996
    %7300 = vmatprep.subr.bf16.mxu0 %v2005
    %7301 = vmatpush1.bf16.msra.mxu0 %v2004
    %7302 = vmatprep.subr.bf16.mxu0 %v2013
    %7303 = vmatpush1.bf16.msra.mxu0 %v2012
    %7304 = vmatprep.subr.bf16.mxu0 %v2021
    %7305 = vmatpush1.bf16.msra.mxu0 %v2020
    %7306 = vmatprep.subr.bf16.mxu0 %v2029
    %7307 = vmatpush1.bf16.msra.mxu0 %v2028
    %7308 = vmatprep.subr.bf16.mxu0 %v2037
    %7309 = vmatpush1.bf16.msra.mxu0 %v2036
    %7310 = vmatprep.subr.bf16.mxu0 %v2045
    %7311 = vmatpush1.bf16.msra.mxu0 %v2044
    %7312 = vmatprep.subr.bf16.mxu0 %v2053
    %7313 = vmatpush1.bf16.msra.mxu0 %v2052
    %7314 = vmatprep.subr.bf16.mxu0 %v2061
    %7315 = vmatpush1.bf16.msra.mxu0 %v2060
    %7316 = vmatprep.subr.bf16.mxu0 %v2069
    %7317 = vmatpush1.bf16.msra.mxu0 %v2068
    %7318 = vmatprep.subr.bf16.mxu0 %v2077
    %7319 = vmatpush1.bf16.msra.mxu0 %v2076
    %7320 = vmatprep.subr.bf16.mxu0 %v2085
    %7321 = vmatpush1.bf16.msra.mxu0 %v2084
    %7322 = vmatprep.subr.bf16.mxu0 %v2093
    %7323 = vmatpush1.bf16.msra.mxu0 %v2092
    %7324 = vmatprep.subr.bf16.mxu0 %v2101
    %7325 = vmatpush1.bf16.msra.mxu0 %v2100
    %7326 = vmatprep.mubr.bf16.mxu0 %v7168
    %7327 = vmatmul.mubr.bf16.gmra.mrb[0].mxu0 %v7167
    %v7328 = vpop.f32.mrb[0].mxu0
    %v7329 = vadd.f32 0.0, %v7328
    %v7330 = vpop.f32.mrb[0].mxu0
    %v7331 = vadd.f32 0.0, %v7330
    %v7332 = vpop.f32.mrb[0].mxu0
    %v7333 = vpop.f32.mrb[0].mxu0
    %7334 = vdwg.mxu0
    %v7335 = vadd.f32 %v6692, %v7206
    %v7336 = vadd.f32 %v6694, %v7208
    %v7337 = vadd.f32 %v6733, %v7247
    %v7338 = vadd.f32 %v6735, %v7249
    %v7339 = vadd.f32 %v6774, %v7288
    %v7340 = vadd.f32 %v6776, %v7290
    %v7341 = vadd.f32 %v6815, %v7329
    %v7342 = vadd.f32 %v6817, %v7331
    %v7343 = vxor.u32 %v7335, 2147483648
    %v7344 = vxor.u32 %v7336, 2147483648
    %v7345 = vmul.f32 %v7343, 1.442695
    %v7346 = vpow.pop %v7345
    %v7347 = vmul.f32 %v7344, 1.442695
    %v7348 = vpow.pop %v7347
    %v7349 = vadd.f32 %v7346, 1.0
    %v7350 = vadd.f32 %v7348, 1.0
    %v7351 = vrcp.pop %v7349
    %v7352 = vmul.f32 1.0, %v7351
    %v7353 = vrcp.pop %v7350
    %v7354 = vmul.f32 1.0, %v7353
    %v7355 = vxor.u32 %v7337, 2147483648
    %v7356 = vxor.u32 %v7338, 2147483648
    %v7357 = vmul.f32 %v7355, 1.442695
    %v7358 = vpow.pop %v7357
    %v7359 = vmul.f32 %v7356, 1.442695
    %v7360 = vpow.pop %v7359
    %v7361 = vadd.f32 %v7358, 1.0
    %v7362 = vadd.f32 %v7360, 1.0
    %v7363 = vrcp.pop %v7361
    %v7364 = vmul.f32 1.0, %v7363
    %v7365 = vrcp.pop %v7362
    %v7366 = vmul.f32 1.0, %v7365
    %v7367 = vtanh.pop %v7339
    %v7368 = vtanh.pop %v7340
    %v7369 = vxor.u32 %v7341, 2147483648
    %v7370 = vxor.u32 %v7342, 2147483648
    %v7371 = vmul.f32 %v7369, 1.442695
    %v7372 = vpow.pop %v7371
    %v7373 = vmul.f32 %v7370, 1.442695
    %v7374 = vpow.pop %v7373
    %v7375 = vadd.f32 %v7372, 1.0
    %v7376 = vadd.f32 %v7374, 1.0
    %v7377 = vrcp.pop %v7375
    %v7378 = vmul.f32 1.0, %v7377
    %v7379 = vrcp.pop %v7376
    %v7380 = vmul.f32 1.0, %v7379
    %v7381 = vmul.f32 %v7364, %v6649
    %v7382 = vmul.f32 %v7366, %v6650
    %v7383 = vmul.f32 %v7352, %v7367
    %v7384 = vmul.f32 %v7354, %v7368
    %v7385 = vadd.f32 %v7381, %v7383
    %v7386 = vadd.f32 %v7382, %v7384
    %v7387 = vtanh.pop %v7385
    %v7388 = vtanh.pop %v7386
    %v7389 = vmul.f32 %v7378, %v7387
    %v7390 = vmul.f32 %v7380, %v7388
    %v7391 = vpack.c.bf16 %v7389, %v7389
    %v7392 = vpack.c.bf16 %v7390, %v7390
    %7393 = vmatprep.subr.bf16.mxu0 %v2104
    %7394 = vmatpush1.bf16.msra.mxu0 %v2103
    %7395 = vmatprep.subr.bf16.mxu0 %v2112
    %7396 = vmatpush1.bf16.msra.mxu0 %v2111
    %7397 = vmatprep.subr.bf16.mxu0 %v2120
    %7398 = vmatpush1.bf16.msra.mxu0 %v2119
    %7399 = vmatprep.subr.bf16.mxu0 %v2128
    %7400 = vmatpush1.bf16.msra.mxu0 %v2127
    %7401 = vmatprep.subr.bf16.mxu0 %v2136
    %7402 = vmatpush1.bf16.msra.mxu0 %v2135
    %7403 = vmatprep.subr.bf16.mxu0 %v2144
    %7404 = vmatpush1.bf16.msra.mxu0 %v2143
    %7405 = vmatprep.subr.bf16.mxu0 %v2152
    %7406 = vmatpush1.bf16.msra.mxu0 %v2151
    %7407 = vmatprep.subr.bf16.mxu0 %v2160
    %7408 = vmatpush1.bf16.msra.mxu0 %v2159
    %7409 = vmatprep.subr.bf16.mxu0 %v2168
    %7410 = vmatpush1.bf16.msra.mxu0 %v2167
    %7411 = vmatprep.subr.bf16.mxu0 %v2176
    %7412 = vmatpush1.bf16.msra.mxu0 %v2175
    %7413 = vmatprep.subr.bf16.mxu0 %v2184
    %7414 = vmatpush1.bf16.msra.mxu0 %v2183
    %7415 = vmatprep.subr.bf16.mxu0 %v2192
    %7416 = vmatpush1.bf16.msra.mxu0 %v2191
    %7417 = vmatprep.subr.bf16.mxu0 %v2200
    %7418 = vmatpush1.bf16.msra.mxu0 %v2199
    %7419 = vmatprep.subr.bf16.mxu0 %v2208
    %7420 = vmatpush1.bf16.msra.mxu0 %v2207
    %7421 = vmatprep.subr.bf16.mxu0 %v2216
    %7422 = vmatpush1.bf16.msra.mxu0 %v2215
    %7423 = vmatprep.subr.bf16.mxu0 %v2224
    %7424 = vmatpush1.bf16.msra.mxu0 %v2223
    %7425 = vmatprep.mubr.bf16.mxu0 %v7392
    %7426 = vmatmul.mubr.bf16.gmra.mrb[0].mxu0 %v7391
    %v7427 = vpop.f32.mrb[0].mxu0
    %v7428 = vadd.f32 %v2236, %v7427
    %v7429 = vpop.f32.mrb[0].mxu0
    %v7430 = vadd.f32 %v2240, %v7429
    %v7431 = vpop.f32.mrb[0].mxu0
    %v7432 = vpop.f32.mrb[0].mxu0
    %7433 = vdwg.mxu0
    %7434 = vmatprep.subr.bf16.mxu0 %v2106
    %7435 = vmatpush1.bf16.msra.mxu0 %v2105
    %7436 = vmatprep.subr.bf16.mxu0 %v2114
    %7437 = vmatpush1.bf16.msra.mxu0 %v2113
    %7438 = vmatprep.subr.bf16.mxu0 %v2122
    %7439 = vmatpush1.bf16.msra.mxu0 %v2121
    %7440 = vmatprep.subr.bf16.mxu0 %v2130
    %7441 = vmatpush1.bf16.msra.mxu0 %v2129
    %7442 = vmatprep.subr.bf16.mxu0 %v2138
    %7443 = vmatpush1.bf16.msra.mxu0 %v2137
    %7444 = vmatprep.subr.bf16.mxu0 %v2146
    %7445 = vmatpush1.bf16.msra.mxu0 %v2145
    %7446 = vmatprep.subr.bf16.mxu0 %v2154
    %7447 = vmatpush1.bf16.msra.mxu0 %v2153
    %7448 = vmatprep.subr.bf16.mxu0 %v2162
    %7449 = vmatpush1.bf16.msra.mxu0 %v2161
    %7450 = vmatprep.subr.bf16.mxu0 %v2170
    %7451 = vmatpush1.bf16.msra.mxu0 %v2169
    %7452 = vmatprep.subr.bf16.mxu0 %v2178
    %7453 = vmatpush1.bf16.msra.mxu0 %v2177
    %7454 = vmatprep.subr.bf16.mxu0 %v2186
    %7455 = vmatpush1.bf16.msra.mxu0 %v2185
    %7456 = vmatprep.subr.bf16.mxu0 %v2194
    %7457 = vmatpush1.bf16.msra.mxu0 %v2193
    %7458 = vmatprep.subr.bf16.mxu0 %v2202
    %7459 = vmatpush1.bf16.msra.mxu0 %v2201
    %7460 = vmatprep.subr.bf16.mxu0 %v2210
    %7461 = vmatpush1.bf16.msra.mxu0 %v2209
    %7462 = vmatprep.subr.bf16.mxu0 %v2218
    %7463 = vmatpush1.bf16.msra.mxu0 %v2217
    %7464 = vmatprep.subr.bf16.mxu0 %v2226
    %7465 = vmatpush1.bf16.msra.mxu0 %v2225
    %7466 = vmatprep.mubr.bf16.mxu0 %v7392
    %7467 = vmatmul.mubr.bf16.gmra.mrb[0].mxu0 %v7391
    %v7468 = vpop.f32.mrb[0].mxu0
    %v7469 = vadd.f32 %v2244, %v7468
    %v7470 = vpop.f32.mrb[0].mxu0
    %v7471 = vadd.f32 %v2248, %v7470
    %v7472 = vpop.f32.mrb[0].mxu0
    %v7473 = vpop.f32.mrb[0].mxu0
    %7474 = vdwg.mxu0
    %7475 = vmatprep.subr.bf16.mxu0 %v2108
    %7476 = vmatpush1.bf16.msra.mxu0 %v2107
    %7477 = vmatprep.subr.bf16.mxu0 %v2116
    %7478 = vmatpush1.bf16.msra.mxu0 %v2115
    %7479 = vmatprep.subr.bf16.mxu0 %v2124
    %7480 = vmatpush1.bf16.msra.mxu0 %v2123
    %7481 = vmatprep.subr.bf16.mxu0 %v2132
    %7482 = vmatpush1.bf16.msra.mxu0 %v2131
    %7483 = vmatprep.subr.bf16.mxu0 %v2140
    %7484 = vmatpush1.bf16.msra.mxu0 %v2139
    %7485 = vmatprep.subr.bf16.mxu0 %v2148
    %7486 = vmatpush1.bf16.msra.mxu0 %v2147
    %7487 = vmatprep.subr.bf16.mxu0 %v2156
    %7488 = vmatpush1.bf16.msra.mxu0 %v2155
    %7489 = vmatprep.subr.bf16.mxu0 %v2164
    %7490 = vmatpush1.bf16.msra.mxu0 %v2163
    %7491 = vmatprep.subr.bf16.mxu0 %v2172
    %7492 = vmatpush1.bf16.msra.mxu0 %v2171
    %7493 = vmatprep.subr.bf16.mxu0 %v2180
    %7494 = vmatpush1.bf16.msra.mxu0 %v2179
    %7495 = vmatprep.subr.bf16.mxu0 %v2188
    %7496 = vmatpush1.bf16.msra.mxu0 %v2187
    %7497 = vmatprep.subr.bf16.mxu0 %v2196
    %7498 = vmatpush1.bf16.msra.mxu0 %v2195
    %7499 = vmatprep.subr.bf16.mxu0 %v2204
    %7500 = vmatpush1.bf16.msra.mxu0 %v2203
    %7501 = vmatprep.subr.bf16.mxu0 %v2212
    %7502 = vmatpush1.bf16.msra.mxu0 %v2211
    %7503 = vmatprep.subr.bf16.mxu0 %v2220
    %7504 = vmatpush1.bf16.msra.mxu0 %v2219
    %7505 = vmatprep.subr.bf16.mxu0 %v2228
    %7506 = vmatpush1.bf16.msra.mxu0 %v2227
    %7507 = vmatprep.mubr.bf16.mxu0 %v7392
    %7508 = vmatmul.mubr.bf16.gmra.mrb[0].mxu0 %v7391
    %v7509 = vpop.f32.mrb[0].mxu0
    %v7510 = vadd.f32 %v2252, %v7509
    %v7511 = vpop.f32.mrb[0].mxu0
    %v7512 = vadd.f32 %v2256, %v7511
    %v7513 = vpop.f32.mrb[0].mxu0
    %v7514 = vpop.f32.mrb[0].mxu0
    %7515 = vdwg.mxu0
    %7516 = vmatprep.subr.bf16.mxu0 %v2110
    %7517 = vmatpush1.bf16.msra.mxu0 %v2109
    %7518 = vmatprep.subr.bf16.mxu0 %v2118
    %7519 = vmatpush1.bf16.msra.mxu0 %v2117
    %7520 = vmatprep.subr.bf16.mxu0 %v2126
    %7521 = vmatpush1.bf16.msra.mxu0 %v2125
    %7522 = vmatprep.subr.bf16.mxu0 %v2134
    %7523 = vmatpush1.bf16.msra.mxu0 %v2133
    %7524 = vmatprep.subr.bf16.mxu0 %v2142
    %7525 = vmatpush1.bf16.msra.mxu0 %v2141
    %7526 = vmatprep.subr.bf16.mxu0 %v2150
    %7527 = vmatpush1.bf16.msra.mxu0 %v2149
    %7528 = vmatprep.subr.bf16.mxu0 %v2158
    %7529 = vmatpush1.bf16.msra.mxu0 %v2157
    %7530 = vmatprep.subr.bf16.mxu0 %v2166
    %7531 = vmatpush1.bf16.msra.mxu0 %v2165
    %7532 = vmatprep.subr.bf16.mxu0 %v2174
    %7533 = vmatpush1.bf16.msra.mxu0 %v2173
    %7534 = vmatprep.subr.bf16.mxu0 %v2182
    %7535 = vmatpush1.bf16.msra.mxu0 %v2181
    %7536 = vmatprep.subr.bf16.mxu0 %v2190
    %7537 = vmatpush1.bf16.msra.mxu0 %v2189
    %7538 = vmatprep.subr.bf16.mxu0 %v2198
    %7539 = vmatpush1.bf16.msra.mxu0 %v2197
    %7540 = vmatprep.subr.bf16.mxu0 %v2206
    %7541 = vmatpush1.bf16.msra.mxu0 %v2205
    %7542 = vmatprep.subr.bf16.mxu0 %v2214
    %7543 = vmatpush1.bf16.msra.mxu0 %v2213
    %7544 = vmatprep.subr.bf16.mxu0 %v2222
    %7545 = vmatpush1.bf16.msra.mxu0 %v2221
    %7546 = vmatprep.subr.bf16.mxu0 %v2230
    %7547 = vmatpush1.bf16.msra.mxu0 %v2229
    %7548 = vmatprep.mubr.bf16.mxu0 %v7392
    %7549 = vmatmul.mubr.bf16.gmra.mrb[0].mxu0 %v7391
    %v7550 = vpop.f32.mrb[0].mxu0
    %v7551 = vadd.f32 %v2260, %v7550
    %v7552 = vpop.f32.mrb[0].mxu0
    %v7553 = vadd.f32 %v2264, %v7552
    %v7554 = vpop.f32.mrb[0].mxu0
    %v7555 = vpop.f32.mrb[0].mxu0
    %7556 = vdwg.mxu0
    %7557 = vmatprep.subr.bf16.mxu0 %v1846
    %7558 = vmatpush1.bf16.msra.mxu0 %v1845
    %7559 = vmatprep.subr.bf16.mxu0 %v1854
    %7560 = vmatpush1.bf16.msra.mxu0 %v1853
    %7561 = vmatprep.subr.bf16.mxu0 %v1862
    %7562 = vmatpush1.bf16.msra.mxu0 %v1861
    %7563 = vmatprep.subr.bf16.mxu0 %v1870
    %7564 = vmatpush1.bf16.msra.mxu0 %v1869
    %7565 = vmatprep.subr.bf16.mxu0 %v1878
    %7566 = vmatpush1.bf16.msra.mxu0 %v1877
    %7567 = vmatprep.subr.bf16.mxu0 %v1886
    %7568 = vmatpush1.bf16.msra.mxu0 %v1885
    %7569 = vmatprep.subr.bf16.mxu0 %v1894
    %7570 = vmatpush1.bf16.msra.mxu0 %v1893
    %7571 = vmatprep.subr.bf16.mxu0 %v1902
    %7572 = vmatpush1.bf16.msra.mxu0 %v1901
    %7573 = vmatprep.subr.bf16.mxu0 %v1910
    %7574 = vmatpush1.bf16.msra.mxu0 %v1909
    %7575 = vmatprep.subr.bf16.mxu0 %v1918
    %7576 = vmatpush1.bf16.msra.mxu0 %v1917
    %7577 = vmatprep.subr.bf16.mxu0 %v1926
    %7578 = vmatpush1.bf16.msra.mxu0 %v1925
    %7579 = vmatprep.subr.bf16.mxu0 %v1934
    %7580 = vmatpush1.bf16.msra.mxu0 %v1933
    %7581 = vmatprep.subr.bf16.mxu0 %v1942
    %7582 = vmatpush1.bf16.msra.mxu0 %v1941
    %7583 = vmatprep.subr.bf16.mxu0 %v1950
    %7584 = vmatpush1.bf16.msra.mxu0 %v1949
    %7585 = vmatprep.subr.bf16.mxu0 %v1958
    %7586 = vmatpush1.bf16.msra.mxu0 %v1957
    %7587 = vmatprep.subr.bf16.mxu0 %v1966
    %7588 = vmatpush1.bf16.msra.mxu0 %v1965
    %7589 = vmatprep.mubr.bf16.mxu0 %v7168
    %7590 = vmatmul.mubr.bf16.gmra.mrb[0].mxu0 %v7167
    %v7591 = vpop.f32.mrb[0].mxu0
    %v7592 = vadd.f32 0.0, %v7591
    %v7593 = vpop.f32.mrb[0].mxu0
    %v7594 = vadd.f32 0.0, %v7593
    %v7595 = vpop.f32.mrb[0].mxu0
    %v7596 = vpop.f32.mrb[0].mxu0
    %7597 = vdwg.mxu0
    %7598 = vmatprep.subr.bf16.mxu0 %v1848
    %7599 = vmatpush1.bf16.msra.mxu0 %v1847
    %7600 = vmatprep.subr.bf16.mxu0 %v1856
    %7601 = vmatpush1.bf16.msra.mxu0 %v1855
    %7602 = vmatprep.subr.bf16.mxu0 %v1864
    %7603 = vmatpush1.bf16.msra.mxu0 %v1863
    %7604 = vmatprep.subr.bf16.mxu0 %v1872
    %7605 = vmatpush1.bf16.msra.mxu0 %v1871
    %7606 = vmatprep.subr.bf16.mxu0 %v1880
    %7607 = vmatpush1.bf16.msra.mxu0 %v1879
    %7608 = vmatprep.subr.bf16.mxu0 %v1888
    %7609 = vmatpush1.bf16.msra.mxu0 %v1887
    %7610 = vmatprep.subr.bf16.mxu0 %v1896
    %7611 = vmatpush1.bf16.msra.mxu0 %v1895
    %7612 = vmatprep.subr.bf16.mxu0 %v1904
    %7613 = vmatpush1.bf16.msra.mxu0 %v1903
    %7614 = vmatprep.subr.bf16.mxu0 %v1912
    %7615 = vmatpush1.bf16.msra.mxu0 %v1911
    %7616 = vmatprep.subr.bf16.mxu0 %v1920
    %7617 = vmatpush1.bf16.msra.mxu0 %v1919
    %7618 = vmatprep.subr.bf16.mxu0 %v1928
    %7619 = vmatpush1.bf16.msra.mxu0 %v1927
    %7620 = vmatprep.subr.bf16.mxu0 %v1936
    %7621 = vmatpush1.bf16.msra.mxu0 %v1935
    %7622 = vmatprep.subr.bf16.mxu0 %v1944
    %7623 = vmatpush1.bf16.msra.mxu0 %v1943
    %7624 = vmatprep.subr.bf16.mxu0 %v1952
    %7625 = vmatpush1.bf16.msra.mxu0 %v1951
    %7626 = vmatprep.subr.bf16.mxu0 %v1960
    %7627 = vmatpush1.bf16.msra.mxu0 %v1959
    %7628 = vmatprep.subr.bf16.mxu0 %v1968
    %7629 = vmatpush1.bf16.msra.mxu0 %v1967
    %7630 = vmatprep.mubr.bf16.mxu0 %v7168
    %7631 = vmatmul.mubr.bf16.gmra.mrb[0].mxu0 %v7167
    %v7632 = vpop.f32.mrb[0].mxu0
    %v7633 = vadd.f32 0.0, %v7632
    %v7634 = vpop.f32.mrb[0].mxu0
    %v7635 = vadd.f32 0.0, %v7634
    %v7636 = vpop.f32.mrb[0].mxu0
    %v7637 = vpop.f32.mrb[0].mxu0
    %7638 = vdwg.mxu0
    %7639 = vmatprep.subr.bf16.mxu0 %v1850
    %7640 = vmatpush1.bf16.msra.mxu0 %v1849
    %7641 = vmatprep.subr.bf16.mxu0 %v1858
    %7642 = vmatpush1.bf16.msra.mxu0 %v1857
    %7643 = vmatprep.subr.bf16.mxu0 %v1866
    %7644 = vmatpush1.bf16.msra.mxu0 %v1865
    %7645 = vmatprep.subr.bf16.mxu0 %v1874
    %7646 = vmatpush1.bf16.msra.mxu0 %v1873
    %7647 = vmatprep.subr.bf16.mxu0 %v1882
    %7648 = vmatpush1.bf16.msra.mxu0 %v1881
    %7649 = vmatprep.subr.bf16.mxu0 %v1890
    %7650 = vmatpush1.bf16.msra.mxu0 %v1889
    %7651 = vmatprep.subr.bf16.mxu0 %v1898
    %7652 = vmatpush1.bf16.msra.mxu0 %v1897
    %7653 = vmatprep.subr.bf16.mxu0 %v1906
    %7654 = vmatpush1.bf16.msra.mxu0 %v1905
    %7655 = vmatprep.subr.bf16.mxu0 %v1914
    %7656 = vmatpush1.bf16.msra.mxu0 %v1913
    %7657 = vmatprep.subr.bf16.mxu0 %v1922
    %7658 = vmatpush1.bf16.msra.mxu0 %v1921
    %7659 = vmatprep.subr.bf16.mxu0 %v1930
    %7660 = vmatpush1.bf16.msra.mxu0 %v1929
    %7661 = vmatprep.subr.bf16.mxu0 %v1938
    %7662 = vmatpush1.bf16.msra.mxu0 %v1937
    %7663 = vmatprep.subr.bf16.mxu0 %v1946
    %7664 = vmatpush1.bf16.msra.mxu0 %v1945
    %7665 = vmatprep.subr.bf16.mxu0 %v1954
    %7666 = vmatpush1.bf16.msra.mxu0 %v1953
    %7667 = vmatprep.subr.bf16.mxu0 %v1962
    %7668 = vmatpush1.bf16.msra.mxu0 %v1961
    %7669 = vmatprep.subr.bf16.mxu0 %v1970
    %7670 = vmatpush1.bf16.msra.mxu0 %v1969
    %7671 = vmatprep.mubr.bf16.mxu0 %v7168
    %7672 = vmatmul.mubr.bf16.gmra.mrb[0].mxu0 %v7167
    %v7673 = vpop.f32.mrb[0].mxu0
    %v7674 = vadd.f32 0.0, %v7673
    %v7675 = vpop.f32.mrb[0].mxu0
    %v7676 = vadd.f32 0.0, %v7675
    %v7677 = vpop.f32.mrb[0].mxu0
    %v7678 = vpop.f32.mrb[0].mxu0
    %7679 = vdwg.mxu0
    %7680 = vmatprep.subr.bf16.mxu0 %v1852
    %7681 = vmatpush1.bf16.msra.mxu0 %v1851
    %7682 = vmatprep.subr.bf16.mxu0 %v1860
    %7683 = vmatpush1.bf16.msra.mxu0 %v1859
    %7684 = vmatprep.subr.bf16.mxu0 %v1868
    %7685 = vmatpush1.bf16.msra.mxu0 %v1867
    %7686 = vmatprep.subr.bf16.mxu0 %v1876
    %7687 = vmatpush1.bf16.msra.mxu0 %v1875
    %7688 = vmatprep.subr.bf16.mxu0 %v1884
    %7689 = vmatpush1.bf16.msra.mxu0 %v1883
    %7690 = vmatprep.subr.bf16.mxu0 %v1892
    %7691 = vmatpush1.bf16.msra.mxu0 %v1891
    %7692 = vmatprep.subr.bf16.mxu0 %v1900
    %7693 = vmatpush1.bf16.msra.mxu0 %v1899
    %7694 = vmatprep.subr.bf16.mxu0 %v1908
    %7695 = vmatpush1.bf16.msra.mxu0 %v1907
    %7696 = vmatprep.subr.bf16.mxu0 %v1916
    %7697 = vmatpush1.bf16.msra.mxu0 %v1915
    %7698 = vmatprep.subr.bf16.mxu0 %v1924
    %7699 = vmatpush1.bf16.msra.mxu0 %v1923
    %7700 = vmatprep.subr.bf16.mxu0 %v1932
    %7701 = vmatpush1.bf16.msra.mxu0 %v1931
    %7702 = vmatprep.subr.bf16.mxu0 %v1940
    %7703 = vmatpush1.bf16.msra.mxu0 %v1939
    %7704 = vmatprep.subr.bf16.mxu0 %v1948
    %7705 = vmatpush1.bf16.msra.mxu0 %v1947
    %7706 = vmatprep.subr.bf16.mxu0 %v1956
    %7707 = vmatpush1.bf16.msra.mxu0 %v1955
    %7708 = vmatprep.subr.bf16.mxu0 %v1964
    %7709 = vmatpush1.bf16.msra.mxu0 %v1963
    %7710 = vmatprep.subr.bf16.mxu0 %v1972
    %7711 = vmatpush1.bf16.msra.mxu0 %v1971
    %7712 = vmatprep.mubr.bf16.mxu0 %v7168
    %7713 = vmatmul.mubr.bf16.gmra.mrb[0].mxu0 %v7167
    %v7714 = vpop.f32.mrb[0].mxu0
    %v7715 = vadd.f32 0.0, %v7714
    %v7716 = vpop.f32.mrb[0].mxu0
    %v7717 = vadd.f32 0.0, %v7716
    %v7718 = vpop.f32.mrb[0].mxu0
    %v7719 = vpop.f32.mrb[0].mxu0
    %7720 = vdwg.mxu0
    %v7729 = vrot.slane %v7592, 1
    %v7730 = vrot.slane %v7594, 1
    %v7731 = vrot.slane %v7633, 1
    %v7732 = vrot.slane %v7635, 1
    %v7733 = vrot.slane %v7674, 1
    %v7734 = vrot.slane %v7676, 1
    %v7735 = vrot.slane %v7715, 1
    %v7736 = vrot.slane %v7717, 1
    %v7737 = vrot.slane %v7592, 2
    %v7738 = vrot.slane %v7594, 2
    %v7739 = vrot.slane %v7633, 2
    %v7740 = vrot.slane %v7635, 2
    %v7741 = vrot.slane %v7674, 2
    %v7742 = vrot.slane %v7676, 2
    %v7743 = vrot.slane %v7715, 2
    %v7744 = vrot.slane %v7717, 2
    %v7761 = vadd.f32 %v1703, %v7729
    %v7762 = vadd.f32 %v1705, %v7730
    %v7763 = vadd.f32 %v1746, %v7731
    %v7764 = vadd.f32 %v1748, %v7732
    %v7765 = vadd.f32 %v1789, %v7733
    %v7766 = vadd.f32 %v1791, %v7734
    %v7767 = vadd.f32 %v1832, %v7735
    %v7768 = vadd.f32 %v1834, %v7736
    %v7769 = vadd.f32 %v1707, %v7737
    %v7770 = vadd.f32 %v1709, %v7738
    %v7771 = vadd.f32 %v1750, %v7739
    %v7772 = vadd.f32 %v1752, %v7740
    %v7773 = vadd.f32 %v1793, %v7741
    %v7774 = vadd.f32 %v1795, %v7742
    %v7775 = vadd.f32 %v1836, %v7743
    %v7776 = vadd.f32 %v1838, %v7744
    %v7777 = vxor.u32 %v7761, 2147483648
    %v7778 = vxor.u32 %v7762, 2147483648
    %v7779 = vxor.u32 %v7769, 2147483648
    %v7780 = vxor.u32 %v7770, 2147483648
    %v7781 = vmul.f32 %v7777, 1.442695
    %v7782 = vpow.pop %v7781
    %v7783 = vmul.f32 %v7778, 1.442695
    %v7784 = vpow.pop %v7783
    %v7785 = vmul.f32 %v7779, 1.442695
    %v7786 = vpow.pop %v7785
    %v7787 = vmul.f32 %v7780, 1.442695
    %v7788 = vpow.pop %v7787
    %v7789 = vadd.f32 %v7782, 1.0
    %v7790 = vadd.f32 %v7784, 1.0
    %v7791 = vadd.f32 %v7786, 1.0
    %v7792 = vadd.f32 %v7788, 1.0
    %v7793 = vrcp.pop %v7789
    %v7794 = vmul.f32 1.0, %v7793
    %v7795 = vrcp.pop %v7790
    %v7796 = vmul.f32 1.0, %v7795
    %v7797 = vrcp.pop %v7791
    %v7798 = vmul.f32 1.0, %v7797
    %v7799 = vrcp.pop %v7792
    %v7800 = vmul.f32 1.0, %v7799
    %v7801 = vxor.u32 %v7763, 2147483648
    %v7802 = vxor.u32 %v7764, 2147483648
    %v7803 = vxor.u32 %v7771, 2147483648
    %v7804 = vxor.u32 %v7772, 2147483648
    %v7805 = vmul.f32 %v7801, 1.442695
    %v7806 = vpow.pop %v7805
    %v7807 = vmul.f32 %v7802, 1.442695
    %v7808 = vpow.pop %v7807
    %v7809 = vmul.f32 %v7803, 1.442695
    %v7810 = vpow.pop %v7809
    %v7811 = vmul.f32 %v7804, 1.442695
    %v7812 = vpow.pop %v7811
    %v7813 = vadd.f32 %v7806, 1.0
    %v7814 = vadd.f32 %v7808, 1.0
    %v7815 = vadd.f32 %v7810, 1.0
    %v7816 = vadd.f32 %v7812, 1.0
    %v7817 = vrcp.pop %v7813
    %v7818 = vmul.f32 1.0, %v7817
    %v7819 = vrcp.pop %v7814
    %v7820 = vmul.f32 1.0, %v7819
    %v7821 = vrcp.pop %v7815
    %v7822 = vmul.f32 1.0, %v7821
    %v7823 = vrcp.pop %v7816
    %v7824 = vmul.f32 1.0, %v7823
    %v7825 = vtanh.pop %v7765
    %v7826 = vtanh.pop %v7766
    %v7827 = vtanh.pop %v7773
    %v7828 = vtanh.pop %v7774
    %v7829 = vxor.u32 %v7767, 2147483648
    %v7830 = vxor.u32 %v7768, 2147483648
    %v7831 = vxor.u32 %v7775, 2147483648
    %v7832 = vxor.u32 %v7776, 2147483648
    %v7833 = vmul.f32 %v7829, 1.442695
    %v7834 = vpow.pop %v7833
    %v7835 = vmul.f32 %v7830, 1.442695
    %v7836 = vpow.pop %v7835
    %v7837 = vmul.f32 %v7831, 1.442695
    %v7838 = vpow.pop %v7837
    %v7839 = vmul.f32 %v7832, 1.442695
    %v7840 = vpow.pop %v7839
    %v7841 = vadd.f32 %v7834, 1.0
    %v7842 = vadd.f32 %v7836, 1.0
    %v7843 = vadd.f32 %v7838, 1.0
    %v7844 = vadd.f32 %v7840, 1.0
    %v7845 = vrcp.pop %v7841
    %v7846 = vmul.f32 1.0, %v7845
    %v7847 = vrcp.pop %v7842
    %v7848 = vmul.f32 1.0, %v7847
    %v7849 = vrcp.pop %v7843
    %v7850 = vmul.f32 1.0, %v7849
    %v7851 = vrcp.pop %v7844
    %v7852 = vmul.f32 1.0, %v7851
    %v7857 = vrot.slane %v7137, 7
    %v7858 = vrot.slane %v7138, 7
    %v7859 = vrot.slane %v7139, 7
    %v7860 = vrot.slane %v7140, 7
    %v7865 = vmul.f32 %v7818, %v7857
    %v7866 = vmul.f32 %v7820, %v7858
    %v7867 = vmul.f32 %v7822, %v7859
    %v7868 = vmul.f32 %v7824, %v7860
    %v7869 = vmul.f32 %v7794, %v7825
    %v7870 = vmul.f32 %v7796, %v7826
    %v7871 = vmul.f32 %v7798, %v7827
    %v7872 = vmul.f32 %v7800, %v7828
    %v7873 = vadd.f32 %v7865, %v7869
    %v7874 = vadd.f32 %v7866, %v7870
    %v7875 = vadd.f32 %v7867, %v7871
    %v7876 = vadd.f32 %v7868, %v7872
    %v7877 = vtanh.pop %v7873
    %v7878 = vtanh.pop %v7874
    %v7879 = vtanh.pop %v7875
    %v7880 = vtanh.pop %v7876
    %v7881 = vmul.f32 %v7846, %v7877
    %v7882 = vmul.f32 %v7848, %v7878
    %v7883 = vmul.f32 %v7850, %v7879
    %v7884 = vmul.f32 %v7852, %v7880
    %v7885 = vpack.c.bf16 %v7881, %v7881
    %v7886 = vpack.c.bf16 %v7882, %v7882
    %v7887 = vpack.c.bf16 %v7883, %v7883
    %v7888 = vpack.c.bf16 %v7884, %v7884
    %v7893 = vunpack.c.l.b16 %v7885
    %v7894 = vunpack.c.l.b16 %v7886
    %v7895 = vunpack.c.l.b16 %v7887
    %v7896 = vunpack.c.l.b16 %v7888
    %v7897 = vrot.slane %v7893, 7
    %v7898 = vrot.slane %v7895, 6
    %v7899 = vsel %vm894, %v7898, %v7897
    %v7900 = vrot.slane %v7894, 7
    %v7901 = vrot.slane %v7896, 6
    %v7902 = vsel %vm894, %v7901, %v7900
    %v7903 = vpack.c.b16 %v7899, %v7899
    %v7904 = vpack.c.b16 %v7902, %v7902
    %7907 = vmatprep.subr.bf16.mxu0 %v1975
    %7908 = vmatpush1.bf16.msra.mxu0 %v1974
    %7909 = vmatprep.subr.bf16.mxu0 %v1983
    %7910 = vmatpush1.bf16.msra.mxu0 %v1982
    %7911 = vmatprep.subr.bf16.mxu0 %v1991
    %7912 = vmatpush1.bf16.msra.mxu0 %v1990
    %7913 = vmatprep.subr.bf16.mxu0 %v1999
    %7914 = vmatpush1.bf16.msra.mxu0 %v1998
    %7915 = vmatprep.subr.bf16.mxu0 %v2007
    %7916 = vmatpush1.bf16.msra.mxu0 %v2006
    %7917 = vmatprep.subr.bf16.mxu0 %v2015
    %7918 = vmatpush1.bf16.msra.mxu0 %v2014
    %7919 = vmatprep.subr.bf16.mxu0 %v2023
    %7920 = vmatpush1.bf16.msra.mxu0 %v2022
    %7921 = vmatprep.subr.bf16.mxu0 %v2031
    %7922 = vmatpush1.bf16.msra.mxu0 %v2030
    %7923 = vmatprep.subr.bf16.mxu0 %v2039
    %7924 = vmatpush1.bf16.msra.mxu0 %v2038
    %7925 = vmatprep.subr.bf16.mxu0 %v2047
    %7926 = vmatpush1.bf16.msra.mxu0 %v2046
    %7927 = vmatprep.subr.bf16.mxu0 %v2055
    %7928 = vmatpush1.bf16.msra.mxu0 %v2054
    %7929 = vmatprep.subr.bf16.mxu0 %v2063
    %7930 = vmatpush1.bf16.msra.mxu0 %v2062
    %7931 = vmatprep.subr.bf16.mxu0 %v2071
    %7932 = vmatpush1.bf16.msra.mxu0 %v2070
    %7933 = vmatprep.subr.bf16.mxu0 %v2079
    %7934 = vmatpush1.bf16.msra.mxu0 %v2078
    %7935 = vmatprep.subr.bf16.mxu0 %v2087
    %7936 = vmatpush1.bf16.msra.mxu0 %v2086
    %7937 = vmatprep.subr.bf16.mxu0 %v2095
    %7938 = vmatpush1.bf16.msra.mxu0 %v2094
    %7939 = vmatprep.mubr.bf16.mxu0 %v7904
    %7940 = vmatmul.mubr.bf16.gmra.mrb[0].mxu0 %v7903
    %v7941 = vpop.f32.mrb[0].mxu0
    %v7942 = vadd.f32 0.0, %v7941
    %v7943 = vpop.f32.mrb[0].mxu0
    %v7944 = vadd.f32 0.0, %v7943
    %v7945 = vpop.f32.mrb[0].mxu0
    %v7946 = vpop.f32.mrb[0].mxu0
    %7947 = vdwg.mxu0
    %7948 = vmatprep.subr.bf16.mxu0 %v1977
    %7949 = vmatpush1.bf16.msra.mxu0 %v1976
    %7950 = vmatprep.subr.bf16.mxu0 %v1985
    %7951 = vmatpush1.bf16.msra.mxu0 %v1984
    %7952 = vmatprep.subr.bf16.mxu0 %v1993
    %7953 = vmatpush1.bf16.msra.mxu0 %v1992
    %7954 = vmatprep.subr.bf16.mxu0 %v2001
    %7955 = vmatpush1.bf16.msra.mxu0 %v2000
    %7956 = vmatprep.subr.bf16.mxu0 %v2009
    %7957 = vmatpush1.bf16.msra.mxu0 %v2008
    %7958 = vmatprep.subr.bf16.mxu0 %v2017
    %7959 = vmatpush1.bf16.msra.mxu0 %v2016
    %7960 = vmatprep.subr.bf16.mxu0 %v2025
    %7961 = vmatpush1.bf16.msra.mxu0 %v2024
    %7962 = vmatprep.subr.bf16.mxu0 %v2033
    %7963 = vmatpush1.bf16.msra.mxu0 %v2032
    %7964 = vmatprep.subr.bf16.mxu0 %v2041
    %7965 = vmatpush1.bf16.msra.mxu0 %v2040
    %7966 = vmatprep.subr.bf16.mxu0 %v2049
    %7967 = vmatpush1.bf16.msra.mxu0 %v2048
    %7968 = vmatprep.subr.bf16.mxu0 %v2057
    %7969 = vmatpush1.bf16.msra.mxu0 %v2056
    %7970 = vmatprep.subr.bf16.mxu0 %v2065
    %7971 = vmatpush1.bf16.msra.mxu0 %v2064
    %7972 = vmatprep.subr.bf16.mxu0 %v2073
    %7973 = vmatpush1.bf16.msra.mxu0 %v2072
    %7974 = vmatprep.subr.bf16.mxu0 %v2081
    %7975 = vmatpush1.bf16.msra.mxu0 %v2080
    %7976 = vmatprep.subr.bf16.mxu0 %v2089
    %7977 = vmatpush1.bf16.msra.mxu0 %v2088
    %7978 = vmatprep.subr.bf16.mxu0 %v2097
    %7979 = vmatpush1.bf16.msra.mxu0 %v2096
    %7980 = vmatprep.mubr.bf16.mxu0 %v7904
    %7981 = vmatmul.mubr.bf16.gmra.mrb[0].mxu0 %v7903
    %v7982 = vpop.f32.mrb[0].mxu0
    %v7983 = vadd.f32 0.0, %v7982
    %v7984 = vpop.f32.mrb[0].mxu0
    %v7985 = vadd.f32 0.0, %v7984
    %v7986 = vpop.f32.mrb[0].mxu0
    %v7987 = vpop.f32.mrb[0].mxu0
    %7988 = vdwg.mxu0
    %7989 = vmatprep.subr.bf16.mxu0 %v1979
    %7990 = vmatpush1.bf16.msra.mxu0 %v1978
    %7991 = vmatprep.subr.bf16.mxu0 %v1987
    %7992 = vmatpush1.bf16.msra.mxu0 %v1986
    %7993 = vmatprep.subr.bf16.mxu0 %v1995
    %7994 = vmatpush1.bf16.msra.mxu0 %v1994
    %7995 = vmatprep.subr.bf16.mxu0 %v2003
    %7996 = vmatpush1.bf16.msra.mxu0 %v2002
    %7997 = vmatprep.subr.bf16.mxu0 %v2011
    %7998 = vmatpush1.bf16.msra.mxu0 %v2010
    %7999 = vmatprep.subr.bf16.mxu0 %v2019
    %8000 = vmatpush1.bf16.msra.mxu0 %v2018
    %8001 = vmatprep.subr.bf16.mxu0 %v2027
    %8002 = vmatpush1.bf16.msra.mxu0 %v2026
    %8003 = vmatprep.subr.bf16.mxu0 %v2035
    %8004 = vmatpush1.bf16.msra.mxu0 %v2034
    %8005 = vmatprep.subr.bf16.mxu0 %v2043
    %8006 = vmatpush1.bf16.msra.mxu0 %v2042
    %8007 = vmatprep.subr.bf16.mxu0 %v2051
    %8008 = vmatpush1.bf16.msra.mxu0 %v2050
    %8009 = vmatprep.subr.bf16.mxu0 %v2059
    %8010 = vmatpush1.bf16.msra.mxu0 %v2058
    %8011 = vmatprep.subr.bf16.mxu0 %v2067
    %8012 = vmatpush1.bf16.msra.mxu0 %v2066
    %8013 = vmatprep.subr.bf16.mxu0 %v2075
    %8014 = vmatpush1.bf16.msra.mxu0 %v2074
    %8015 = vmatprep.subr.bf16.mxu0 %v2083
    %8016 = vmatpush1.bf16.msra.mxu0 %v2082
    %8017 = vmatprep.subr.bf16.mxu0 %v2091
    %8018 = vmatpush1.bf16.msra.mxu0 %v2090
    %8019 = vmatprep.subr.bf16.mxu0 %v2099
    %8020 = vmatpush1.bf16.msra.mxu0 %v2098
    %8021 = vmatprep.mubr.bf16.mxu0 %v7904
    %8022 = vmatmul.mubr.bf16.gmra.mrb[0].mxu0 %v7903
    %v8023 = vpop.f32.mrb[0].mxu0
    %v8024 = vadd.f32 0.0, %v8023
    %v8025 = vpop.f32.mrb[0].mxu0
    %v8026 = vadd.f32 0.0, %v8025
    %v8027 = vpop.f32.mrb[0].mxu0
    %v8028 = vpop.f32.mrb[0].mxu0
    %8029 = vdwg.mxu0
    %8030 = vmatprep.subr.bf16.mxu0 %v1981
    %8031 = vmatpush1.bf16.msra.mxu0 %v1980
    %8032 = vmatprep.subr.bf16.mxu0 %v1989
    %8033 = vmatpush1.bf16.msra.mxu0 %v1988
    %8034 = vmatprep.subr.bf16.mxu0 %v1997
    %8035 = vmatpush1.bf16.msra.mxu0 %v1996
    %8036 = vmatprep.subr.bf16.mxu0 %v2005
    %8037 = vmatpush1.bf16.msra.mxu0 %v2004
    %8038 = vmatprep.subr.bf16.mxu0 %v2013
    %8039 = vmatpush1.bf16.msra.mxu0 %v2012
    %8040 = vmatprep.subr.bf16.mxu0 %v2021
    %8041 = vmatpush1.bf16.msra.mxu0 %v2020
    %8042 = vmatprep.subr.bf16.mxu0 %v2029
    %8043 = vmatpush1.bf16.msra.mxu0 %v2028
    %8044 = vmatprep.subr.bf16.mxu0 %v2037
    %8045 = vmatpush1.bf16.msra.mxu0 %v2036
    %8046 = vmatprep.subr.bf16.mxu0 %v2045
    %8047 = vmatpush1.bf16.msra.mxu0 %v2044
    %8048 = vmatprep.subr.bf16.mxu0 %v2053
    %8049 = vmatpush1.bf16.msra.mxu0 %v2052
    %8050 = vmatprep.subr.bf16.mxu0 %v2061
    %8051 = vmatpush1.bf16.msra.mxu0 %v2060
    %8052 = vmatprep.subr.bf16.mxu0 %v2069
    %8053 = vmatpush1.bf16.msra.mxu0 %v2068
    %8054 = vmatprep.subr.bf16.mxu0 %v2077
    %8055 = vmatpush1.bf16.msra.mxu0 %v2076
    %8056 = vmatprep.subr.bf16.mxu0 %v2085
    %8057 = vmatpush1.bf16.msra.mxu0 %v2084
    %8058 = vmatprep.subr.bf16.mxu0 %v2093
    %8059 = vmatpush1.bf16.msra.mxu0 %v2092
    %8060 = vmatprep.subr.bf16.mxu0 %v2101
    %8061 = vmatpush1.bf16.msra.mxu0 %v2100
    %8062 = vmatprep.mubr.bf16.mxu0 %v7904
    %8063 = vmatmul.mubr.bf16.gmra.mrb[0].mxu0 %v7903
    %v8064 = vpop.f32.mrb[0].mxu0
    %v8065 = vadd.f32 0.0, %v8064
    %v8066 = vpop.f32.mrb[0].mxu0
    %v8067 = vadd.f32 0.0, %v8066
    %v8068 = vpop.f32.mrb[0].mxu0
    %v8069 = vpop.f32.mrb[0].mxu0
    %8070 = vdwg.mxu0
    %v8071 = vadd.f32 %v7428, %v7942
    %v8072 = vadd.f32 %v7430, %v7944
    %v8073 = vadd.f32 %v7469, %v7983
    %v8074 = vadd.f32 %v7471, %v7985
    %v8075 = vadd.f32 %v7510, %v8024
    %v8076 = vadd.f32 %v7512, %v8026
    %v8077 = vadd.f32 %v7551, %v8065
    %v8078 = vadd.f32 %v7553, %v8067
    %v8079 = vxor.u32 %v8071, 2147483648
    %v8080 = vxor.u32 %v8072, 2147483648
    %v8081 = vmul.f32 %v8079, 1.442695
    %v8082 = vpow.pop %v8081
    %v8083 = vmul.f32 %v8080, 1.442695
    %v8084 = vpow.pop %v8083
    %v8085 = vadd.f32 %v8082, 1.0
    %v8086 = vadd.f32 %v8084, 1.0
    %v8087 = vrcp.pop %v8085
    %v8088 = vmul.f32 1.0, %v8087
    %v8089 = vrcp.pop %v8086
    %v8090 = vmul.f32 1.0, %v8089
    %v8091 = vxor.u32 %v8073, 2147483648
    %v8092 = vxor.u32 %v8074, 2147483648
    %v8093 = vmul.f32 %v8091, 1.442695
    %v8094 = vpow.pop %v8093
    %v8095 = vmul.f32 %v8092, 1.442695
    %v8096 = vpow.pop %v8095
    %v8097 = vadd.f32 %v8094, 1.0
    %v8098 = vadd.f32 %v8096, 1.0
    %v8099 = vrcp.pop %v8097
    %v8100 = vmul.f32 1.0, %v8099
    %v8101 = vrcp.pop %v8098
    %v8102 = vmul.f32 1.0, %v8101
    %v8103 = vtanh.pop %v8075
    %v8104 = vtanh.pop %v8076
    %v8105 = vxor.u32 %v8077, 2147483648
    %v8106 = vxor.u32 %v8078, 2147483648
    %v8107 = vmul.f32 %v8105, 1.442695
    %v8108 = vpow.pop %v8107
    %v8109 = vmul.f32 %v8106, 1.442695
    %v8110 = vpow.pop %v8109
    %v8111 = vadd.f32 %v8108, 1.0
    %v8112 = vadd.f32 %v8110, 1.0
    %v8113 = vrcp.pop %v8111
    %v8114 = vmul.f32 1.0, %v8113
    %v8115 = vrcp.pop %v8112
    %v8116 = vmul.f32 1.0, %v8115
    %v8117 = vmul.f32 %v8100, %v7385
    %v8118 = vmul.f32 %v8102, %v7386
    %v8119 = vmul.f32 %v8088, %v8103
    %v8120 = vmul.f32 %v8090, %v8104
    %v8121 = vadd.f32 %v8117, %v8119
    %v8122 = vadd.f32 %v8118, %v8120
    %v8123 = vtanh.pop %v8121
    %v8124 = vtanh.pop %v8122
    %v8125 = vmul.f32 %v8114, %v8123
    %v8126 = vmul.f32 %v8116, %v8124
    %v8131 = vrot.slane %v7883, 7
    %v8132 = vrot.slane %v7884, 7
    %v8139 = vrot.slane %v8125, 1
    %v8140 = vrot.slane %v8126, 1
    %v8143 = vpack.c.bf16 %v8131, %v7881
    %v8144 = vpack.c.bf16 %v8132, %v7882
    %v8145 = vpack.c.bf16 %v8139, %v8139
    %v8146 = vpack.c.bf16 %v8140, %v8140
    %v8147 = vld [vmem:[%s7] sm:$0xf]
    %v8148 = vld [vmem:[%s7 + $0x4] sm:$0xf]
    %v8149 = vld [vmem:[%s7 + $0x8] sm:$0xf]
    %v8150 = vld [vmem:[%s7 + $0xc] sm:$0xf]
    %v8151 = vld [vmem:[%s7 + $0x10] sm:$0xf]
    %v8152 = vld [vmem:[%s7 + $0x14] sm:$0xf]
    %v8153 = vld [vmem:[%s7 + $0x18] sm:$0xf]
    %v8154 = vld [vmem:[%s7 + $0x1c] sm:$0xf]
    %v8155 = vld [vmem:[%s7 + $0x20] sm:$0xf]
    %v8156 = vld [vmem:[%s7 + $0x24] sm:$0xf]
    %v8157 = vld [vmem:[%s7 + $0x28] sm:$0xf]
    %v8158 = vld [vmem:[%s7 + $0x2c] sm:$0xf]
    %v8159 = vld [vmem:[%s7 + $0x30] sm:$0xf]
    %v8160 = vld [vmem:[%s7 + $0x34] sm:$0xf]
    %v8161 = vld [vmem:[%s7 + $0x38] sm:$0xf]
    %v8162 = vld [vmem:[%s7 + $0x3c] sm:$0xf]
    %v8163 = vld [vmem:[%s7 + $0x40] sm:$0xf]
    %v8164 = vld [vmem:[%s7 + $0x44] sm:$0xf]
    %v8165 = vld [vmem:[%s7 + $0x48] sm:$0xf]
    %v8166 = vld [vmem:[%s7 + $0x4c] sm:$0xf]
    %v8167 = vld [vmem:[%s7 + $0x50] sm:$0xf]
    %v8168 = vld [vmem:[%s7 + $0x54] sm:$0xf]
    %v8169 = vld [vmem:[%s7 + $0x58] sm:$0xf]
    %v8170 = vld [vmem:[%s7 + $0x5c] sm:$0xf]
    %v8171 = vld [vmem:[%s7 + $0x60] sm:$0xf]
    %v8172 = vld [vmem:[%s7 + $0x64] sm:$0xf]
    %v8173 = vld [vmem:[%s7 + $0x68] sm:$0xf]
    %v8174 = vld [vmem:[%s7 + $0x6c] sm:$0xf]
    %v8175 = vld [vmem:[%s7 + $0x70] sm:$0xf]
    %v8176 = vld [vmem:[%s7 + $0x74] sm:$0xf]
    %v8177 = vld [vmem:[%s7 + $0x78] sm:$0xf]
    %v8178 = vld [vmem:[%s7 + $0x7c] sm:$0xf]
    %v8179 = vld [vmem:[%s7 + $0x80] sm:$0xf]
    %v8180 = vld [vmem:[%s7 + $0x84] sm:$0xf]
    %v8181 = vld [vmem:[%s7 + $0x88] sm:$0xf]
    %v8182 = vld [vmem:[%s7 + $0x8c] sm:$0xf]
    %v8183 = vld [vmem:[%s7 + $0x90] sm:$0xf]
    %v8184 = vld [vmem:[%s7 + $0x94] sm:$0xf]
    %v8185 = vld [vmem:[%s7 + $0x98] sm:$0xf]
    %v8186 = vld [vmem:[%s7 + $0x9c] sm:$0xf]
    %v8187 = vld [vmem:[%s7 + $0xa0] sm:$0xf]
    %v8188 = vld [vmem:[%s7 + $0xa4] sm:$0xf]
    %v8189 = vld [vmem:[%s7 + $0xa8] sm:$0xf]
    %v8190 = vld [vmem:[%s7 + $0xac] sm:$0xf]
    %v8191 = vld [vmem:[%s7 + $0xb0] sm:$0xf]
    %v8192 = vld [vmem:[%s7 + $0xb4] sm:$0xf]
    %v8193 = vld [vmem:[%s7 + $0xb8] sm:$0xf]
    %v8194 = vld [vmem:[%s7 + $0xbc] sm:$0xf]
    %v8195 = vld [vmem:[%s7 + $0xc0] sm:$0xf]
    %v8196 = vld [vmem:[%s7 + $0xc4] sm:$0xf]
    %v8197 = vld [vmem:[%s7 + $0xc8] sm:$0xf]
    %v8198 = vld [vmem:[%s7 + $0xcc] sm:$0xf]
    %v8199 = vld [vmem:[%s7 + $0xd0] sm:$0xf]
    %v8200 = vld [vmem:[%s7 + $0xd4] sm:$0xf]
    %v8201 = vld [vmem:[%s7 + $0xd8] sm:$0xf]
    %v8202 = vld [vmem:[%s7 + $0xdc] sm:$0xf]
    %v8203 = vld [vmem:[%s7 + $0xe0] sm:$0xf]
    %v8204 = vld [vmem:[%s7 + $0xe4] sm:$0xf]
    %v8205 = vld [vmem:[%s7 + $0xe8] sm:$0xf]
    %v8206 = vld [vmem:[%s7 + $0xec] sm:$0xf]
    %v8207 = vld [vmem:[%s7 + $0xf0] sm:$0xf]
    %v8208 = vld [vmem:[%s7 + $0xf4] sm:$0xf]
    %v8209 = vld [vmem:[%s7 + $0xf8] sm:$0xf]
    %v8210 = vld [vmem:[%s7 + $0xfc] sm:$0xf]
    %v8211 = vld [vmem:[#allocation16] sm:$0x1]
    %v8213 = vlaneseq
    %v8214 = vshrl.u32 %v8213, 7
    %v8215 = vsub.s32 0, %v8214
    %v8216 = vrot.slane %v8211, %v8215
    %v8219 = vshrl.u32 %v8143, 16
    %v8221 = vrot.slane %v8219, 3
    %v8222 = vshll.u32 %v8143, 16
    %v8224 = vrot.slane %v8222, 4
    %v8225 = vor.u32 %v8221, %v8224
    %v8227 = vshrl.u32 %v8144, 16
    %v8229 = vrot.slane %v8227, 3
    %v8230 = vshll.u32 %v8144, 16
    %v8232 = vrot.slane %v8230, 4
    %v8233 = vor.u32 %v8229, %v8232
    %v8235 = vshrl.u32 %v8145, 16
    %v8237 = vrot.slane %v8235, 3
    %v8238 = vshll.u32 %v8145, 16
    %v8240 = vrot.slane %v8238, 4
    %v8241 = vor.u32 %v8237, %v8240
    %v8243 = vshrl.u32 %v8146, 16
    %v8245 = vrot.slane %v8243, 3
    %v8246 = vshll.u32 %v8146, 16
    %v8248 = vrot.slane %v8246, 4
    %v8249 = vor.u32 %v8245, %v8248
    %v8318 = vunpack.c.l.b16 %v8147
    %v8319 = vunpack.c.l.b16 %v8148
    %v8320 = vunpack.c.l.b16 %v8149
    %v8321 = vunpack.c.l.b16 %v8150
    %v8322 = vunpack.c.l.b16 %v8151
    %v8323 = vunpack.c.l.b16 %v8152
    %v8324 = vunpack.c.l.b16 %v8153
    %v8325 = vunpack.c.l.b16 %v8154
    %v8326 = vunpack.c.l.b16 %v8155
    %v8327 = vunpack.c.l.b16 %v8156
    %v8328 = vunpack.c.l.b16 %v8157
    %v8329 = vunpack.c.l.b16 %v8158
    %v8330 = vunpack.c.l.b16 %v8159
    %v8331 = vunpack.c.l.b16 %v8160
    %v8332 = vunpack.c.l.b16 %v8161
    %v8333 = vunpack.c.l.b16 %v8162
    %v8334 = vunpack.c.l.b16 %v8163
    %v8335 = vunpack.c.l.b16 %v8164
    %v8336 = vunpack.c.l.b16 %v8165
    %v8337 = vunpack.c.l.b16 %v8166
    %v8338 = vunpack.c.l.b16 %v8167
    %v8339 = vunpack.c.l.b16 %v8168
    %v8340 = vunpack.c.l.b16 %v8169
    %v8341 = vunpack.c.l.b16 %v8170
    %v8342 = vunpack.c.l.b16 %v8171
    %v8343 = vunpack.c.l.b16 %v8172
    %v8344 = vunpack.c.l.b16 %v8173
    %v8345 = vunpack.c.l.b16 %v8174
    %v8346 = vunpack.c.l.b16 %v8175
    %v8347 = vunpack.c.l.b16 %v8176
    %v8348 = vunpack.c.l.b16 %v8177
    %v8349 = vunpack.c.l.b16 %v8178
    %v8350 = vunpack.c.l.b16 %v8179
    %v8351 = vunpack.c.l.b16 %v8180
    %v8352 = vunpack.c.l.b16 %v8181
    %v8353 = vunpack.c.l.b16 %v8182
    %v8354 = vunpack.c.l.b16 %v8183
    %v8355 = vunpack.c.l.b16 %v8184
    %v8356 = vunpack.c.l.b16 %v8185
    %v8357 = vunpack.c.l.b16 %v8186
    %v8358 = vunpack.c.l.b16 %v8187
    %v8359 = vunpack.c.l.b16 %v8188
    %v8360 = vunpack.c.l.b16 %v8189
    %v8361 = vunpack.c.l.b16 %v8190
    %v8362 = vunpack.c.l.b16 %v8191
    %v8363 = vunpack.c.l.b16 %v8192
    %v8364 = vunpack.c.l.b16 %v8193
    %v8365 = vunpack.c.l.b16 %v8194
    %v8366 = vunpack.c.l.b16 %v8195
    %v8367 = vunpack.c.l.b16 %v8196
    %v8368 = vunpack.c.l.b16 %v8197
    %v8369 = vunpack.c.l.b16 %v8198
    %v8370 = vunpack.c.l.b16 %v8199
    %v8371 = vunpack.c.l.b16 %v8200
    %v8372 = vunpack.c.l.b16 %v8201
    %v8373 = vunpack.c.l.b16 %v8202
    %v8374 = vunpack.c.l.b16 %v8203
    %v8375 = vunpack.c.l.b16 %v8204
    %v8376 = vunpack.c.l.b16 %v8205
    %v8377 = vunpack.c.l.b16 %v8206
    %v8378 = vunpack.c.l.b16 %v8207
    %v8379 = vunpack.c.l.b16 %v8208
    %v8380 = vunpack.c.l.b16 %v8209
    %v8381 = vunpack.c.l.b16 %v8210
    %v8382 = vpack.c.b16 %v8319, %v8318
    %v8383 = vpack.c.b16 %v8321, %v8320
    %v8384 = vpack.c.b16 %v8323, %v8322
    %v8385 = vpack.c.b16 %v8325, %v8324
    %v8386 = vpack.c.b16 %v8327, %v8326
    %v8387 = vpack.c.b16 %v8329, %v8328
    %v8388 = vpack.c.b16 %v8331, %v8330
    %v8389 = vpack.c.b16 %v8333, %v8332
    %v8390 = vpack.c.b16 %v8335, %v8334
    %v8391 = vpack.c.b16 %v8337, %v8336
    %v8392 = vpack.c.b16 %v8339, %v8338
    %v8393 = vpack.c.b16 %v8341, %v8340
    %v8394 = vpack.c.b16 %v8343, %v8342
    %v8395 = vpack.c.b16 %v8345, %v8344
    %v8396 = vpack.c.b16 %v8347, %v8346
    %v8397 = vpack.c.b16 %v8349, %v8348
    %v8398 = vpack.c.b16 %v8351, %v8350
    %v8399 = vpack.c.b16 %v8353, %v8352
    %v8400 = vpack.c.b16 %v8355, %v8354
    %v8401 = vpack.c.b16 %v8357, %v8356
    %v8402 = vpack.c.b16 %v8359, %v8358
    %v8403 = vpack.c.b16 %v8361, %v8360
    %v8404 = vpack.c.b16 %v8363, %v8362
    %v8405 = vpack.c.b16 %v8365, %v8364
    %v8406 = vpack.c.b16 %v8367, %v8366
    %v8407 = vpack.c.b16 %v8369, %v8368
    %v8408 = vpack.c.b16 %v8371, %v8370
    %v8409 = vpack.c.b16 %v8373, %v8372
    %v8410 = vpack.c.b16 %v8375, %v8374
    %v8411 = vpack.c.b16 %v8377, %v8376
    %v8412 = vpack.c.b16 %v8379, %v8378
    %v8413 = vpack.c.b16 %v8381, %v8380
    %8446 = vmatprep.subr.bf16.mxu0 0
    %8447 = vmatpush1.bf16.msra.mxu0 %v8382
    %8448 = vmatprep.subr.bf16.mxu0 0
    %8449 = vmatpush1.bf16.msra.mxu0 %v8383
    %8450 = vmatprep.subr.bf16.mxu0 0
    %8451 = vmatpush1.bf16.msra.mxu0 %v8384
    %8452 = vmatprep.subr.bf16.mxu0 0
    %8453 = vmatpush1.bf16.msra.mxu0 %v8385
    %8454 = vmatprep.subr.bf16.mxu0 0
    %8455 = vmatpush1.bf16.msra.mxu0 %v8386
    %8456 = vmatprep.subr.bf16.mxu0 0
    %8457 = vmatpush1.bf16.msra.mxu0 %v8387
    %8458 = vmatprep.subr.bf16.mxu0 0
    %8459 = vmatpush1.bf16.msra.mxu0 %v8388
    %8460 = vmatprep.subr.bf16.mxu0 0
    %8461 = vmatpush1.bf16.msra.mxu0 %v8389
    %8462 = vmatprep.subr.bf16.mxu0 0
    %8463 = vmatpush1.bf16.msra.mxu0 %v8390
    %8464 = vmatprep.subr.bf16.mxu0 0
    %8465 = vmatpush1.bf16.msra.mxu0 %v8391
    %8466 = vmatprep.subr.bf16.mxu0 0
    %8467 = vmatpush1.bf16.msra.mxu0 %v8392
    %8468 = vmatprep.subr.bf16.mxu0 0
    %8469 = vmatpush1.bf16.msra.mxu0 %v8393
    %8470 = vmatprep.subr.bf16.mxu0 0
    %8471 = vmatpush1.bf16.msra.mxu0 %v8394
    %8472 = vmatprep.subr.bf16.mxu0 0
    %8473 = vmatpush1.bf16.msra.mxu0 %v8395
    %8474 = vmatprep.subr.bf16.mxu0 0
    %8475 = vmatpush1.bf16.msra.mxu0 %v8396
    %8476 = vmatprep.subr.bf16.mxu0 0
    %8477 = vmatpush1.bf16.msra.mxu0 %v8397
    %8478 = vmatprep.mubr.bf16.mxu0 %v8233
    %8479 = vmatmul.mubr.bf16.gmra.mrb[0].mxu0 %v8225
    %v8480 = vpop.f32.mrb[0].mxu0
    %v8481 = vadd.f32 %v8216, %v8480
    %v8482 = vpop.f32.mrb[0].mxu0
    %v8483 = vpop.f32.mrb[0].mxu0
    %v8484 = vpop.f32.mrb[0].mxu0
    %8485 = vdwg.mxu0
    %8486 = vmatprep.subr.bf16.mxu0 0
    %8487 = vmatpush1.bf16.msra.mxu0 %v8398
    %8488 = vmatprep.subr.bf16.mxu0 0
    %8489 = vmatpush1.bf16.msra.mxu0 %v8399
    %8490 = vmatprep.subr.bf16.mxu0 0
    %8491 = vmatpush1.bf16.msra.mxu0 %v8400
    %8492 = vmatprep.subr.bf16.mxu0 0
    %8493 = vmatpush1.bf16.msra.mxu0 %v8401
    %8494 = vmatprep.subr.bf16.mxu0 0
    %8495 = vmatpush1.bf16.msra.mxu0 %v8402
    %8496 = vmatprep.subr.bf16.mxu0 0
    %8497 = vmatpush1.bf16.msra.mxu0 %v8403
    %8498 = vmatprep.subr.bf16.mxu0 0
    %8499 = vmatpush1.bf16.msra.mxu0 %v8404
    %8500 = vmatprep.subr.bf16.mxu0 0
    %8501 = vmatpush1.bf16.msra.mxu0 %v8405
    %8502 = vmatprep.subr.bf16.mxu0 0
    %8503 = vmatpush1.bf16.msra.mxu0 %v8406
    %8504 = vmatprep.subr.bf16.mxu0 0
    %8505 = vmatpush1.bf16.msra.mxu0 %v8407
    %8506 = vmatprep.subr.bf16.mxu0 0
    %8507 = vmatpush1.bf16.msra.mxu0 %v8408
    %8508 = vmatprep.subr.bf16.mxu0 0
    %8509 = vmatpush1.bf16.msra.mxu0 %v8409
    %8510 = vmatprep.subr.bf16.mxu0 0
    %8511 = vmatpush1.bf16.msra.mxu0 %v8410
    %8512 = vmatprep.subr.bf16.mxu0 0
    %8513 = vmatpush1.bf16.msra.mxu0 %v8411
    %8514 = vmatprep.subr.bf16.mxu0 0
    %8515 = vmatpush1.bf16.msra.mxu0 %v8412
    %8516 = vmatprep.subr.bf16.mxu0 0
    %8517 = vmatpush1.bf16.msra.mxu0 %v8413
    %8518 = vmatprep.mubr.bf16.mxu0 %v8249
    %8519 = vmatmul.mubr.bf16.gmra.mrb[0].mxu0 %v8241
    %v8520 = vpop.f32.mrb[0].mxu0
    %v8521 = vadd.f32 %v8481, %v8520
    %v8522 = vpop.f32.mrb[0].mxu0
    %v8523 = vpop.f32.mrb[0].mxu0
    %v8524 = vpop.f32.mrb[0].mxu0
    %8525 = vdwg.mxu0
    %vm8526 = vcmask 74752
    %8527 = vst.msk [vmem:[#allocation17] sm:$0x3] %vm8526, %v8521
    // Predicated region
    $region66: #{crnn_lstm_forward.1} parent=1 // pred_check
      _
    $region67: #{crnn_lstm_forward.1} parent=1 // pred_check_branch
      %8529 = sbr.rel (0) target = $region69
    $region68: #{crnn_lstm_forward.1} parent=1 // pred_region
      %s8531 = ssub.s32 32, 32
      %8532 = vsyncadd [#allocation7], %s8531
      %s8534 = sshll.u32 [#allocation17], 4
      %s8535 = int_to_ptr.vmem [resolvable:$true] %s8534
      %8537 = dma.vmem_to_hbm [thread:$0]  %s8535, 32, %s11, [#allocation7]
    $region69: #{crnn_lstm_forward.1} parent=1 // pred_fallthru
      _
    // Predicated region
    $region70: #{crnn_lstm_forward.1} parent=1 // pred_check
      _
    $region71: #{crnn_lstm_forward.1} parent=1 // pred_check_branch
      %8539 = sbr.rel (0) target = $region73
    $region72: #{crnn_lstm_forward.1} parent=1 // pred_region
      %8540 = dma.done [#allocation7], 32
    $region73: #{crnn_lstm_forward.1} parent=1 // pred_fallthru
      _
    %8541 = vsyncpa [#allocation6], 1
    %8542 = vsyncpa [#allocation9], 1
    %8543 = vsyncpa [#allocation12], 1
    %8544 = vsyncpa [#allocation15], 1
    %8545 = vsyncpa [#allocation7], 1
  %8546 = vsyncmov [#allocation4]
  %s8547 = vpop.sfrf %8546
  %p8548 = scmp.eq.s32.totalorder %s8547, 0
  %p8549 = pneg %p8548
  %8551 = shalt.err (%p8549)
  %s8552 = scalar_lea.sflag [#allocation4], 1
  %8553 = vsyncmov %s8552
  %s8554 = vpop.sfrf %8553
  %p8555 = scmp.eq.s32.totalorder %s8554, 0
  %p8556 = pneg %p8555
  %8558 = shalt.err (%p8556)

</llo_original>
